<compile_context>
chip_gen: v5e
topology: v5e:2x2
jax: 0.10.0
libtpu: 0.0.40
codegen_flags: <defaults>
</compile_context>

<pallas_src>
import functools

import jax
import jax.numpy as jnp
import numpy as np
from jax import lax
from jax.experimental import pallas as pl
from jax.experimental.pallas import tpu as pltpu

_KSIZE = 3
_ACTIVATIONS = ("relu", "relu", "relu", "sigmoid")


def _round_up(x, m):
    return ((x + m - 1) // m) * m


def _spatial_chain(h0, w0):
    """Spatial sizes through Conv(s2,p1) x2 then ConvT(s2,p1,op1) x2 (all 3x3)."""
    k = _KSIZE
    h1, w1 = (h0 + 2 - k) // 2 + 1, (w0 + 2 - k) // 2 + 1
    h2, w2 = (h1 + 2 - k) // 2 + 1, (w1 + 2 - k) // 2 + 1
    h3, w3 = (h2 - 1) * 2 - 2 + k + 1, (w2 - 1) * 2 - 2 + k + 1
    h4, w4 = (h3 - 1) * 2 - 2 + k + 1, (w3 - 1) * 2 - 2 + k + 1
    return (h1, w1), (h2, w2), (h3, w3), (h4, w4)


# ----------------------------------------------------------------------------
# Pallas kernel: the entire 4-layer forward pass for ONE image (grid = batch).
# ----------------------------------------------------------------------------
def _autoencoder_kernel(x_ref, *refs, activations):
    o_ref = refs[-1]
    layer_refs = refs[:-1]
    n_layers = len(activations)

    h = x_ref[...].astype(jnp.bfloat16)            # (rows, cin_pad) bf16 MXU operand
    for li in range(n_layers):
        g_ref, w_ref, b_ref = layer_refs[3 * li: 3 * li + 3]
        n_taps, cin, cout = w_ref.shape
        m_out = g_ref.shape[1]

        acc = jnp.zeros((m_out, cout), jnp.float32)
        gather_first = cin <= cout                 # cheaper association order (static)
        for t in range(n_taps):                    # 9 taps, fully unrolled
            g = g_ref[t]                           # (m_out, m_in) 0/1 gather matrix, bf16
            w = w_ref[t]                           # (cin, cout) per-tap weights, bf16
            if gather_first:
                gathered = jnp.dot(g, h, preferred_element_type=jnp.float32)
                acc = acc + jnp.dot(gathered.astype(jnp.bfloat16), w,
                                    preferred_element_type=jnp.float32)
            else:
                y = jnp.dot(h, w, preferred_element_type=jnp.float32)
                acc = acc + jnp.dot(g, y.astype(jnp.bfloat16),
                                    preferred_element_type=jnp.float32)

        acc = acc + b_ref[...]                     # (1, cout) bias broadcast, f32
        act = activations[li]
        if act == "relu":
            out = jnp.maximum(acc, 0.0)
        elif act == "sigmoid":
            out = pl.reciprocal(1.0 + jnp.exp(-acc), approx=True)   # EUP exp + EUP recip
        else:
            out = acc

        if li == n_layers - 1:
            o_ref[...] = out.astype(o_ref.dtype)
        else:
            h = out.astype(jnp.bfloat16)


def _fused_forward(x_flat, layers, activations, batch):
    rows_in = x_flat.shape[0] // batch
    cin0 = x_flat.shape[1]
    args = [x_flat]
    in_specs = [pl.BlockSpec((rows_in, cin0), lambda b: (b, 0))]
    for layer in layers:
        g, w, bias = layer["g"], layer["w"], layer["b"]
        args += [g, w, bias]
        in_specs += [
            pl.BlockSpec(g.shape, lambda b: (0, 0, 0)),     # shared across batch
            pl.BlockSpec(w.shape, lambda b: (0, 0, 0)),
            pl.BlockSpec(bias.shape, lambda b: (0, 0)),
        ]
    rows_out = layers[-1]["g"].shape[1]
    cout = layers[-1]["w"].shape[2]
    return pl.pallas_call(
        functools.partial(_autoencoder_kernel, activations=activations),
        out_shape=jax.ShapeDtypeStruct((batch * rows_out, cout), jnp.float32),
        grid=(batch,),
        in_specs=in_specs,
        out_specs=pl.BlockSpec((rows_out, cout), lambda b: (b, 0)),
        compiler_params=pltpu.CompilerParams(
            dimension_semantics=("parallel",)),             # megacore over batch on v7x
    )(*args)


# ----------------------------------------------------------------------------
# One-time operand preparation (outside the jit'd forward): per-image gather
# matrices, per-tap weight slices (bf16), channel padding to multiples of 8.
# ----------------------------------------------------------------------------
def _conv_gather_mats(h, w, ho, wo, k, stride, pad):
    """Conv2d: output (oy, ox) at tap (i, j) reads input (oy*s - p + i, ox*s - p + j)."""
    g = np.zeros((k * k, ho * wo, h * w), np.float32)
    for oy in range(ho):
        for ox in range(wo):
            row = oy * wo + ox
            for i in range(k):
                for j in range(k):
                    iy = oy * stride - pad + i
                    ix = ox * stride - pad + j
                    if 0 <= iy < h and 0 <= ix < w:
                        g[i * k + j, row, iy * w + ix] = 1.0
    return g


def _conv_transpose_gather_mats(h, w, ho, wo, k, stride, pad):
    """ConvTranspose2d: output (oy, ox) at tap (i, j) reads input
    ((oy + p - i)/s, (ox + p - j)/s) when the division is exact (else zero)."""
    g = np.zeros((k * k, ho * wo, h * w), np.float32)
    for oy in range(ho):
        for ox in range(wo):
            row = oy * wo + ox
            for i in range(k):
                for j in range(k):
                    ny = oy + pad - i
                    nx = ox + pad - j
                    if ny % stride or nx % stride:
                        continue
                    iy, ix = ny // stride, nx // stride
                    if 0 <= iy < h and 0 <= ix < w:
                        g[i * k + j, row, iy * w + ix] = 1.0
    return g


def _pack_weights(w_taps, b):
    """w_taps: (k*k, cin, cout). Pad channel dims to multiples of 8 (zero channels);
    cast to bf16. Bias kept f32."""
    _, cin, cout = w_taps.shape
    cin_p, cout_p = _round_up(cin, 8), _round_up(cout, 8)
    w_taps = jnp.pad(w_taps, ((0, 0), (0, cin_p - cin), (0, cout_p - cout)))
    b = jnp.pad(b.reshape(1, -1), ((0, 0), (0, cout_p - cout)))
    return w_taps.astype(jnp.bfloat16), b.astype(jnp.float32)


def _conv_layer(w, b, g):
    cout, cin, k, _ = w.shape
    w_taps = jnp.transpose(w, (2, 3, 1, 0)).reshape(k * k, cin, cout)   # tap = i*k + j
    w_taps, b2 = _pack_weights(w_taps, b)
    return dict(g=jnp.asarray(g, jnp.bfloat16), w=w_taps, b=b2)


def _convt_layer(w_t, b, g):
    cin, cout, k, _ = w_t.shape
    w_taps = jnp.transpose(w_t, (2, 3, 0, 1)).reshape(k * k, cin, cout)  # tap = i*k + j
    w_taps, b2 = _pack_weights(w_taps, b)
    return dict(g=jnp.asarray(g, jnp.bfloat16), w=w_taps, b=b2)


def prepare_operands(params, input_shape):
    """Build all fused-kernel operands once, for a fixed input spatial shape."""
    _, _, h0, w0 = input_shape
    k = _KSIZE
    (h1, w1), (h2, w2), (h3, w3), (h4, w4) = _spatial_chain(h0, w0)
    return [
        _conv_layer(params["enc1_w"], params["enc1_b"],
                    _conv_gather_mats(h0, w0, h1, w1, k, 2, 1)),
        _conv_layer(params["enc2_w"], params["enc2_b"],
                    _conv_gather_mats(h1, w1, h2, w2, k, 2, 1)),
        _convt_layer(params["dec1_w"], params["dec1_b"],
                     _conv_transpose_gather_mats(h2, w2, h3, w3, k, 2, 1)),
        _convt_layer(params["dec2_w"], params["dec2_b"],
                     _conv_transpose_gather_mats(h3, w3, h4, w4, k, 2, 1)),
    ]


# ----------------------------------------------------------------------------
# Forward pass (jit'd): only NCHW<->flat layout plumbing stays outside the kernel.
# ----------------------------------------------------------------------------
def autoencoder_forward(x, prep_layers):
    n, c, h, w = x.shape
    x_flat = jnp.transpose(x, (0, 2, 3, 1)).reshape(n * h * w, c)
    cin_pad = prep_layers[0]["w"].shape[1]
    if cin_pad > c:
        x_flat = jnp.pad(x_flat, ((0, 0), (0, cin_pad - c)))
    out_flat = _fused_forward(x_flat, prep_layers, _ACTIVATIONS, n)   # (n*h4*w4, cout_pad)
    (_, _), (_, _), (_, _), (h4, w4) = _spatial_chain(h, w)
    return out_flat[:, :c].reshape(n, h4, w4, c).transpose(0, 3, 1, 2)


# ----------------------------------------------------------------------------
# Pure-JAX reference (lax convs, f32 HIGHEST) used as a correctness cross-check.
# ----------------------------------------------------------------------------
def autoencoder_reference(x, params):
    dn = ("NCHW", "OIHW", "NCHW")

    def conv(x, w, b, s, p):
        y = lax.conv_general_dilated(x, w, (s, s), [(p, p), (p, p)],
                                     dimension_numbers=dn,
                                     precision=lax.Precision.HIGHEST)
        return y + b[None, :, None, None]

    def convT(x, w_t, b, s, p, op):
        kh = w_t.shape[2]
        w_eq = jnp.flip(w_t, axis=(2, 3)).transpose(1, 0, 2, 3)
        pad_lo, pad_hi = kh - 1 - p, kh - 1 - p + op
        y = lax.conv_general_dilated(x, w_eq, (1, 1),
                                     [(pad_lo, pad_hi), (pad_lo, pad_hi)],
                                     lhs_dilation=(s, s), dimension_numbers=dn,
                                     precision=lax.Precision.HIGHEST)
        return y + b[None, :, None, None]

    h = jax.nn.relu(conv(x, params["enc1_w"], params["enc1_b"], 2, 1))
    h = jax.nn.relu(conv(h, params["enc2_w"], params["enc2_b"], 2, 1))
    h = jax.nn.relu(convT(h, params["dec1_w"], params["dec1_b"], 2, 1, 1))
    h = jax.nn.sigmoid(convT(h, params["dec2_w"], params["dec2_b"], 2, 1, 1))
    return h


def init_params(key):
    def uconv(k, shape, fan_in):
        bound = 1.0 / np.sqrt(fan_in)
        return jax.random.uniform(k, shape, jnp.float32, -bound, bound)

    ks = jax.random.split(key, 8)
    return {
        # Conv2d weights: (Cout, Cin, kh, kw)
        "enc1_w": uconv(ks[0], (32, 3, 3, 3), 3 * 9),
        "enc1_b": uconv(ks[1], (32,), 3 * 9),
        "enc2_w": uconv(ks[2], (64, 32, 3, 3), 32 * 9),
        "enc2_b": uconv(ks[3], (64,), 32 * 9),
        # ConvTranspose2d weights: (Cin, Cout, kh, kw)
        "dec1_w": uconv(ks[4], (64, 32, 3, 3), 32 * 9),
        "dec1_b": uconv(ks[5], (32,), 32 * 9),
        "dec2_w": uconv(ks[6], (32, 3, 3, 3), 3 * 9),
        "dec2_b": uconv(ks[7], (3,), 3 * 9),
    }


if __name__ == "__main__":
    key = jax.random.PRNGKey(0)
    k_params, k_x = jax.random.split(key)
    params = init_params(k_params)

    # Small NCHW input consistent with the module (RGB image batch).
    x = jax.random.uniform(k_x, (2, 3, 16, 16), jnp.float32)

    # One-time operand preparation (outside the jit'd forward).
    prep = prepare_operands(params, x.shape)

    fwd = jax.jit(autoencoder_forward)
    out = jax.block_until_ready(fwd(x, prep))

    assert out.shape == (2, 3, 16, 16), out.shape
    assert out.dtype == jnp.float32

    ref = jax.block_until_ready(autoencoder_reference(x, params))
    np.testing.assert_allclose(np.asarray(out), np.asarray(ref), rtol=2e-2, atol=2e-2)

    print("KERNEL_OK")
</pallas_src>

<mosaic_0001>
module attributes {stable_mosaic.version = 11 : i64} {
  func.func @_autoencoder_kernel(%arg0: i32, %arg1: memref<256x8xf32, #tpu.memory_space<vmem>>, %arg2: memref<9x64x256xbf16, #tpu.memory_space<vmem>>, %arg3: memref<9x8x32xbf16, #tpu.memory_space<vmem>>, %arg4: memref<1x32xf32, #tpu.memory_space<vmem>>, %arg5: memref<9x16x64xbf16, #tpu.memory_space<vmem>>, %arg6: memref<9x32x64xbf16, #tpu.memory_space<vmem>>, %arg7: memref<1x64xf32, #tpu.memory_space<vmem>>, %arg8: memref<9x64x16xbf16, #tpu.memory_space<vmem>>, %arg9: memref<9x64x32xbf16, #tpu.memory_space<vmem>>, %arg10: memref<1x32xf32, #tpu.memory_space<vmem>>, %arg11: memref<9x256x64xbf16, #tpu.memory_space<vmem>>, %arg12: memref<9x32x8xbf16, #tpu.memory_space<vmem>>, %arg13: memref<1x8xf32, #tpu.memory_space<vmem>>, %arg14: memref<256x8xf32, #tpu.memory_space<vmem>>) attributes {dimension_semantics = [#tpu.dimension_semantics<parallel>], iteration_bounds = array<i64: 2>, scalar_prefetch = 0 : i64, scratch_operands = 0 : i64, tpu.core_type = #tpu.core_type<tc>, window_params = [{transform_indices = @transform_0, window_bounds = array<i64: 256, 8>}, {pipeline_mode = #tpu.pipeline_mode<synchronous>, transform_indices = @transform_1, window_bounds = array<i64: 9, 64, 256>}, {pipeline_mode = #tpu.pipeline_mode<synchronous>, transform_indices = @transform_2, window_bounds = array<i64: 9, 8, 32>}, {pipeline_mode = #tpu.pipeline_mode<synchronous>, transform_indices = @transform_3, window_bounds = array<i64: 1, 32>}, {pipeline_mode = #tpu.pipeline_mode<synchronous>, transform_indices = @transform_4, window_bounds = array<i64: 9, 16, 64>}, {pipeline_mode = #tpu.pipeline_mode<synchronous>, transform_indices = @transform_5, window_bounds = array<i64: 9, 32, 64>}, {pipeline_mode = #tpu.pipeline_mode<synchronous>, transform_indices = @transform_6, window_bounds = array<i64: 1, 64>}, {pipeline_mode = #tpu.pipeline_mode<synchronous>, transform_indices = @transform_7, window_bounds = array<i64: 9, 64, 16>}, {pipeline_mode = #tpu.pipeline_mode<synchronous>, transform_indices = @transform_8, window_bounds = array<i64: 9, 64, 32>}, {pipeline_mode = #tpu.pipeline_mode<synchronous>, transform_indices = @transform_9, window_bounds = array<i64: 1, 32>}, {pipeline_mode = #tpu.pipeline_mode<synchronous>, transform_indices = @transform_10, window_bounds = array<i64: 9, 256, 64>}, {pipeline_mode = #tpu.pipeline_mode<synchronous>, transform_indices = @transform_11, window_bounds = array<i64: 9, 32, 8>}, {pipeline_mode = #tpu.pipeline_mode<synchronous>, transform_indices = @transform_12, window_bounds = array<i64: 1, 8>}, {transform_indices = @transform_13, window_bounds = array<i64: 256, 8>}]} {
    %c0 = arith.constant 0 : index
    %c0_0 = arith.constant 0 : index
    %0 = vector.load %arg1[%c0, %c0_0] : memref<256x8xf32, #tpu.memory_space<vmem>>, vector<256x8xf32>
    %1 = arith.truncf %0 : vector<256x8xf32> to vector<256x8xbf16>
    %cst = arith.constant 0.000000e+00 : f32
    %2 = vector.broadcast %cst : f32 to vector<64x32xf32>
    %c0_1 = arith.constant 0 : index
    %c0_2 = arith.constant 0 : index
    %c0_3 = arith.constant 0 : index
    %3 = vector.load %arg2[%c0_1, %c0_2, %c0_3] : memref<9x64x256xbf16, #tpu.memory_space<vmem>>, vector<1x64x256xbf16>
    %4 = vector.shape_cast %3 : vector<1x64x256xbf16> to vector<64x256xbf16>
    %c0_4 = arith.constant 0 : index
    %c0_5 = arith.constant 0 : index
    %c0_6 = arith.constant 0 : index
    %5 = vector.load %arg3[%c0_4, %c0_5, %c0_6] : memref<9x8x32xbf16, #tpu.memory_space<vmem>>, vector<1x8x32xbf16>
    %6 = vector.shape_cast %5 : vector<1x8x32xbf16> to vector<8x32xbf16>
    %cst_7 = arith.constant dense<0.000000e+00> : vector<64x8xf32>
    %7 = tpu.matmul %4, %1, %cst_7 {dimension_numbers = #tpu.dot_dimension_numbers<[1], [0], [0], [1], [0, 0, 1, 1], [], []>} : vector<64x256xbf16>, vector<256x8xbf16>, vector<64x8xf32> -> vector<64x8xf32>
    %8 = arith.truncf %7 : vector<64x8xf32> to vector<64x8xbf16>
    %cst_8 = arith.constant dense<0.000000e+00> : vector<64x32xf32>
    %9 = tpu.matmul %8, %6, %cst_8 {dimension_numbers = #tpu.dot_dimension_numbers<[1], [0], [0], [1], [0, 0, 1, 1], [], []>} : vector<64x8xbf16>, vector<8x32xbf16>, vector<64x32xf32> -> vector<64x32xf32>
    %10 = arith.addf %2, %9 : vector<64x32xf32>
    %c1 = arith.constant 1 : index
    %c0_9 = arith.constant 0 : index
    %c0_10 = arith.constant 0 : index
    %11 = vector.load %arg2[%c1, %c0_9, %c0_10] : memref<9x64x256xbf16, #tpu.memory_space<vmem>>, vector<1x64x256xbf16>
    %12 = vector.shape_cast %11 : vector<1x64x256xbf16> to vector<64x256xbf16>
    %c1_11 = arith.constant 1 : index
    %c0_12 = arith.constant 0 : index
    %c0_13 = arith.constant 0 : index
    %13 = vector.load %arg3[%c1_11, %c0_12, %c0_13] : memref<9x8x32xbf16, #tpu.memory_space<vmem>>, vector<1x8x32xbf16>
    %14 = vector.shape_cast %13 : vector<1x8x32xbf16> to vector<8x32xbf16>
    %cst_14 = arith.constant dense<0.000000e+00> : vector<64x8xf32>
    %15 = tpu.matmul %12, %1, %cst_14 {dimension_numbers = #tpu.dot_dimension_numbers<[1], [0], [0], [1], [0, 0, 1, 1], [], []>} : vector<64x256xbf16>, vector<256x8xbf16>, vector<64x8xf32> -> vector<64x8xf32>
    %16 = arith.truncf %15 : vector<64x8xf32> to vector<64x8xbf16>
    %cst_15 = arith.constant dense<0.000000e+00> : vector<64x32xf32>
    %17 = tpu.matmul %16, %14, %cst_15 {dimension_numbers = #tpu.dot_dimension_numbers<[1], [0], [0], [1], [0, 0, 1, 1], [], []>} : vector<64x8xbf16>, vector<8x32xbf16>, vector<64x32xf32> -> vector<64x32xf32>
    %18 = arith.addf %10, %17 : vector<64x32xf32>
    %c2 = arith.constant 2 : index
    %c0_16 = arith.constant 0 : index
    %c0_17 = arith.constant 0 : index
    %19 = vector.load %arg2[%c2, %c0_16, %c0_17] : memref<9x64x256xbf16, #tpu.memory_space<vmem>>, vector<1x64x256xbf16>
    %20 = vector.shape_cast %19 : vector<1x64x256xbf16> to vector<64x256xbf16>
    %c2_18 = arith.constant 2 : index
    %c0_19 = arith.constant 0 : index
    %c0_20 = arith.constant 0 : index
    %21 = vector.load %arg3[%c2_18, %c0_19, %c0_20] : memref<9x8x32xbf16, #tpu.memory_space<vmem>>, vector<1x8x32xbf16>
    %22 = vector.shape_cast %21 : vector<1x8x32xbf16> to vector<8x32xbf16>
    %cst_21 = arith.constant dense<0.000000e+00> : vector<64x8xf32>
    %23 = tpu.matmul %20, %1, %cst_21 {dimension_numbers = #tpu.dot_dimension_numbers<[1], [0], [0], [1], [0, 0, 1, 1], [], []>} : vector<64x256xbf16>, vector<256x8xbf16>, vector<64x8xf32> -> vector<64x8xf32>
    %24 = arith.truncf %23 : vector<64x8xf32> to vector<64x8xbf16>
    %cst_22 = arith.constant dense<0.000000e+00> : vector<64x32xf32>
    %25 = tpu.matmul %24, %22, %cst_22 {dimension_numbers = #tpu.dot_dimension_numbers<[1], [0], [0], [1], [0, 0, 1, 1], [], []>} : vector<64x8xbf16>, vector<8x32xbf16>, vector<64x32xf32> -> vector<64x32xf32>
    %26 = arith.addf %18, %25 : vector<64x32xf32>
    %c3 = arith.constant 3 : index
    %c0_23 = arith.constant 0 : index
    %c0_24 = arith.constant 0 : index
    %27 = vector.load %arg2[%c3, %c0_23, %c0_24] : memref<9x64x256xbf16, #tpu.memory_space<vmem>>, vector<1x64x256xbf16>
    %28 = vector.shape_cast %27 : vector<1x64x256xbf16> to vector<64x256xbf16>
    %c3_25 = arith.constant 3 : index
    %c0_26 = arith.constant 0 : index
    %c0_27 = arith.constant 0 : index
    %29 = vector.load %arg3[%c3_25, %c0_26, %c0_27] : memref<9x8x32xbf16, #tpu.memory_space<vmem>>, vector<1x8x32xbf16>
    %30 = vector.shape_cast %29 : vector<1x8x32xbf16> to vector<8x32xbf16>
    %cst_28 = arith.constant dense<0.000000e+00> : vector<64x8xf32>
    %31 = tpu.matmul %28, %1, %cst_28 {dimension_numbers = #tpu.dot_dimension_numbers<[1], [0], [0], [1], [0, 0, 1, 1], [], []>} : vector<64x256xbf16>, vector<256x8xbf16>, vector<64x8xf32> -> vector<64x8xf32>
    %32 = arith.truncf %31 : vector<64x8xf32> to vector<64x8xbf16>
    %cst_29 = arith.constant dense<0.000000e+00> : vector<64x32xf32>
    %33 = tpu.matmul %32, %30, %cst_29 {dimension_numbers = #tpu.dot_dimension_numbers<[1], [0], [0], [1], [0, 0, 1, 1], [], []>} : vector<64x8xbf16>, vector<8x32xbf16>, vector<64x32xf32> -> vector<64x32xf32>
    %34 = arith.addf %26, %33 : vector<64x32xf32>
    %c4 = arith.constant 4 : index
    %c0_30 = arith.constant 0 : index
    %c0_31 = arith.constant 0 : index
    %35 = vector.load %arg2[%c4, %c0_30, %c0_31] : memref<9x64x256xbf16, #tpu.memory_space<vmem>>, vector<1x64x256xbf16>
    %36 = vector.shape_cast %35 : vector<1x64x256xbf16> to vector<64x256xbf16>
    %c4_32 = arith.constant 4 : index
    %c0_33 = arith.constant 0 : index
    %c0_34 = arith.constant 0 : index
    %37 = vector.load %arg3[%c4_32, %c0_33, %c0_34] : memref<9x8x32xbf16, #tpu.memory_space<vmem>>, vector<1x8x32xbf16>
    %38 = vector.shape_cast %37 : vector<1x8x32xbf16> to vector<8x32xbf16>
    %cst_35 = arith.constant dense<0.000000e+00> : vector<64x8xf32>
    %39 = tpu.matmul %36, %1, %cst_35 {dimension_numbers = #tpu.dot_dimension_numbers<[1], [0], [0], [1], [0, 0, 1, 1], [], []>} : vector<64x256xbf16>, vector<256x8xbf16>, vector<64x8xf32> -> vector<64x8xf32>
    %40 = arith.truncf %39 : vector<64x8xf32> to vector<64x8xbf16>
    %cst_36 = arith.constant dense<0.000000e+00> : vector<64x32xf32>
    %41 = tpu.matmul %40, %38, %cst_36 {dimension_numbers = #tpu.dot_dimension_numbers<[1], [0], [0], [1], [0, 0, 1, 1], [], []>} : vector<64x8xbf16>, vector<8x32xbf16>, vector<64x32xf32> -> vector<64x32xf32>
    %42 = arith.addf %34, %41 : vector<64x32xf32>
    %c5 = arith.constant 5 : index
    %c0_37 = arith.constant 0 : index
    %c0_38 = arith.constant 0 : index
    %43 = vector.load %arg2[%c5, %c0_37, %c0_38] : memref<9x64x256xbf16, #tpu.memory_space<vmem>>, vector<1x64x256xbf16>
    %44 = vector.shape_cast %43 : vector<1x64x256xbf16> to vector<64x256xbf16>
    %c5_39 = arith.constant 5 : index
    %c0_40 = arith.constant 0 : index
    %c0_41 = arith.constant 0 : index
    %45 = vector.load %arg3[%c5_39, %c0_40, %c0_41] : memref<9x8x32xbf16, #tpu.memory_space<vmem>>, vector<1x8x32xbf16>
    %46 = vector.shape_cast %45 : vector<1x8x32xbf16> to vector<8x32xbf16>
    %cst_42 = arith.constant dense<0.000000e+00> : vector<64x8xf32>
    %47 = tpu.matmul %44, %1, %cst_42 {dimension_numbers = #tpu.dot_dimension_numbers<[1], [0], [0], [1], [0, 0, 1, 1], [], []>} : vector<64x256xbf16>, vector<256x8xbf16>, vector<64x8xf32> -> vector<64x8xf32>
    %48 = arith.truncf %47 : vector<64x8xf32> to vector<64x8xbf16>
    %cst_43 = arith.constant dense<0.000000e+00> : vector<64x32xf32>
    %49 = tpu.matmul %48, %46, %cst_43 {dimension_numbers = #tpu.dot_dimension_numbers<[1], [0], [0], [1], [0, 0, 1, 1], [], []>} : vector<64x8xbf16>, vector<8x32xbf16>, vector<64x32xf32> -> vector<64x32xf32>
    %50 = arith.addf %42, %49 : vector<64x32xf32>
    %c6 = arith.constant 6 : index
    %c0_44 = arith.constant 0 : index
    %c0_45 = arith.constant 0 : index
    %51 = vector.load %arg2[%c6, %c0_44, %c0_45] : memref<9x64x256xbf16, #tpu.memory_space<vmem>>, vector<1x64x256xbf16>
    %52 = vector.shape_cast %51 : vector<1x64x256xbf16> to vector<64x256xbf16>
    %c6_46 = arith.constant 6 : index
    %c0_47 = arith.constant 0 : index
    %c0_48 = arith.constant 0 : index
    %53 = vector.load %arg3[%c6_46, %c0_47, %c0_48] : memref<9x8x32xbf16, #tpu.memory_space<vmem>>, vector<1x8x32xbf16>
    %54 = vector.shape_cast %53 : vector<1x8x32xbf16> to vector<8x32xbf16>
    %cst_49 = arith.constant dense<0.000000e+00> : vector<64x8xf32>
    %55 = tpu.matmul %52, %1, %cst_49 {dimension_numbers = #tpu.dot_dimension_numbers<[1], [0], [0], [1], [0, 0, 1, 1], [], []>} : vector<64x256xbf16>, vector<256x8xbf16>, vector<64x8xf32> -> vector<64x8xf32>
    %56 = arith.truncf %55 : vector<64x8xf32> to vector<64x8xbf16>
    %cst_50 = arith.constant dense<0.000000e+00> : vector<64x32xf32>
    %57 = tpu.matmul %56, %54, %cst_50 {dimension_numbers = #tpu.dot_dimension_numbers<[1], [0], [0], [1], [0, 0, 1, 1], [], []>} : vector<64x8xbf16>, vector<8x32xbf16>, vector<64x32xf32> -> vector<64x32xf32>
    %58 = arith.addf %50, %57 : vector<64x32xf32>
    %c7 = arith.constant 7 : index
    %c0_51 = arith.constant 0 : index
    %c0_52 = arith.constant 0 : index
    %59 = vector.load %arg2[%c7, %c0_51, %c0_52] : memref<9x64x256xbf16, #tpu.memory_space<vmem>>, vector<1x64x256xbf16>
    %60 = vector.shape_cast %59 : vector<1x64x256xbf16> to vector<64x256xbf16>
    %c7_53 = arith.constant 7 : index
    %c0_54 = arith.constant 0 : index
    %c0_55 = arith.constant 0 : index
    %61 = vector.load %arg3[%c7_53, %c0_54, %c0_55] : memref<9x8x32xbf16, #tpu.memory_space<vmem>>, vector<1x8x32xbf16>
    %62 = vector.shape_cast %61 : vector<1x8x32xbf16> to vector<8x32xbf16>
    %cst_56 = arith.constant dense<0.000000e+00> : vector<64x8xf32>
    %63 = tpu.matmul %60, %1, %cst_56 {dimension_numbers = #tpu.dot_dimension_numbers<[1], [0], [0], [1], [0, 0, 1, 1], [], []>} : vector<64x256xbf16>, vector<256x8xbf16>, vector<64x8xf32> -> vector<64x8xf32>
    %64 = arith.truncf %63 : vector<64x8xf32> to vector<64x8xbf16>
    %cst_57 = arith.constant dense<0.000000e+00> : vector<64x32xf32>
    %65 = tpu.matmul %64, %62, %cst_57 {dimension_numbers = #tpu.dot_dimension_numbers<[1], [0], [0], [1], [0, 0, 1, 1], [], []>} : vector<64x8xbf16>, vector<8x32xbf16>, vector<64x32xf32> -> vector<64x32xf32>
    %66 = arith.addf %58, %65 : vector<64x32xf32>
    %c8 = arith.constant 8 : index
    %c0_58 = arith.constant 0 : index
    %c0_59 = arith.constant 0 : index
    %67 = vector.load %arg2[%c8, %c0_58, %c0_59] : memref<9x64x256xbf16, #tpu.memory_space<vmem>>, vector<1x64x256xbf16>
    %68 = vector.shape_cast %67 : vector<1x64x256xbf16> to vector<64x256xbf16>
    %c8_60 = arith.constant 8 : index
    %c0_61 = arith.constant 0 : index
    %c0_62 = arith.constant 0 : index
    %69 = vector.load %arg3[%c8_60, %c0_61, %c0_62] : memref<9x8x32xbf16, #tpu.memory_space<vmem>>, vector<1x8x32xbf16>
    %70 = vector.shape_cast %69 : vector<1x8x32xbf16> to vector<8x32xbf16>
    %cst_63 = arith.constant dense<0.000000e+00> : vector<64x8xf32>
    %71 = tpu.matmul %68, %1, %cst_63 {dimension_numbers = #tpu.dot_dimension_numbers<[1], [0], [0], [1], [0, 0, 1, 1], [], []>} : vector<64x256xbf16>, vector<256x8xbf16>, vector<64x8xf32> -> vector<64x8xf32>
    %72 = arith.truncf %71 : vector<64x8xf32> to vector<64x8xbf16>
    %cst_64 = arith.constant dense<0.000000e+00> : vector<64x32xf32>
    %73 = tpu.matmul %72, %70, %cst_64 {dimension_numbers = #tpu.dot_dimension_numbers<[1], [0], [0], [1], [0, 0, 1, 1], [], []>} : vector<64x8xbf16>, vector<8x32xbf16>, vector<64x32xf32> -> vector<64x32xf32>
    %74 = arith.addf %66, %73 : vector<64x32xf32>
    %c0_65 = arith.constant 0 : index
    %c0_66 = arith.constant 0 : index
    %75 = vector.load %arg4[%c0_65, %c0_66] : memref<1x32xf32, #tpu.memory_space<vmem>>, vector<1x32xf32>
    %76 = vector.broadcast %75 : vector<1x32xf32> to vector<64x32xf32>
    %77 = arith.addf %74, %76 : vector<64x32xf32>
    %cst_67 = arith.constant 0.000000e+00 : f32
    %78 = vector.broadcast %cst_67 : f32 to vector<64x32xf32>
    %79 = arith.maximumf %77, %78 : vector<64x32xf32>
    %80 = arith.truncf %79 : vector<64x32xf32> to vector<64x32xbf16>
    %cst_68 = arith.constant 0.000000e+00 : f32
    %81 = vector.broadcast %cst_68 : f32 to vector<16x64xf32>
    %c0_69 = arith.constant 0 : index
    %c0_70 = arith.constant 0 : index
    %c0_71 = arith.constant 0 : index
    %82 = vector.load %arg5[%c0_69, %c0_70, %c0_71] : memref<9x16x64xbf16, #tpu.memory_space<vmem>>, vector<1x16x64xbf16>
    %83 = vector.shape_cast %82 : vector<1x16x64xbf16> to vector<16x64xbf16>
    %c0_72 = arith.constant 0 : index
    %c0_73 = arith.constant 0 : index
    %c0_74 = arith.constant 0 : index
    %84 = vector.load %arg6[%c0_72, %c0_73, %c0_74] : memref<9x32x64xbf16, #tpu.memory_space<vmem>>, vector<1x32x64xbf16>
    %85 = vector.shape_cast %84 : vector<1x32x64xbf16> to vector<32x64xbf16>
    %cst_75 = arith.constant dense<0.000000e+00> : vector<16x32xf32>
    %86 = tpu.matmul %83, %80, %cst_75 {dimension_numbers = #tpu.dot_dimension_numbers<[1], [0], [0], [1], [0, 0, 1, 1], [], []>} : vector<16x64xbf16>, vector<64x32xbf16>, vector<16x32xf32> -> vector<16x32xf32>
    %87 = arith.truncf %86 : vector<16x32xf32> to vector<16x32xbf16>
    %cst_76 = arith.constant dense<0.000000e+00> : vector<16x64xf32>
    %88 = tpu.matmul %87, %85, %cst_76 {dimension_numbers = #tpu.dot_dimension_numbers<[1], [0], [0], [1], [0, 0, 1, 1], [], []>} : vector<16x32xbf16>, vector<32x64xbf16>, vector<16x64xf32> -> vector<16x64xf32>
    %89 = arith.addf %81, %88 : vector<16x64xf32>
    %c1_77 = arith.constant 1 : index
    %c0_78 = arith.constant 0 : index
    %c0_79 = arith.constant 0 : index
    %90 = vector.load %arg5[%c1_77, %c0_78, %c0_79] : memref<9x16x64xbf16, #tpu.memory_space<vmem>>, vector<1x16x64xbf16>
    %91 = vector.shape_cast %90 : vector<1x16x64xbf16> to vector<16x64xbf16>
    %c1_80 = arith.constant 1 : index
    %c0_81 = arith.constant 0 : index
    %c0_82 = arith.constant 0 : index
    %92 = vector.load %arg6[%c1_80, %c0_81, %c0_82] : memref<9x32x64xbf16, #tpu.memory_space<vmem>>, vector<1x32x64xbf16>
    %93 = vector.shape_cast %92 : vector<1x32x64xbf16> to vector<32x64xbf16>
    %cst_83 = arith.constant dense<0.000000e+00> : vector<16x32xf32>
    %94 = tpu.matmul %91, %80, %cst_83 {dimension_numbers = #tpu.dot_dimension_numbers<[1], [0], [0], [1], [0, 0, 1, 1], [], []>} : vector<16x64xbf16>, vector<64x32xbf16>, vector<16x32xf32> -> vector<16x32xf32>
    %95 = arith.truncf %94 : vector<16x32xf32> to vector<16x32xbf16>
    %cst_84 = arith.constant dense<0.000000e+00> : vector<16x64xf32>
    %96 = tpu.matmul %95, %93, %cst_84 {dimension_numbers = #tpu.dot_dimension_numbers<[1], [0], [0], [1], [0, 0, 1, 1], [], []>} : vector<16x32xbf16>, vector<32x64xbf16>, vector<16x64xf32> -> vector<16x64xf32>
    %97 = arith.addf %89, %96 : vector<16x64xf32>
    %c2_85 = arith.constant 2 : index
    %c0_86 = arith.constant 0 : index
    %c0_87 = arith.constant 0 : index
    %98 = vector.load %arg5[%c2_85, %c0_86, %c0_87] : memref<9x16x64xbf16, #tpu.memory_space<vmem>>, vector<1x16x64xbf16>
    %99 = vector.shape_cast %98 : vector<1x16x64xbf16> to vector<16x64xbf16>
    %c2_88 = arith.constant 2 : index
    %c0_89 = arith.constant 0 : index
    %c0_90 = arith.constant 0 : index
    %100 = vector.load %arg6[%c2_88, %c0_89, %c0_90] : memref<9x32x64xbf16, #tpu.memory_space<vmem>>, vector<1x32x64xbf16>
    %101 = vector.shape_cast %100 : vector<1x32x64xbf16> to vector<32x64xbf16>
    %cst_91 = arith.constant dense<0.000000e+00> : vector<16x32xf32>
    %102 = tpu.matmul %99, %80, %cst_91 {dimension_numbers = #tpu.dot_dimension_numbers<[1], [0], [0], [1], [0, 0, 1, 1], [], []>} : vector<16x64xbf16>, vector<64x32xbf16>, vector<16x32xf32> -> vector<16x32xf32>
    %103 = arith.truncf %102 : vector<16x32xf32> to vector<16x32xbf16>
    %cst_92 = arith.constant dense<0.000000e+00> : vector<16x64xf32>
    %104 = tpu.matmul %103, %101, %cst_92 {dimension_numbers = #tpu.dot_dimension_numbers<[1], [0], [0], [1], [0, 0, 1, 1], [], []>} : vector<16x32xbf16>, vector<32x64xbf16>, vector<16x64xf32> -> vector<16x64xf32>
    %105 = arith.addf %97, %104 : vector<16x64xf32>
    %c3_93 = arith.constant 3 : index
    %c0_94 = arith.constant 0 : index
    %c0_95 = arith.constant 0 : index
    %106 = vector.load %arg5[%c3_93, %c0_94, %c0_95] : memref<9x16x64xbf16, #tpu.memory_space<vmem>>, vector<1x16x64xbf16>
    %107 = vector.shape_cast %106 : vector<1x16x64xbf16> to vector<16x64xbf16>
    %c3_96 = arith.constant 3 : index
    %c0_97 = arith.constant 0 : index
    %c0_98 = arith.constant 0 : index
    %108 = vector.load %arg6[%c3_96, %c0_97, %c0_98] : memref<9x32x64xbf16, #tpu.memory_space<vmem>>, vector<1x32x64xbf16>
    %109 = vector.shape_cast %108 : vector<1x32x64xbf16> to vector<32x64xbf16>
    %cst_99 = arith.constant dense<0.000000e+00> : vector<16x32xf32>
    %110 = tpu.matmul %107, %80, %cst_99 {dimension_numbers = #tpu.dot_dimension_numbers<[1], [0], [0], [1], [0, 0, 1, 1], [], []>} : vector<16x64xbf16>, vector<64x32xbf16>, vector<16x32xf32> -> vector<16x32xf32>
    %111 = arith.truncf %110 : vector<16x32xf32> to vector<16x32xbf16>
    %cst_100 = arith.constant dense<0.000000e+00> : vector<16x64xf32>
    %112 = tpu.matmul %111, %109, %cst_100 {dimension_numbers = #tpu.dot_dimension_numbers<[1], [0], [0], [1], [0, 0, 1, 1], [], []>} : vector<16x32xbf16>, vector<32x64xbf16>, vector<16x64xf32> -> vector<16x64xf32>
    %113 = arith.addf %105, %112 : vector<16x64xf32>
    %c4_101 = arith.constant 4 : index
    %c0_102 = arith.constant 0 : index
    %c0_103 = arith.constant 0 : index
    %114 = vector.load %arg5[%c4_101, %c0_102, %c0_103] : memref<9x16x64xbf16, #tpu.memory_space<vmem>>, vector<1x16x64xbf16>
    %115 = vector.shape_cast %114 : vector<1x16x64xbf16> to vector<16x64xbf16>
    %c4_104 = arith.constant 4 : index
    %c0_105 = arith.constant 0 : index
    %c0_106 = arith.constant 0 : index
    %116 = vector.load %arg6[%c4_104, %c0_105, %c0_106] : memref<9x32x64xbf16, #tpu.memory_space<vmem>>, vector<1x32x64xbf16>
    %117 = vector.shape_cast %116 : vector<1x32x64xbf16> to vector<32x64xbf16>
    %cst_107 = arith.constant dense<0.000000e+00> : vector<16x32xf32>
    %118 = tpu.matmul %115, %80, %cst_107 {dimension_numbers = #tpu.dot_dimension_numbers<[1], [0], [0], [1], [0, 0, 1, 1], [], []>} : vector<16x64xbf16>, vector<64x32xbf16>, vector<16x32xf32> -> vector<16x32xf32>
    %119 = arith.truncf %118 : vector<16x32xf32> to vector<16x32xbf16>
    %cst_108 = arith.constant dense<0.000000e+00> : vector<16x64xf32>
    %120 = tpu.matmul %119, %117, %cst_108 {dimension_numbers = #tpu.dot_dimension_numbers<[1], [0], [0], [1], [0, 0, 1, 1], [], []>} : vector<16x32xbf16>, vector<32x64xbf16>, vector<16x64xf32> -> vector<16x64xf32>
    %121 = arith.addf %113, %120 : vector<16x64xf32>
    %c5_109 = arith.constant 5 : index
    %c0_110 = arith.constant 0 : index
    %c0_111 = arith.constant 0 : index
    %122 = vector.load %arg5[%c5_109, %c0_110, %c0_111] : memref<9x16x64xbf16, #tpu.memory_space<vmem>>, vector<1x16x64xbf16>
    %123 = vector.shape_cast %122 : vector<1x16x64xbf16> to vector<16x64xbf16>
    %c5_112 = arith.constant 5 : index
    %c0_113 = arith.constant 0 : index
    %c0_114 = arith.constant 0 : index
    %124 = vector.load %arg6[%c5_112, %c0_113, %c0_114] : memref<9x32x64xbf16, #tpu.memory_space<vmem>>, vector<1x32x64xbf16>
    %125 = vector.shape_cast %124 : vector<1x32x64xbf16> to vector<32x64xbf16>
    %cst_115 = arith.constant dense<0.000000e+00> : vector<16x32xf32>
    %126 = tpu.matmul %123, %80, %cst_115 {dimension_numbers = #tpu.dot_dimension_numbers<[1], [0], [0], [1], [0, 0, 1, 1], [], []>} : vector<16x64xbf16>, vector<64x32xbf16>, vector<16x32xf32> -> vector<16x32xf32>
    %127 = arith.truncf %126 : vector<16x32xf32> to vector<16x32xbf16>
    %cst_116 = arith.constant dense<0.000000e+00> : vector<16x64xf32>
    %128 = tpu.matmul %127, %125, %cst_116 {dimension_numbers = #tpu.dot_dimension_numbers<[1], [0], [0], [1], [0, 0, 1, 1], [], []>} : vector<16x32xbf16>, vector<32x64xbf16>, vector<16x64xf32> -> vector<16x64xf32>
    %129 = arith.addf %121, %128 : vector<16x64xf32>
    %c6_117 = arith.constant 6 : index
    %c0_118 = arith.constant 0 : index
    %c0_119 = arith.constant 0 : index
    %130 = vector.load %arg5[%c6_117, %c0_118, %c0_119] : memref<9x16x64xbf16, #tpu.memory_space<vmem>>, vector<1x16x64xbf16>
    %131 = vector.shape_cast %130 : vector<1x16x64xbf16> to vector<16x64xbf16>
    %c6_120 = arith.constant 6 : index
    %c0_121 = arith.constant 0 : index
    %c0_122 = arith.constant 0 : index
    %132 = vector.load %arg6[%c6_120, %c0_121, %c0_122] : memref<9x32x64xbf16, #tpu.memory_space<vmem>>, vector<1x32x64xbf16>
    %133 = vector.shape_cast %132 : vector<1x32x64xbf16> to vector<32x64xbf16>
    %cst_123 = arith.constant dense<0.000000e+00> : vector<16x32xf32>
    %134 = tpu.matmul %131, %80, %cst_123 {dimension_numbers = #tpu.dot_dimension_numbers<[1], [0], [0], [1], [0, 0, 1, 1], [], []>} : vector<16x64xbf16>, vector<64x32xbf16>, vector<16x32xf32> -> vector<16x32xf32>
    %135 = arith.truncf %134 : vector<16x32xf32> to vector<16x32xbf16>
    %cst_124 = arith.constant dense<0.000000e+00> : vector<16x64xf32>
    %136 = tpu.matmul %135, %133, %cst_124 {dimension_numbers = #tpu.dot_dimension_numbers<[1], [0], [0], [1], [0, 0, 1, 1], [], []>} : vector<16x32xbf16>, vector<32x64xbf16>, vector<16x64xf32> -> vector<16x64xf32>
    %137 = arith.addf %129, %136 : vector<16x64xf32>
    %c7_125 = arith.constant 7 : index
    %c0_126 = arith.constant 0 : index
    %c0_127 = arith.constant 0 : index
    %138 = vector.load %arg5[%c7_125, %c0_126, %c0_127] : memref<9x16x64xbf16, #tpu.memory_space<vmem>>, vector<1x16x64xbf16>
    %139 = vector.shape_cast %138 : vector<1x16x64xbf16> to vector<16x64xbf16>
    %c7_128 = arith.constant 7 : index
    %c0_129 = arith.constant 0 : index
    %c0_130 = arith.constant 0 : index
    %140 = vector.load %arg6[%c7_128, %c0_129, %c0_130] : memref<9x32x64xbf16, #tpu.memory_space<vmem>>, vector<1x32x64xbf16>
    %141 = vector.shape_cast %140 : vector<1x32x64xbf16> to vector<32x64xbf16>
    %cst_131 = arith.constant dense<0.000000e+00> : vector<16x32xf32>
    %142 = tpu.matmul %139, %80, %cst_131 {dimension_numbers = #tpu.dot_dimension_numbers<[1], [0], [0], [1], [0, 0, 1, 1], [], []>} : vector<16x64xbf16>, vector<64x32xbf16>, vector<16x32xf32> -> vector<16x32xf32>
    %143 = arith.truncf %142 : vector<16x32xf32> to vector<16x32xbf16>
    %cst_132 = arith.constant dense<0.000000e+00> : vector<16x64xf32>
    %144 = tpu.matmul %143, %141, %cst_132 {dimension_numbers = #tpu.dot_dimension_numbers<[1], [0], [0], [1], [0, 0, 1, 1], [], []>} : vector<16x32xbf16>, vector<32x64xbf16>, vector<16x64xf32> -> vector<16x64xf32>
    %145 = arith.addf %137, %144 : vector<16x64xf32>
    %c8_133 = arith.constant 8 : index
    %c0_134 = arith.constant 0 : index
    %c0_135 = arith.constant 0 : index
    %146 = vector.load %arg5[%c8_133, %c0_134, %c0_135] : memref<9x16x64xbf16, #tpu.memory_space<vmem>>, vector<1x16x64xbf16>
    %147 = vector.shape_cast %146 : vector<1x16x64xbf16> to vector<16x64xbf16>
    %c8_136 = arith.constant 8 : index
    %c0_137 = arith.constant 0 : index
    %c0_138 = arith.constant 0 : index
    %148 = vector.load %arg6[%c8_136, %c0_137, %c0_138] : memref<9x32x64xbf16, #tpu.memory_space<vmem>>, vector<1x32x64xbf16>
    %149 = vector.shape_cast %148 : vector<1x32x64xbf16> to vector<32x64xbf16>
    %cst_139 = arith.constant dense<0.000000e+00> : vector<16x32xf32>
    %150 = tpu.matmul %147, %80, %cst_139 {dimension_numbers = #tpu.dot_dimension_numbers<[1], [0], [0], [1], [0, 0, 1, 1], [], []>} : vector<16x64xbf16>, vector<64x32xbf16>, vector<16x32xf32> -> vector<16x32xf32>
    %151 = arith.truncf %150 : vector<16x32xf32> to vector<16x32xbf16>
    %cst_140 = arith.constant dense<0.000000e+00> : vector<16x64xf32>
    %152 = tpu.matmul %151, %149, %cst_140 {dimension_numbers = #tpu.dot_dimension_numbers<[1], [0], [0], [1], [0, 0, 1, 1], [], []>} : vector<16x32xbf16>, vector<32x64xbf16>, vector<16x64xf32> -> vector<16x64xf32>
    %153 = arith.addf %145, %152 : vector<16x64xf32>
    %c0_141 = arith.constant 0 : index
    %c0_142 = arith.constant 0 : index
    %154 = vector.load %arg7[%c0_141, %c0_142] : memref<1x64xf32, #tpu.memory_space<vmem>>, vector<1x64xf32>
    %155 = vector.broadcast %154 : vector<1x64xf32> to vector<16x64xf32>
    %156 = arith.addf %153, %155 : vector<16x64xf32>
    %cst_143 = arith.constant 0.000000e+00 : f32
    %157 = vector.broadcast %cst_143 : f32 to vector<16x64xf32>
    %158 = arith.maximumf %156, %157 : vector<16x64xf32>
    %159 = arith.truncf %158 : vector<16x64xf32> to vector<16x64xbf16>
    %cst_144 = arith.constant 0.000000e+00 : f32
    %160 = vector.broadcast %cst_144 : f32 to vector<64x32xf32>
    %c0_145 = arith.constant 0 : index
    %c0_146 = arith.constant 0 : index
    %c0_147 = arith.constant 0 : index
    %161 = vector.load %arg8[%c0_145, %c0_146, %c0_147] : memref<9x64x16xbf16, #tpu.memory_space<vmem>>, vector<1x64x16xbf16>
    %162 = vector.shape_cast %161 : vector<1x64x16xbf16> to vector<64x16xbf16>
    %c0_148 = arith.constant 0 : index
    %c0_149 = arith.constant 0 : index
    %c0_150 = arith.constant 0 : index
    %163 = vector.load %arg9[%c0_148, %c0_149, %c0_150] : memref<9x64x32xbf16, #tpu.memory_space<vmem>>, vector<1x64x32xbf16>
    %164 = vector.shape_cast %163 : vector<1x64x32xbf16> to vector<64x32xbf16>
    %cst_151 = arith.constant dense<0.000000e+00> : vector<16x32xf32>
    %165 = tpu.matmul %159, %164, %cst_151 {dimension_numbers = #tpu.dot_dimension_numbers<[1], [0], [0], [1], [0, 0, 1, 1], [], []>} : vector<16x64xbf16>, vector<64x32xbf16>, vector<16x32xf32> -> vector<16x32xf32>
    %166 = arith.truncf %165 : vector<16x32xf32> to vector<16x32xbf16>
    %cst_152 = arith.constant dense<0.000000e+00> : vector<64x32xf32>
    %167 = tpu.matmul %162, %166, %cst_152 {dimension_numbers = #tpu.dot_dimension_numbers<[1], [0], [0], [1], [0, 0, 1, 1], [], []>} : vector<64x16xbf16>, vector<16x32xbf16>, vector<64x32xf32> -> vector<64x32xf32>
    %168 = arith.addf %160, %167 : vector<64x32xf32>
    %c1_153 = arith.constant 1 : index
    %c0_154 = arith.constant 0 : index
    %c0_155 = arith.constant 0 : index
    %169 = vector.load %arg8[%c1_153, %c0_154, %c0_155] : memref<9x64x16xbf16, #tpu.memory_space<vmem>>, vector<1x64x16xbf16>
    %170 = vector.shape_cast %169 : vector<1x64x16xbf16> to vector<64x16xbf16>
    %c1_156 = arith.constant 1 : index
    %c0_157 = arith.constant 0 : index
    %c0_158 = arith.constant 0 : index
    %171 = vector.load %arg9[%c1_156, %c0_157, %c0_158] : memref<9x64x32xbf16, #tpu.memory_space<vmem>>, vector<1x64x32xbf16>
    %172 = vector.shape_cast %171 : vector<1x64x32xbf16> to vector<64x32xbf16>
    %cst_159 = arith.constant dense<0.000000e+00> : vector<16x32xf32>
    %173 = tpu.matmul %159, %172, %cst_159 {dimension_numbers = #tpu.dot_dimension_numbers<[1], [0], [0], [1], [0, 0, 1, 1], [], []>} : vector<16x64xbf16>, vector<64x32xbf16>, vector<16x32xf32> -> vector<16x32xf32>
    %174 = arith.truncf %173 : vector<16x32xf32> to vector<16x32xbf16>
    %cst_160 = arith.constant dense<0.000000e+00> : vector<64x32xf32>
    %175 = tpu.matmul %170, %174, %cst_160 {dimension_numbers = #tpu.dot_dimension_numbers<[1], [0], [0], [1], [0, 0, 1, 1], [], []>} : vector<64x16xbf16>, vector<16x32xbf16>, vector<64x32xf32> -> vector<64x32xf32>
    %176 = arith.addf %168, %175 : vector<64x32xf32>
    %c2_161 = arith.constant 2 : index
    %c0_162 = arith.constant 0 : index
    %c0_163 = arith.constant 0 : index
    %177 = vector.load %arg8[%c2_161, %c0_162, %c0_163] : memref<9x64x16xbf16, #tpu.memory_space<vmem>>, vector<1x64x16xbf16>
    %178 = vector.shape_cast %177 : vector<1x64x16xbf16> to vector<64x16xbf16>
    %c2_164 = arith.constant 2 : index
    %c0_165 = arith.constant 0 : index
    %c0_166 = arith.constant 0 : index
    %179 = vector.load %arg9[%c2_164, %c0_165, %c0_166] : memref<9x64x32xbf16, #tpu.memory_space<vmem>>, vector<1x64x32xbf16>
    %180 = vector.shape_cast %179 : vector<1x64x32xbf16> to vector<64x32xbf16>
    %cst_167 = arith.constant dense<0.000000e+00> : vector<16x32xf32>
    %181 = tpu.matmul %159, %180, %cst_167 {dimension_numbers = #tpu.dot_dimension_numbers<[1], [0], [0], [1], [0, 0, 1, 1], [], []>} : vector<16x64xbf16>, vector<64x32xbf16>, vector<16x32xf32> -> vector<16x32xf32>
    %182 = arith.truncf %181 : vector<16x32xf32> to vector<16x32xbf16>
    %cst_168 = arith.constant dense<0.000000e+00> : vector<64x32xf32>
    %183 = tpu.matmul %178, %182, %cst_168 {dimension_numbers = #tpu.dot_dimension_numbers<[1], [0], [0], [1], [0, 0, 1, 1], [], []>} : vector<64x16xbf16>, vector<16x32xbf16>, vector<64x32xf32> -> vector<64x32xf32>
    %184 = arith.addf %176, %183 : vector<64x32xf32>
    %c3_169 = arith.constant 3 : index
    %c0_170 = arith.constant 0 : index
    %c0_171 = arith.constant 0 : index
    %185 = vector.load %arg8[%c3_169, %c0_170, %c0_171] : memref<9x64x16xbf16, #tpu.memory_space<vmem>>, vector<1x64x16xbf16>
    %186 = vector.shape_cast %185 : vector<1x64x16xbf16> to vector<64x16xbf16>
    %c3_172 = arith.constant 3 : index
    %c0_173 = arith.constant 0 : index
    %c0_174 = arith.constant 0 : index
    %187 = vector.load %arg9[%c3_172, %c0_173, %c0_174] : memref<9x64x32xbf16, #tpu.memory_space<vmem>>, vector<1x64x32xbf16>
    %188 = vector.shape_cast %187 : vector<1x64x32xbf16> to vector<64x32xbf16>
    %cst_175 = arith.constant dense<0.000000e+00> : vector<16x32xf32>
    %189 = tpu.matmul %159, %188, %cst_175 {dimension_numbers = #tpu.dot_dimension_numbers<[1], [0], [0], [1], [0, 0, 1, 1], [], []>} : vector<16x64xbf16>, vector<64x32xbf16>, vector<16x32xf32> -> vector<16x32xf32>
    %190 = arith.truncf %189 : vector<16x32xf32> to vector<16x32xbf16>
    %cst_176 = arith.constant dense<0.000000e+00> : vector<64x32xf32>
    %191 = tpu.matmul %186, %190, %cst_176 {dimension_numbers = #tpu.dot_dimension_numbers<[1], [0], [0], [1], [0, 0, 1, 1], [], []>} : vector<64x16xbf16>, vector<16x32xbf16>, vector<64x32xf32> -> vector<64x32xf32>
    %192 = arith.addf %184, %191 : vector<64x32xf32>
    %c4_177 = arith.constant 4 : index
    %c0_178 = arith.constant 0 : index
    %c0_179 = arith.constant 0 : index
    %193 = vector.load %arg8[%c4_177, %c0_178, %c0_179] : memref<9x64x16xbf16, #tpu.memory_space<vmem>>, vector<1x64x16xbf16>
    %194 = vector.shape_cast %193 : vector<1x64x16xbf16> to vector<64x16xbf16>
    %c4_180 = arith.constant 4 : index
    %c0_181 = arith.constant 0 : index
    %c0_182 = arith.constant 0 : index
    %195 = vector.load %arg9[%c4_180, %c0_181, %c0_182] : memref<9x64x32xbf16, #tpu.memory_space<vmem>>, vector<1x64x32xbf16>
    %196 = vector.shape_cast %195 : vector<1x64x32xbf16> to vector<64x32xbf16>
    %cst_183 = arith.constant dense<0.000000e+00> : vector<16x32xf32>
    %197 = tpu.matmul %159, %196, %cst_183 {dimension_numbers = #tpu.dot_dimension_numbers<[1], [0], [0], [1], [0, 0, 1, 1], [], []>} : vector<16x64xbf16>, vector<64x32xbf16>, vector<16x32xf32> -> vector<16x32xf32>
    %198 = arith.truncf %197 : vector<16x32xf32> to vector<16x32xbf16>
    %cst_184 = arith.constant dense<0.000000e+00> : vector<64x32xf32>
    %199 = tpu.matmul %194, %198, %cst_184 {dimension_numbers = #tpu.dot_dimension_numbers<[1], [0], [0], [1], [0, 0, 1, 1], [], []>} : vector<64x16xbf16>, vector<16x32xbf16>, vector<64x32xf32> -> vector<64x32xf32>
    %200 = arith.addf %192, %199 : vector<64x32xf32>
    %c5_185 = arith.constant 5 : index
    %c0_186 = arith.constant 0 : index
    %c0_187 = arith.constant 0 : index
    %201 = vector.load %arg8[%c5_185, %c0_186, %c0_187] : memref<9x64x16xbf16, #tpu.memory_space<vmem>>, vector<1x64x16xbf16>
    %202 = vector.shape_cast %201 : vector<1x64x16xbf16> to vector<64x16xbf16>
    %c5_188 = arith.constant 5 : index
    %c0_189 = arith.constant 0 : index
    %c0_190 = arith.constant 0 : index
    %203 = vector.load %arg9[%c5_188, %c0_189, %c0_190] : memref<9x64x32xbf16, #tpu.memory_space<vmem>>, vector<1x64x32xbf16>
    %204 = vector.shape_cast %203 : vector<1x64x32xbf16> to vector<64x32xbf16>
    %cst_191 = arith.constant dense<0.000000e+00> : vector<16x32xf32>
    %205 = tpu.matmul %159, %204, %cst_191 {dimension_numbers = #tpu.dot_dimension_numbers<[1], [0], [0], [1], [0, 0, 1, 1], [], []>} : vector<16x64xbf16>, vector<64x32xbf16>, vector<16x32xf32> -> vector<16x32xf32>
    %206 = arith.truncf %205 : vector<16x32xf32> to vector<16x32xbf16>
    %cst_192 = arith.constant dense<0.000000e+00> : vector<64x32xf32>
    %207 = tpu.matmul %202, %206, %cst_192 {dimension_numbers = #tpu.dot_dimension_numbers<[1], [0], [0], [1], [0, 0, 1, 1], [], []>} : vector<64x16xbf16>, vector<16x32xbf16>, vector<64x32xf32> -> vector<64x32xf32>
    %208 = arith.addf %200, %207 : vector<64x32xf32>
    %c6_193 = arith.constant 6 : index
    %c0_194 = arith.constant 0 : index
    %c0_195 = arith.constant 0 : index
    %209 = vector.load %arg8[%c6_193, %c0_194, %c0_195] : memref<9x64x16xbf16, #tpu.memory_space<vmem>>, vector<1x64x16xbf16>
    %210 = vector.shape_cast %209 : vector<1x64x16xbf16> to vector<64x16xbf16>
    %c6_196 = arith.constant 6 : index
    %c0_197 = arith.constant 0 : index
    %c0_198 = arith.constant 0 : index
    %211 = vector.load %arg9[%c6_196, %c0_197, %c0_198] : memref<9x64x32xbf16, #tpu.memory_space<vmem>>, vector<1x64x32xbf16>
    %212 = vector.shape_cast %211 : vector<1x64x32xbf16> to vector<64x32xbf16>
    %cst_199 = arith.constant dense<0.000000e+00> : vector<16x32xf32>
    %213 = tpu.matmul %159, %212, %cst_199 {dimension_numbers = #tpu.dot_dimension_numbers<[1], [0], [0], [1], [0, 0, 1, 1], [], []>} : vector<16x64xbf16>, vector<64x32xbf16>, vector<16x32xf32> -> vector<16x32xf32>
    %214 = arith.truncf %213 : vector<16x32xf32> to vector<16x32xbf16>
    %cst_200 = arith.constant dense<0.000000e+00> : vector<64x32xf32>
    %215 = tpu.matmul %210, %214, %cst_200 {dimension_numbers = #tpu.dot_dimension_numbers<[1], [0], [0], [1], [0, 0, 1, 1], [], []>} : vector<64x16xbf16>, vector<16x32xbf16>, vector<64x32xf32> -> vector<64x32xf32>
    %216 = arith.addf %208, %215 : vector<64x32xf32>
    %c7_201 = arith.constant 7 : index
    %c0_202 = arith.constant 0 : index
    %c0_203 = arith.constant 0 : index
    %217 = vector.load %arg8[%c7_201, %c0_202, %c0_203] : memref<9x64x16xbf16, #tpu.memory_space<vmem>>, vector<1x64x16xbf16>
    %218 = vector.shape_cast %217 : vector<1x64x16xbf16> to vector<64x16xbf16>
    %c7_204 = arith.constant 7 : index
    %c0_205 = arith.constant 0 : index
    %c0_206 = arith.constant 0 : index
    %219 = vector.load %arg9[%c7_204, %c0_205, %c0_206] : memref<9x64x32xbf16, #tpu.memory_space<vmem>>, vector<1x64x32xbf16>
    %220 = vector.shape_cast %219 : vector<1x64x32xbf16> to vector<64x32xbf16>
    %cst_207 = arith.constant dense<0.000000e+00> : vector<16x32xf32>
    %221 = tpu.matmul %159, %220, %cst_207 {dimension_numbers = #tpu.dot_dimension_numbers<[1], [0], [0], [1], [0, 0, 1, 1], [], []>} : vector<16x64xbf16>, vector<64x32xbf16>, vector<16x32xf32> -> vector<16x32xf32>
    %222 = arith.truncf %221 : vector<16x32xf32> to vector<16x32xbf16>
    %cst_208 = arith.constant dense<0.000000e+00> : vector<64x32xf32>
    %223 = tpu.matmul %218, %222, %cst_208 {dimension_numbers = #tpu.dot_dimension_numbers<[1], [0], [0], [1], [0, 0, 1, 1], [], []>} : vector<64x16xbf16>, vector<16x32xbf16>, vector<64x32xf32> -> vector<64x32xf32>
    %224 = arith.addf %216, %223 : vector<64x32xf32>
    %c8_209 = arith.constant 8 : index
    %c0_210 = arith.constant 0 : index
    %c0_211 = arith.constant 0 : index
    %225 = vector.load %arg8[%c8_209, %c0_210, %c0_211] : memref<9x64x16xbf16, #tpu.memory_space<vmem>>, vector<1x64x16xbf16>
    %226 = vector.shape_cast %225 : vector<1x64x16xbf16> to vector<64x16xbf16>
    %c8_212 = arith.constant 8 : index
    %c0_213 = arith.constant 0 : index
    %c0_214 = arith.constant 0 : index
    %227 = vector.load %arg9[%c8_212, %c0_213, %c0_214] : memref<9x64x32xbf16, #tpu.memory_space<vmem>>, vector<1x64x32xbf16>
    %228 = vector.shape_cast %227 : vector<1x64x32xbf16> to vector<64x32xbf16>
    %cst_215 = arith.constant dense<0.000000e+00> : vector<16x32xf32>
    %229 = tpu.matmul %159, %228, %cst_215 {dimension_numbers = #tpu.dot_dimension_numbers<[1], [0], [0], [1], [0, 0, 1, 1], [], []>} : vector<16x64xbf16>, vector<64x32xbf16>, vector<16x32xf32> -> vector<16x32xf32>
    %230 = arith.truncf %229 : vector<16x32xf32> to vector<16x32xbf16>
    %cst_216 = arith.constant dense<0.000000e+00> : vector<64x32xf32>
    %231 = tpu.matmul %226, %230, %cst_216 {dimension_numbers = #tpu.dot_dimension_numbers<[1], [0], [0], [1], [0, 0, 1, 1], [], []>} : vector<64x16xbf16>, vector<16x32xbf16>, vector<64x32xf32> -> vector<64x32xf32>
    %232 = arith.addf %224, %231 : vector<64x32xf32>
    %c0_217 = arith.constant 0 : index
    %c0_218 = arith.constant 0 : index
    %233 = vector.load %arg10[%c0_217, %c0_218] : memref<1x32xf32, #tpu.memory_space<vmem>>, vector<1x32xf32>
    %234 = vector.broadcast %233 : vector<1x32xf32> to vector<64x32xf32>
    %235 = arith.addf %232, %234 : vector<64x32xf32>
    %cst_219 = arith.constant 0.000000e+00 : f32
    %236 = vector.broadcast %cst_219 : f32 to vector<64x32xf32>
    %237 = arith.maximumf %235, %236 : vector<64x32xf32>
    %238 = arith.truncf %237 : vector<64x32xf32> to vector<64x32xbf16>
    %cst_220 = arith.constant 0.000000e+00 : f32
    %239 = vector.broadcast %cst_220 : f32 to vector<256x8xf32>
    %c0_221 = arith.constant 0 : index
    %c0_222 = arith.constant 0 : index
    %c0_223 = arith.constant 0 : index
    %240 = vector.load %arg11[%c0_221, %c0_222, %c0_223] : memref<9x256x64xbf16, #tpu.memory_space<vmem>>, vector<1x256x64xbf16>
    %241 = vector.shape_cast %240 : vector<1x256x64xbf16> to vector<256x64xbf16>
    %c0_224 = arith.constant 0 : index
    %c0_225 = arith.constant 0 : index
    %c0_226 = arith.constant 0 : index
    %242 = vector.load %arg12[%c0_224, %c0_225, %c0_226] : memref<9x32x8xbf16, #tpu.memory_space<vmem>>, vector<1x32x8xbf16>
    %243 = vector.shape_cast %242 : vector<1x32x8xbf16> to vector<32x8xbf16>
    %cst_227 = arith.constant dense<0.000000e+00> : vector<64x8xf32>
    %244 = tpu.matmul %238, %243, %cst_227 {dimension_numbers = #tpu.dot_dimension_numbers<[1], [0], [0], [1], [0, 0, 1, 1], [], []>} : vector<64x32xbf16>, vector<32x8xbf16>, vector<64x8xf32> -> vector<64x8xf32>
    %245 = arith.truncf %244 : vector<64x8xf32> to vector<64x8xbf16>
    %cst_228 = arith.constant dense<0.000000e+00> : vector<256x8xf32>
    %246 = tpu.matmul %241, %245, %cst_228 {dimension_numbers = #tpu.dot_dimension_numbers<[1], [0], [0], [1], [0, 0, 1, 1], [], []>} : vector<256x64xbf16>, vector<64x8xbf16>, vector<256x8xf32> -> vector<256x8xf32>
    %247 = arith.addf %239, %246 : vector<256x8xf32>
    %c1_229 = arith.constant 1 : index
    %c0_230 = arith.constant 0 : index
    %c0_231 = arith.constant 0 : index
    %248 = vector.load %arg11[%c1_229, %c0_230, %c0_231] : memref<9x256x64xbf16, #tpu.memory_space<vmem>>, vector<1x256x64xbf16>
    %249 = vector.shape_cast %248 : vector<1x256x64xbf16> to vector<256x64xbf16>
    %c1_232 = arith.constant 1 : index
    %c0_233 = arith.constant 0 : index
    %c0_234 = arith.constant 0 : index
    %250 = vector.load %arg12[%c1_232, %c0_233, %c0_234] : memref<9x32x8xbf16, #tpu.memory_space<vmem>>, vector<1x32x8xbf16>
    %251 = vector.shape_cast %250 : vector<1x32x8xbf16> to vector<32x8xbf16>
    %cst_235 = arith.constant dense<0.000000e+00> : vector<64x8xf32>
    %252 = tpu.matmul %238, %251, %cst_235 {dimension_numbers = #tpu.dot_dimension_numbers<[1], [0], [0], [1], [0, 0, 1, 1], [], []>} : vector<64x32xbf16>, vector<32x8xbf16>, vector<64x8xf32> -> vector<64x8xf32>
    %253 = arith.truncf %252 : vector<64x8xf32> to vector<64x8xbf16>
    %cst_236 = arith.constant dense<0.000000e+00> : vector<256x8xf32>
    %254 = tpu.matmul %249, %253, %cst_236 {dimension_numbers = #tpu.dot_dimension_numbers<[1], [0], [0], [1], [0, 0, 1, 1], [], []>} : vector<256x64xbf16>, vector<64x8xbf16>, vector<256x8xf32> -> vector<256x8xf32>
    %255 = arith.addf %247, %254 : vector<256x8xf32>
    %c2_237 = arith.constant 2 : index
    %c0_238 = arith.constant 0 : index
    %c0_239 = arith.constant 0 : index
    %256 = vector.load %arg11[%c2_237, %c0_238, %c0_239] : memref<9x256x64xbf16, #tpu.memory_space<vmem>>, vector<1x256x64xbf16>
    %257 = vector.shape_cast %256 : vector<1x256x64xbf16> to vector<256x64xbf16>
    %c2_240 = arith.constant 2 : index
    %c0_241 = arith.constant 0 : index
    %c0_242 = arith.constant 0 : index
    %258 = vector.load %arg12[%c2_240, %c0_241, %c0_242] : memref<9x32x8xbf16, #tpu.memory_space<vmem>>, vector<1x32x8xbf16>
    %259 = vector.shape_cast %258 : vector<1x32x8xbf16> to vector<32x8xbf16>
    %cst_243 = arith.constant dense<0.000000e+00> : vector<64x8xf32>
    %260 = tpu.matmul %238, %259, %cst_243 {dimension_numbers = #tpu.dot_dimension_numbers<[1], [0], [0], [1], [0, 0, 1, 1], [], []>} : vector<64x32xbf16>, vector<32x8xbf16>, vector<64x8xf32> -> vector<64x8xf32>
    %261 = arith.truncf %260 : vector<64x8xf32> to vector<64x8xbf16>
    %cst_244 = arith.constant dense<0.000000e+00> : vector<256x8xf32>
    %262 = tpu.matmul %257, %261, %cst_244 {dimension_numbers = #tpu.dot_dimension_numbers<[1], [0], [0], [1], [0, 0, 1, 1], [], []>} : vector<256x64xbf16>, vector<64x8xbf16>, vector<256x8xf32> -> vector<256x8xf32>
    %263 = arith.addf %255, %262 : vector<256x8xf32>
    %c3_245 = arith.constant 3 : index
    %c0_246 = arith.constant 0 : index
    %c0_247 = arith.constant 0 : index
    %264 = vector.load %arg11[%c3_245, %c0_246, %c0_247] : memref<9x256x64xbf16, #tpu.memory_space<vmem>>, vector<1x256x64xbf16>
    %265 = vector.shape_cast %264 : vector<1x256x64xbf16> to vector<256x64xbf16>
    %c3_248 = arith.constant 3 : index
    %c0_249 = arith.constant 0 : index
    %c0_250 = arith.constant 0 : index
    %266 = vector.load %arg12[%c3_248, %c0_249, %c0_250] : memref<9x32x8xbf16, #tpu.memory_space<vmem>>, vector<1x32x8xbf16>
    %267 = vector.shape_cast %266 : vector<1x32x8xbf16> to vector<32x8xbf16>
    %cst_251 = arith.constant dense<0.000000e+00> : vector<64x8xf32>
    %268 = tpu.matmul %238, %267, %cst_251 {dimension_numbers = #tpu.dot_dimension_numbers<[1], [0], [0], [1], [0, 0, 1, 1], [], []>} : vector<64x32xbf16>, vector<32x8xbf16>, vector<64x8xf32> -> vector<64x8xf32>
    %269 = arith.truncf %268 : vector<64x8xf32> to vector<64x8xbf16>
    %cst_252 = arith.constant dense<0.000000e+00> : vector<256x8xf32>
    %270 = tpu.matmul %265, %269, %cst_252 {dimension_numbers = #tpu.dot_dimension_numbers<[1], [0], [0], [1], [0, 0, 1, 1], [], []>} : vector<256x64xbf16>, vector<64x8xbf16>, vector<256x8xf32> -> vector<256x8xf32>
    %271 = arith.addf %263, %270 : vector<256x8xf32>
    %c4_253 = arith.constant 4 : index
    %c0_254 = arith.constant 0 : index
    %c0_255 = arith.constant 0 : index
    %272 = vector.load %arg11[%c4_253, %c0_254, %c0_255] : memref<9x256x64xbf16, #tpu.memory_space<vmem>>, vector<1x256x64xbf16>
    %273 = vector.shape_cast %272 : vector<1x256x64xbf16> to vector<256x64xbf16>
    %c4_256 = arith.constant 4 : index
    %c0_257 = arith.constant 0 : index
    %c0_258 = arith.constant 0 : index
    %274 = vector.load %arg12[%c4_256, %c0_257, %c0_258] : memref<9x32x8xbf16, #tpu.memory_space<vmem>>, vector<1x32x8xbf16>
    %275 = vector.shape_cast %274 : vector<1x32x8xbf16> to vector<32x8xbf16>
    %cst_259 = arith.constant dense<0.000000e+00> : vector<64x8xf32>
    %276 = tpu.matmul %238, %275, %cst_259 {dimension_numbers = #tpu.dot_dimension_numbers<[1], [0], [0], [1], [0, 0, 1, 1], [], []>} : vector<64x32xbf16>, vector<32x8xbf16>, vector<64x8xf32> -> vector<64x8xf32>
    %277 = arith.truncf %276 : vector<64x8xf32> to vector<64x8xbf16>
    %cst_260 = arith.constant dense<0.000000e+00> : vector<256x8xf32>
    %278 = tpu.matmul %273, %277, %cst_260 {dimension_numbers = #tpu.dot_dimension_numbers<[1], [0], [0], [1], [0, 0, 1, 1], [], []>} : vector<256x64xbf16>, vector<64x8xbf16>, vector<256x8xf32> -> vector<256x8xf32>
    %279 = arith.addf %271, %278 : vector<256x8xf32>
    %c5_261 = arith.constant 5 : index
    %c0_262 = arith.constant 0 : index
    %c0_263 = arith.constant 0 : index
    %280 = vector.load %arg11[%c5_261, %c0_262, %c0_263] : memref<9x256x64xbf16, #tpu.memory_space<vmem>>, vector<1x256x64xbf16>
    %281 = vector.shape_cast %280 : vector<1x256x64xbf16> to vector<256x64xbf16>
    %c5_264 = arith.constant 5 : index
    %c0_265 = arith.constant 0 : index
    %c0_266 = arith.constant 0 : index
    %282 = vector.load %arg12[%c5_264, %c0_265, %c0_266] : memref<9x32x8xbf16, #tpu.memory_space<vmem>>, vector<1x32x8xbf16>
    %283 = vector.shape_cast %282 : vector<1x32x8xbf16> to vector<32x8xbf16>
    %cst_267 = arith.constant dense<0.000000e+00> : vector<64x8xf32>
    %284 = tpu.matmul %238, %283, %cst_267 {dimension_numbers = #tpu.dot_dimension_numbers<[1], [0], [0], [1], [0, 0, 1, 1], [], []>} : vector<64x32xbf16>, vector<32x8xbf16>, vector<64x8xf32> -> vector<64x8xf32>
    %285 = arith.truncf %284 : vector<64x8xf32> to vector<64x8xbf16>
    %cst_268 = arith.constant dense<0.000000e+00> : vector<256x8xf32>
    %286 = tpu.matmul %281, %285, %cst_268 {dimension_numbers = #tpu.dot_dimension_numbers<[1], [0], [0], [1], [0, 0, 1, 1], [], []>} : vector<256x64xbf16>, vector<64x8xbf16>, vector<256x8xf32> -> vector<256x8xf32>
    %287 = arith.addf %279, %286 : vector<256x8xf32>
    %c6_269 = arith.constant 6 : index
    %c0_270 = arith.constant 0 : index
    %c0_271 = arith.constant 0 : index
    %288 = vector.load %arg11[%c6_269, %c0_270, %c0_271] : memref<9x256x64xbf16, #tpu.memory_space<vmem>>, vector<1x256x64xbf16>
    %289 = vector.shape_cast %288 : vector<1x256x64xbf16> to vector<256x64xbf16>
    %c6_272 = arith.constant 6 : index
    %c0_273 = arith.constant 0 : index
    %c0_274 = arith.constant 0 : index
    %290 = vector.load %arg12[%c6_272, %c0_273, %c0_274] : memref<9x32x8xbf16, #tpu.memory_space<vmem>>, vector<1x32x8xbf16>
    %291 = vector.shape_cast %290 : vector<1x32x8xbf16> to vector<32x8xbf16>
    %cst_275 = arith.constant dense<0.000000e+00> : vector<64x8xf32>
    %292 = tpu.matmul %238, %291, %cst_275 {dimension_numbers = #tpu.dot_dimension_numbers<[1], [0], [0], [1], [0, 0, 1, 1], [], []>} : vector<64x32xbf16>, vector<32x8xbf16>, vector<64x8xf32> -> vector<64x8xf32>
    %293 = arith.truncf %292 : vector<64x8xf32> to vector<64x8xbf16>
    %cst_276 = arith.constant dense<0.000000e+00> : vector<256x8xf32>
    %294 = tpu.matmul %289, %293, %cst_276 {dimension_numbers = #tpu.dot_dimension_numbers<[1], [0], [0], [1], [0, 0, 1, 1], [], []>} : vector<256x64xbf16>, vector<64x8xbf16>, vector<256x8xf32> -> vector<256x8xf32>
    %295 = arith.addf %287, %294 : vector<256x8xf32>
    %c7_277 = arith.constant 7 : index
    %c0_278 = arith.constant 0 : index
    %c0_279 = arith.constant 0 : index
    %296 = vector.load %arg11[%c7_277, %c0_278, %c0_279] : memref<9x256x64xbf16, #tpu.memory_space<vmem>>, vector<1x256x64xbf16>
    %297 = vector.shape_cast %296 : vector<1x256x64xbf16> to vector<256x64xbf16>
    %c7_280 = arith.constant 7 : index
    %c0_281 = arith.constant 0 : index
    %c0_282 = arith.constant 0 : index
    %298 = vector.load %arg12[%c7_280, %c0_281, %c0_282] : memref<9x32x8xbf16, #tpu.memory_space<vmem>>, vector<1x32x8xbf16>
    %299 = vector.shape_cast %298 : vector<1x32x8xbf16> to vector<32x8xbf16>
    %cst_283 = arith.constant dense<0.000000e+00> : vector<64x8xf32>
    %300 = tpu.matmul %238, %299, %cst_283 {dimension_numbers = #tpu.dot_dimension_numbers<[1], [0], [0], [1], [0, 0, 1, 1], [], []>} : vector<64x32xbf16>, vector<32x8xbf16>, vector<64x8xf32> -> vector<64x8xf32>
    %301 = arith.truncf %300 : vector<64x8xf32> to vector<64x8xbf16>
    %cst_284 = arith.constant dense<0.000000e+00> : vector<256x8xf32>
    %302 = tpu.matmul %297, %301, %cst_284 {dimension_numbers = #tpu.dot_dimension_numbers<[1], [0], [0], [1], [0, 0, 1, 1], [], []>} : vector<256x64xbf16>, vector<64x8xbf16>, vector<256x8xf32> -> vector<256x8xf32>
    %303 = arith.addf %295, %302 : vector<256x8xf32>
    %c8_285 = arith.constant 8 : index
    %c0_286 = arith.constant 0 : index
    %c0_287 = arith.constant 0 : index
    %304 = vector.load %arg11[%c8_285, %c0_286, %c0_287] : memref<9x256x64xbf16, #tpu.memory_space<vmem>>, vector<1x256x64xbf16>
    %305 = vector.shape_cast %304 : vector<1x256x64xbf16> to vector<256x64xbf16>
    %c8_288 = arith.constant 8 : index
    %c0_289 = arith.constant 0 : index
    %c0_290 = arith.constant 0 : index
    %306 = vector.load %arg12[%c8_288, %c0_289, %c0_290] : memref<9x32x8xbf16, #tpu.memory_space<vmem>>, vector<1x32x8xbf16>
    %307 = vector.shape_cast %306 : vector<1x32x8xbf16> to vector<32x8xbf16>
    %cst_291 = arith.constant dense<0.000000e+00> : vector<64x8xf32>
    %308 = tpu.matmul %238, %307, %cst_291 {dimension_numbers = #tpu.dot_dimension_numbers<[1], [0], [0], [1], [0, 0, 1, 1], [], []>} : vector<64x32xbf16>, vector<32x8xbf16>, vector<64x8xf32> -> vector<64x8xf32>
    %309 = arith.truncf %308 : vector<64x8xf32> to vector<64x8xbf16>
    %cst_292 = arith.constant dense<0.000000e+00> : vector<256x8xf32>
    %310 = tpu.matmul %305, %309, %cst_292 {dimension_numbers = #tpu.dot_dimension_numbers<[1], [0], [0], [1], [0, 0, 1, 1], [], []>} : vector<256x64xbf16>, vector<64x8xbf16>, vector<256x8xf32> -> vector<256x8xf32>
    %311 = arith.addf %303, %310 : vector<256x8xf32>
    %c0_293 = arith.constant 0 : index
    %c0_294 = arith.constant 0 : index
    %312 = vector.load %arg13[%c0_293, %c0_294] : memref<1x8xf32, #tpu.memory_space<vmem>>, vector<1x8xf32>
    %313 = vector.broadcast %312 : vector<1x8xf32> to vector<256x8xf32>
    %314 = arith.addf %311, %313 : vector<256x8xf32>
    %cst_295 = arith.constant 0.000000e+00 : f32
    %315 = vector.broadcast %cst_295 : f32 to vector<256x8xf32>
    %316 = arith.subf %315, %314 : vector<256x8xf32>
    %317 = math.exp %316 : vector<256x8xf32>
    %cst_296 = arith.constant 1.000000e+00 : f32
    %318 = vector.broadcast %cst_296 : f32 to vector<256x8xf32>
    %319 = arith.addf %318, %317 : vector<256x8xf32>
    %320 = tpu.reciprocal %319 {approx = true} : vector<256x8xf32> -> vector<256x8xf32>
    %c0_297 = arith.constant 0 : index
    %c0_298 = arith.constant 0 : index
    %321 = vector.load %arg14[%c0_297, %c0_298] : memref<256x8xf32, #tpu.memory_space<vmem>>, vector<256x8xf32>
    tpu.vector_store %arg14[%c0_297, %c0_298], %320 {strides = array<i32>} : memref<256x8xf32, #tpu.memory_space<vmem>>, vector<256x8xf32>,
    return
  }
  func.func @transform_0(%arg0: i32) -> (i32, i32) {
    %c0_i32 = arith.constant 0 : i32
    %c0_i32_0 = arith.constant 0 : i32
    return %arg0, %c0_i32 : i32, i32
  }
  func.func @transform_1(%arg0: i32) -> (i32, i32, i32) {
    %c0_i32 = arith.constant 0 : i32
    %c0_i32_0 = arith.constant 0 : i32
    %c0_i32_1 = arith.constant 0 : i32
    %c0_i32_2 = arith.constant 0 : i32
    return %c0_i32, %c0_i32_0, %c0_i32_1 : i32, i32, i32
  }
  func.func @transform_2(%arg0: i32) -> (i32, i32, i32) {
    %c0_i32 = arith.constant 0 : i32
    %c0_i32_0 = arith.constant 0 : i32
    %c0_i32_1 = arith.constant 0 : i32
    %c0_i32_2 = arith.constant 0 : i32
    return %c0_i32, %c0_i32_0, %c0_i32_1 : i32, i32, i32
  }
  func.func @transform_3(%arg0: i32) -> (i32, i32) {
    %c0_i32 = arith.constant 0 : i32
    %c0_i32_0 = arith.constant 0 : i32
    %c0_i32_1 = arith.constant 0 : i32
    return %c0_i32, %c0_i32_0 : i32, i32
  }
  func.func @transform_4(%arg0: i32) -> (i32, i32, i32) {
    %c0_i32 = arith.constant 0 : i32
    %c0_i32_0 = arith.constant 0 : i32
    %c0_i32_1 = arith.constant 0 : i32
    %c0_i32_2 = arith.constant 0 : i32
    return %c0_i32, %c0_i32_0, %c0_i32_1 : i32, i32, i32
  }
  func.func @transform_5(%arg0: i32) -> (i32, i32, i32) {
    %c0_i32 = arith.constant 0 : i32
    %c0_i32_0 = arith.constant 0 : i32
    %c0_i32_1 = arith.constant 0 : i32
    %c0_i32_2 = arith.constant 0 : i32
    return %c0_i32, %c0_i32_0, %c0_i32_1 : i32, i32, i32
  }
  func.func @transform_6(%arg0: i32) -> (i32, i32) {
    %c0_i32 = arith.constant 0 : i32
    %c0_i32_0 = arith.constant 0 : i32
    %c0_i32_1 = arith.constant 0 : i32
    return %c0_i32, %c0_i32_0 : i32, i32
  }
  func.func @transform_7(%arg0: i32) -> (i32, i32, i32) {
    %c0_i32 = arith.constant 0 : i32
    %c0_i32_0 = arith.constant 0 : i32
    %c0_i32_1 = arith.constant 0 : i32
    %c0_i32_2 = arith.constant 0 : i32
    return %c0_i32, %c0_i32_0, %c0_i32_1 : i32, i32, i32
  }
  func.func @transform_8(%arg0: i32) -> (i32, i32, i32) {
    %c0_i32 = arith.constant 0 : i32
    %c0_i32_0 = arith.constant 0 : i32
    %c0_i32_1 = arith.constant 0 : i32
    %c0_i32_2 = arith.constant 0 : i32
    return %c0_i32, %c0_i32_0, %c0_i32_1 : i32, i32, i32
  }
  func.func @transform_9(%arg0: i32) -> (i32, i32) {
    %c0_i32 = arith.constant 0 : i32
    %c0_i32_0 = arith.constant 0 : i32
    %c0_i32_1 = arith.constant 0 : i32
    return %c0_i32, %c0_i32_0 : i32, i32
  }
  func.func @transform_10(%arg0: i32) -> (i32, i32, i32) {
    %c0_i32 = arith.constant 0 : i32
    %c0_i32_0 = arith.constant 0 : i32
    %c0_i32_1 = arith.constant 0 : i32
    %c0_i32_2 = arith.constant 0 : i32
    return %c0_i32, %c0_i32_0, %c0_i32_1 : i32, i32, i32
  }
  func.func @transform_11(%arg0: i32) -> (i32, i32, i32) {
    %c0_i32 = arith.constant 0 : i32
    %c0_i32_0 = arith.constant 0 : i32
    %c0_i32_1 = arith.constant 0 : i32
    %c0_i32_2 = arith.constant 0 : i32
    return %c0_i32, %c0_i32_0, %c0_i32_1 : i32, i32, i32
  }
  func.func @transform_12(%arg0: i32) -> (i32, i32) {
    %c0_i32 = arith.constant 0 : i32
    %c0_i32_0 = arith.constant 0 : i32
    %c0_i32_1 = arith.constant 0 : i32
    return %c0_i32, %c0_i32_0 : i32, i32
  }
  func.func @transform_13(%arg0: i32) -> (i32, i32) {
    %c0_i32 = arith.constant 0 : i32
    %c0_i32_0 = arith.constant 0 : i32
    return %arg0, %c0_i32 : i32, i32
  }
}

</mosaic_0001>

<llo_original>
// kernel: autoencoder_forward.1
$region0: #{autoencoder_forward.1}
  #allocation0 [shape = 'u32[]', space=smem, size = 0x4, offset = 0x4, fixed_abs, tag = 'smem constant byte address 0x4 - core index']
  #allocation1 [shape = 'u32[72,128]{1,0:T(1,128)}', space=vmem, size = 0x9000, scoped, tag = 'internal scratch']
  %s0 = inlined_call_operand.vmem [shape: f32[512,8], index: 0, kind: input, shape index: {}]
  %s1 = inlined_call_operand.vmem [shape: bf16[9,64,256], index: 1, kind: input, shape index: {}]
  %s2 = inlined_call_operand.vmem [shape: bf16[9,8,32], index: 2, kind: input, shape index: {}]
  %s3 = inlined_call_operand.vmem [shape: f32[1,32], index: 3, kind: input, shape index: {}]
  %s4 = inlined_call_operand.vmem [shape: bf16[9,16,64], index: 4, kind: input, shape index: {}]
  %s5 = inlined_call_operand.vmem [shape: bf16[9,32,64], index: 5, kind: input, shape index: {}]
  %s6 = inlined_call_operand.vmem [shape: f32[1,64], index: 6, kind: input, shape index: {}]
  %s7 = inlined_call_operand.vmem [shape: bf16[9,64,16], index: 7, kind: input, shape index: {}]
  %s8 = inlined_call_operand.vmem [shape: bf16[9,64,32], index: 8, kind: input, shape index: {}]
  %s9 = inlined_call_operand.vmem [shape: f32[1,32], index: 9, kind: input, shape index: {}]
  %s10 = inlined_call_operand.vmem [shape: bf16[9,256,64], index: 10, kind: input, shape index: {}]
  %s11 = inlined_call_operand.vmem [shape: bf16[9,32,8], index: 11, kind: input, shape index: {}]
  %s12 = inlined_call_operand.vmem [shape: f32[1,8], index: 12, kind: input, shape index: {}]
  %s13 = inlined_call_operand.vmem [shape: f32[512,8], index: 13, kind: output, shape index: {}]
  %s14 = sld [smem:[#allocation0]]
  $region85: #{autoencoder_forward.1} parent=0
    _
  %s16 = ssub.s32 1, %s14
  %s17 = scalar_select 0, %s16, %s14
  loop: start=0, step=1, limit=4
  $region2: #{autoencoder_forward.1} parent=0 // loop_pre_header
    _
  $region3: #{autoencoder_forward.1} parent=0 // loop_header
    %s19 = sphi 0, %s23
    %p20 = scmp.ge.s32.totalorder %s19, 4
    %s29 = sphi 0, %s31
    %s32 = sphi 0, %s29
    %s33 = sphi 0, %s32
    %s49 = sphi 0, %s33
    %s53 = sphi 0, %s53
    %s55 = sphi 0, %s53
    %s56 = sphi 0, %s55
    %s70 = sphi 0, %s56
    %s74 = sphi 0, %s74
    %s76 = sphi 0, %s74
    %s77 = sphi 0, %s76
    %s91 = sphi 0, %s77
    %s95 = sphi 0, %s95
    %s97 = sphi 0, %s95
    %s98 = sphi 0, %s97
    %s112 = sphi 0, %s98
    %s116 = sphi 0, %s116
    %s118 = sphi 0, %s116
    %s119 = sphi 0, %s118
    %s133 = sphi 0, %s119
    %s137 = sphi 0, %s137
    %s139 = sphi 0, %s137
    %s140 = sphi 0, %s139
    %s154 = sphi 0, %s140
    %s158 = sphi 0, %s158
    %s160 = sphi 0, %s158
    %s161 = sphi 0, %s160
    %s175 = sphi 0, %s161
    %s179 = sphi 0, %s179
    %s181 = sphi 0, %s179
    %s182 = sphi 0, %s181
    %s196 = sphi 0, %s182
    %s200 = sphi 0, %s200
    %s202 = sphi 0, %s200
    %s203 = sphi 0, %s202
    %s217 = sphi 0, %s203
    %s221 = sphi 0, %s221
    %s223 = sphi 0, %s221
    %s224 = sphi 0, %s223
    %s238 = sphi 0, %s224
    %s242 = sphi 0, %s242
    %s244 = sphi 0, %s242
    %s245 = sphi 0, %s244
    %s259 = sphi 0, %s245
    %s263 = sphi 0, %s263
    %s265 = sphi 0, %s263
    %s266 = sphi 0, %s265
    %s280 = sphi 0, %s266
    %s284 = sphi 0, %s284
    %s286 = sphi 0, %s284
    %s287 = sphi 0, %s286
    %s301 = sphi 0, %s287
    %s307 = sphi 0, %s309
    %s310 = sphi 0, %s307
    %s311 = sphi 0, %s310
    %s327 = sphi 0, %s311
  $region4: #{autoencoder_forward.1} parent=0 // loop_header_branch
    %22 = sbr.rel (%p20) target = $region8
  $region5: #{autoencoder_forward.1} parent=0 // loop_body
    %s24 = ssub.s32 %s19, 1
    %s25 = ssub.s32 %s19, 2
    %s26 = sadd.s32 %s19, 1
    %s27 = ssub.s32 %s19, %s26
    %p28 = scmp.eq.s32.totalorder %s27, 0
    %s30 = sadd.s32 %s29, 1
    %s31 = scalar_select %p28, %s29, %s30
    %p34 = pneg %p28
    %p35 = scmp.eq.s32.totalorder %s19, 1
    %p36 = por %p34, %p35
    %p37 = scmp.ne.s32.totalorder %s29, %s32
    %p38 = scmp.eq.s32.totalorder %s19, 0
    %p39 = por %p37, %p38
    %p40 = scmp.ne.s32.totalorder %s29, %s32
    %p41 = scmp.eq.s32.totalorder %s24, 1
    %p42 = por %p40, %p41
    %p43 = scmp.ne.s32.totalorder %s32, %s33
    %p44 = scmp.eq.s32.totalorder %s24, 0
    %p45 = por %p43, %p44
    %p46 = scmp.ne.s32.totalorder %s32, %s33
    %p47 = scmp.eq.s32.totalorder %s25, 1
    %p48 = por %p46, %p47
    %p50 = scmp.ne.s32.totalorder %s33, %s49
    %p51 = scmp.eq.s32.totalorder %s25, 0
    %p52 = por %p50, %p51
    %s54 = sadd.s32 %s53, 1
    %p57 = scmp.eq.s32.totalorder %s19, 1
    %p58 = scmp.ne.s32.totalorder %s53, %s55
    %p59 = scmp.eq.s32.totalorder %s19, 0
    %p60 = por %p58, %p59
    %p61 = scmp.ne.s32.totalorder %s53, %s55
    %p62 = scmp.eq.s32.totalorder %s24, 1
    %p63 = por %p61, %p62
    %p64 = scmp.ne.s32.totalorder %s55, %s56
    %p65 = scmp.eq.s32.totalorder %s24, 0
    %p66 = por %p64, %p65
    %p67 = scmp.ne.s32.totalorder %s55, %s56
    %p68 = scmp.eq.s32.totalorder %s25, 1
    %p69 = por %p67, %p68
    %p71 = scmp.ne.s32.totalorder %s56, %s70
    %p72 = scmp.eq.s32.totalorder %s25, 0
    %p73 = por %p71, %p72
    %s75 = sadd.s32 %s74, 1
    %p78 = scmp.eq.s32.totalorder %s19, 1
    %p79 = scmp.ne.s32.totalorder %s74, %s76
    %p80 = scmp.eq.s32.totalorder %s19, 0
    %p81 = por %p79, %p80
    %p82 = scmp.ne.s32.totalorder %s74, %s76
    %p83 = scmp.eq.s32.totalorder %s24, 1
    %p84 = por %p82, %p83
    %p85 = scmp.ne.s32.totalorder %s76, %s77
    %p86 = scmp.eq.s32.totalorder %s24, 0
    %p87 = por %p85, %p86
    %p88 = scmp.ne.s32.totalorder %s76, %s77
    %p89 = scmp.eq.s32.totalorder %s25, 1
    %p90 = por %p88, %p89
    %p92 = scmp.ne.s32.totalorder %s77, %s91
    %p93 = scmp.eq.s32.totalorder %s25, 0
    %p94 = por %p92, %p93
    %s96 = sadd.s32 %s95, 1
    %p99 = scmp.eq.s32.totalorder %s19, 1
    %p100 = scmp.ne.s32.totalorder %s95, %s97
    %p101 = scmp.eq.s32.totalorder %s19, 0
    %p102 = por %p100, %p101
    %p103 = scmp.ne.s32.totalorder %s95, %s97
    %p104 = scmp.eq.s32.totalorder %s24, 1
    %p105 = por %p103, %p104
    %p106 = scmp.ne.s32.totalorder %s97, %s98
    %p107 = scmp.eq.s32.totalorder %s24, 0
    %p108 = por %p106, %p107
    %p109 = scmp.ne.s32.totalorder %s97, %s98
    %p110 = scmp.eq.s32.totalorder %s25, 1
    %p111 = por %p109, %p110
    %p113 = scmp.ne.s32.totalorder %s98, %s112
    %p114 = scmp.eq.s32.totalorder %s25, 0
    %p115 = por %p113, %p114
    %s117 = sadd.s32 %s116, 1
    %p120 = scmp.eq.s32.totalorder %s19, 1
    %p121 = scmp.ne.s32.totalorder %s116, %s118
    %p122 = scmp.eq.s32.totalorder %s19, 0
    %p123 = por %p121, %p122
    %p124 = scmp.ne.s32.totalorder %s116, %s118
    %p125 = scmp.eq.s32.totalorder %s24, 1
    %p126 = por %p124, %p125
    %p127 = scmp.ne.s32.totalorder %s118, %s119
    %p128 = scmp.eq.s32.totalorder %s24, 0
    %p129 = por %p127, %p128
    %p130 = scmp.ne.s32.totalorder %s118, %s119
    %p131 = scmp.eq.s32.totalorder %s25, 1
    %p132 = por %p130, %p131
    %p134 = scmp.ne.s32.totalorder %s119, %s133
    %p135 = scmp.eq.s32.totalorder %s25, 0
    %p136 = por %p134, %p135
    %s138 = sadd.s32 %s137, 1
    %p141 = scmp.eq.s32.totalorder %s19, 1
    %p142 = scmp.ne.s32.totalorder %s137, %s139
    %p143 = scmp.eq.s32.totalorder %s19, 0
    %p144 = por %p142, %p143
    %p145 = scmp.ne.s32.totalorder %s137, %s139
    %p146 = scmp.eq.s32.totalorder %s24, 1
    %p147 = por %p145, %p146
    %p148 = scmp.ne.s32.totalorder %s139, %s140
    %p149 = scmp.eq.s32.totalorder %s24, 0
    %p150 = por %p148, %p149
    %p151 = scmp.ne.s32.totalorder %s139, %s140
    %p152 = scmp.eq.s32.totalorder %s25, 1
    %p153 = por %p151, %p152
    %p155 = scmp.ne.s32.totalorder %s140, %s154
    %p156 = scmp.eq.s32.totalorder %s25, 0
    %p157 = por %p155, %p156
    %s159 = sadd.s32 %s158, 1
    %p162 = scmp.eq.s32.totalorder %s19, 1
    %p163 = scmp.ne.s32.totalorder %s158, %s160
    %p164 = scmp.eq.s32.totalorder %s19, 0
    %p165 = por %p163, %p164
    %p166 = scmp.ne.s32.totalorder %s158, %s160
    %p167 = scmp.eq.s32.totalorder %s24, 1
    %p168 = por %p166, %p167
    %p169 = scmp.ne.s32.totalorder %s160, %s161
    %p170 = scmp.eq.s32.totalorder %s24, 0
    %p171 = por %p169, %p170
    %p172 = scmp.ne.s32.totalorder %s160, %s161
    %p173 = scmp.eq.s32.totalorder %s25, 1
    %p174 = por %p172, %p173
    %p176 = scmp.ne.s32.totalorder %s161, %s175
    %p177 = scmp.eq.s32.totalorder %s25, 0
    %p178 = por %p176, %p177
    %s180 = sadd.s32 %s179, 1
    %p183 = scmp.eq.s32.totalorder %s19, 1
    %p184 = scmp.ne.s32.totalorder %s179, %s181
    %p185 = scmp.eq.s32.totalorder %s19, 0
    %p186 = por %p184, %p185
    %p187 = scmp.ne.s32.totalorder %s179, %s181
    %p188 = scmp.eq.s32.totalorder %s24, 1
    %p189 = por %p187, %p188
    %p190 = scmp.ne.s32.totalorder %s181, %s182
    %p191 = scmp.eq.s32.totalorder %s24, 0
    %p192 = por %p190, %p191
    %p193 = scmp.ne.s32.totalorder %s181, %s182
    %p194 = scmp.eq.s32.totalorder %s25, 1
    %p195 = por %p193, %p194
    %p197 = scmp.ne.s32.totalorder %s182, %s196
    %p198 = scmp.eq.s32.totalorder %s25, 0
    %p199 = por %p197, %p198
    %s201 = sadd.s32 %s200, 1
    %p204 = scmp.eq.s32.totalorder %s19, 1
    %p205 = scmp.ne.s32.totalorder %s200, %s202
    %p206 = scmp.eq.s32.totalorder %s19, 0
    %p207 = por %p205, %p206
    %p208 = scmp.ne.s32.totalorder %s200, %s202
    %p209 = scmp.eq.s32.totalorder %s24, 1
    %p210 = por %p208, %p209
    %p211 = scmp.ne.s32.totalorder %s202, %s203
    %p212 = scmp.eq.s32.totalorder %s24, 0
    %p213 = por %p211, %p212
    %p214 = scmp.ne.s32.totalorder %s202, %s203
    %p215 = scmp.eq.s32.totalorder %s25, 1
    %p216 = por %p214, %p215
    %p218 = scmp.ne.s32.totalorder %s203, %s217
    %p219 = scmp.eq.s32.totalorder %s25, 0
    %p220 = por %p218, %p219
    %s222 = sadd.s32 %s221, 1
    %p225 = scmp.eq.s32.totalorder %s19, 1
    %p226 = scmp.ne.s32.totalorder %s221, %s223
    %p227 = scmp.eq.s32.totalorder %s19, 0
    %p228 = por %p226, %p227
    %p229 = scmp.ne.s32.totalorder %s221, %s223
    %p230 = scmp.eq.s32.totalorder %s24, 1
    %p231 = por %p229, %p230
    %p232 = scmp.ne.s32.totalorder %s223, %s224
    %p233 = scmp.eq.s32.totalorder %s24, 0
    %p234 = por %p232, %p233
    %p235 = scmp.ne.s32.totalorder %s223, %s224
    %p236 = scmp.eq.s32.totalorder %s25, 1
    %p237 = por %p235, %p236
    %p239 = scmp.ne.s32.totalorder %s224, %s238
    %p240 = scmp.eq.s32.totalorder %s25, 0
    %p241 = por %p239, %p240
    %s243 = sadd.s32 %s242, 1
    %p246 = scmp.eq.s32.totalorder %s19, 1
    %p247 = scmp.ne.s32.totalorder %s242, %s244
    %p248 = scmp.eq.s32.totalorder %s19, 0
    %p249 = por %p247, %p248
    %p250 = scmp.ne.s32.totalorder %s242, %s244
    %p251 = scmp.eq.s32.totalorder %s24, 1
    %p252 = por %p250, %p251
    %p253 = scmp.ne.s32.totalorder %s244, %s245
    %p254 = scmp.eq.s32.totalorder %s24, 0
    %p255 = por %p253, %p254
    %p256 = scmp.ne.s32.totalorder %s244, %s245
    %p257 = scmp.eq.s32.totalorder %s25, 1
    %p258 = por %p256, %p257
    %p260 = scmp.ne.s32.totalorder %s245, %s259
    %p261 = scmp.eq.s32.totalorder %s25, 0
    %p262 = por %p260, %p261
    %s264 = sadd.s32 %s263, 1
    %p267 = scmp.eq.s32.totalorder %s19, 1
    %p268 = scmp.ne.s32.totalorder %s263, %s265
    %p269 = scmp.eq.s32.totalorder %s19, 0
    %p270 = por %p268, %p269
    %p271 = scmp.ne.s32.totalorder %s263, %s265
    %p272 = scmp.eq.s32.totalorder %s24, 1
    %p273 = por %p271, %p272
    %p274 = scmp.ne.s32.totalorder %s265, %s266
    %p275 = scmp.eq.s32.totalorder %s24, 0
    %p276 = por %p274, %p275
    %p277 = scmp.ne.s32.totalorder %s265, %s266
    %p278 = scmp.eq.s32.totalorder %s25, 1
    %p279 = por %p277, %p278
    %p281 = scmp.ne.s32.totalorder %s266, %s280
    %p282 = scmp.eq.s32.totalorder %s25, 0
    %p283 = por %p281, %p282
    %s285 = sadd.s32 %s284, 1
    %p288 = scmp.eq.s32.totalorder %s19, 1
    %p289 = scmp.ne.s32.totalorder %s284, %s286
    %p290 = scmp.eq.s32.totalorder %s19, 0
    %p291 = por %p289, %p290
    %p292 = scmp.ne.s32.totalorder %s284, %s286
    %p293 = scmp.eq.s32.totalorder %s24, 1
    %p294 = por %p292, %p293
    %p295 = scmp.ne.s32.totalorder %s286, %s287
    %p296 = scmp.eq.s32.totalorder %s24, 0
    %p297 = por %p295, %p296
    %p298 = scmp.ne.s32.totalorder %s286, %s287
    %p299 = scmp.eq.s32.totalorder %s25, 1
    %p300 = por %p298, %p299
    %p302 = scmp.ne.s32.totalorder %s287, %s301
    %p303 = scmp.eq.s32.totalorder %s25, 0
    %p304 = por %p302, %p303
    %s305 = ssub.s32 %s19, %s26
    %p306 = scmp.eq.s32.totalorder %s305, 0
    %s308 = sadd.s32 %s307, 1
    %s309 = scalar_select %p306, %s307, %s308
    %p312 = pneg %p306
    %p313 = scmp.eq.s32.totalorder %s19, 1
    %p314 = por %p312, %p313
    %p315 = scmp.ne.s32.totalorder %s307, %s310
    %p316 = scmp.eq.s32.totalorder %s19, 0
    %p317 = por %p315, %p316
    %p318 = scmp.ne.s32.totalorder %s307, %s310
    %p319 = scmp.eq.s32.totalorder %s24, 1
    %p320 = por %p318, %p319
    %p321 = scmp.ne.s32.totalorder %s310, %s311
    %p322 = scmp.eq.s32.totalorder %s24, 0
    %p323 = por %p321, %p322
    %p324 = scmp.ne.s32.totalorder %s310, %s311
    %p325 = scmp.eq.s32.totalorder %s25, 1
    %p326 = por %p324, %p325
    %p328 = scmp.ne.s32.totalorder %s311, %s327
    %p329 = scmp.eq.s32.totalorder %s25, 0
    %p330 = por %p328, %p329
    %p331 = scmp.le.s32.totalorder 1, %s19
    %p332 = scmp.lt.s32.totalorder %s19, 3
    %p333 = pnand %p331, %p332
    %p334 = pneg %p333
    // Predicated region
    $region9: #{autoencoder_forward.1} parent=5 // pred_check
      _
    $region10: #{autoencoder_forward.1} parent=5 // pred_check_branch
      %336 = sbr.rel (%p333) target = $region12
    $region11: #{autoencoder_forward.1} parent=5 // pred_region
      %s337 = ssub.s32 %s19, 1
      // Predicated region
      $region13: #{autoencoder_forward.1} parent=11 // pred_check
        %p338 = pneg %p66
      $region14: #{autoencoder_forward.1} parent=11 // pred_check_branch
        %340 = sbr.rel (%p338) target = $region16
      $region15: #{autoencoder_forward.1} parent=11 // pred_region
        _
      $region16: #{autoencoder_forward.1} parent=11 // pred_fallthru
        _
      // Predicated region
      $region17: #{autoencoder_forward.1} parent=11 // pred_check
        %p341 = pneg %p87
      $region18: #{autoencoder_forward.1} parent=11 // pred_check_branch
        %343 = sbr.rel (%p341) target = $region20
      $region19: #{autoencoder_forward.1} parent=11 // pred_region
        _
      $region20: #{autoencoder_forward.1} parent=11 // pred_fallthru
        _
      // Predicated region
      $region21: #{autoencoder_forward.1} parent=11 // pred_check
        %p344 = pneg %p108
      $region22: #{autoencoder_forward.1} parent=11 // pred_check_branch
        %346 = sbr.rel (%p344) target = $region24
      $region23: #{autoencoder_forward.1} parent=11 // pred_region
        _
      $region24: #{autoencoder_forward.1} parent=11 // pred_fallthru
        _
      // Predicated region
      $region25: #{autoencoder_forward.1} parent=11 // pred_check
        %p347 = pneg %p129
      $region26: #{autoencoder_forward.1} parent=11 // pred_check_branch
        %349 = sbr.rel (%p347) target = $region28
      $region27: #{autoencoder_forward.1} parent=11 // pred_region
        _
      $region28: #{autoencoder_forward.1} parent=11 // pred_fallthru
        _
      // Predicated region
      $region29: #{autoencoder_forward.1} parent=11 // pred_check
        %p350 = pneg %p150
      $region30: #{autoencoder_forward.1} parent=11 // pred_check_branch
        %352 = sbr.rel (%p350) target = $region32
      $region31: #{autoencoder_forward.1} parent=11 // pred_region
        _
      $region32: #{autoencoder_forward.1} parent=11 // pred_fallthru
        _
      // Predicated region
      $region33: #{autoencoder_forward.1} parent=11 // pred_check
        %p353 = pneg %p171
      $region34: #{autoencoder_forward.1} parent=11 // pred_check_branch
        %355 = sbr.rel (%p353) target = $region36
      $region35: #{autoencoder_forward.1} parent=11 // pred_region
        _
      $region36: #{autoencoder_forward.1} parent=11 // pred_fallthru
        _
      // Predicated region
      $region37: #{autoencoder_forward.1} parent=11 // pred_check
        %p356 = pneg %p192
      $region38: #{autoencoder_forward.1} parent=11 // pred_check_branch
        %358 = sbr.rel (%p356) target = $region40
      $region39: #{autoencoder_forward.1} parent=11 // pred_region
        _
      $region40: #{autoencoder_forward.1} parent=11 // pred_fallthru
        _
      // Predicated region
      $region41: #{autoencoder_forward.1} parent=11 // pred_check
        %p359 = pneg %p213
      $region42: #{autoencoder_forward.1} parent=11 // pred_check_branch
        %361 = sbr.rel (%p359) target = $region44
      $region43: #{autoencoder_forward.1} parent=11 // pred_region
        _
      $region44: #{autoencoder_forward.1} parent=11 // pred_fallthru
        _
      // Predicated region
      $region45: #{autoencoder_forward.1} parent=11 // pred_check
        %p362 = pneg %p234
      $region46: #{autoencoder_forward.1} parent=11 // pred_check_branch
        %364 = sbr.rel (%p362) target = $region48
      $region47: #{autoencoder_forward.1} parent=11 // pred_region
        _
      $region48: #{autoencoder_forward.1} parent=11 // pred_fallthru
        _
      // Predicated region
      $region49: #{autoencoder_forward.1} parent=11 // pred_check
        %p365 = pneg %p255
      $region50: #{autoencoder_forward.1} parent=11 // pred_check_branch
        %367 = sbr.rel (%p365) target = $region52
      $region51: #{autoencoder_forward.1} parent=11 // pred_region
        _
      $region52: #{autoencoder_forward.1} parent=11 // pred_fallthru
        _
      // Predicated region
      $region53: #{autoencoder_forward.1} parent=11 // pred_check
        %p368 = pneg %p276
      $region54: #{autoencoder_forward.1} parent=11 // pred_check_branch
        %370 = sbr.rel (%p368) target = $region56
      $region55: #{autoencoder_forward.1} parent=11 // pred_region
        _
      $region56: #{autoencoder_forward.1} parent=11 // pred_fallthru
        _
      // Predicated region
      $region57: #{autoencoder_forward.1} parent=11 // pred_check
        %p371 = pneg %p297
      $region58: #{autoencoder_forward.1} parent=11 // pred_check_branch
        %373 = sbr.rel (%p371) target = $region60
      $region59: #{autoencoder_forward.1} parent=11 // pred_region
        _
      $region60: #{autoencoder_forward.1} parent=11 // pred_fallthru
        _
    $region12: #{autoencoder_forward.1} parent=5 // pred_fallthru
      _
    %p374 = scmp.lt.s32.totalorder %s19, 2
    // Predicated region
    $region61: #{autoencoder_forward.1} parent=5 // pred_check
      %p375 = pneg %p374
    $region62: #{autoencoder_forward.1} parent=5 // pred_check_branch
      %377 = sbr.rel (%p375) target = $region64
    $region63: #{autoencoder_forward.1} parent=5 // pred_region
      // Predicated region
      $region65: #{autoencoder_forward.1} parent=63 // pred_check
        %p378 = pneg %p39
      $region66: #{autoencoder_forward.1} parent=63 // pred_check_branch
        %380 = sbr.rel (%p378) target = $region68
      $region67: #{autoencoder_forward.1} parent=63 // pred_region
        %s381 = smul.u32 32, %s19
        %p382 = scmp.lt.s32.totalorder %s381, 63
        %s383 = scalar_select %p382, %s381, 63
        %s384 = smul.addr %s383, 8
        %s385 = scalar_lea.vmem %s0, %s384
        %s386 = smul.u32 32, %s19
      $region68: #{autoencoder_forward.1} parent=63 // pred_fallthru
        _
    $region64: #{autoencoder_forward.1} parent=5 // pred_fallthru
      _
    %p387 = scmp.le.s32.totalorder 1, %s19
    %p388 = scmp.lt.s32.totalorder %s19, 3
    %p389 = pnand %p387, %p388
    %p390 = pneg %p389
    // Predicated region
    $region69: #{autoencoder_forward.1} parent=5 // pred_check
      _
    $region70: #{autoencoder_forward.1} parent=5 // pred_check_branch
      %392 = sbr.rel (%p389) target = $region72
    $region71: #{autoencoder_forward.1} parent=5 // pred_region
      %s393 = ssub.s32 %s19, 1
      %s394 = smul.u32 32, %s24
      %p395 = scmp.lt.s32.totalorder %s394, 63
      %s396 = scalar_select %p395, %s394, 63
      %s397 = smul.addr %s396, 8
      %s398 = scalar_lea.vmem %s0, %s397
      %p399 = pneg %p45
      %p400 = pneg %p42
      %p401 = pneg %p66
      %p402 = pneg %p63
      %p403 = pneg %p87
      %p404 = pneg %p84
      %p405 = pneg %p108
      %p406 = pneg %p105
      %p407 = pneg %p129
      %p408 = pneg %p126
      %p409 = pneg %p150
      %p410 = pneg %p147
      %p411 = pneg %p171
      %p412 = pneg %p168
      %p413 = pneg %p192
      %p414 = pneg %p189
      %p415 = pneg %p213
      %p416 = pneg %p210
      %p417 = pneg %p234
      %p418 = pneg %p231
      %p419 = pneg %p255
      %p420 = pneg %p252
      %p421 = pneg %p276
      %p422 = pneg %p273
      %p423 = pneg %p297
      %p424 = pneg %p294
      %p425 = pneg %p323
      %p426 = pneg %p320
      %s427 = smul.u32 32, %s24
      %p428 = scmp.lt.s32.totalorder %s427, 63
      %s429 = scalar_select %p428, %s427, 63
      %s430 = smul.addr %s429, 8
      %s431 = scalar_lea.vmem %s13, %s430
      %s432 = smul.u32 32, %s24
      %p433 = scmp.lt.s32.totalorder %s432, 63
      %s434 = scalar_select %p433, %s432, 63
      %s435 = smul.addr %s434, 8
      %s436 = scalar_lea.vmem %s0, %s435
      %s437 = smul.u32 32, %s24
      %s438 = smul.u32 32, %s24
      %p439 = scmp.lt.s32.totalorder %s438, 63
      %s440 = scalar_select %p439, %s438, 63
      %s441 = smul.addr %s440, 8
      %s442 = scalar_lea.vmem %s13, %s441
      %s443 = smul.u32 32, %s24
      %v445 = vld [vmem:[%s436] sm:$0xff]
      %v446 = vld [vmem:[%s436 + $0x8] sm:$0xff]
      %v447 = vld [vmem:[%s436 + $0x10] sm:$0xff]
      %v448 = vld [vmem:[%s436 + $0x18] sm:$0xff]
      %v449 = vld [vmem:[%s436 + $0x20] sm:$0xff]
      %v450 = vld [vmem:[%s436 + $0x28] sm:$0xff]
      %v451 = vld [vmem:[%s436 + $0x30] sm:$0xff]
      %v452 = vld [vmem:[%s436 + $0x38] sm:$0xff]
      %v453 = vld [vmem:[%s436 + $0x40] sm:$0xff]
      %v454 = vld [vmem:[%s436 + $0x48] sm:$0xff]
      %v455 = vld [vmem:[%s436 + $0x50] sm:$0xff]
      %v456 = vld [vmem:[%s436 + $0x58] sm:$0xff]
      %v457 = vld [vmem:[%s436 + $0x60] sm:$0xff]
      %v458 = vld [vmem:[%s436 + $0x68] sm:$0xff]
      %v459 = vld [vmem:[%s436 + $0x70] sm:$0xff]
      %v460 = vld [vmem:[%s436 + $0x78] sm:$0xff]
      %v461 = vld [vmem:[%s436 + $0x80] sm:$0xff]
      %v462 = vld [vmem:[%s436 + $0x88] sm:$0xff]
      %v463 = vld [vmem:[%s436 + $0x90] sm:$0xff]
      %v464 = vld [vmem:[%s436 + $0x98] sm:$0xff]
      %v465 = vld [vmem:[%s436 + $0xa0] sm:$0xff]
      %v466 = vld [vmem:[%s436 + $0xa8] sm:$0xff]
      %v467 = vld [vmem:[%s436 + $0xb0] sm:$0xff]
      %v468 = vld [vmem:[%s436 + $0xb8] sm:$0xff]
      %v469 = vld [vmem:[%s436 + $0xc0] sm:$0xff]
      %v470 = vld [vmem:[%s436 + $0xc8] sm:$0xff]
      %v471 = vld [vmem:[%s436 + $0xd0] sm:$0xff]
      %v472 = vld [vmem:[%s436 + $0xd8] sm:$0xff]
      %v473 = vld [vmem:[%s436 + $0xe0] sm:$0xff]
      %v474 = vld [vmem:[%s436 + $0xe8] sm:$0xff]
      %v475 = vld [vmem:[%s436 + $0xf0] sm:$0xff]
      %v476 = vld [vmem:[%s436 + $0xf8] sm:$0xff]
      %v477 = vpack.c.bf16 %v446, %v445
      %v478 = vpack.c.bf16 %v448, %v447
      %v479 = vpack.c.bf16 %v450, %v449
      %v480 = vpack.c.bf16 %v452, %v451
      %v481 = vpack.c.bf16 %v454, %v453
      %v482 = vpack.c.bf16 %v456, %v455
      %v483 = vpack.c.bf16 %v458, %v457
      %v484 = vpack.c.bf16 %v460, %v459
      %v485 = vpack.c.bf16 %v462, %v461
      %v486 = vpack.c.bf16 %v464, %v463
      %v487 = vpack.c.bf16 %v466, %v465
      %v488 = vpack.c.bf16 %v468, %v467
      %v489 = vpack.c.bf16 %v470, %v469
      %v490 = vpack.c.bf16 %v472, %v471
      %v491 = vpack.c.bf16 %v474, %v473
      %v492 = vpack.c.bf16 %v476, %v475
      %v493 = vld [vmem:[%s1] sm:$0xff]
      %v494 = vld [vmem:[%s1 + $0x8] sm:$0xff]
      %v495 = vld [vmem:[%s1 + $0x10] sm:$0xff]
      %v496 = vld [vmem:[%s1 + $0x18] sm:$0xff]
      %v497 = vld [vmem:[%s1 + $0x20] sm:$0xff]
      %v498 = vld [vmem:[%s1 + $0x28] sm:$0xff]
      %v499 = vld [vmem:[%s1 + $0x30] sm:$0xff]
      %v500 = vld [vmem:[%s1 + $0x38] sm:$0xff]
      %v501 = vld [vmem:[%s2] sm:$0xf]
      %v510 = vunpack.c.l.b16 %v493
      %v511 = vunpack.c.h.b16 %v493
      %v512 = vunpack.c.l.b16 %v494
      %v513 = vunpack.c.h.b16 %v494
      %v514 = vunpack.c.l.b16 %v495
      %v515 = vunpack.c.h.b16 %v495
      %v516 = vunpack.c.l.b16 %v496
      %v517 = vunpack.c.h.b16 %v496
      %v518 = vunpack.c.l.b16 %v497
      %v519 = vunpack.c.h.b16 %v497
      %v520 = vunpack.c.l.b16 %v498
      %v521 = vunpack.c.h.b16 %v498
      %v522 = vunpack.c.l.b16 %v499
      %v523 = vunpack.c.h.b16 %v499
      %v524 = vunpack.c.l.b16 %v500
      %v525 = vunpack.c.h.b16 %v500
      %v526 = vpack.c.b16 %v512, %v510
      %v527 = vpack.c.b16 %v513, %v511
      %v528 = vpack.c.b16 %v516, %v514
      %v529 = vpack.c.b16 %v517, %v515
      %v530 = vpack.c.b16 %v520, %v518
      %v531 = vpack.c.b16 %v521, %v519
      %v532 = vpack.c.b16 %v524, %v522
      %v533 = vpack.c.b16 %v525, %v523
      %542 = vmatpush.bf16.msra.mxu0 %v484
      %543 = vmatpush.bf16.msra.mxu0 %v483
      %544 = vmatpush.bf16.msra.mxu0 %v482
      %545 = vmatpush.bf16.msra.mxu0 %v481
      %546 = vmatpush.bf16.msra.mxu0 %v480
      %547 = vmatpush.bf16.msra.mxu0 %v479
      %548 = vmatpush.bf16.msra.mxu0 %v478
      %549 = vmatpush.bf16.msra.mxu0 %v477
      %550 = vmatmul.bf16.gmra.mxu0 %v526
      %v551 = vpop.f32.mrf.mxu0
      %v552 = vadd.f32 0.0, %v551
      %v553 = vpop.f32.mrf.mxu0
      %v554 = vadd.f32 0.0, %v553
      %555 = vmatmul.bf16.gmra.mxu0 %v528
      %v556 = vpop.f32.mrf.mxu0
      %v557 = vadd.f32 0.0, %v556
      %v558 = vpop.f32.mrf.mxu0
      %v559 = vadd.f32 0.0, %v558
      %560 = vmatmul.bf16.gmra.mxu0 %v530
      %v561 = vpop.f32.mrf.mxu0
      %v562 = vadd.f32 0.0, %v561
      %v563 = vpop.f32.mrf.mxu0
      %v564 = vadd.f32 0.0, %v563
      %565 = vmatmul.bf16.gmra.mxu0 %v532
      %v566 = vpop.f32.mrf.mxu0
      %v567 = vadd.f32 0.0, %v566
      %v568 = vpop.f32.mrf.mxu0
      %v569 = vadd.f32 0.0, %v568
      %570 = vdwg.mxu0
      %571 = vmatpush.bf16.msra.mxu0 %v492
      %572 = vmatpush.bf16.msra.mxu0 %v491
      %573 = vmatpush.bf16.msra.mxu0 %v490
      %574 = vmatpush.bf16.msra.mxu0 %v489
      %575 = vmatpush.bf16.msra.mxu0 %v488
      %576 = vmatpush.bf16.msra.mxu0 %v487
      %577 = vmatpush.bf16.msra.mxu0 %v486
      %578 = vmatpush.bf16.msra.mxu0 %v485
      %579 = vmatmul.bf16.gmra.mxu0 %v527
      %v580 = vpop.f32.mrf.mxu0
      %v581 = vadd.f32 %v552, %v580
      %v582 = vpop.f32.mrf.mxu0
      %v583 = vadd.f32 %v554, %v582
      %584 = vmatmul.bf16.gmra.mxu0 %v529
      %v585 = vpop.f32.mrf.mxu0
      %v586 = vadd.f32 %v557, %v585
      %v587 = vpop.f32.mrf.mxu0
      %v588 = vadd.f32 %v559, %v587
      %589 = vmatmul.bf16.gmra.mxu0 %v531
      %v590 = vpop.f32.mrf.mxu0
      %v591 = vadd.f32 %v562, %v590
      %v592 = vpop.f32.mrf.mxu0
      %v593 = vadd.f32 %v564, %v592
      %594 = vmatmul.bf16.gmra.mxu0 %v533
      %v595 = vpop.f32.mrf.mxu0
      %v596 = vadd.f32 %v567, %v595
      %v597 = vpop.f32.mrf.mxu0
      %v598 = vadd.f32 %v569, %v597
      %599 = vdwg.mxu0
      %v600 = vpack.c.bf16 %v583, %v581
      %v601 = vpack.c.bf16 %v588, %v586
      %v602 = vpack.c.bf16 %v593, %v591
      %v603 = vpack.c.bf16 %v598, %v596
      %s604 = scalar_lea.vmem %s1, 64
      %v605 = vld [vmem:[%s604] sm:$0xff]
      %v606 = vld [vmem:[%s604 + $0x8] sm:$0xff]
      %v607 = vld [vmem:[%s604 + $0x10] sm:$0xff]
      %v608 = vld [vmem:[%s604 + $0x18] sm:$0xff]
      %v609 = vld [vmem:[%s604 + $0x20] sm:$0xff]
      %v610 = vld [vmem:[%s604 + $0x28] sm:$0xff]
      %v611 = vld [vmem:[%s604 + $0x30] sm:$0xff]
      %v612 = vld [vmem:[%s604 + $0x38] sm:$0xff]
      %s613 = scalar_lea.vmem %s2, 4
      %v614 = vld [vmem:[%s613] sm:$0xf]
      %v623 = vunpack.c.l.b16 %v605
      %v624 = vunpack.c.h.b16 %v605
      %v625 = vunpack.c.l.b16 %v606
      %v626 = vunpack.c.h.b16 %v606
      %v627 = vunpack.c.l.b16 %v607
      %v628 = vunpack.c.h.b16 %v607
      %v629 = vunpack.c.l.b16 %v608
      %v630 = vunpack.c.h.b16 %v608
      %v631 = vunpack.c.l.b16 %v609
      %v632 = vunpack.c.h.b16 %v609
      %v633 = vunpack.c.l.b16 %v610
      %v634 = vunpack.c.h.b16 %v610
      %v635 = vunpack.c.l.b16 %v611
      %v636 = vunpack.c.h.b16 %v611
      %v637 = vunpack.c.l.b16 %v612
      %v638 = vunpack.c.h.b16 %v612
      %v639 = vpack.c.b16 %v625, %v623
      %v640 = vpack.c.b16 %v626, %v624
      %v641 = vpack.c.b16 %v629, %v627
      %v642 = vpack.c.b16 %v630, %v628
      %v643 = vpack.c.b16 %v633, %v631
      %v644 = vpack.c.b16 %v634, %v632
      %v645 = vpack.c.b16 %v637, %v635
      %v646 = vpack.c.b16 %v638, %v636
      %655 = vmatpush.bf16.msra.mxu0 %v484
      %656 = vmatpush.bf16.msra.mxu0 %v483
      %657 = vmatpush.bf16.msra.mxu0 %v482
      %658 = vmatpush.bf16.msra.mxu0 %v481
      %659 = vmatpush.bf16.msra.mxu0 %v480
      %660 = vmatpush.bf16.msra.mxu0 %v479
      %661 = vmatpush.bf16.msra.mxu0 %v478
      %662 = vmatpush.bf16.msra.mxu0 %v477
      %663 = vmatmul.bf16.gmra.mxu0 %v639
      %v664 = vpop.f32.mrf.mxu0
      %v665 = vadd.f32 0.0, %v664
      %v666 = vpop.f32.mrf.mxu0
      %v667 = vadd.f32 0.0, %v666
      %668 = vmatmul.bf16.gmra.mxu0 %v641
      %v669 = vpop.f32.mrf.mxu0
      %v670 = vadd.f32 0.0, %v669
      %v671 = vpop.f32.mrf.mxu0
      %v672 = vadd.f32 0.0, %v671
      %673 = vmatmul.bf16.gmra.mxu0 %v643
      %v674 = vpop.f32.mrf.mxu0
      %v675 = vadd.f32 0.0, %v674
      %v676 = vpop.f32.mrf.mxu0
      %v677 = vadd.f32 0.0, %v676
      %678 = vmatmul.bf16.gmra.mxu0 %v645
      %v679 = vpop.f32.mrf.mxu0
      %v680 = vadd.f32 0.0, %v679
      %v681 = vpop.f32.mrf.mxu0
      %v682 = vadd.f32 0.0, %v681
      %683 = vdwg.mxu0
      %684 = vmatpush.bf16.msra.mxu0 %v492
      %685 = vmatpush.bf16.msra.mxu0 %v491
      %686 = vmatpush.bf16.msra.mxu0 %v490
      %687 = vmatpush.bf16.msra.mxu0 %v489
      %688 = vmatpush.bf16.msra.mxu0 %v488
      %689 = vmatpush.bf16.msra.mxu0 %v487
      %690 = vmatpush.bf16.msra.mxu0 %v486
      %691 = vmatpush.bf16.msra.mxu0 %v485
      %692 = vmatmul.bf16.gmra.mxu0 %v640
      %v693 = vpop.f32.mrf.mxu0
      %v694 = vadd.f32 %v665, %v693
      %v695 = vpop.f32.mrf.mxu0
      %v696 = vadd.f32 %v667, %v695
      %697 = vmatmul.bf16.gmra.mxu0 %v642
      %v698 = vpop.f32.mrf.mxu0
      %v699 = vadd.f32 %v670, %v698
      %v700 = vpop.f32.mrf.mxu0
      %v701 = vadd.f32 %v672, %v700
      %702 = vmatmul.bf16.gmra.mxu0 %v644
      %v703 = vpop.f32.mrf.mxu0
      %v704 = vadd.f32 %v675, %v703
      %v705 = vpop.f32.mrf.mxu0
      %v706 = vadd.f32 %v677, %v705
      %707 = vmatmul.bf16.gmra.mxu0 %v646
      %v708 = vpop.f32.mrf.mxu0
      %v709 = vadd.f32 %v680, %v708
      %v710 = vpop.f32.mrf.mxu0
      %v711 = vadd.f32 %v682, %v710
      %712 = vdwg.mxu0
      %v713 = vpack.c.bf16 %v696, %v694
      %v714 = vpack.c.bf16 %v701, %v699
      %v715 = vpack.c.bf16 %v706, %v704
      %v716 = vpack.c.bf16 %v711, %v709
      %vm717 = vcmask 64512
      %v719 = vsel %vm717, %v713, 0
      %v722 = vsel %vm717, %v714, 0
      %v725 = vsel %vm717, %v715, 0
      %v728 = vsel %vm717, %v716, 0
      %vm730 = vcmask 1043456
      %v732 = vsel %vm730, %v614, 0
      %734 = vmatpush.bf16.msra.mxu0 0
      %735 = vmatpush.bf16.msra.mxu0 0
      %736 = vmatpush.bf16.msra.mxu0 0
      %737 = vmatpush.bf16.msra.mxu0 0
      %738 = vmatpush.bf16.msra.mxu0 0
      %739 = vmatpush.bf16.msra.mxu0 0
      %740 = vmatpush.bf16.msra.mxu0 0
      %741 = vmatpush.bf16.msra.mxu0 %v732
      %742 = vmatmul.bf16.gmra.mxu0 %v719
      %v743 = vpop.f32.mrf.mxu0
      %v744 = vadd.f32 0.0, %v743
      %v745 = vpop.f32.mrf.mxu0
      %v746 = vadd.f32 0.0, %v745
      %747 = vmatmul.bf16.gmra.mxu0 %v722
      %v748 = vpop.f32.mrf.mxu0
      %v749 = vadd.f32 0.0, %v748
      %v750 = vpop.f32.mrf.mxu0
      %v751 = vadd.f32 0.0, %v750
      %752 = vmatmul.bf16.gmra.mxu0 %v725
      %v753 = vpop.f32.mrf.mxu0
      %v754 = vadd.f32 0.0, %v753
      %v755 = vpop.f32.mrf.mxu0
      %v756 = vadd.f32 0.0, %v755
      %757 = vmatmul.bf16.gmra.mxu0 %v728
      %v758 = vpop.f32.mrf.mxu0
      %v759 = vadd.f32 0.0, %v758
      %v760 = vpop.f32.mrf.mxu0
      %v761 = vadd.f32 0.0, %v760
      %762 = vdwg.mxu0
      %v764 = vsel %vm717, %v600, 0
      %v767 = vsel %vm717, %v601, 0
      %v770 = vsel %vm717, %v602, 0
      %v773 = vsel %vm717, %v603, 0
      %v776 = vsel %vm730, %v501, 0
      %778 = vmatpush.bf16.msra.mxu0 0
      %779 = vmatpush.bf16.msra.mxu0 0
      %780 = vmatpush.bf16.msra.mxu0 0
      %781 = vmatpush.bf16.msra.mxu0 0
      %782 = vmatpush.bf16.msra.mxu0 0
      %783 = vmatpush.bf16.msra.mxu0 0
      %784 = vmatpush.bf16.msra.mxu0 0
      %785 = vmatpush.bf16.msra.mxu0 %v776
      %786 = vmatmul.bf16.gmra.mxu0 %v764
      %v787 = vpop.f32.mrf.mxu0
      %v788 = vadd.f32 %v744, %v787
      %v789 = vpop.f32.mrf.mxu0
      %v790 = vadd.f32 %v746, %v789
      %791 = vmatmul.bf16.gmra.mxu0 %v767
      %v792 = vpop.f32.mrf.mxu0
      %v793 = vadd.f32 %v749, %v792
      %v794 = vpop.f32.mrf.mxu0
      %v795 = vadd.f32 %v751, %v794
      %796 = vmatmul.bf16.gmra.mxu0 %v770
      %v797 = vpop.f32.mrf.mxu0
      %v798 = vadd.f32 %v754, %v797
      %v799 = vpop.f32.mrf.mxu0
      %v800 = vadd.f32 %v756, %v799
      %801 = vmatmul.bf16.gmra.mxu0 %v773
      %v802 = vpop.f32.mrf.mxu0
      %v803 = vadd.f32 %v759, %v802
      %v804 = vpop.f32.mrf.mxu0
      %v805 = vadd.f32 %v761, %v804
      %806 = vdwg.mxu0
      %s807 = scalar_lea.vmem %s1, 128
      %v808 = vld [vmem:[%s807] sm:$0xff]
      %v809 = vld [vmem:[%s807 + $0x8] sm:$0xff]
      %v810 = vld [vmem:[%s807 + $0x10] sm:$0xff]
      %v811 = vld [vmem:[%s807 + $0x18] sm:$0xff]
      %v812 = vld [vmem:[%s807 + $0x20] sm:$0xff]
      %v813 = vld [vmem:[%s807 + $0x28] sm:$0xff]
      %v814 = vld [vmem:[%s807 + $0x30] sm:$0xff]
      %v815 = vld [vmem:[%s807 + $0x38] sm:$0xff]
      %s816 = scalar_lea.vmem %s2, 8
      %v817 = vld [vmem:[%s816] sm:$0xf]
      %v826 = vunpack.c.l.b16 %v808
      %v827 = vunpack.c.h.b16 %v808
      %v828 = vunpack.c.l.b16 %v809
      %v829 = vunpack.c.h.b16 %v809
      %v830 = vunpack.c.l.b16 %v810
      %v831 = vunpack.c.h.b16 %v810
      %v832 = vunpack.c.l.b16 %v811
      %v833 = vunpack.c.h.b16 %v811
      %v834 = vunpack.c.l.b16 %v812
      %v835 = vunpack.c.h.b16 %v812
      %v836 = vunpack.c.l.b16 %v813
      %v837 = vunpack.c.h.b16 %v813
      %v838 = vunpack.c.l.b16 %v814
      %v839 = vunpack.c.h.b16 %v814
      %v840 = vunpack.c.l.b16 %v815
      %v841 = vunpack.c.h.b16 %v815
      %v842 = vpack.c.b16 %v828, %v826
      %v843 = vpack.c.b16 %v829, %v827
      %v844 = vpack.c.b16 %v832, %v830
      %v845 = vpack.c.b16 %v833, %v831
      %v846 = vpack.c.b16 %v836, %v834
      %v847 = vpack.c.b16 %v837, %v835
      %v848 = vpack.c.b16 %v840, %v838
      %v849 = vpack.c.b16 %v841, %v839
      %858 = vmatpush.bf16.msra.mxu0 %v484
      %859 = vmatpush.bf16.msra.mxu0 %v483
      %860 = vmatpush.bf16.msra.mxu0 %v482
      %861 = vmatpush.bf16.msra.mxu0 %v481
      %862 = vmatpush.bf16.msra.mxu0 %v480
      %863 = vmatpush.bf16.msra.mxu0 %v479
      %864 = vmatpush.bf16.msra.mxu0 %v478
      %865 = vmatpush.bf16.msra.mxu0 %v477
      %866 = vmatmul.bf16.gmra.mxu0 %v842
      %v867 = vpop.f32.mrf.mxu0
      %v868 = vadd.f32 0.0, %v867
      %v869 = vpop.f32.mrf.mxu0
      %v870 = vadd.f32 0.0, %v869
      %871 = vmatmul.bf16.gmra.mxu0 %v844
      %v872 = vpop.f32.mrf.mxu0
      %v873 = vadd.f32 0.0, %v872
      %v874 = vpop.f32.mrf.mxu0
      %v875 = vadd.f32 0.0, %v874
      %876 = vmatmul.bf16.gmra.mxu0 %v846
      %v877 = vpop.f32.mrf.mxu0
      %v878 = vadd.f32 0.0, %v877
      %v879 = vpop.f32.mrf.mxu0
      %v880 = vadd.f32 0.0, %v879
      %881 = vmatmul.bf16.gmra.mxu0 %v848
      %v882 = vpop.f32.mrf.mxu0
      %v883 = vadd.f32 0.0, %v882
      %v884 = vpop.f32.mrf.mxu0
      %v885 = vadd.f32 0.0, %v884
      %886 = vdwg.mxu0
      %887 = vmatpush.bf16.msra.mxu0 %v492
      %888 = vmatpush.bf16.msra.mxu0 %v491
      %889 = vmatpush.bf16.msra.mxu0 %v490
      %890 = vmatpush.bf16.msra.mxu0 %v489
      %891 = vmatpush.bf16.msra.mxu0 %v488
      %892 = vmatpush.bf16.msra.mxu0 %v487
      %893 = vmatpush.bf16.msra.mxu0 %v486
      %894 = vmatpush.bf16.msra.mxu0 %v485
      %895 = vmatmul.bf16.gmra.mxu0 %v843
      %v896 = vpop.f32.mrf.mxu0
      %v897 = vadd.f32 %v868, %v896
      %v898 = vpop.f32.mrf.mxu0
      %v899 = vadd.f32 %v870, %v898
      %900 = vmatmul.bf16.gmra.mxu0 %v845
      %v901 = vpop.f32.mrf.mxu0
      %v902 = vadd.f32 %v873, %v901
      %v903 = vpop.f32.mrf.mxu0
      %v904 = vadd.f32 %v875, %v903
      %905 = vmatmul.bf16.gmra.mxu0 %v847
      %v906 = vpop.f32.mrf.mxu0
      %v907 = vadd.f32 %v878, %v906
      %v908 = vpop.f32.mrf.mxu0
      %v909 = vadd.f32 %v880, %v908
      %910 = vmatmul.bf16.gmra.mxu0 %v849
      %v911 = vpop.f32.mrf.mxu0
      %v912 = vadd.f32 %v883, %v911
      %v913 = vpop.f32.mrf.mxu0
      %v914 = vadd.f32 %v885, %v913
      %915 = vdwg.mxu0
      %v916 = vpack.c.bf16 %v899, %v897
      %v917 = vpack.c.bf16 %v904, %v902
      %v918 = vpack.c.bf16 %v909, %v907
      %v919 = vpack.c.bf16 %v914, %v912
      %v921 = vsel %vm717, %v916, 0
      %v924 = vsel %vm717, %v917, 0
      %v927 = vsel %vm717, %v918, 0
      %v930 = vsel %vm717, %v919, 0
      %v933 = vsel %vm730, %v817, 0
      %935 = vmatpush.bf16.msra.mxu0 0
      %936 = vmatpush.bf16.msra.mxu0 0
      %937 = vmatpush.bf16.msra.mxu0 0
      %938 = vmatpush.bf16.msra.mxu0 0
      %939 = vmatpush.bf16.msra.mxu0 0
      %940 = vmatpush.bf16.msra.mxu0 0
      %941 = vmatpush.bf16.msra.mxu0 0
      %942 = vmatpush.bf16.msra.mxu0 %v933
      %943 = vmatmul.bf16.gmra.mxu0 %v921
      %v944 = vpop.f32.mrf.mxu0
      %v945 = vadd.f32 0.0, %v944
      %v946 = vpop.f32.mrf.mxu0
      %v947 = vadd.f32 0.0, %v946
      %948 = vmatmul.bf16.gmra.mxu0 %v924
      %v949 = vpop.f32.mrf.mxu0
      %v950 = vadd.f32 0.0, %v949
      %v951 = vpop.f32.mrf.mxu0
      %v952 = vadd.f32 0.0, %v951
      %953 = vmatmul.bf16.gmra.mxu0 %v927
      %v954 = vpop.f32.mrf.mxu0
      %v955 = vadd.f32 0.0, %v954
      %v956 = vpop.f32.mrf.mxu0
      %v957 = vadd.f32 0.0, %v956
      %958 = vmatmul.bf16.gmra.mxu0 %v930
      %v959 = vpop.f32.mrf.mxu0
      %v960 = vadd.f32 0.0, %v959
      %v961 = vpop.f32.mrf.mxu0
      %v962 = vadd.f32 0.0, %v961
      %963 = vdwg.mxu0
      %v964 = vadd.f32 %v788, %v945
      %v965 = vadd.f32 %v790, %v947
      %v966 = vadd.f32 %v793, %v950
      %v967 = vadd.f32 %v795, %v952
      %v968 = vadd.f32 %v798, %v955
      %v969 = vadd.f32 %v800, %v957
      %v970 = vadd.f32 %v803, %v960
      %v971 = vadd.f32 %v805, %v962
      %s972 = scalar_lea.vmem %s1, 192
      %v973 = vld [vmem:[%s972] sm:$0xff]
      %v974 = vld [vmem:[%s972 + $0x8] sm:$0xff]
      %v975 = vld [vmem:[%s972 + $0x10] sm:$0xff]
      %v976 = vld [vmem:[%s972 + $0x18] sm:$0xff]
      %v977 = vld [vmem:[%s972 + $0x20] sm:$0xff]
      %v978 = vld [vmem:[%s972 + $0x28] sm:$0xff]
      %v979 = vld [vmem:[%s972 + $0x30] sm:$0xff]
      %v980 = vld [vmem:[%s972 + $0x38] sm:$0xff]
      %s981 = scalar_lea.vmem %s2, 12
      %v982 = vld [vmem:[%s981] sm:$0xf]
      %v991 = vunpack.c.l.b16 %v973
      %v992 = vunpack.c.h.b16 %v973
      %v993 = vunpack.c.l.b16 %v974
      %v994 = vunpack.c.h.b16 %v974
      %v995 = vunpack.c.l.b16 %v975
      %v996 = vunpack.c.h.b16 %v975
      %v997 = vunpack.c.l.b16 %v976
      %v998 = vunpack.c.h.b16 %v976
      %v999 = vunpack.c.l.b16 %v977
      %v1000 = vunpack.c.h.b16 %v977
      %v1001 = vunpack.c.l.b16 %v978
      %v1002 = vunpack.c.h.b16 %v978
      %v1003 = vunpack.c.l.b16 %v979
      %v1004 = vunpack.c.h.b16 %v979
      %v1005 = vunpack.c.l.b16 %v980
      %v1006 = vunpack.c.h.b16 %v980
      %v1007 = vpack.c.b16 %v993, %v991
      %v1008 = vpack.c.b16 %v994, %v992
      %v1009 = vpack.c.b16 %v997, %v995
      %v1010 = vpack.c.b16 %v998, %v996
      %v1011 = vpack.c.b16 %v1001, %v999
      %v1012 = vpack.c.b16 %v1002, %v1000
      %v1013 = vpack.c.b16 %v1005, %v1003
      %v1014 = vpack.c.b16 %v1006, %v1004
      %1023 = vmatpush.bf16.msra.mxu0 %v484
      %1024 = vmatpush.bf16.msra.mxu0 %v483
      %1025 = vmatpush.bf16.msra.mxu0 %v482
      %1026 = vmatpush.bf16.msra.mxu0 %v481
      %1027 = vmatpush.bf16.msra.mxu0 %v480
      %1028 = vmatpush.bf16.msra.mxu0 %v479
      %1029 = vmatpush.bf16.msra.mxu0 %v478
      %1030 = vmatpush.bf16.msra.mxu0 %v477
      %1031 = vmatmul.bf16.gmra.mxu0 %v1007
      %v1032 = vpop.f32.mrf.mxu0
      %v1033 = vadd.f32 0.0, %v1032
      %v1034 = vpop.f32.mrf.mxu0
      %v1035 = vadd.f32 0.0, %v1034
      %1036 = vmatmul.bf16.gmra.mxu0 %v1009
      %v1037 = vpop.f32.mrf.mxu0
      %v1038 = vadd.f32 0.0, %v1037
      %v1039 = vpop.f32.mrf.mxu0
      %v1040 = vadd.f32 0.0, %v1039
      %1041 = vmatmul.bf16.gmra.mxu0 %v1011
      %v1042 = vpop.f32.mrf.mxu0
      %v1043 = vadd.f32 0.0, %v1042
      %v1044 = vpop.f32.mrf.mxu0
      %v1045 = vadd.f32 0.0, %v1044
      %1046 = vmatmul.bf16.gmra.mxu0 %v1013
      %v1047 = vpop.f32.mrf.mxu0
      %v1048 = vadd.f32 0.0, %v1047
      %v1049 = vpop.f32.mrf.mxu0
      %v1050 = vadd.f32 0.0, %v1049
      %1051 = vdwg.mxu0
      %1052 = vmatpush.bf16.msra.mxu0 %v492
      %1053 = vmatpush.bf16.msra.mxu0 %v491
      %1054 = vmatpush.bf16.msra.mxu0 %v490
      %1055 = vmatpush.bf16.msra.mxu0 %v489
      %1056 = vmatpush.bf16.msra.mxu0 %v488
      %1057 = vmatpush.bf16.msra.mxu0 %v487
      %1058 = vmatpush.bf16.msra.mxu0 %v486
      %1059 = vmatpush.bf16.msra.mxu0 %v485
      %1060 = vmatmul.bf16.gmra.mxu0 %v1008
      %v1061 = vpop.f32.mrf.mxu0
      %v1062 = vadd.f32 %v1033, %v1061
      %v1063 = vpop.f32.mrf.mxu0
      %v1064 = vadd.f32 %v1035, %v1063
      %1065 = vmatmul.bf16.gmra.mxu0 %v1010
      %v1066 = vpop.f32.mrf.mxu0
      %v1067 = vadd.f32 %v1038, %v1066
      %v1068 = vpop.f32.mrf.mxu0
      %v1069 = vadd.f32 %v1040, %v1068
      %1070 = vmatmul.bf16.gmra.mxu0 %v1012
      %v1071 = vpop.f32.mrf.mxu0
      %v1072 = vadd.f32 %v1043, %v1071
      %v1073 = vpop.f32.mrf.mxu0
      %v1074 = vadd.f32 %v1045, %v1073
      %1075 = vmatmul.bf16.gmra.mxu0 %v1014
      %v1076 = vpop.f32.mrf.mxu0
      %v1077 = vadd.f32 %v1048, %v1076
      %v1078 = vpop.f32.mrf.mxu0
      %v1079 = vadd.f32 %v1050, %v1078
      %1080 = vdwg.mxu0
      %v1081 = vpack.c.bf16 %v1064, %v1062
      %v1082 = vpack.c.bf16 %v1069, %v1067
      %v1083 = vpack.c.bf16 %v1074, %v1072
      %v1084 = vpack.c.bf16 %v1079, %v1077
      %v1086 = vsel %vm717, %v1081, 0
      %v1089 = vsel %vm717, %v1082, 0
      %v1092 = vsel %vm717, %v1083, 0
      %v1095 = vsel %vm717, %v1084, 0
      %v1098 = vsel %vm730, %v982, 0
      %1100 = vmatpush.bf16.msra.mxu0 0
      %1101 = vmatpush.bf16.msra.mxu0 0
      %1102 = vmatpush.bf16.msra.mxu0 0
      %1103 = vmatpush.bf16.msra.mxu0 0
      %1104 = vmatpush.bf16.msra.mxu0 0
      %1105 = vmatpush.bf16.msra.mxu0 0
      %1106 = vmatpush.bf16.msra.mxu0 0
      %1107 = vmatpush.bf16.msra.mxu0 %v1098
      %1108 = vmatmul.bf16.gmra.mxu0 %v1086
      %v1109 = vpop.f32.mrf.mxu0
      %v1110 = vadd.f32 0.0, %v1109
      %v1111 = vpop.f32.mrf.mxu0
      %v1112 = vadd.f32 0.0, %v1111
      %1113 = vmatmul.bf16.gmra.mxu0 %v1089
      %v1114 = vpop.f32.mrf.mxu0
      %v1115 = vadd.f32 0.0, %v1114
      %v1116 = vpop.f32.mrf.mxu0
      %v1117 = vadd.f32 0.0, %v1116
      %1118 = vmatmul.bf16.gmra.mxu0 %v1092
      %v1119 = vpop.f32.mrf.mxu0
      %v1120 = vadd.f32 0.0, %v1119
      %v1121 = vpop.f32.mrf.mxu0
      %v1122 = vadd.f32 0.0, %v1121
      %1123 = vmatmul.bf16.gmra.mxu0 %v1095
      %v1124 = vpop.f32.mrf.mxu0
      %v1125 = vadd.f32 0.0, %v1124
      %v1126 = vpop.f32.mrf.mxu0
      %v1127 = vadd.f32 0.0, %v1126
      %1128 = vdwg.mxu0
      %v1129 = vadd.f32 %v964, %v1110
      %v1130 = vadd.f32 %v965, %v1112
      %v1131 = vadd.f32 %v966, %v1115
      %v1132 = vadd.f32 %v967, %v1117
      %v1133 = vadd.f32 %v968, %v1120
      %v1134 = vadd.f32 %v969, %v1122
      %v1135 = vadd.f32 %v970, %v1125
      %v1136 = vadd.f32 %v971, %v1127
      %s1137 = scalar_lea.vmem %s1, 256
      %v1138 = vld [vmem:[%s1137] sm:$0xff]
      %v1139 = vld [vmem:[%s1137 + $0x8] sm:$0xff]
      %v1140 = vld [vmem:[%s1137 + $0x10] sm:$0xff]
      %v1141 = vld [vmem:[%s1137 + $0x18] sm:$0xff]
      %v1142 = vld [vmem:[%s1137 + $0x20] sm:$0xff]
      %v1143 = vld [vmem:[%s1137 + $0x28] sm:$0xff]
      %v1144 = vld [vmem:[%s1137 + $0x30] sm:$0xff]
      %v1145 = vld [vmem:[%s1137 + $0x38] sm:$0xff]
      %s1146 = scalar_lea.vmem %s2, 16
      %v1147 = vld [vmem:[%s1146] sm:$0xf]
      %v1156 = vunpack.c.l.b16 %v1138
      %v1157 = vunpack.c.h.b16 %v1138
      %v1158 = vunpack.c.l.b16 %v1139
      %v1159 = vunpack.c.h.b16 %v1139
      %v1160 = vunpack.c.l.b16 %v1140
      %v1161 = vunpack.c.h.b16 %v1140
      %v1162 = vunpack.c.l.b16 %v1141
      %v1163 = vunpack.c.h.b16 %v1141
      %v1164 = vunpack.c.l.b16 %v1142
      %v1165 = vunpack.c.h.b16 %v1142
      %v1166 = vunpack.c.l.b16 %v1143
      %v1167 = vunpack.c.h.b16 %v1143
      %v1168 = vunpack.c.l.b16 %v1144
      %v1169 = vunpack.c.h.b16 %v1144
      %v1170 = vunpack.c.l.b16 %v1145
      %v1171 = vunpack.c.h.b16 %v1145
      %v1172 = vpack.c.b16 %v1158, %v1156
      %v1173 = vpack.c.b16 %v1159, %v1157
      %v1174 = vpack.c.b16 %v1162, %v1160
      %v1175 = vpack.c.b16 %v1163, %v1161
      %v1176 = vpack.c.b16 %v1166, %v1164
      %v1177 = vpack.c.b16 %v1167, %v1165
      %v1178 = vpack.c.b16 %v1170, %v1168
      %v1179 = vpack.c.b16 %v1171, %v1169
      %1188 = vmatpush.bf16.msra.mxu0 %v484
      %1189 = vmatpush.bf16.msra.mxu0 %v483
      %1190 = vmatpush.bf16.msra.mxu0 %v482
      %1191 = vmatpush.bf16.msra.mxu0 %v481
      %1192 = vmatpush.bf16.msra.mxu0 %v480
      %1193 = vmatpush.bf16.msra.mxu0 %v479
      %1194 = vmatpush.bf16.msra.mxu0 %v478
      %1195 = vmatpush.bf16.msra.mxu0 %v477
      %1196 = vmatmul.bf16.gmra.mxu0 %v1172
      %v1197 = vpop.f32.mrf.mxu0
      %v1198 = vadd.f32 0.0, %v1197
      %v1199 = vpop.f32.mrf.mxu0
      %v1200 = vadd.f32 0.0, %v1199
      %1201 = vmatmul.bf16.gmra.mxu0 %v1174
      %v1202 = vpop.f32.mrf.mxu0
      %v1203 = vadd.f32 0.0, %v1202
      %v1204 = vpop.f32.mrf.mxu0
      %v1205 = vadd.f32 0.0, %v1204
      %1206 = vmatmul.bf16.gmra.mxu0 %v1176
      %v1207 = vpop.f32.mrf.mxu0
      %v1208 = vadd.f32 0.0, %v1207
      %v1209 = vpop.f32.mrf.mxu0
      %v1210 = vadd.f32 0.0, %v1209
      %1211 = vmatmul.bf16.gmra.mxu0 %v1178
      %v1212 = vpop.f32.mrf.mxu0
      %v1213 = vadd.f32 0.0, %v1212
      %v1214 = vpop.f32.mrf.mxu0
      %v1215 = vadd.f32 0.0, %v1214
      %1216 = vdwg.mxu0
      %1217 = vmatpush.bf16.msra.mxu0 %v492
      %1218 = vmatpush.bf16.msra.mxu0 %v491
      %1219 = vmatpush.bf16.msra.mxu0 %v490
      %1220 = vmatpush.bf16.msra.mxu0 %v489
      %1221 = vmatpush.bf16.msra.mxu0 %v488
      %1222 = vmatpush.bf16.msra.mxu0 %v487
      %1223 = vmatpush.bf16.msra.mxu0 %v486
      %1224 = vmatpush.bf16.msra.mxu0 %v485
      %1225 = vmatmul.bf16.gmra.mxu0 %v1173
      %v1226 = vpop.f32.mrf.mxu0
      %v1227 = vadd.f32 %v1198, %v1226
      %v1228 = vpop.f32.mrf.mxu0
      %v1229 = vadd.f32 %v1200, %v1228
      %1230 = vmatmul.bf16.gmra.mxu0 %v1175
      %v1231 = vpop.f32.mrf.mxu0
      %v1232 = vadd.f32 %v1203, %v1231
      %v1233 = vpop.f32.mrf.mxu0
      %v1234 = vadd.f32 %v1205, %v1233
      %1235 = vmatmul.bf16.gmra.mxu0 %v1177
      %v1236 = vpop.f32.mrf.mxu0
      %v1237 = vadd.f32 %v1208, %v1236
      %v1238 = vpop.f32.mrf.mxu0
      %v1239 = vadd.f32 %v1210, %v1238
      %1240 = vmatmul.bf16.gmra.mxu0 %v1179
      %v1241 = vpop.f32.mrf.mxu0
      %v1242 = vadd.f32 %v1213, %v1241
      %v1243 = vpop.f32.mrf.mxu0
      %v1244 = vadd.f32 %v1215, %v1243
      %1245 = vdwg.mxu0
      %v1246 = vpack.c.bf16 %v1229, %v1227
      %v1247 = vpack.c.bf16 %v1234, %v1232
      %v1248 = vpack.c.bf16 %v1239, %v1237
      %v1249 = vpack.c.bf16 %v1244, %v1242
      %v1251 = vsel %vm717, %v1246, 0
      %v1254 = vsel %vm717, %v1247, 0
      %v1257 = vsel %vm717, %v1248, 0
      %v1260 = vsel %vm717, %v1249, 0
      %v1263 = vsel %vm730, %v1147, 0
      %1265 = vmatpush.bf16.msra.mxu0 0
      %1266 = vmatpush.bf16.msra.mxu0 0
      %1267 = vmatpush.bf16.msra.mxu0 0
      %1268 = vmatpush.bf16.msra.mxu0 0
      %1269 = vmatpush.bf16.msra.mxu0 0
      %1270 = vmatpush.bf16.msra.mxu0 0
      %1271 = vmatpush.bf16.msra.mxu0 0
      %1272 = vmatpush.bf16.msra.mxu0 %v1263
      %1273 = vmatmul.bf16.gmra.mxu0 %v1251
      %v1274 = vpop.f32.mrf.mxu0
      %v1275 = vadd.f32 0.0, %v1274
      %v1276 = vpop.f32.mrf.mxu0
      %v1277 = vadd.f32 0.0, %v1276
      %1278 = vmatmul.bf16.gmra.mxu0 %v1254
      %v1279 = vpop.f32.mrf.mxu0
      %v1280 = vadd.f32 0.0, %v1279
      %v1281 = vpop.f32.mrf.mxu0
      %v1282 = vadd.f32 0.0, %v1281
      %1283 = vmatmul.bf16.gmra.mxu0 %v1257
      %v1284 = vpop.f32.mrf.mxu0
      %v1285 = vadd.f32 0.0, %v1284
      %v1286 = vpop.f32.mrf.mxu0
      %v1287 = vadd.f32 0.0, %v1286
      %1288 = vmatmul.bf16.gmra.mxu0 %v1260
      %v1289 = vpop.f32.mrf.mxu0
      %v1290 = vadd.f32 0.0, %v1289
      %v1291 = vpop.f32.mrf.mxu0
      %v1292 = vadd.f32 0.0, %v1291
      %1293 = vdwg.mxu0
      %v1294 = vadd.f32 %v1129, %v1275
      %v1295 = vadd.f32 %v1130, %v1277
      %v1296 = vadd.f32 %v1131, %v1280
      %v1297 = vadd.f32 %v1132, %v1282
      %v1298 = vadd.f32 %v1133, %v1285
      %v1299 = vadd.f32 %v1134, %v1287
      %v1300 = vadd.f32 %v1135, %v1290
      %v1301 = vadd.f32 %v1136, %v1292
      %s1302 = scalar_lea.vmem %s1, 320
      %v1303 = vld [vmem:[%s1302] sm:$0xff]
      %v1304 = vld [vmem:[%s1302 + $0x8] sm:$0xff]
      %v1305 = vld [vmem:[%s1302 + $0x10] sm:$0xff]
      %v1306 = vld [vmem:[%s1302 + $0x18] sm:$0xff]
      %v1307 = vld [vmem:[%s1302 + $0x20] sm:$0xff]
      %v1308 = vld [vmem:[%s1302 + $0x28] sm:$0xff]
      %v1309 = vld [vmem:[%s1302 + $0x30] sm:$0xff]
      %v1310 = vld [vmem:[%s1302 + $0x38] sm:$0xff]
      %s1311 = scalar_lea.vmem %s2, 20
      %v1312 = vld [vmem:[%s1311] sm:$0xf]
      %v1321 = vunpack.c.l.b16 %v1303
      %v1322 = vunpack.c.h.b16 %v1303
      %v1323 = vunpack.c.l.b16 %v1304
      %v1324 = vunpack.c.h.b16 %v1304
      %v1325 = vunpack.c.l.b16 %v1305
      %v1326 = vunpack.c.h.b16 %v1305
      %v1327 = vunpack.c.l.b16 %v1306
      %v1328 = vunpack.c.h.b16 %v1306
      %v1329 = vunpack.c.l.b16 %v1307
      %v1330 = vunpack.c.h.b16 %v1307
      %v1331 = vunpack.c.l.b16 %v1308
      %v1332 = vunpack.c.h.b16 %v1308
      %v1333 = vunpack.c.l.b16 %v1309
      %v1334 = vunpack.c.h.b16 %v1309
      %v1335 = vunpack.c.l.b16 %v1310
      %v1336 = vunpack.c.h.b16 %v1310
      %v1337 = vpack.c.b16 %v1323, %v1321
      %v1338 = vpack.c.b16 %v1324, %v1322
      %v1339 = vpack.c.b16 %v1327, %v1325
      %v1340 = vpack.c.b16 %v1328, %v1326
      %v1341 = vpack.c.b16 %v1331, %v1329
      %v1342 = vpack.c.b16 %v1332, %v1330
      %v1343 = vpack.c.b16 %v1335, %v1333
      %v1344 = vpack.c.b16 %v1336, %v1334
      %1353 = vmatpush.bf16.msra.mxu0 %v484
      %1354 = vmatpush.bf16.msra.mxu0 %v483
      %1355 = vmatpush.bf16.msra.mxu0 %v482
      %1356 = vmatpush.bf16.msra.mxu0 %v481
      %1357 = vmatpush.bf16.msra.mxu0 %v480
      %1358 = vmatpush.bf16.msra.mxu0 %v479
      %1359 = vmatpush.bf16.msra.mxu0 %v478
      %1360 = vmatpush.bf16.msra.mxu0 %v477
      %1361 = vmatmul.bf16.gmra.mxu0 %v1337
      %v1362 = vpop.f32.mrf.mxu0
      %v1363 = vadd.f32 0.0, %v1362
      %v1364 = vpop.f32.mrf.mxu0
      %v1365 = vadd.f32 0.0, %v1364
      %1366 = vmatmul.bf16.gmra.mxu0 %v1339
      %v1367 = vpop.f32.mrf.mxu0
      %v1368 = vadd.f32 0.0, %v1367
      %v1369 = vpop.f32.mrf.mxu0
      %v1370 = vadd.f32 0.0, %v1369
      %1371 = vmatmul.bf16.gmra.mxu0 %v1341
      %v1372 = vpop.f32.mrf.mxu0
      %v1373 = vadd.f32 0.0, %v1372
      %v1374 = vpop.f32.mrf.mxu0
      %v1375 = vadd.f32 0.0, %v1374
      %1376 = vmatmul.bf16.gmra.mxu0 %v1343
      %v1377 = vpop.f32.mrf.mxu0
      %v1378 = vadd.f32 0.0, %v1377
      %v1379 = vpop.f32.mrf.mxu0
      %v1380 = vadd.f32 0.0, %v1379
      %1381 = vdwg.mxu0
      %1382 = vmatpush.bf16.msra.mxu0 %v492
      %1383 = vmatpush.bf16.msra.mxu0 %v491
      %1384 = vmatpush.bf16.msra.mxu0 %v490
      %1385 = vmatpush.bf16.msra.mxu0 %v489
      %1386 = vmatpush.bf16.msra.mxu0 %v488
      %1387 = vmatpush.bf16.msra.mxu0 %v487
      %1388 = vmatpush.bf16.msra.mxu0 %v486
      %1389 = vmatpush.bf16.msra.mxu0 %v485
      %1390 = vmatmul.bf16.gmra.mxu0 %v1338
      %v1391 = vpop.f32.mrf.mxu0
      %v1392 = vadd.f32 %v1363, %v1391
      %v1393 = vpop.f32.mrf.mxu0
      %v1394 = vadd.f32 %v1365, %v1393
      %1395 = vmatmul.bf16.gmra.mxu0 %v1340
      %v1396 = vpop.f32.mrf.mxu0
      %v1397 = vadd.f32 %v1368, %v1396
      %v1398 = vpop.f32.mrf.mxu0
      %v1399 = vadd.f32 %v1370, %v1398
      %1400 = vmatmul.bf16.gmra.mxu0 %v1342
      %v1401 = vpop.f32.mrf.mxu0
      %v1402 = vadd.f32 %v1373, %v1401
      %v1403 = vpop.f32.mrf.mxu0
      %v1404 = vadd.f32 %v1375, %v1403
      %1405 = vmatmul.bf16.gmra.mxu0 %v1344
      %v1406 = vpop.f32.mrf.mxu0
      %v1407 = vadd.f32 %v1378, %v1406
      %v1408 = vpop.f32.mrf.mxu0
      %v1409 = vadd.f32 %v1380, %v1408
      %1410 = vdwg.mxu0
      %v1411 = vpack.c.bf16 %v1394, %v1392
      %v1412 = vpack.c.bf16 %v1399, %v1397
      %v1413 = vpack.c.bf16 %v1404, %v1402
      %v1414 = vpack.c.bf16 %v1409, %v1407
      %v1416 = vsel %vm717, %v1411, 0
      %v1419 = vsel %vm717, %v1412, 0
      %v1422 = vsel %vm717, %v1413, 0
      %v1425 = vsel %vm717, %v1414, 0
      %v1428 = vsel %vm730, %v1312, 0
      %1430 = vmatpush.bf16.msra.mxu0 0
      %1431 = vmatpush.bf16.msra.mxu0 0
      %1432 = vmatpush.bf16.msra.mxu0 0
      %1433 = vmatpush.bf16.msra.mxu0 0
      %1434 = vmatpush.bf16.msra.mxu0 0
      %1435 = vmatpush.bf16.msra.mxu0 0
      %1436 = vmatpush.bf16.msra.mxu0 0
      %1437 = vmatpush.bf16.msra.mxu0 %v1428
      %1438 = vmatmul.bf16.gmra.mxu0 %v1416
      %v1439 = vpop.f32.mrf.mxu0
      %v1440 = vadd.f32 0.0, %v1439
      %v1441 = vpop.f32.mrf.mxu0
      %v1442 = vadd.f32 0.0, %v1441
      %1443 = vmatmul.bf16.gmra.mxu0 %v1419
      %v1444 = vpop.f32.mrf.mxu0
      %v1445 = vadd.f32 0.0, %v1444
      %v1446 = vpop.f32.mrf.mxu0
      %v1447 = vadd.f32 0.0, %v1446
      %1448 = vmatmul.bf16.gmra.mxu0 %v1422
      %v1449 = vpop.f32.mrf.mxu0
      %v1450 = vadd.f32 0.0, %v1449
      %v1451 = vpop.f32.mrf.mxu0
      %v1452 = vadd.f32 0.0, %v1451
      %1453 = vmatmul.bf16.gmra.mxu0 %v1425
      %v1454 = vpop.f32.mrf.mxu0
      %v1455 = vadd.f32 0.0, %v1454
      %v1456 = vpop.f32.mrf.mxu0
      %v1457 = vadd.f32 0.0, %v1456
      %1458 = vdwg.mxu0
      %v1459 = vadd.f32 %v1294, %v1440
      %v1460 = vadd.f32 %v1295, %v1442
      %v1461 = vadd.f32 %v1296, %v1445
      %v1462 = vadd.f32 %v1297, %v1447
      %v1463 = vadd.f32 %v1298, %v1450
      %v1464 = vadd.f32 %v1299, %v1452
      %v1465 = vadd.f32 %v1300, %v1455
      %v1466 = vadd.f32 %v1301, %v1457
      %s1467 = scalar_lea.vmem %s1, 384
      %v1468 = vld [vmem:[%s1467] sm:$0xff]
      %v1469 = vld [vmem:[%s1467 + $0x8] sm:$0xff]
      %v1470 = vld [vmem:[%s1467 + $0x10] sm:$0xff]
      %v1471 = vld [vmem:[%s1467 + $0x18] sm:$0xff]
      %v1472 = vld [vmem:[%s1467 + $0x20] sm:$0xff]
      %v1473 = vld [vmem:[%s1467 + $0x28] sm:$0xff]
      %v1474 = vld [vmem:[%s1467 + $0x30] sm:$0xff]
      %v1475 = vld [vmem:[%s1467 + $0x38] sm:$0xff]
      %s1476 = scalar_lea.vmem %s2, 24
      %v1477 = vld [vmem:[%s1476] sm:$0xf]
      %v1486 = vunpack.c.l.b16 %v1468
      %v1487 = vunpack.c.h.b16 %v1468
      %v1488 = vunpack.c.l.b16 %v1469
      %v1489 = vunpack.c.h.b16 %v1469
      %v1490 = vunpack.c.l.b16 %v1470
      %v1491 = vunpack.c.h.b16 %v1470
      %v1492 = vunpack.c.l.b16 %v1471
      %v1493 = vunpack.c.h.b16 %v1471
      %v1494 = vunpack.c.l.b16 %v1472
      %v1495 = vunpack.c.h.b16 %v1472
      %v1496 = vunpack.c.l.b16 %v1473
      %v1497 = vunpack.c.h.b16 %v1473
      %v1498 = vunpack.c.l.b16 %v1474
      %v1499 = vunpack.c.h.b16 %v1474
      %v1500 = vunpack.c.l.b16 %v1475
      %v1501 = vunpack.c.h.b16 %v1475
      %v1502 = vpack.c.b16 %v1488, %v1486
      %v1503 = vpack.c.b16 %v1489, %v1487
      %v1504 = vpack.c.b16 %v1492, %v1490
      %v1505 = vpack.c.b16 %v1493, %v1491
      %v1506 = vpack.c.b16 %v1496, %v1494
      %v1507 = vpack.c.b16 %v1497, %v1495
      %v1508 = vpack.c.b16 %v1500, %v1498
      %v1509 = vpack.c.b16 %v1501, %v1499
      %1518 = vmatpush.bf16.msra.mxu0 %v484
      %1519 = vmatpush.bf16.msra.mxu0 %v483
      %1520 = vmatpush.bf16.msra.mxu0 %v482
      %1521 = vmatpush.bf16.msra.mxu0 %v481
      %1522 = vmatpush.bf16.msra.mxu0 %v480
      %1523 = vmatpush.bf16.msra.mxu0 %v479
      %1524 = vmatpush.bf16.msra.mxu0 %v478
      %1525 = vmatpush.bf16.msra.mxu0 %v477
      %1526 = vmatmul.bf16.gmra.mxu0 %v1502
      %v1527 = vpop.f32.mrf.mxu0
      %v1528 = vadd.f32 0.0, %v1527
      %v1529 = vpop.f32.mrf.mxu0
      %v1530 = vadd.f32 0.0, %v1529
      %1531 = vmatmul.bf16.gmra.mxu0 %v1504
      %v1532 = vpop.f32.mrf.mxu0
      %v1533 = vadd.f32 0.0, %v1532
      %v1534 = vpop.f32.mrf.mxu0
      %v1535 = vadd.f32 0.0, %v1534
      %1536 = vmatmul.bf16.gmra.mxu0 %v1506
      %v1537 = vpop.f32.mrf.mxu0
      %v1538 = vadd.f32 0.0, %v1537
      %v1539 = vpop.f32.mrf.mxu0
      %v1540 = vadd.f32 0.0, %v1539
      %1541 = vmatmul.bf16.gmra.mxu0 %v1508
      %v1542 = vpop.f32.mrf.mxu0
      %v1543 = vadd.f32 0.0, %v1542
      %v1544 = vpop.f32.mrf.mxu0
      %v1545 = vadd.f32 0.0, %v1544
      %1546 = vdwg.mxu0
      %1547 = vmatpush.bf16.msra.mxu0 %v492
      %1548 = vmatpush.bf16.msra.mxu0 %v491
      %1549 = vmatpush.bf16.msra.mxu0 %v490
      %1550 = vmatpush.bf16.msra.mxu0 %v489
      %1551 = vmatpush.bf16.msra.mxu0 %v488
      %1552 = vmatpush.bf16.msra.mxu0 %v487
      %1553 = vmatpush.bf16.msra.mxu0 %v486
      %1554 = vmatpush.bf16.msra.mxu0 %v485
      %1555 = vmatmul.bf16.gmra.mxu0 %v1503
      %v1556 = vpop.f32.mrf.mxu0
      %v1557 = vadd.f32 %v1528, %v1556
      %v1558 = vpop.f32.mrf.mxu0
      %v1559 = vadd.f32 %v1530, %v1558
      %1560 = vmatmul.bf16.gmra.mxu0 %v1505
      %v1561 = vpop.f32.mrf.mxu0
      %v1562 = vadd.f32 %v1533, %v1561
      %v1563 = vpop.f32.mrf.mxu0
      %v1564 = vadd.f32 %v1535, %v1563
      %1565 = vmatmul.bf16.gmra.mxu0 %v1507
      %v1566 = vpop.f32.mrf.mxu0
      %v1567 = vadd.f32 %v1538, %v1566
      %v1568 = vpop.f32.mrf.mxu0
      %v1569 = vadd.f32 %v1540, %v1568
      %1570 = vmatmul.bf16.gmra.mxu0 %v1509
      %v1571 = vpop.f32.mrf.mxu0
      %v1572 = vadd.f32 %v1543, %v1571
      %v1573 = vpop.f32.mrf.mxu0
      %v1574 = vadd.f32 %v1545, %v1573
      %1575 = vdwg.mxu0
      %v1576 = vpack.c.bf16 %v1559, %v1557
      %v1577 = vpack.c.bf16 %v1564, %v1562
      %v1578 = vpack.c.bf16 %v1569, %v1567
      %v1579 = vpack.c.bf16 %v1574, %v1572
      %v1581 = vsel %vm717, %v1576, 0
      %v1584 = vsel %vm717, %v1577, 0
      %v1587 = vsel %vm717, %v1578, 0
      %v1590 = vsel %vm717, %v1579, 0
      %v1593 = vsel %vm730, %v1477, 0
      %1595 = vmatpush.bf16.msra.mxu0 0
      %1596 = vmatpush.bf16.msra.mxu0 0
      %1597 = vmatpush.bf16.msra.mxu0 0
      %1598 = vmatpush.bf16.msra.mxu0 0
      %1599 = vmatpush.bf16.msra.mxu0 0
      %1600 = vmatpush.bf16.msra.mxu0 0
      %1601 = vmatpush.bf16.msra.mxu0 0
      %1602 = vmatpush.bf16.msra.mxu0 %v1593
      %1603 = vmatmul.bf16.gmra.mxu0 %v1581
      %v1604 = vpop.f32.mrf.mxu0
      %v1605 = vadd.f32 0.0, %v1604
      %v1606 = vpop.f32.mrf.mxu0
      %v1607 = vadd.f32 0.0, %v1606
      %1608 = vmatmul.bf16.gmra.mxu0 %v1584
      %v1609 = vpop.f32.mrf.mxu0
      %v1610 = vadd.f32 0.0, %v1609
      %v1611 = vpop.f32.mrf.mxu0
      %v1612 = vadd.f32 0.0, %v1611
      %1613 = vmatmul.bf16.gmra.mxu0 %v1587
      %v1614 = vpop.f32.mrf.mxu0
      %v1615 = vadd.f32 0.0, %v1614
      %v1616 = vpop.f32.mrf.mxu0
      %v1617 = vadd.f32 0.0, %v1616
      %1618 = vmatmul.bf16.gmra.mxu0 %v1590
      %v1619 = vpop.f32.mrf.mxu0
      %v1620 = vadd.f32 0.0, %v1619
      %v1621 = vpop.f32.mrf.mxu0
      %v1622 = vadd.f32 0.0, %v1621
      %1623 = vdwg.mxu0
      %v1624 = vadd.f32 %v1459, %v1605
      %v1625 = vadd.f32 %v1460, %v1607
      %v1626 = vadd.f32 %v1461, %v1610
      %v1627 = vadd.f32 %v1462, %v1612
      %v1628 = vadd.f32 %v1463, %v1615
      %v1629 = vadd.f32 %v1464, %v1617
      %v1630 = vadd.f32 %v1465, %v1620
      %v1631 = vadd.f32 %v1466, %v1622
      %s1632 = scalar_lea.vmem %s1, 448
      %v1633 = vld [vmem:[%s1632] sm:$0xff]
      %v1634 = vld [vmem:[%s1632 + $0x8] sm:$0xff]
      %v1635 = vld [vmem:[%s1632 + $0x10] sm:$0xff]
      %v1636 = vld [vmem:[%s1632 + $0x18] sm:$0xff]
      %v1637 = vld [vmem:[%s1632 + $0x20] sm:$0xff]
      %v1638 = vld [vmem:[%s1632 + $0x28] sm:$0xff]
      %v1639 = vld [vmem:[%s1632 + $0x30] sm:$0xff]
      %v1640 = vld [vmem:[%s1632 + $0x38] sm:$0xff]
      %s1641 = scalar_lea.vmem %s2, 28
      %v1642 = vld [vmem:[%s1641] sm:$0xf]
      %v1651 = vunpack.c.l.b16 %v1633
      %v1652 = vunpack.c.h.b16 %v1633
      %v1653 = vunpack.c.l.b16 %v1634
      %v1654 = vunpack.c.h.b16 %v1634
      %v1655 = vunpack.c.l.b16 %v1635
      %v1656 = vunpack.c.h.b16 %v1635
      %v1657 = vunpack.c.l.b16 %v1636
      %v1658 = vunpack.c.h.b16 %v1636
      %v1659 = vunpack.c.l.b16 %v1637
      %v1660 = vunpack.c.h.b16 %v1637
      %v1661 = vunpack.c.l.b16 %v1638
      %v1662 = vunpack.c.h.b16 %v1638
      %v1663 = vunpack.c.l.b16 %v1639
      %v1664 = vunpack.c.h.b16 %v1639
      %v1665 = vunpack.c.l.b16 %v1640
      %v1666 = vunpack.c.h.b16 %v1640
      %v1667 = vpack.c.b16 %v1653, %v1651
      %v1668 = vpack.c.b16 %v1654, %v1652
      %v1669 = vpack.c.b16 %v1657, %v1655
      %v1670 = vpack.c.b16 %v1658, %v1656
      %v1671 = vpack.c.b16 %v1661, %v1659
      %v1672 = vpack.c.b16 %v1662, %v1660
      %v1673 = vpack.c.b16 %v1665, %v1663
      %v1674 = vpack.c.b16 %v1666, %v1664
      %1683 = vmatpush.bf16.msra.mxu0 %v484
      %1684 = vmatpush.bf16.msra.mxu0 %v483
      %1685 = vmatpush.bf16.msra.mxu0 %v482
      %1686 = vmatpush.bf16.msra.mxu0 %v481
      %1687 = vmatpush.bf16.msra.mxu0 %v480
      %1688 = vmatpush.bf16.msra.mxu0 %v479
      %1689 = vmatpush.bf16.msra.mxu0 %v478
      %1690 = vmatpush.bf16.msra.mxu0 %v477
      %1691 = vmatmul.bf16.gmra.mxu0 %v1667
      %v1692 = vpop.f32.mrf.mxu0
      %v1693 = vadd.f32 0.0, %v1692
      %v1694 = vpop.f32.mrf.mxu0
      %v1695 = vadd.f32 0.0, %v1694
      %1696 = vmatmul.bf16.gmra.mxu0 %v1669
      %v1697 = vpop.f32.mrf.mxu0
      %v1698 = vadd.f32 0.0, %v1697
      %v1699 = vpop.f32.mrf.mxu0
      %v1700 = vadd.f32 0.0, %v1699
      %1701 = vmatmul.bf16.gmra.mxu0 %v1671
      %v1702 = vpop.f32.mrf.mxu0
      %v1703 = vadd.f32 0.0, %v1702
      %v1704 = vpop.f32.mrf.mxu0
      %v1705 = vadd.f32 0.0, %v1704
      %1706 = vmatmul.bf16.gmra.mxu0 %v1673
      %v1707 = vpop.f32.mrf.mxu0
      %v1708 = vadd.f32 0.0, %v1707
      %v1709 = vpop.f32.mrf.mxu0
      %v1710 = vadd.f32 0.0, %v1709
      %1711 = vdwg.mxu0
      %1712 = vmatpush.bf16.msra.mxu0 %v492
      %1713 = vmatpush.bf16.msra.mxu0 %v491
      %1714 = vmatpush.bf16.msra.mxu0 %v490
      %1715 = vmatpush.bf16.msra.mxu0 %v489
      %1716 = vmatpush.bf16.msra.mxu0 %v488
      %1717 = vmatpush.bf16.msra.mxu0 %v487
      %1718 = vmatpush.bf16.msra.mxu0 %v486
      %1719 = vmatpush.bf16.msra.mxu0 %v485
      %1720 = vmatmul.bf16.gmra.mxu0 %v1668
      %v1721 = vpop.f32.mrf.mxu0
      %v1722 = vadd.f32 %v1693, %v1721
      %v1723 = vpop.f32.mrf.mxu0
      %v1724 = vadd.f32 %v1695, %v1723
      %1725 = vmatmul.bf16.gmra.mxu0 %v1670
      %v1726 = vpop.f32.mrf.mxu0
      %v1727 = vadd.f32 %v1698, %v1726
      %v1728 = vpop.f32.mrf.mxu0
      %v1729 = vadd.f32 %v1700, %v1728
      %1730 = vmatmul.bf16.gmra.mxu0 %v1672
      %v1731 = vpop.f32.mrf.mxu0
      %v1732 = vadd.f32 %v1703, %v1731
      %v1733 = vpop.f32.mrf.mxu0
      %v1734 = vadd.f32 %v1705, %v1733
      %1735 = vmatmul.bf16.gmra.mxu0 %v1674
      %v1736 = vpop.f32.mrf.mxu0
      %v1737 = vadd.f32 %v1708, %v1736
      %v1738 = vpop.f32.mrf.mxu0
      %v1739 = vadd.f32 %v1710, %v1738
      %1740 = vdwg.mxu0
      %v1741 = vpack.c.bf16 %v1724, %v1722
      %v1742 = vpack.c.bf16 %v1729, %v1727
      %v1743 = vpack.c.bf16 %v1734, %v1732
      %v1744 = vpack.c.bf16 %v1739, %v1737
      %v1746 = vsel %vm717, %v1741, 0
      %v1749 = vsel %vm717, %v1742, 0
      %v1752 = vsel %vm717, %v1743, 0
      %v1755 = vsel %vm717, %v1744, 0
      %v1758 = vsel %vm730, %v1642, 0
      %1760 = vmatpush.bf16.msra.mxu0 0
      %1761 = vmatpush.bf16.msra.mxu0 0
      %1762 = vmatpush.bf16.msra.mxu0 0
      %1763 = vmatpush.bf16.msra.mxu0 0
      %1764 = vmatpush.bf16.msra.mxu0 0
      %1765 = vmatpush.bf16.msra.mxu0 0
      %1766 = vmatpush.bf16.msra.mxu0 0
      %1767 = vmatpush.bf16.msra.mxu0 %v1758
      %1768 = vmatmul.bf16.gmra.mxu0 %v1746
      %v1769 = vpop.f32.mrf.mxu0
      %v1770 = vadd.f32 0.0, %v1769
      %v1771 = vpop.f32.mrf.mxu0
      %v1772 = vadd.f32 0.0, %v1771
      %1773 = vmatmul.bf16.gmra.mxu0 %v1749
      %v1774 = vpop.f32.mrf.mxu0
      %v1775 = vadd.f32 0.0, %v1774
      %v1776 = vpop.f32.mrf.mxu0
      %v1777 = vadd.f32 0.0, %v1776
      %1778 = vmatmul.bf16.gmra.mxu0 %v1752
      %v1779 = vpop.f32.mrf.mxu0
      %v1780 = vadd.f32 0.0, %v1779
      %v1781 = vpop.f32.mrf.mxu0
      %v1782 = vadd.f32 0.0, %v1781
      %1783 = vmatmul.bf16.gmra.mxu0 %v1755
      %v1784 = vpop.f32.mrf.mxu0
      %v1785 = vadd.f32 0.0, %v1784
      %v1786 = vpop.f32.mrf.mxu0
      %v1787 = vadd.f32 0.0, %v1786
      %1788 = vdwg.mxu0
      %v1789 = vadd.f32 %v1624, %v1770
      %v1790 = vadd.f32 %v1625, %v1772
      %v1791 = vadd.f32 %v1626, %v1775
      %v1792 = vadd.f32 %v1627, %v1777
      %v1793 = vadd.f32 %v1628, %v1780
      %v1794 = vadd.f32 %v1629, %v1782
      %v1795 = vadd.f32 %v1630, %v1785
      %v1796 = vadd.f32 %v1631, %v1787
      %s1797 = scalar_lea.vmem %s1, 512
      %v1798 = vld [vmem:[%s1797] sm:$0xff]
      %v1799 = vld [vmem:[%s1797 + $0x8] sm:$0xff]
      %v1800 = vld [vmem:[%s1797 + $0x10] sm:$0xff]
      %v1801 = vld [vmem:[%s1797 + $0x18] sm:$0xff]
      %v1802 = vld [vmem:[%s1797 + $0x20] sm:$0xff]
      %v1803 = vld [vmem:[%s1797 + $0x28] sm:$0xff]
      %v1804 = vld [vmem:[%s1797 + $0x30] sm:$0xff]
      %v1805 = vld [vmem:[%s1797 + $0x38] sm:$0xff]
      %s1806 = scalar_lea.vmem %s2, 32
      %v1807 = vld [vmem:[%s1806] sm:$0xf]
      %v1816 = vunpack.c.l.b16 %v1798
      %v1817 = vunpack.c.h.b16 %v1798
      %v1818 = vunpack.c.l.b16 %v1799
      %v1819 = vunpack.c.h.b16 %v1799
      %v1820 = vunpack.c.l.b16 %v1800
      %v1821 = vunpack.c.h.b16 %v1800
      %v1822 = vunpack.c.l.b16 %v1801
      %v1823 = vunpack.c.h.b16 %v1801
      %v1824 = vunpack.c.l.b16 %v1802
      %v1825 = vunpack.c.h.b16 %v1802
      %v1826 = vunpack.c.l.b16 %v1803
      %v1827 = vunpack.c.h.b16 %v1803
      %v1828 = vunpack.c.l.b16 %v1804
      %v1829 = vunpack.c.h.b16 %v1804
      %v1830 = vunpack.c.l.b16 %v1805
      %v1831 = vunpack.c.h.b16 %v1805
      %v1832 = vpack.c.b16 %v1818, %v1816
      %v1833 = vpack.c.b16 %v1819, %v1817
      %v1834 = vpack.c.b16 %v1822, %v1820
      %v1835 = vpack.c.b16 %v1823, %v1821
      %v1836 = vpack.c.b16 %v1826, %v1824
      %v1837 = vpack.c.b16 %v1827, %v1825
      %v1838 = vpack.c.b16 %v1830, %v1828
      %v1839 = vpack.c.b16 %v1831, %v1829
      %1848 = vmatpush.bf16.msra.mxu0 %v484
      %1849 = vmatpush.bf16.msra.mxu0 %v483
      %1850 = vmatpush.bf16.msra.mxu0 %v482
      %1851 = vmatpush.bf16.msra.mxu0 %v481
      %1852 = vmatpush.bf16.msra.mxu0 %v480
      %1853 = vmatpush.bf16.msra.mxu0 %v479
      %1854 = vmatpush.bf16.msra.mxu0 %v478
      %1855 = vmatpush.bf16.msra.mxu0 %v477
      %1856 = vmatmul.bf16.gmra.mxu0 %v1832
      %v1857 = vpop.f32.mrf.mxu0
      %v1858 = vadd.f32 0.0, %v1857
      %v1859 = vpop.f32.mrf.mxu0
      %v1860 = vadd.f32 0.0, %v1859
      %1861 = vmatmul.bf16.gmra.mxu0 %v1834
      %v1862 = vpop.f32.mrf.mxu0
      %v1863 = vadd.f32 0.0, %v1862
      %v1864 = vpop.f32.mrf.mxu0
      %v1865 = vadd.f32 0.0, %v1864
      %1866 = vmatmul.bf16.gmra.mxu0 %v1836
      %v1867 = vpop.f32.mrf.mxu0
      %v1868 = vadd.f32 0.0, %v1867
      %v1869 = vpop.f32.mrf.mxu0
      %v1870 = vadd.f32 0.0, %v1869
      %1871 = vmatmul.bf16.gmra.mxu0 %v1838
      %v1872 = vpop.f32.mrf.mxu0
      %v1873 = vadd.f32 0.0, %v1872
      %v1874 = vpop.f32.mrf.mxu0
      %v1875 = vadd.f32 0.0, %v1874
      %1876 = vdwg.mxu0
      %1877 = vmatpush.bf16.msra.mxu0 %v492
      %1878 = vmatpush.bf16.msra.mxu0 %v491
      %1879 = vmatpush.bf16.msra.mxu0 %v490
      %1880 = vmatpush.bf16.msra.mxu0 %v489
      %1881 = vmatpush.bf16.msra.mxu0 %v488
      %1882 = vmatpush.bf16.msra.mxu0 %v487
      %1883 = vmatpush.bf16.msra.mxu0 %v486
      %1884 = vmatpush.bf16.msra.mxu0 %v485
      %1885 = vmatmul.bf16.gmra.mxu0 %v1833
      %v1886 = vpop.f32.mrf.mxu0
      %v1887 = vadd.f32 %v1858, %v1886
      %v1888 = vpop.f32.mrf.mxu0
      %v1889 = vadd.f32 %v1860, %v1888
      %1890 = vmatmul.bf16.gmra.mxu0 %v1835
      %v1891 = vpop.f32.mrf.mxu0
      %v1892 = vadd.f32 %v1863, %v1891
      %v1893 = vpop.f32.mrf.mxu0
      %v1894 = vadd.f32 %v1865, %v1893
      %1895 = vmatmul.bf16.gmra.mxu0 %v1837
      %v1896 = vpop.f32.mrf.mxu0
      %v1897 = vadd.f32 %v1868, %v1896
      %v1898 = vpop.f32.mrf.mxu0
      %v1899 = vadd.f32 %v1870, %v1898
      %1900 = vmatmul.bf16.gmra.mxu0 %v1839
      %v1901 = vpop.f32.mrf.mxu0
      %v1902 = vadd.f32 %v1873, %v1901
      %v1903 = vpop.f32.mrf.mxu0
      %v1904 = vadd.f32 %v1875, %v1903
      %1905 = vdwg.mxu0
      %v1906 = vpack.c.bf16 %v1889, %v1887
      %v1907 = vpack.c.bf16 %v1894, %v1892
      %v1908 = vpack.c.bf16 %v1899, %v1897
      %v1909 = vpack.c.bf16 %v1904, %v1902
      %v1911 = vsel %vm717, %v1906, 0
      %v1914 = vsel %vm717, %v1907, 0
      %v1917 = vsel %vm717, %v1908, 0
      %v1920 = vsel %vm717, %v1909, 0
      %v1923 = vsel %vm730, %v1807, 0
      %1925 = vmatpush.bf16.msra.mxu0 0
      %1926 = vmatpush.bf16.msra.mxu0 0
      %1927 = vmatpush.bf16.msra.mxu0 0
      %1928 = vmatpush.bf16.msra.mxu0 0
      %1929 = vmatpush.bf16.msra.mxu0 0
      %1930 = vmatpush.bf16.msra.mxu0 0
      %1931 = vmatpush.bf16.msra.mxu0 0
      %1932 = vmatpush.bf16.msra.mxu0 %v1923
      %1933 = vmatmul.bf16.gmra.mxu0 %v1911
      %v1934 = vpop.f32.mrf.mxu0
      %v1935 = vadd.f32 0.0, %v1934
      %v1936 = vpop.f32.mrf.mxu0
      %v1937 = vadd.f32 0.0, %v1936
      %1938 = vmatmul.bf16.gmra.mxu0 %v1914
      %v1939 = vpop.f32.mrf.mxu0
      %v1940 = vadd.f32 0.0, %v1939
      %v1941 = vpop.f32.mrf.mxu0
      %v1942 = vadd.f32 0.0, %v1941
      %1943 = vmatmul.bf16.gmra.mxu0 %v1917
      %v1944 = vpop.f32.mrf.mxu0
      %v1945 = vadd.f32 0.0, %v1944
      %v1946 = vpop.f32.mrf.mxu0
      %v1947 = vadd.f32 0.0, %v1946
      %1948 = vmatmul.bf16.gmra.mxu0 %v1920
      %v1949 = vpop.f32.mrf.mxu0
      %v1950 = vadd.f32 0.0, %v1949
      %v1951 = vpop.f32.mrf.mxu0
      %v1952 = vadd.f32 0.0, %v1951
      %1953 = vdwg.mxu0
      %v1954 = vadd.f32 %v1789, %v1935
      %v1955 = vadd.f32 %v1790, %v1937
      %v1956 = vadd.f32 %v1791, %v1940
      %v1957 = vadd.f32 %v1792, %v1942
      %v1958 = vadd.f32 %v1793, %v1945
      %v1959 = vadd.f32 %v1794, %v1947
      %v1960 = vadd.f32 %v1795, %v1950
      %v1961 = vadd.f32 %v1796, %v1952
      %v1962 = vld [vmem:[%s3] sm:$0x1]
      %v1964 = vperm.slane %v1962, 0
      %v1966 = vadd.f32 %v1954, %v1964
      %v1967 = vadd.f32 %v1955, %v1964
      %v1968 = vadd.f32 %v1956, %v1964
      %v1969 = vadd.f32 %v1957, %v1964
      %v1970 = vadd.f32 %v1958, %v1964
      %v1971 = vadd.f32 %v1959, %v1964
      %v1972 = vadd.f32 %v1960, %v1964
      %v1973 = vadd.f32 %v1961, %v1964
      %v1974 = vmax.f32 %v1966, 0.0
      %v1975 = vmax.f32 %v1967, 0.0
      %v1976 = vmax.f32 %v1968, 0.0
      %v1977 = vmax.f32 %v1969, 0.0
      %v1978 = vmax.f32 %v1970, 0.0
      %v1979 = vmax.f32 %v1971, 0.0
      %v1980 = vmax.f32 %v1972, 0.0
      %v1981 = vmax.f32 %v1973, 0.0
      %v1982 = vpack.c.bf16 %v1975, %v1974
      %v1983 = vpack.c.bf16 %v1977, %v1976
      %v1984 = vpack.c.bf16 %v1979, %v1978
      %v1985 = vpack.c.bf16 %v1981, %v1980
      %v1986 = vld [vmem:[%s4] sm:$0xf]
      %v1987 = vld [vmem:[%s4 + $0x4] sm:$0xf]
      %v1988 = vld [vmem:[%s5] sm:$0xf]
      %v1989 = vld [vmem:[%s5 + $0x4] sm:$0xf]
      %v1990 = vld [vmem:[%s5 + $0x8] sm:$0xf]
      %v1991 = vld [vmem:[%s5 + $0xc] sm:$0xf]
      %v1994 = vunpack.c.l.b16 %v1986
      %v1995 = vunpack.c.l.b16 %v1987
      %v1996 = vpack.c.b16 %v1995, %v1994
      %vm1997 = vcmask 523264
      %v1999 = vsel %vm1997, %v1996, 0
      %2001 = vmatpush.bf16.msra.mxu0 0
      %2002 = vmatpush.bf16.msra.mxu0 0
      %2003 = vmatpush.bf16.msra.mxu0 0
      %2004 = vmatpush.bf16.msra.mxu0 0
      %2005 = vmatpush.bf16.msra.mxu0 %v1985
      %2006 = vmatpush.bf16.msra.mxu0 %v1984
      %2007 = vmatpush.bf16.msra.mxu0 %v1983
      %2008 = vmatpush.bf16.msra.mxu0 %v1982
      %2009 = vmatmul.bf16.gmra.mxu0 %v1999
      %v2010 = vpop.f32.mrf.mxu0
      %v2011 = vadd.f32 0.0, %v2010
      %v2012 = vpop.f32.mrf.mxu0
      %v2013 = vadd.f32 0.0, %v2012
      %2014 = vdwg.mxu0
      %v2015 = vpack.c.bf16 %v2013, %v2011
      %s2016 = scalar_lea.vmem %s4, 8
      %v2017 = vld [vmem:[%s2016] sm:$0xf]
      %v2018 = vld [vmem:[%s2016 + $0x4] sm:$0xf]
      %s2019 = scalar_lea.vmem %s5, 16
      %v2020 = vld [vmem:[%s2019] sm:$0xf]
      %v2021 = vld [vmem:[%s2019 + $0x4] sm:$0xf]
      %v2022 = vld [vmem:[%s2019 + $0x8] sm:$0xf]
      %v2023 = vld [vmem:[%s2019 + $0xc] sm:$0xf]
      %v2026 = vunpack.c.l.b16 %v2017
      %v2027 = vunpack.c.l.b16 %v2018
      %v2028 = vpack.c.b16 %v2027, %v2026
      %v2030 = vsel %vm1997, %v2028, 0
      %2032 = vmatpush.bf16.msra.mxu0 0
      %2033 = vmatpush.bf16.msra.mxu0 0
      %2034 = vmatpush.bf16.msra.mxu0 0
      %2035 = vmatpush.bf16.msra.mxu0 0
      %2036 = vmatpush.bf16.msra.mxu0 %v1985
      %2037 = vmatpush.bf16.msra.mxu0 %v1984
      %2038 = vmatpush.bf16.msra.mxu0 %v1983
      %2039 = vmatpush.bf16.msra.mxu0 %v1982
      %2040 = vmatmul.bf16.gmra.mxu0 %v2030
      %v2041 = vpop.f32.mrf.mxu0
      %v2042 = vadd.f32 0.0, %v2041
      %v2043 = vpop.f32.mrf.mxu0
      %v2044 = vadd.f32 0.0, %v2043
      %2045 = vdwg.mxu0
      %v2046 = vpack.c.bf16 %v2044, %v2042
      %v2051 = vunpack.c.l.b16 %v2020
      %v2052 = vunpack.c.l.b16 %v2021
      %v2053 = vunpack.c.l.b16 %v2022
      %v2054 = vunpack.c.l.b16 %v2023
      %v2055 = vpack.c.b16 %v2052, %v2051
      %v2056 = vpack.c.b16 %v2054, %v2053
      %vm2059 = vcmask 261120
      %v2061 = vsel %vm2059, %v2046, 0
      %2063 = vmatpush.bf16.msra.mxu0 0
      %2064 = vmatpush.bf16.msra.mxu0 0
      %2065 = vmatpush.bf16.msra.mxu0 0
      %2066 = vmatpush.bf16.msra.mxu0 0
      %2067 = vmatpush.bf16.msra.mxu0 0
      %2068 = vmatpush.bf16.msra.mxu0 0
      %2069 = vmatpush.bf16.msra.mxu0 %v2056
      %2070 = vmatpush.bf16.msra.mxu0 %v2055
      %2071 = vmatmul.bf16.gmra.mxu0 %v2061
      %v2072 = vpop.f32.mrf.mxu0
      %v2073 = vadd.f32 0.0, %v2072
      %v2074 = vpop.f32.mrf.mxu0
      %v2075 = vadd.f32 0.0, %v2074
      %2076 = vdwg.mxu0
      %v2081 = vunpack.c.l.b16 %v1988
      %v2082 = vunpack.c.l.b16 %v1989
      %v2083 = vunpack.c.l.b16 %v1990
      %v2084 = vunpack.c.l.b16 %v1991
      %v2085 = vpack.c.b16 %v2082, %v2081
      %v2086 = vpack.c.b16 %v2084, %v2083
      %v2090 = vsel %vm2059, %v2015, 0
      %2092 = vmatpush.bf16.msra.mxu0 0
      %2093 = vmatpush.bf16.msra.mxu0 0
      %2094 = vmatpush.bf16.msra.mxu0 0
      %2095 = vmatpush.bf16.msra.mxu0 0
      %2096 = vmatpush.bf16.msra.mxu0 0
      %2097 = vmatpush.bf16.msra.mxu0 0
      %2098 = vmatpush.bf16.msra.mxu0 %v2086
      %2099 = vmatpush.bf16.msra.mxu0 %v2085
      %2100 = vmatmul.bf16.gmra.mxu0 %v2090
      %v2101 = vpop.f32.mrf.mxu0
      %v2102 = vadd.f32 %v2073, %v2101
      %v2103 = vpop.f32.mrf.mxu0
      %v2104 = vadd.f32 %v2075, %v2103
      %2105 = vdwg.mxu0
      %s2106 = scalar_lea.vmem %s4, 16
      %v2107 = vld [vmem:[%s2106] sm:$0xf]
      %v2108 = vld [vmem:[%s2106 + $0x4] sm:$0xf]
      %s2109 = scalar_lea.vmem %s5, 32
      %v2110 = vld [vmem:[%s2109] sm:$0xf]
      %v2111 = vld [vmem:[%s2109 + $0x4] sm:$0xf]
      %v2112 = vld [vmem:[%s2109 + $0x8] sm:$0xf]
      %v2113 = vld [vmem:[%s2109 + $0xc] sm:$0xf]
      %v2116 = vunpack.c.l.b16 %v2107
      %v2117 = vunpack.c.l.b16 %v2108
      %v2118 = vpack.c.b16 %v2117, %v2116
      %v2120 = vsel %vm1997, %v2118, 0
      %2122 = vmatpush.bf16.msra.mxu0 0
      %2123 = vmatpush.bf16.msra.mxu0 0
      %2124 = vmatpush.bf16.msra.mxu0 0
      %2125 = vmatpush.bf16.msra.mxu0 0
      %2126 = vmatpush.bf16.msra.mxu0 %v1985
      %2127 = vmatpush.bf16.msra.mxu0 %v1984
      %2128 = vmatpush.bf16.msra.mxu0 %v1983
      %2129 = vmatpush.bf16.msra.mxu0 %v1982
      %2130 = vmatmul.bf16.gmra.mxu0 %v2120
      %v2131 = vpop.f32.mrf.mxu0
      %v2132 = vadd.f32 0.0, %v2131
      %v2133 = vpop.f32.mrf.mxu0
      %v2134 = vadd.f32 0.0, %v2133
      %2135 = vdwg.mxu0
      %v2136 = vpack.c.bf16 %v2134, %v2132
      %v2141 = vunpack.c.l.b16 %v2110
      %v2142 = vunpack.c.l.b16 %v2111
      %v2143 = vunpack.c.l.b16 %v2112
      %v2144 = vunpack.c.l.b16 %v2113
      %v2145 = vpack.c.b16 %v2142, %v2141
      %v2146 = vpack.c.b16 %v2144, %v2143
      %v2150 = vsel %vm2059, %v2136, 0
      %2152 = vmatpush.bf16.msra.mxu0 0
      %2153 = vmatpush.bf16.msra.mxu0 0
      %2154 = vmatpush.bf16.msra.mxu0 0
      %2155 = vmatpush.bf16.msra.mxu0 0
      %2156 = vmatpush.bf16.msra.mxu0 0
      %2157 = vmatpush.bf16.msra.mxu0 0
      %2158 = vmatpush.bf16.msra.mxu0 %v2146
      %2159 = vmatpush.bf16.msra.mxu0 %v2145
      %2160 = vmatmul.bf16.gmra.mxu0 %v2150
      %v2161 = vpop.f32.mrf.mxu0
      %v2162 = vadd.f32 0.0, %v2161
      %v2163 = vpop.f32.mrf.mxu0
      %v2164 = vadd.f32 0.0, %v2163
      %2165 = vdwg.mxu0
      %v2166 = vadd.f32 %v2102, %v2162
      %v2167 = vadd.f32 %v2104, %v2164
      %s2168 = scalar_lea.vmem %s4, 24
      %v2169 = vld [vmem:[%s2168] sm:$0xf]
      %v2170 = vld [vmem:[%s2168 + $0x4] sm:$0xf]
      %s2171 = scalar_lea.vmem %s5, 48
      %v2172 = vld [vmem:[%s2171] sm:$0xf]
      %v2173 = vld [vmem:[%s2171 + $0x4] sm:$0xf]
      %v2174 = vld [vmem:[%s2171 + $0x8] sm:$0xf]
      %v2175 = vld [vmem:[%s2171 + $0xc] sm:$0xf]
      %v2178 = vunpack.c.l.b16 %v2169
      %v2179 = vunpack.c.l.b16 %v2170
      %v2180 = vpack.c.b16 %v2179, %v2178
      %v2182 = vsel %vm1997, %v2180, 0
      %2184 = vmatpush.bf16.msra.mxu0 0
      %2185 = vmatpush.bf16.msra.mxu0 0
      %2186 = vmatpush.bf16.msra.mxu0 0
      %2187 = vmatpush.bf16.msra.mxu0 0
      %2188 = vmatpush.bf16.msra.mxu0 %v1985
      %2189 = vmatpush.bf16.msra.mxu0 %v1984
      %2190 = vmatpush.bf16.msra.mxu0 %v1983
      %2191 = vmatpush.bf16.msra.mxu0 %v1982
      %2192 = vmatmul.bf16.gmra.mxu0 %v2182
      %v2193 = vpop.f32.mrf.mxu0
      %v2194 = vadd.f32 0.0, %v2193
      %v2195 = vpop.f32.mrf.mxu0
      %v2196 = vadd.f32 0.0, %v2195
      %2197 = vdwg.mxu0
      %v2198 = vpack.c.bf16 %v2196, %v2194
      %v2203 = vunpack.c.l.b16 %v2172
      %v2204 = vunpack.c.l.b16 %v2173
      %v2205 = vunpack.c.l.b16 %v2174
      %v2206 = vunpack.c.l.b16 %v2175
      %v2207 = vpack.c.b16 %v2204, %v2203
      %v2208 = vpack.c.b16 %v2206, %v2205
      %v2212 = vsel %vm2059, %v2198, 0
      %2214 = vmatpush.bf16.msra.mxu0 0
      %2215 = vmatpush.bf16.msra.mxu0 0
      %2216 = vmatpush.bf16.msra.mxu0 0
      %2217 = vmatpush.bf16.msra.mxu0 0
      %2218 = vmatpush.bf16.msra.mxu0 0
      %2219 = vmatpush.bf16.msra.mxu0 0
      %2220 = vmatpush.bf16.msra.mxu0 %v2208
      %2221 = vmatpush.bf16.msra.mxu0 %v2207
      %2222 = vmatmul.bf16.gmra.mxu0 %v2212
      %v2223 = vpop.f32.mrf.mxu0
      %v2224 = vadd.f32 0.0, %v2223
      %v2225 = vpop.f32.mrf.mxu0
      %v2226 = vadd.f32 0.0, %v2225
      %2227 = vdwg.mxu0
      %v2228 = vadd.f32 %v2166, %v2224
      %v2229 = vadd.f32 %v2167, %v2226
      %s2230 = scalar_lea.vmem %s4, 32
      %v2231 = vld [vmem:[%s2230] sm:$0xf]
      %v2232 = vld [vmem:[%s2230 + $0x4] sm:$0xf]
      %s2233 = scalar_lea.vmem %s5, 64
      %v2234 = vld [vmem:[%s2233] sm:$0xf]
      %v2235 = vld [vmem:[%s2233 + $0x4] sm:$0xf]
      %v2236 = vld [vmem:[%s2233 + $0x8] sm:$0xf]
      %v2237 = vld [vmem:[%s2233 + $0xc] sm:$0xf]
      %v2240 = vunpack.c.l.b16 %v2231
      %v2241 = vunpack.c.l.b16 %v2232
      %v2242 = vpack.c.b16 %v2241, %v2240
      %v2244 = vsel %vm1997, %v2242, 0
      %2246 = vmatpush.bf16.msra.mxu0 0
      %2247 = vmatpush.bf16.msra.mxu0 0
      %2248 = vmatpush.bf16.msra.mxu0 0
      %2249 = vmatpush.bf16.msra.mxu0 0
      %2250 = vmatpush.bf16.msra.mxu0 %v1985
      %2251 = vmatpush.bf16.msra.mxu0 %v1984
      %2252 = vmatpush.bf16.msra.mxu0 %v1983
      %2253 = vmatpush.bf16.msra.mxu0 %v1982
      %2254 = vmatmul.bf16.gmra.mxu0 %v2244
      %v2255 = vpop.f32.mrf.mxu0
      %v2256 = vadd.f32 0.0, %v2255
      %v2257 = vpop.f32.mrf.mxu0
      %v2258 = vadd.f32 0.0, %v2257
      %2259 = vdwg.mxu0
      %v2260 = vpack.c.bf16 %v2258, %v2256
      %v2265 = vunpack.c.l.b16 %v2234
      %v2266 = vunpack.c.l.b16 %v2235
      %v2267 = vunpack.c.l.b16 %v2236
      %v2268 = vunpack.c.l.b16 %v2237
      %v2269 = vpack.c.b16 %v2266, %v2265
      %v2270 = vpack.c.b16 %v2268, %v2267
      %v2274 = vsel %vm2059, %v2260, 0
      %2276 = vmatpush.bf16.msra.mxu0 0
      %2277 = vmatpush.bf16.msra.mxu0 0
      %2278 = vmatpush.bf16.msra.mxu0 0
      %2279 = vmatpush.bf16.msra.mxu0 0
      %2280 = vmatpush.bf16.msra.mxu0 0
      %2281 = vmatpush.bf16.msra.mxu0 0
      %2282 = vmatpush.bf16.msra.mxu0 %v2270
      %2283 = vmatpush.bf16.msra.mxu0 %v2269
      %2284 = vmatmul.bf16.gmra.mxu0 %v2274
      %v2285 = vpop.f32.mrf.mxu0
      %v2286 = vadd.f32 0.0, %v2285
      %v2287 = vpop.f32.mrf.mxu0
      %v2288 = vadd.f32 0.0, %v2287
      %2289 = vdwg.mxu0
      %v2290 = vadd.f32 %v2228, %v2286
      %v2291 = vadd.f32 %v2229, %v2288
      %s2292 = scalar_lea.vmem %s4, 40
      %v2293 = vld [vmem:[%s2292] sm:$0xf]
      %v2294 = vld [vmem:[%s2292 + $0x4] sm:$0xf]
      %s2295 = scalar_lea.vmem %s5, 80
      %v2296 = vld [vmem:[%s2295] sm:$0xf]
      %v2297 = vld [vmem:[%s2295 + $0x4] sm:$0xf]
      %v2298 = vld [vmem:[%s2295 + $0x8] sm:$0xf]
      %v2299 = vld [vmem:[%s2295 + $0xc] sm:$0xf]
      %v2302 = vunpack.c.l.b16 %v2293
      %v2303 = vunpack.c.l.b16 %v2294
      %v2304 = vpack.c.b16 %v2303, %v2302
      %v2306 = vsel %vm1997, %v2304, 0
      %2308 = vmatpush.bf16.msra.mxu0 0
      %2309 = vmatpush.bf16.msra.mxu0 0
      %2310 = vmatpush.bf16.msra.mxu0 0
      %2311 = vmatpush.bf16.msra.mxu0 0
      %2312 = vmatpush.bf16.msra.mxu0 %v1985
      %2313 = vmatpush.bf16.msra.mxu0 %v1984
      %2314 = vmatpush.bf16.msra.mxu0 %v1983
      %2315 = vmatpush.bf16.msra.mxu0 %v1982
      %2316 = vmatmul.bf16.gmra.mxu0 %v2306
      %v2317 = vpop.f32.mrf.mxu0
      %v2318 = vadd.f32 0.0, %v2317
      %v2319 = vpop.f32.mrf.mxu0
      %v2320 = vadd.f32 0.0, %v2319
      %2321 = vdwg.mxu0
      %v2322 = vpack.c.bf16 %v2320, %v2318
      %v2327 = vunpack.c.l.b16 %v2296
      %v2328 = vunpack.c.l.b16 %v2297
      %v2329 = vunpack.c.l.b16 %v2298
      %v2330 = vunpack.c.l.b16 %v2299
      %v2331 = vpack.c.b16 %v2328, %v2327
      %v2332 = vpack.c.b16 %v2330, %v2329
      %v2336 = vsel %vm2059, %v2322, 0
      %2338 = vmatpush.bf16.msra.mxu0 0
      %2339 = vmatpush.bf16.msra.mxu0 0
      %2340 = vmatpush.bf16.msra.mxu0 0
      %2341 = vmatpush.bf16.msra.mxu0 0
      %2342 = vmatpush.bf16.msra.mxu0 0
      %2343 = vmatpush.bf16.msra.mxu0 0
      %2344 = vmatpush.bf16.msra.mxu0 %v2332
      %2345 = vmatpush.bf16.msra.mxu0 %v2331
      %2346 = vmatmul.bf16.gmra.mxu0 %v2336
      %v2347 = vpop.f32.mrf.mxu0
      %v2348 = vadd.f32 0.0, %v2347
      %v2349 = vpop.f32.mrf.mxu0
      %v2350 = vadd.f32 0.0, %v2349
      %2351 = vdwg.mxu0
      %v2352 = vadd.f32 %v2290, %v2348
      %v2353 = vadd.f32 %v2291, %v2350
      %s2354 = scalar_lea.vmem %s4, 48
      %v2355 = vld [vmem:[%s2354] sm:$0xf]
      %v2356 = vld [vmem:[%s2354 + $0x4] sm:$0xf]
      %s2357 = scalar_lea.vmem %s5, 96
      %v2358 = vld [vmem:[%s2357] sm:$0xf]
      %v2359 = vld [vmem:[%s2357 + $0x4] sm:$0xf]
      %v2360 = vld [vmem:[%s2357 + $0x8] sm:$0xf]
      %v2361 = vld [vmem:[%s2357 + $0xc] sm:$0xf]
      %v2364 = vunpack.c.l.b16 %v2355
      %v2365 = vunpack.c.l.b16 %v2356
      %v2366 = vpack.c.b16 %v2365, %v2364
      %v2368 = vsel %vm1997, %v2366, 0
      %2370 = vmatpush.bf16.msra.mxu0 0
      %2371 = vmatpush.bf16.msra.mxu0 0
      %2372 = vmatpush.bf16.msra.mxu0 0
      %2373 = vmatpush.bf16.msra.mxu0 0
      %2374 = vmatpush.bf16.msra.mxu0 %v1985
      %2375 = vmatpush.bf16.msra.mxu0 %v1984
      %2376 = vmatpush.bf16.msra.mxu0 %v1983
      %2377 = vmatpush.bf16.msra.mxu0 %v1982
      %2378 = vmatmul.bf16.gmra.mxu0 %v2368
      %v2379 = vpop.f32.mrf.mxu0
      %v2380 = vadd.f32 0.0, %v2379
      %v2381 = vpop.f32.mrf.mxu0
      %v2382 = vadd.f32 0.0, %v2381
      %2383 = vdwg.mxu0
      %v2384 = vpack.c.bf16 %v2382, %v2380
      %v2389 = vunpack.c.l.b16 %v2358
      %v2390 = vunpack.c.l.b16 %v2359
      %v2391 = vunpack.c.l.b16 %v2360
      %v2392 = vunpack.c.l.b16 %v2361
      %v2393 = vpack.c.b16 %v2390, %v2389
      %v2394 = vpack.c.b16 %v2392, %v2391
      %v2398 = vsel %vm2059, %v2384, 0
      %2400 = vmatpush.bf16.msra.mxu0 0
      %2401 = vmatpush.bf16.msra.mxu0 0
      %2402 = vmatpush.bf16.msra.mxu0 0
      %2403 = vmatpush.bf16.msra.mxu0 0
      %2404 = vmatpush.bf16.msra.mxu0 0
      %2405 = vmatpush.bf16.msra.mxu0 0
      %2406 = vmatpush.bf16.msra.mxu0 %v2394
      %2407 = vmatpush.bf16.msra.mxu0 %v2393
      %2408 = vmatmul.bf16.gmra.mxu0 %v2398
      %v2409 = vpop.f32.mrf.mxu0
      %v2410 = vadd.f32 0.0, %v2409
      %v2411 = vpop.f32.mrf.mxu0
      %v2412 = vadd.f32 0.0, %v2411
      %2413 = vdwg.mxu0
      %v2414 = vadd.f32 %v2352, %v2410
      %v2415 = vadd.f32 %v2353, %v2412
      %s2416 = scalar_lea.vmem %s4, 56
      %v2417 = vld [vmem:[%s2416] sm:$0xf]
      %v2418 = vld [vmem:[%s2416 + $0x4] sm:$0xf]
      %s2419 = scalar_lea.vmem %s5, 112
      %v2420 = vld [vmem:[%s2419] sm:$0xf]
      %v2421 = vld [vmem:[%s2419 + $0x4] sm:$0xf]
      %v2422 = vld [vmem:[%s2419 + $0x8] sm:$0xf]
      %v2423 = vld [vmem:[%s2419 + $0xc] sm:$0xf]
      %v2426 = vunpack.c.l.b16 %v2417
      %v2427 = vunpack.c.l.b16 %v2418
      %v2428 = vpack.c.b16 %v2427, %v2426
      %v2430 = vsel %vm1997, %v2428, 0
      %2432 = vmatpush.bf16.msra.mxu0 0
      %2433 = vmatpush.bf16.msra.mxu0 0
      %2434 = vmatpush.bf16.msra.mxu0 0
      %2435 = vmatpush.bf16.msra.mxu0 0
      %2436 = vmatpush.bf16.msra.mxu0 %v1985
      %2437 = vmatpush.bf16.msra.mxu0 %v1984
      %2438 = vmatpush.bf16.msra.mxu0 %v1983
      %2439 = vmatpush.bf16.msra.mxu0 %v1982
      %2440 = vmatmul.bf16.gmra.mxu0 %v2430
      %v2441 = vpop.f32.mrf.mxu0
      %v2442 = vadd.f32 0.0, %v2441
      %v2443 = vpop.f32.mrf.mxu0
      %v2444 = vadd.f32 0.0, %v2443
      %2445 = vdwg.mxu0
      %v2446 = vpack.c.bf16 %v2444, %v2442
      %v2451 = vunpack.c.l.b16 %v2420
      %v2452 = vunpack.c.l.b16 %v2421
      %v2453 = vunpack.c.l.b16 %v2422
      %v2454 = vunpack.c.l.b16 %v2423
      %v2455 = vpack.c.b16 %v2452, %v2451
      %v2456 = vpack.c.b16 %v2454, %v2453
      %v2460 = vsel %vm2059, %v2446, 0
      %2462 = vmatpush.bf16.msra.mxu0 0
      %2463 = vmatpush.bf16.msra.mxu0 0
      %2464 = vmatpush.bf16.msra.mxu0 0
      %2465 = vmatpush.bf16.msra.mxu0 0
      %2466 = vmatpush.bf16.msra.mxu0 0
      %2467 = vmatpush.bf16.msra.mxu0 0
      %2468 = vmatpush.bf16.msra.mxu0 %v2456
      %2469 = vmatpush.bf16.msra.mxu0 %v2455
      %2470 = vmatmul.bf16.gmra.mxu0 %v2460
      %v2471 = vpop.f32.mrf.mxu0
      %v2472 = vadd.f32 0.0, %v2471
      %v2473 = vpop.f32.mrf.mxu0
      %v2474 = vadd.f32 0.0, %v2473
      %2475 = vdwg.mxu0
      %v2476 = vadd.f32 %v2414, %v2472
      %v2477 = vadd.f32 %v2415, %v2474
      %s2478 = scalar_lea.vmem %s4, 64
      %v2479 = vld [vmem:[%s2478] sm:$0xf]
      %v2480 = vld [vmem:[%s2478 + $0x4] sm:$0xf]
      %s2481 = scalar_lea.vmem %s5, 128
      %v2482 = vld [vmem:[%s2481] sm:$0xf]
      %v2483 = vld [vmem:[%s2481 + $0x4] sm:$0xf]
      %v2484 = vld [vmem:[%s2481 + $0x8] sm:$0xf]
      %v2485 = vld [vmem:[%s2481 + $0xc] sm:$0xf]
      %v2488 = vunpack.c.l.b16 %v2479
      %v2489 = vunpack.c.l.b16 %v2480
      %v2490 = vpack.c.b16 %v2489, %v2488
      %v2492 = vsel %vm1997, %v2490, 0
      %2494 = vmatpush.bf16.msra.mxu0 0
      %2495 = vmatpush.bf16.msra.mxu0 0
      %2496 = vmatpush.bf16.msra.mxu0 0
      %2497 = vmatpush.bf16.msra.mxu0 0
      %2498 = vmatpush.bf16.msra.mxu0 %v1985
      %2499 = vmatpush.bf16.msra.mxu0 %v1984
      %2500 = vmatpush.bf16.msra.mxu0 %v1983
      %2501 = vmatpush.bf16.msra.mxu0 %v1982
      %2502 = vmatmul.bf16.gmra.mxu0 %v2492
      %v2503 = vpop.f32.mrf.mxu0
      %v2504 = vadd.f32 0.0, %v2503
      %v2505 = vpop.f32.mrf.mxu0
      %v2506 = vadd.f32 0.0, %v2505
      %2507 = vdwg.mxu0
      %v2508 = vpack.c.bf16 %v2506, %v2504
      %v2513 = vunpack.c.l.b16 %v2482
      %v2514 = vunpack.c.l.b16 %v2483
      %v2515 = vunpack.c.l.b16 %v2484
      %v2516 = vunpack.c.l.b16 %v2485
      %v2517 = vpack.c.b16 %v2514, %v2513
      %v2518 = vpack.c.b16 %v2516, %v2515
      %v2522 = vsel %vm2059, %v2508, 0
      %2524 = vmatpush.bf16.msra.mxu0 0
      %2525 = vmatpush.bf16.msra.mxu0 0
      %2526 = vmatpush.bf16.msra.mxu0 0
      %2527 = vmatpush.bf16.msra.mxu0 0
      %2528 = vmatpush.bf16.msra.mxu0 0
      %2529 = vmatpush.bf16.msra.mxu0 0
      %2530 = vmatpush.bf16.msra.mxu0 %v2518
      %2531 = vmatpush.bf16.msra.mxu0 %v2517
      %2532 = vmatmul.bf16.gmra.mxu0 %v2522
      %v2533 = vpop.f32.mrf.mxu0
      %v2534 = vadd.f32 0.0, %v2533
      %v2535 = vpop.f32.mrf.mxu0
      %v2536 = vadd.f32 0.0, %v2535
      %2537 = vdwg.mxu0
      %v2538 = vadd.f32 %v2476, %v2534
      %v2539 = vadd.f32 %v2477, %v2536
      %v2540 = vld [vmem:[%s6] sm:$0x1]
      %v2542 = vperm.slane %v2540, 0
      %v2544 = vadd.f32 %v2538, %v2542
      %v2545 = vadd.f32 %v2539, %v2542
      %v2546 = vmax.f32 %v2544, 0.0
      %v2547 = vmax.f32 %v2545, 0.0
      %v2548 = vpack.c.bf16 %v2547, %v2546
      %v2549 = vld [vmem:[%s7] sm:$0xf]
      %v2550 = vld [vmem:[%s7 + $0x4] sm:$0xf]
      %v2551 = vld [vmem:[%s7 + $0x8] sm:$0xf]
      %v2552 = vld [vmem:[%s7 + $0xc] sm:$0xf]
      %v2553 = vld [vmem:[%s7 + $0x10] sm:$0xf]
      %v2554 = vld [vmem:[%s7 + $0x14] sm:$0xf]
      %v2555 = vld [vmem:[%s7 + $0x18] sm:$0xf]
      %v2556 = vld [vmem:[%s7 + $0x1c] sm:$0xf]
      %v2557 = vld [vmem:[%s8] sm:$0xf]
      %v2558 = vld [vmem:[%s8 + $0x4] sm:$0xf]
      %v2559 = vld [vmem:[%s8 + $0x8] sm:$0xf]
      %v2560 = vld [vmem:[%s8 + $0xc] sm:$0xf]
      %v2561 = vld [vmem:[%s8 + $0x10] sm:$0xf]
      %v2562 = vld [vmem:[%s8 + $0x14] sm:$0xf]
      %v2563 = vld [vmem:[%s8 + $0x18] sm:$0xf]
      %v2564 = vld [vmem:[%s8 + $0x1c] sm:$0xf]
      %v2573 = vunpack.c.l.b16 %v2557
      %v2574 = vunpack.c.l.b16 %v2558
      %v2575 = vunpack.c.l.b16 %v2559
      %v2576 = vunpack.c.l.b16 %v2560
      %v2577 = vunpack.c.l.b16 %v2561
      %v2578 = vunpack.c.l.b16 %v2562
      %v2579 = vunpack.c.l.b16 %v2563
      %v2580 = vunpack.c.l.b16 %v2564
      %v2581 = vpack.c.b16 %v2574, %v2573
      %v2582 = vpack.c.b16 %v2576, %v2575
      %v2583 = vpack.c.b16 %v2578, %v2577
      %v2584 = vpack.c.b16 %v2580, %v2579
      %v2590 = vsel %vm1997, %v2548, 0
      %2592 = vmatpush.bf16.msra.mxu0 0
      %2593 = vmatpush.bf16.msra.mxu0 0
      %2594 = vmatpush.bf16.msra.mxu0 0
      %2595 = vmatpush.bf16.msra.mxu0 0
      %2596 = vmatpush.bf16.msra.mxu0 %v2584
      %2597 = vmatpush.bf16.msra.mxu0 %v2583
      %2598 = vmatpush.bf16.msra.mxu0 %v2582
      %2599 = vmatpush.bf16.msra.mxu0 %v2581
      %2600 = vmatmul.bf16.gmra.mxu0 %v2590
      %v2601 = vpop.f32.mrf.mxu0
      %v2602 = vadd.f32 0.0, %v2601
      %v2603 = vpop.f32.mrf.mxu0
      %v2604 = vadd.f32 0.0, %v2603
      %2605 = vdwg.mxu0
      %v2606 = vpack.c.bf16 %v2604, %v2602
      %s2607 = scalar_lea.vmem %s7, 32
      %v2608 = vld [vmem:[%s2607] sm:$0xf]
      %v2609 = vld [vmem:[%s2607 + $0x4] sm:$0xf]
      %v2610 = vld [vmem:[%s2607 + $0x8] sm:$0xf]
      %v2611 = vld [vmem:[%s2607 + $0xc] sm:$0xf]
      %v2612 = vld [vmem:[%s2607 + $0x10] sm:$0xf]
      %v2613 = vld [vmem:[%s2607 + $0x14] sm:$0xf]
      %v2614 = vld [vmem:[%s2607 + $0x18] sm:$0xf]
      %v2615 = vld [vmem:[%s2607 + $0x1c] sm:$0xf]
      %s2616 = scalar_lea.vmem %s8, 32
      %v2617 = vld [vmem:[%s2616] sm:$0xf]
      %v2618 = vld [vmem:[%s2616 + $0x4] sm:$0xf]
      %v2619 = vld [vmem:[%s2616 + $0x8] sm:$0xf]
      %v2620 = vld [vmem:[%s2616 + $0xc] sm:$0xf]
      %v2621 = vld [vmem:[%s2616 + $0x10] sm:$0xf]
      %v2622 = vld [vmem:[%s2616 + $0x14] sm:$0xf]
      %v2623 = vld [vmem:[%s2616 + $0x18] sm:$0xf]
      %v2624 = vld [vmem:[%s2616 + $0x1c] sm:$0xf]
      %v2633 = vunpack.c.l.b16 %v2617
      %v2634 = vunpack.c.l.b16 %v2618
      %v2635 = vunpack.c.l.b16 %v2619
      %v2636 = vunpack.c.l.b16 %v2620
      %v2637 = vunpack.c.l.b16 %v2621
      %v2638 = vunpack.c.l.b16 %v2622
      %v2639 = vunpack.c.l.b16 %v2623
      %v2640 = vunpack.c.l.b16 %v2624
      %v2641 = vpack.c.b16 %v2634, %v2633
      %v2642 = vpack.c.b16 %v2636, %v2635
      %v2643 = vpack.c.b16 %v2638, %v2637
      %v2644 = vpack.c.b16 %v2640, %v2639
      %2649 = vmatpush.bf16.msra.mxu0 0
      %2650 = vmatpush.bf16.msra.mxu0 0
      %2651 = vmatpush.bf16.msra.mxu0 0
      %2652 = vmatpush.bf16.msra.mxu0 0
      %2653 = vmatpush.bf16.msra.mxu0 %v2644
      %2654 = vmatpush.bf16.msra.mxu0 %v2643
      %2655 = vmatpush.bf16.msra.mxu0 %v2642
      %2656 = vmatpush.bf16.msra.mxu0 %v2641
      %2657 = vmatmul.bf16.gmra.mxu0 %v2590
      %v2658 = vpop.f32.mrf.mxu0
      %v2659 = vadd.f32 0.0, %v2658
      %v2660 = vpop.f32.mrf.mxu0
      %v2661 = vadd.f32 0.0, %v2660
      %2662 = vdwg.mxu0
      %v2663 = vpack.c.bf16 %v2661, %v2659
      %v2672 = vunpack.c.l.b16 %v2608
      %v2673 = vunpack.c.l.b16 %v2609
      %v2674 = vunpack.c.l.b16 %v2610
      %v2675 = vunpack.c.l.b16 %v2611
      %v2676 = vunpack.c.l.b16 %v2612
      %v2677 = vunpack.c.l.b16 %v2613
      %v2678 = vunpack.c.l.b16 %v2614
      %v2679 = vunpack.c.l.b16 %v2615
      %v2680 = vpack.c.b16 %v2673, %v2672
      %v2681 = vpack.c.b16 %v2675, %v2674
      %v2682 = vpack.c.b16 %v2677, %v2676
      %v2683 = vpack.c.b16 %v2679, %v2678
      %vm2684 = vcmask 130048
      %v2686 = vsel %vm2684, %v2680, 0
      %v2689 = vsel %vm2684, %v2681, 0
      %v2692 = vsel %vm2684, %v2682, 0
      %v2695 = vsel %vm2684, %v2683, 0
      %2697 = vmatpush.bf16.msra.mxu0 0
      %2698 = vmatpush.bf16.msra.mxu0 0
      %2699 = vmatpush.bf16.msra.mxu0 0
      %2700 = vmatpush.bf16.msra.mxu0 0
      %2701 = vmatpush.bf16.msra.mxu0 0
      %2702 = vmatpush.bf16.msra.mxu0 0
      %2703 = vmatpush.bf16.msra.mxu0 0
      %2704 = vmatpush.bf16.msra.mxu0 %v2663
      %2705 = vmatmul.bf16.gmra.mxu0 %v2686
      %v2706 = vpop.f32.mrf.mxu0
      %v2707 = vadd.f32 0.0, %v2706
      %v2708 = vpop.f32.mrf.mxu0
      %v2709 = vadd.f32 0.0, %v2708
      %2710 = vmatmul.bf16.gmra.mxu0 %v2689
      %v2711 = vpop.f32.mrf.mxu0
      %v2712 = vadd.f32 0.0, %v2711
      %v2713 = vpop.f32.mrf.mxu0
      %v2714 = vadd.f32 0.0, %v2713
      %2715 = vmatmul.bf16.gmra.mxu0 %v2692
      %v2716 = vpop.f32.mrf.mxu0
      %v2717 = vadd.f32 0.0, %v2716
      %v2718 = vpop.f32.mrf.mxu0
      %v2719 = vadd.f32 0.0, %v2718
      %2720 = vmatmul.bf16.gmra.mxu0 %v2695
      %v2721 = vpop.f32.mrf.mxu0
      %v2722 = vadd.f32 0.0, %v2721
      %v2723 = vpop.f32.mrf.mxu0
      %v2724 = vadd.f32 0.0, %v2723
      %2725 = vdwg.mxu0
      %v2734 = vunpack.c.l.b16 %v2549
      %v2735 = vunpack.c.l.b16 %v2550
      %v2736 = vunpack.c.l.b16 %v2551
      %v2737 = vunpack.c.l.b16 %v2552
      %v2738 = vunpack.c.l.b16 %v2553
      %v2739 = vunpack.c.l.b16 %v2554
      %v2740 = vunpack.c.l.b16 %v2555
      %v2741 = vunpack.c.l.b16 %v2556
      %v2742 = vpack.c.b16 %v2735, %v2734
      %v2743 = vpack.c.b16 %v2737, %v2736
      %v2744 = vpack.c.b16 %v2739, %v2738
      %v2745 = vpack.c.b16 %v2741, %v2740
      %v2747 = vsel %vm2684, %v2742, 0
      %v2750 = vsel %vm2684, %v2743, 0
      %v2753 = vsel %vm2684, %v2744, 0
      %v2756 = vsel %vm2684, %v2745, 0
      %2758 = vmatpush.bf16.msra.mxu0 0
      %2759 = vmatpush.bf16.msra.mxu0 0
      %2760 = vmatpush.bf16.msra.mxu0 0
      %2761 = vmatpush.bf16.msra.mxu0 0
      %2762 = vmatpush.bf16.msra.mxu0 0
      %2763 = vmatpush.bf16.msra.mxu0 0
      %2764 = vmatpush.bf16.msra.mxu0 0
      %2765 = vmatpush.bf16.msra.mxu0 %v2606
      %2766 = vmatmul.bf16.gmra.mxu0 %v2747
      %v2767 = vpop.f32.mrf.mxu0
      %v2768 = vadd.f32 %v2707, %v2767
      %v2769 = vpop.f32.mrf.mxu0
      %v2770 = vadd.f32 %v2709, %v2769
      %2771 = vmatmul.bf16.gmra.mxu0 %v2750
      %v2772 = vpop.f32.mrf.mxu0
      %v2773 = vadd.f32 %v2712, %v2772
      %v2774 = vpop.f32.mrf.mxu0
      %v2775 = vadd.f32 %v2714, %v2774
      %2776 = vmatmul.bf16.gmra.mxu0 %v2753
      %v2777 = vpop.f32.mrf.mxu0
      %v2778 = vadd.f32 %v2717, %v2777
      %v2779 = vpop.f32.mrf.mxu0
      %v2780 = vadd.f32 %v2719, %v2779
      %2781 = vmatmul.bf16.gmra.mxu0 %v2756
      %v2782 = vpop.f32.mrf.mxu0
      %v2783 = vadd.f32 %v2722, %v2782
      %v2784 = vpop.f32.mrf.mxu0
      %v2785 = vadd.f32 %v2724, %v2784
      %2786 = vdwg.mxu0
      %s2787 = scalar_lea.vmem %s7, 64
      %v2788 = vld [vmem:[%s2787] sm:$0xf]
      %v2789 = vld [vmem:[%s2787 + $0x4] sm:$0xf]
      %v2790 = vld [vmem:[%s2787 + $0x8] sm:$0xf]
      %v2791 = vld [vmem:[%s2787 + $0xc] sm:$0xf]
      %v2792 = vld [vmem:[%s2787 + $0x10] sm:$0xf]
      %v2793 = vld [vmem:[%s2787 + $0x14] sm:$0xf]
      %v2794 = vld [vmem:[%s2787 + $0x18] sm:$0xf]
      %v2795 = vld [vmem:[%s2787 + $0x1c] sm:$0xf]
      %s2796 = scalar_lea.vmem %s8, 64
      %v2797 = vld [vmem:[%s2796] sm:$0xf]
      %v2798 = vld [vmem:[%s2796 + $0x4] sm:$0xf]
      %v2799 = vld [vmem:[%s2796 + $0x8] sm:$0xf]
      %v2800 = vld [vmem:[%s2796 + $0xc] sm:$0xf]
      %v2801 = vld [vmem:[%s2796 + $0x10] sm:$0xf]
      %v2802 = vld [vmem:[%s2796 + $0x14] sm:$0xf]
      %v2803 = vld [vmem:[%s2796 + $0x18] sm:$0xf]
      %v2804 = vld [vmem:[%s2796 + $0x1c] sm:$0xf]
      %v2813 = vunpack.c.l.b16 %v2797
      %v2814 = vunpack.c.l.b16 %v2798
      %v2815 = vunpack.c.l.b16 %v2799
      %v2816 = vunpack.c.l.b16 %v2800
      %v2817 = vunpack.c.l.b16 %v2801
      %v2818 = vunpack.c.l.b16 %v2802
      %v2819 = vunpack.c.l.b16 %v2803
      %v2820 = vunpack.c.l.b16 %v2804
      %v2821 = vpack.c.b16 %v2814, %v2813
      %v2822 = vpack.c.b16 %v2816, %v2815
      %v2823 = vpack.c.b16 %v2818, %v2817
      %v2824 = vpack.c.b16 %v2820, %v2819
      %2829 = vmatpush.bf16.msra.mxu0 0
      %2830 = vmatpush.bf16.msra.mxu0 0
      %2831 = vmatpush.bf16.msra.mxu0 0
      %2832 = vmatpush.bf16.msra.mxu0 0
      %2833 = vmatpush.bf16.msra.mxu0 %v2824
      %2834 = vmatpush.bf16.msra.mxu0 %v2823
      %2835 = vmatpush.bf16.msra.mxu0 %v2822
      %2836 = vmatpush.bf16.msra.mxu0 %v2821
      %2837 = vmatmul.bf16.gmra.mxu0 %v2590
      %v2838 = vpop.f32.mrf.mxu0
      %v2839 = vadd.f32 0.0, %v2838
      %v2840 = vpop.f32.mrf.mxu0
      %v2841 = vadd.f32 0.0, %v2840
      %2842 = vdwg.mxu0
      %v2843 = vpack.c.bf16 %v2841, %v2839
      %v2852 = vunpack.c.l.b16 %v2788
      %v2853 = vunpack.c.l.b16 %v2789
      %v2854 = vunpack.c.l.b16 %v2790
      %v2855 = vunpack.c.l.b16 %v2791
      %v2856 = vunpack.c.l.b16 %v2792
      %v2857 = vunpack.c.l.b16 %v2793
      %v2858 = vunpack.c.l.b16 %v2794
      %v2859 = vunpack.c.l.b16 %v2795
      %v2860 = vpack.c.b16 %v2853, %v2852
      %v2861 = vpack.c.b16 %v2855, %v2854
      %v2862 = vpack.c.b16 %v2857, %v2856
      %v2863 = vpack.c.b16 %v2859, %v2858
      %v2865 = vsel %vm2684, %v2860, 0
      %v2868 = vsel %vm2684, %v2861, 0
      %v2871 = vsel %vm2684, %v2862, 0
      %v2874 = vsel %vm2684, %v2863, 0
      %2876 = vmatpush.bf16.msra.mxu0 0
      %2877 = vmatpush.bf16.msra.mxu0 0
      %2878 = vmatpush.bf16.msra.mxu0 0
      %2879 = vmatpush.bf16.msra.mxu0 0
      %2880 = vmatpush.bf16.msra.mxu0 0
      %2881 = vmatpush.bf16.msra.mxu0 0
      %2882 = vmatpush.bf16.msra.mxu0 0
      %2883 = vmatpush.bf16.msra.mxu0 %v2843
      %2884 = vmatmul.bf16.gmra.mxu0 %v2865
      %v2885 = vpop.f32.mrf.mxu0
      %v2886 = vadd.f32 0.0, %v2885
      %v2887 = vpop.f32.mrf.mxu0
      %v2888 = vadd.f32 0.0, %v2887
      %2889 = vmatmul.bf16.gmra.mxu0 %v2868
      %v2890 = vpop.f32.mrf.mxu0
      %v2891 = vadd.f32 0.0, %v2890
      %v2892 = vpop.f32.mrf.mxu0
      %v2893 = vadd.f32 0.0, %v2892
      %2894 = vmatmul.bf16.gmra.mxu0 %v2871
      %v2895 = vpop.f32.mrf.mxu0
      %v2896 = vadd.f32 0.0, %v2895
      %v2897 = vpop.f32.mrf.mxu0
      %v2898 = vadd.f32 0.0, %v2897
      %2899 = vmatmul.bf16.gmra.mxu0 %v2874
      %v2900 = vpop.f32.mrf.mxu0
      %v2901 = vadd.f32 0.0, %v2900
      %v2902 = vpop.f32.mrf.mxu0
      %v2903 = vadd.f32 0.0, %v2902
      %2904 = vdwg.mxu0
      %v2905 = vadd.f32 %v2768, %v2886
      %v2906 = vadd.f32 %v2770, %v2888
      %v2907 = vadd.f32 %v2773, %v2891
      %v2908 = vadd.f32 %v2775, %v2893
      %v2909 = vadd.f32 %v2778, %v2896
      %v2910 = vadd.f32 %v2780, %v2898
      %v2911 = vadd.f32 %v2783, %v2901
      %v2912 = vadd.f32 %v2785, %v2903
      %s2913 = scalar_lea.vmem %s7, 96
      %v2914 = vld [vmem:[%s2913] sm:$0xf]
      %v2915 = vld [vmem:[%s2913 + $0x4] sm:$0xf]
      %v2916 = vld [vmem:[%s2913 + $0x8] sm:$0xf]
      %v2917 = vld [vmem:[%s2913 + $0xc] sm:$0xf]
      %v2918 = vld [vmem:[%s2913 + $0x10] sm:$0xf]
      %v2919 = vld [vmem:[%s2913 + $0x14] sm:$0xf]
      %v2920 = vld [vmem:[%s2913 + $0x18] sm:$0xf]
      %v2921 = vld [vmem:[%s2913 + $0x1c] sm:$0xf]
      %s2922 = scalar_lea.vmem %s8, 96
      %v2923 = vld [vmem:[%s2922] sm:$0xf]
      %v2924 = vld [vmem:[%s2922 + $0x4] sm:$0xf]
      %v2925 = vld [vmem:[%s2922 + $0x8] sm:$0xf]
      %v2926 = vld [vmem:[%s2922 + $0xc] sm:$0xf]
      %v2927 = vld [vmem:[%s2922 + $0x10] sm:$0xf]
      %v2928 = vld [vmem:[%s2922 + $0x14] sm:$0xf]
      %v2929 = vld [vmem:[%s2922 + $0x18] sm:$0xf]
      %v2930 = vld [vmem:[%s2922 + $0x1c] sm:$0xf]
      %v2939 = vunpack.c.l.b16 %v2923
      %v2940 = vunpack.c.l.b16 %v2924
      %v2941 = vunpack.c.l.b16 %v2925
      %v2942 = vunpack.c.l.b16 %v2926
      %v2943 = vunpack.c.l.b16 %v2927
      %v2944 = vunpack.c.l.b16 %v2928
      %v2945 = vunpack.c.l.b16 %v2929
      %v2946 = vunpack.c.l.b16 %v2930
      %v2947 = vpack.c.b16 %v2940, %v2939
      %v2948 = vpack.c.b16 %v2942, %v2941
      %v2949 = vpack.c.b16 %v2944, %v2943
      %v2950 = vpack.c.b16 %v2946, %v2945
      %2955 = vmatpush.bf16.msra.mxu0 0
      %2956 = vmatpush.bf16.msra.mxu0 0
      %2957 = vmatpush.bf16.msra.mxu0 0
      %2958 = vmatpush.bf16.msra.mxu0 0
      %2959 = vmatpush.bf16.msra.mxu0 %v2950
      %2960 = vmatpush.bf16.msra.mxu0 %v2949
      %2961 = vmatpush.bf16.msra.mxu0 %v2948
      %2962 = vmatpush.bf16.msra.mxu0 %v2947
      %2963 = vmatmul.bf16.gmra.mxu0 %v2590
      %v2964 = vpop.f32.mrf.mxu0
      %v2965 = vadd.f32 0.0, %v2964
      %v2966 = vpop.f32.mrf.mxu0
      %v2967 = vadd.f32 0.0, %v2966
      %2968 = vdwg.mxu0
      %v2969 = vpack.c.bf16 %v2967, %v2965
      %v2978 = vunpack.c.l.b16 %v2914
      %v2979 = vunpack.c.l.b16 %v2915
      %v2980 = vunpack.c.l.b16 %v2916
      %v2981 = vunpack.c.l.b16 %v2917
      %v2982 = vunpack.c.l.b16 %v2918
      %v2983 = vunpack.c.l.b16 %v2919
      %v2984 = vunpack.c.l.b16 %v2920
      %v2985 = vunpack.c.l.b16 %v2921
      %v2986 = vpack.c.b16 %v2979, %v2978
      %v2987 = vpack.c.b16 %v2981, %v2980
      %v2988 = vpack.c.b16 %v2983, %v2982
      %v2989 = vpack.c.b16 %v2985, %v2984
      %v2991 = vsel %vm2684, %v2986, 0
      %v2994 = vsel %vm2684, %v2987, 0
      %v2997 = vsel %vm2684, %v2988, 0
      %v3000 = vsel %vm2684, %v2989, 0
      %3002 = vmatpush.bf16.msra.mxu0 0
      %3003 = vmatpush.bf16.msra.mxu0 0
      %3004 = vmatpush.bf16.msra.mxu0 0
      %3005 = vmatpush.bf16.msra.mxu0 0
      %3006 = vmatpush.bf16.msra.mxu0 0
      %3007 = vmatpush.bf16.msra.mxu0 0
      %3008 = vmatpush.bf16.msra.mxu0 0
      %3009 = vmatpush.bf16.msra.mxu0 %v2969
      %3010 = vmatmul.bf16.gmra.mxu0 %v2991
      %v3011 = vpop.f32.mrf.mxu0
      %v3012 = vadd.f32 0.0, %v3011
      %v3013 = vpop.f32.mrf.mxu0
      %v3014 = vadd.f32 0.0, %v3013
      %3015 = vmatmul.bf16.gmra.mxu0 %v2994
      %v3016 = vpop.f32.mrf.mxu0
      %v3017 = vadd.f32 0.0, %v3016
      %v3018 = vpop.f32.mrf.mxu0
      %v3019 = vadd.f32 0.0, %v3018
      %3020 = vmatmul.bf16.gmra.mxu0 %v2997
      %v3021 = vpop.f32.mrf.mxu0
      %v3022 = vadd.f32 0.0, %v3021
      %v3023 = vpop.f32.mrf.mxu0
      %v3024 = vadd.f32 0.0, %v3023
      %3025 = vmatmul.bf16.gmra.mxu0 %v3000
      %v3026 = vpop.f32.mrf.mxu0
      %v3027 = vadd.f32 0.0, %v3026
      %v3028 = vpop.f32.mrf.mxu0
      %v3029 = vadd.f32 0.0, %v3028
      %3030 = vdwg.mxu0
      %v3031 = vadd.f32 %v2905, %v3012
      %v3032 = vadd.f32 %v2906, %v3014
      %v3033 = vadd.f32 %v2907, %v3017
      %v3034 = vadd.f32 %v2908, %v3019
      %v3035 = vadd.f32 %v2909, %v3022
      %v3036 = vadd.f32 %v2910, %v3024
      %v3037 = vadd.f32 %v2911, %v3027
      %v3038 = vadd.f32 %v2912, %v3029
      %s3039 = scalar_lea.vmem %s7, 128
      %v3040 = vld [vmem:[%s3039] sm:$0xf]
      %v3041 = vld [vmem:[%s3039 + $0x4] sm:$0xf]
      %v3042 = vld [vmem:[%s3039 + $0x8] sm:$0xf]
      %v3043 = vld [vmem:[%s3039 + $0xc] sm:$0xf]
      %v3044 = vld [vmem:[%s3039 + $0x10] sm:$0xf]
      %v3045 = vld [vmem:[%s3039 + $0x14] sm:$0xf]
      %v3046 = vld [vmem:[%s3039 + $0x18] sm:$0xf]
      %v3047 = vld [vmem:[%s3039 + $0x1c] sm:$0xf]
      %s3048 = scalar_lea.vmem %s8, 128
      %v3049 = vld [vmem:[%s3048] sm:$0xf]
      %v3050 = vld [vmem:[%s3048 + $0x4] sm:$0xf]
      %v3051 = vld [vmem:[%s3048 + $0x8] sm:$0xf]
      %v3052 = vld [vmem:[%s3048 + $0xc] sm:$0xf]
      %v3053 = vld [vmem:[%s3048 + $0x10] sm:$0xf]
      %v3054 = vld [vmem:[%s3048 + $0x14] sm:$0xf]
      %v3055 = vld [vmem:[%s3048 + $0x18] sm:$0xf]
      %v3056 = vld [vmem:[%s3048 + $0x1c] sm:$0xf]
      %v3065 = vunpack.c.l.b16 %v3049
      %v3066 = vunpack.c.l.b16 %v3050
      %v3067 = vunpack.c.l.b16 %v3051
      %v3068 = vunpack.c.l.b16 %v3052
      %v3069 = vunpack.c.l.b16 %v3053
      %v3070 = vunpack.c.l.b16 %v3054
      %v3071 = vunpack.c.l.b16 %v3055
      %v3072 = vunpack.c.l.b16 %v3056
      %v3073 = vpack.c.b16 %v3066, %v3065
      %v3074 = vpack.c.b16 %v3068, %v3067
      %v3075 = vpack.c.b16 %v3070, %v3069
      %v3076 = vpack.c.b16 %v3072, %v3071
      %3081 = vmatpush.bf16.msra.mxu0 0
      %3082 = vmatpush.bf16.msra.mxu0 0
      %3083 = vmatpush.bf16.msra.mxu0 0
      %3084 = vmatpush.bf16.msra.mxu0 0
      %3085 = vmatpush.bf16.msra.mxu0 %v3076
      %3086 = vmatpush.bf16.msra.mxu0 %v3075
      %3087 = vmatpush.bf16.msra.mxu0 %v3074
      %3088 = vmatpush.bf16.msra.mxu0 %v3073
      %3089 = vmatmul.bf16.gmra.mxu0 %v2590
      %v3090 = vpop.f32.mrf.mxu0
      %v3091 = vadd.f32 0.0, %v3090
      %v3092 = vpop.f32.mrf.mxu0
      %v3093 = vadd.f32 0.0, %v3092
      %3094 = vdwg.mxu0
      %v3095 = vpack.c.bf16 %v3093, %v3091
      %v3104 = vunpack.c.l.b16 %v3040
      %v3105 = vunpack.c.l.b16 %v3041
      %v3106 = vunpack.c.l.b16 %v3042
      %v3107 = vunpack.c.l.b16 %v3043
      %v3108 = vunpack.c.l.b16 %v3044
      %v3109 = vunpack.c.l.b16 %v3045
      %v3110 = vunpack.c.l.b16 %v3046
      %v3111 = vunpack.c.l.b16 %v3047
      %v3112 = vpack.c.b16 %v3105, %v3104
      %v3113 = vpack.c.b16 %v3107, %v3106
      %v3114 = vpack.c.b16 %v3109, %v3108
      %v3115 = vpack.c.b16 %v3111, %v3110
      %v3117 = vsel %vm2684, %v3112, 0
      %v3120 = vsel %vm2684, %v3113, 0
      %v3123 = vsel %vm2684, %v3114, 0
      %v3126 = vsel %vm2684, %v3115, 0
      %3128 = vmatpush.bf16.msra.mxu0 0
      %3129 = vmatpush.bf16.msra.mxu0 0
      %3130 = vmatpush.bf16.msra.mxu0 0
      %3131 = vmatpush.bf16.msra.mxu0 0
      %3132 = vmatpush.bf16.msra.mxu0 0
      %3133 = vmatpush.bf16.msra.mxu0 0
      %3134 = vmatpush.bf16.msra.mxu0 0
      %3135 = vmatpush.bf16.msra.mxu0 %v3095
      %3136 = vmatmul.bf16.gmra.mxu0 %v3117
      %v3137 = vpop.f32.mrf.mxu0
      %v3138 = vadd.f32 0.0, %v3137
      %v3139 = vpop.f32.mrf.mxu0
      %v3140 = vadd.f32 0.0, %v3139
      %3141 = vmatmul.bf16.gmra.mxu0 %v3120
      %v3142 = vpop.f32.mrf.mxu0
      %v3143 = vadd.f32 0.0, %v3142
      %v3144 = vpop.f32.mrf.mxu0
      %v3145 = vadd.f32 0.0, %v3144
      %3146 = vmatmul.bf16.gmra.mxu0 %v3123
      %v3147 = vpop.f32.mrf.mxu0
      %v3148 = vadd.f32 0.0, %v3147
      %v3149 = vpop.f32.mrf.mxu0
      %v3150 = vadd.f32 0.0, %v3149
      %3151 = vmatmul.bf16.gmra.mxu0 %v3126
      %v3152 = vpop.f32.mrf.mxu0
      %v3153 = vadd.f32 0.0, %v3152
      %v3154 = vpop.f32.mrf.mxu0
      %v3155 = vadd.f32 0.0, %v3154
      %3156 = vdwg.mxu0
      %v3157 = vadd.f32 %v3031, %v3138
      %v3158 = vadd.f32 %v3032, %v3140
      %v3159 = vadd.f32 %v3033, %v3143
      %v3160 = vadd.f32 %v3034, %v3145
      %v3161 = vadd.f32 %v3035, %v3148
      %v3162 = vadd.f32 %v3036, %v3150
      %v3163 = vadd.f32 %v3037, %v3153
      %v3164 = vadd.f32 %v3038, %v3155
      %s3165 = scalar_lea.vmem %s7, 160
      %v3166 = vld [vmem:[%s3165] sm:$0xf]
      %v3167 = vld [vmem:[%s3165 + $0x4] sm:$0xf]
      %v3168 = vld [vmem:[%s3165 + $0x8] sm:$0xf]
      %v3169 = vld [vmem:[%s3165 + $0xc] sm:$0xf]
      %v3170 = vld [vmem:[%s3165 + $0x10] sm:$0xf]
      %v3171 = vld [vmem:[%s3165 + $0x14] sm:$0xf]
      %v3172 = vld [vmem:[%s3165 + $0x18] sm:$0xf]
      %v3173 = vld [vmem:[%s3165 + $0x1c] sm:$0xf]
      %s3174 = scalar_lea.vmem %s8, 160
      %v3175 = vld [vmem:[%s3174] sm:$0xf]
      %v3176 = vld [vmem:[%s3174 + $0x4] sm:$0xf]
      %v3177 = vld [vmem:[%s3174 + $0x8] sm:$0xf]
      %v3178 = vld [vmem:[%s3174 + $0xc] sm:$0xf]
      %v3179 = vld [vmem:[%s3174 + $0x10] sm:$0xf]
      %v3180 = vld [vmem:[%s3174 + $0x14] sm:$0xf]
      %v3181 = vld [vmem:[%s3174 + $0x18] sm:$0xf]
      %v3182 = vld [vmem:[%s3174 + $0x1c] sm:$0xf]
      %v3191 = vunpack.c.l.b16 %v3175
      %v3192 = vunpack.c.l.b16 %v3176
      %v3193 = vunpack.c.l.b16 %v3177
      %v3194 = vunpack.c.l.b16 %v3178
      %v3195 = vunpack.c.l.b16 %v3179
      %v3196 = vunpack.c.l.b16 %v3180
      %v3197 = vunpack.c.l.b16 %v3181
      %v3198 = vunpack.c.l.b16 %v3182
      %v3199 = vpack.c.b16 %v3192, %v3191
      %v3200 = vpack.c.b16 %v3194, %v3193
      %v3201 = vpack.c.b16 %v3196, %v3195
      %v3202 = vpack.c.b16 %v3198, %v3197
      %3207 = vmatpush.bf16.msra.mxu0 0
      %3208 = vmatpush.bf16.msra.mxu0 0
      %3209 = vmatpush.bf16.msra.mxu0 0
      %3210 = vmatpush.bf16.msra.mxu0 0
      %3211 = vmatpush.bf16.msra.mxu0 %v3202
      %3212 = vmatpush.bf16.msra.mxu0 %v3201
      %3213 = vmatpush.bf16.msra.mxu0 %v3200
      %3214 = vmatpush.bf16.msra.mxu0 %v3199
      %3215 = vmatmul.bf16.gmra.mxu0 %v2590
      %v3216 = vpop.f32.mrf.mxu0
      %v3217 = vadd.f32 0.0, %v3216
      %v3218 = vpop.f32.mrf.mxu0
      %v3219 = vadd.f32 0.0, %v3218
      %3220 = vdwg.mxu0
      %v3221 = vpack.c.bf16 %v3219, %v3217
      %v3230 = vunpack.c.l.b16 %v3166
      %v3231 = vunpack.c.l.b16 %v3167
      %v3232 = vunpack.c.l.b16 %v3168
      %v3233 = vunpack.c.l.b16 %v3169
      %v3234 = vunpack.c.l.b16 %v3170
      %v3235 = vunpack.c.l.b16 %v3171
      %v3236 = vunpack.c.l.b16 %v3172
      %v3237 = vunpack.c.l.b16 %v3173
      %v3238 = vpack.c.b16 %v3231, %v3230
      %v3239 = vpack.c.b16 %v3233, %v3232
      %v3240 = vpack.c.b16 %v3235, %v3234
      %v3241 = vpack.c.b16 %v3237, %v3236
      %v3243 = vsel %vm2684, %v3238, 0
      %v3246 = vsel %vm2684, %v3239, 0
      %v3249 = vsel %vm2684, %v3240, 0
      %v3252 = vsel %vm2684, %v3241, 0
      %3254 = vmatpush.bf16.msra.mxu0 0
      %3255 = vmatpush.bf16.msra.mxu0 0
      %3256 = vmatpush.bf16.msra.mxu0 0
      %3257 = vmatpush.bf16.msra.mxu0 0
      %3258 = vmatpush.bf16.msra.mxu0 0
      %3259 = vmatpush.bf16.msra.mxu0 0
      %3260 = vmatpush.bf16.msra.mxu0 0
      %3261 = vmatpush.bf16.msra.mxu0 %v3221
      %3262 = vmatmul.bf16.gmra.mxu0 %v3243
      %v3263 = vpop.f32.mrf.mxu0
      %v3264 = vadd.f32 0.0, %v3263
      %v3265 = vpop.f32.mrf.mxu0
      %v3266 = vadd.f32 0.0, %v3265
      %3267 = vmatmul.bf16.gmra.mxu0 %v3246
      %v3268 = vpop.f32.mrf.mxu0
      %v3269 = vadd.f32 0.0, %v3268
      %v3270 = vpop.f32.mrf.mxu0
      %v3271 = vadd.f32 0.0, %v3270
      %3272 = vmatmul.bf16.gmra.mxu0 %v3249
      %v3273 = vpop.f32.mrf.mxu0
      %v3274 = vadd.f32 0.0, %v3273
      %v3275 = vpop.f32.mrf.mxu0
      %v3276 = vadd.f32 0.0, %v3275
      %3277 = vmatmul.bf16.gmra.mxu0 %v3252
      %v3278 = vpop.f32.mrf.mxu0
      %v3279 = vadd.f32 0.0, %v3278
      %v3280 = vpop.f32.mrf.mxu0
      %v3281 = vadd.f32 0.0, %v3280
      %3282 = vdwg.mxu0
      %v3283 = vadd.f32 %v3157, %v3264
      %v3284 = vadd.f32 %v3158, %v3266
      %v3285 = vadd.f32 %v3159, %v3269
      %v3286 = vadd.f32 %v3160, %v3271
      %v3287 = vadd.f32 %v3161, %v3274
      %v3288 = vadd.f32 %v3162, %v3276
      %v3289 = vadd.f32 %v3163, %v3279
      %v3290 = vadd.f32 %v3164, %v3281
      %s3291 = scalar_lea.vmem %s7, 192
      %v3292 = vld [vmem:[%s3291] sm:$0xf]
      %v3293 = vld [vmem:[%s3291 + $0x4] sm:$0xf]
      %v3294 = vld [vmem:[%s3291 + $0x8] sm:$0xf]
      %v3295 = vld [vmem:[%s3291 + $0xc] sm:$0xf]
      %v3296 = vld [vmem:[%s3291 + $0x10] sm:$0xf]
      %v3297 = vld [vmem:[%s3291 + $0x14] sm:$0xf]
      %v3298 = vld [vmem:[%s3291 + $0x18] sm:$0xf]
      %v3299 = vld [vmem:[%s3291 + $0x1c] sm:$0xf]
      %s3300 = scalar_lea.vmem %s8, 192
      %v3301 = vld [vmem:[%s3300] sm:$0xf]
      %v3302 = vld [vmem:[%s3300 + $0x4] sm:$0xf]
      %v3303 = vld [vmem:[%s3300 + $0x8] sm:$0xf]
      %v3304 = vld [vmem:[%s3300 + $0xc] sm:$0xf]
      %v3305 = vld [vmem:[%s3300 + $0x10] sm:$0xf]
      %v3306 = vld [vmem:[%s3300 + $0x14] sm:$0xf]
      %v3307 = vld [vmem:[%s3300 + $0x18] sm:$0xf]
      %v3308 = vld [vmem:[%s3300 + $0x1c] sm:$0xf]
      %v3317 = vunpack.c.l.b16 %v3301
      %v3318 = vunpack.c.l.b16 %v3302
      %v3319 = vunpack.c.l.b16 %v3303
      %v3320 = vunpack.c.l.b16 %v3304
      %v3321 = vunpack.c.l.b16 %v3305
      %v3322 = vunpack.c.l.b16 %v3306
      %v3323 = vunpack.c.l.b16 %v3307
      %v3324 = vunpack.c.l.b16 %v3308
      %v3325 = vpack.c.b16 %v3318, %v3317
      %v3326 = vpack.c.b16 %v3320, %v3319
      %v3327 = vpack.c.b16 %v3322, %v3321
      %v3328 = vpack.c.b16 %v3324, %v3323
      %3333 = vmatpush.bf16.msra.mxu0 0
      %3334 = vmatpush.bf16.msra.mxu0 0
      %3335 = vmatpush.bf16.msra.mxu0 0
      %3336 = vmatpush.bf16.msra.mxu0 0
      %3337 = vmatpush.bf16.msra.mxu0 %v3328
      %3338 = vmatpush.bf16.msra.mxu0 %v3327
      %3339 = vmatpush.bf16.msra.mxu0 %v3326
      %3340 = vmatpush.bf16.msra.mxu0 %v3325
      %3341 = vmatmul.bf16.gmra.mxu0 %v2590
      %v3342 = vpop.f32.mrf.mxu0
      %v3343 = vadd.f32 0.0, %v3342
      %v3344 = vpop.f32.mrf.mxu0
      %v3345 = vadd.f32 0.0, %v3344
      %3346 = vdwg.mxu0
      %v3347 = vpack.c.bf16 %v3345, %v3343
      %v3356 = vunpack.c.l.b16 %v3292
      %v3357 = vunpack.c.l.b16 %v3293
      %v3358 = vunpack.c.l.b16 %v3294
      %v3359 = vunpack.c.l.b16 %v3295
      %v3360 = vunpack.c.l.b16 %v3296
      %v3361 = vunpack.c.l.b16 %v3297
      %v3362 = vunpack.c.l.b16 %v3298
      %v3363 = vunpack.c.l.b16 %v3299
      %v3364 = vpack.c.b16 %v3357, %v3356
      %v3365 = vpack.c.b16 %v3359, %v3358
      %v3366 = vpack.c.b16 %v3361, %v3360
      %v3367 = vpack.c.b16 %v3363, %v3362
      %v3369 = vsel %vm2684, %v3364, 0
      %v3372 = vsel %vm2684, %v3365, 0
      %v3375 = vsel %vm2684, %v3366, 0
      %v3378 = vsel %vm2684, %v3367, 0
      %3380 = vmatpush.bf16.msra.mxu0 0
      %3381 = vmatpush.bf16.msra.mxu0 0
      %3382 = vmatpush.bf16.msra.mxu0 0
      %3383 = vmatpush.bf16.msra.mxu0 0
      %3384 = vmatpush.bf16.msra.mxu0 0
      %3385 = vmatpush.bf16.msra.mxu0 0
      %3386 = vmatpush.bf16.msra.mxu0 0
      %3387 = vmatpush.bf16.msra.mxu0 %v3347
      %3388 = vmatmul.bf16.gmra.mxu0 %v3369
      %v3389 = vpop.f32.mrf.mxu0
      %v3390 = vadd.f32 0.0, %v3389
      %v3391 = vpop.f32.mrf.mxu0
      %v3392 = vadd.f32 0.0, %v3391
      %3393 = vmatmul.bf16.gmra.mxu0 %v3372
      %v3394 = vpop.f32.mrf.mxu0
      %v3395 = vadd.f32 0.0, %v3394
      %v3396 = vpop.f32.mrf.mxu0
      %v3397 = vadd.f32 0.0, %v3396
      %3398 = vmatmul.bf16.gmra.mxu0 %v3375
      %v3399 = vpop.f32.mrf.mxu0
      %v3400 = vadd.f32 0.0, %v3399
      %v3401 = vpop.f32.mrf.mxu0
      %v3402 = vadd.f32 0.0, %v3401
      %3403 = vmatmul.bf16.gmra.mxu0 %v3378
      %v3404 = vpop.f32.mrf.mxu0
      %v3405 = vadd.f32 0.0, %v3404
      %v3406 = vpop.f32.mrf.mxu0
      %v3407 = vadd.f32 0.0, %v3406
      %3408 = vdwg.mxu0
      %v3409 = vadd.f32 %v3283, %v3390
      %v3410 = vadd.f32 %v3284, %v3392
      %v3411 = vadd.f32 %v3285, %v3395
      %v3412 = vadd.f32 %v3286, %v3397
      %v3413 = vadd.f32 %v3287, %v3400
      %v3414 = vadd.f32 %v3288, %v3402
      %v3415 = vadd.f32 %v3289, %v3405
      %v3416 = vadd.f32 %v3290, %v3407
      %s3417 = scalar_lea.vmem %s7, 224
      %v3418 = vld [vmem:[%s3417] sm:$0xf]
      %v3419 = vld [vmem:[%s3417 + $0x4] sm:$0xf]
      %v3420 = vld [vmem:[%s3417 + $0x8] sm:$0xf]
      %v3421 = vld [vmem:[%s3417 + $0xc] sm:$0xf]
      %v3422 = vld [vmem:[%s3417 + $0x10] sm:$0xf]
      %v3423 = vld [vmem:[%s3417 + $0x14] sm:$0xf]
      %v3424 = vld [vmem:[%s3417 + $0x18] sm:$0xf]
      %v3425 = vld [vmem:[%s3417 + $0x1c] sm:$0xf]
      %s3426 = scalar_lea.vmem %s8, 224
      %v3427 = vld [vmem:[%s3426] sm:$0xf]
      %v3428 = vld [vmem:[%s3426 + $0x4] sm:$0xf]
      %v3429 = vld [vmem:[%s3426 + $0x8] sm:$0xf]
      %v3430 = vld [vmem:[%s3426 + $0xc] sm:$0xf]
      %v3431 = vld [vmem:[%s3426 + $0x10] sm:$0xf]
      %v3432 = vld [vmem:[%s3426 + $0x14] sm:$0xf]
      %v3433 = vld [vmem:[%s3426 + $0x18] sm:$0xf]
      %v3434 = vld [vmem:[%s3426 + $0x1c] sm:$0xf]
      %v3443 = vunpack.c.l.b16 %v3427
      %v3444 = vunpack.c.l.b16 %v3428
      %v3445 = vunpack.c.l.b16 %v3429
      %v3446 = vunpack.c.l.b16 %v3430
      %v3447 = vunpack.c.l.b16 %v3431
      %v3448 = vunpack.c.l.b16 %v3432
      %v3449 = vunpack.c.l.b16 %v3433
      %v3450 = vunpack.c.l.b16 %v3434
      %v3451 = vpack.c.b16 %v3444, %v3443
      %v3452 = vpack.c.b16 %v3446, %v3445
      %v3453 = vpack.c.b16 %v3448, %v3447
      %v3454 = vpack.c.b16 %v3450, %v3449
      %3459 = vmatpush.bf16.msra.mxu0 0
      %3460 = vmatpush.bf16.msra.mxu0 0
      %3461 = vmatpush.bf16.msra.mxu0 0
      %3462 = vmatpush.bf16.msra.mxu0 0
      %3463 = vmatpush.bf16.msra.mxu0 %v3454
      %3464 = vmatpush.bf16.msra.mxu0 %v3453
      %3465 = vmatpush.bf16.msra.mxu0 %v3452
      %3466 = vmatpush.bf16.msra.mxu0 %v3451
      %3467 = vmatmul.bf16.gmra.mxu0 %v2590
      %v3468 = vpop.f32.mrf.mxu0
      %v3469 = vadd.f32 0.0, %v3468
      %v3470 = vpop.f32.mrf.mxu0
      %v3471 = vadd.f32 0.0, %v3470
      %3472 = vdwg.mxu0
      %v3473 = vpack.c.bf16 %v3471, %v3469
      %v3482 = vunpack.c.l.b16 %v3418
      %v3483 = vunpack.c.l.b16 %v3419
      %v3484 = vunpack.c.l.b16 %v3420
      %v3485 = vunpack.c.l.b16 %v3421
      %v3486 = vunpack.c.l.b16 %v3422
      %v3487 = vunpack.c.l.b16 %v3423
      %v3488 = vunpack.c.l.b16 %v3424
      %v3489 = vunpack.c.l.b16 %v3425
      %v3490 = vpack.c.b16 %v3483, %v3482
      %v3491 = vpack.c.b16 %v3485, %v3484
      %v3492 = vpack.c.b16 %v3487, %v3486
      %v3493 = vpack.c.b16 %v3489, %v3488
      %v3495 = vsel %vm2684, %v3490, 0
      %v3498 = vsel %vm2684, %v3491, 0
      %v3501 = vsel %vm2684, %v3492, 0
      %v3504 = vsel %vm2684, %v3493, 0
      %3506 = vmatpush.bf16.msra.mxu0 0
      %3507 = vmatpush.bf16.msra.mxu0 0
      %3508 = vmatpush.bf16.msra.mxu0 0
      %3509 = vmatpush.bf16.msra.mxu0 0
      %3510 = vmatpush.bf16.msra.mxu0 0
      %3511 = vmatpush.bf16.msra.mxu0 0
      %3512 = vmatpush.bf16.msra.mxu0 0
      %3513 = vmatpush.bf16.msra.mxu0 %v3473
      %3514 = vmatmul.bf16.gmra.mxu0 %v3495
      %v3515 = vpop.f32.mrf.mxu0
      %v3516 = vadd.f32 0.0, %v3515
      %v3517 = vpop.f32.mrf.mxu0
      %v3518 = vadd.f32 0.0, %v3517
      %3519 = vmatmul.bf16.gmra.mxu0 %v3498
      %v3520 = vpop.f32.mrf.mxu0
      %v3521 = vadd.f32 0.0, %v3520
      %v3522 = vpop.f32.mrf.mxu0
      %v3523 = vadd.f32 0.0, %v3522
      %3524 = vmatmul.bf16.gmra.mxu0 %v3501
      %v3525 = vpop.f32.mrf.mxu0
      %v3526 = vadd.f32 0.0, %v3525
      %v3527 = vpop.f32.mrf.mxu0
      %v3528 = vadd.f32 0.0, %v3527
      %3529 = vmatmul.bf16.gmra.mxu0 %v3504
      %v3530 = vpop.f32.mrf.mxu0
      %v3531 = vadd.f32 0.0, %v3530
      %v3532 = vpop.f32.mrf.mxu0
      %v3533 = vadd.f32 0.0, %v3532
      %3534 = vdwg.mxu0
      %v3535 = vadd.f32 %v3409, %v3516
      %v3536 = vadd.f32 %v3410, %v3518
      %v3537 = vadd.f32 %v3411, %v3521
      %v3538 = vadd.f32 %v3412, %v3523
      %v3539 = vadd.f32 %v3413, %v3526
      %v3540 = vadd.f32 %v3414, %v3528
      %v3541 = vadd.f32 %v3415, %v3531
      %v3542 = vadd.f32 %v3416, %v3533
      %s3543 = scalar_lea.vmem %s7, 256
      %v3544 = vld [vmem:[%s3543] sm:$0xf]
      %v3545 = vld [vmem:[%s3543 + $0x4] sm:$0xf]
      %v3546 = vld [vmem:[%s3543 + $0x8] sm:$0xf]
      %v3547 = vld [vmem:[%s3543 + $0xc] sm:$0xf]
      %v3548 = vld [vmem:[%s3543 + $0x10] sm:$0xf]
      %v3549 = vld [vmem:[%s3543 + $0x14] sm:$0xf]
      %v3550 = vld [vmem:[%s3543 + $0x18] sm:$0xf]
      %v3551 = vld [vmem:[%s3543 + $0x1c] sm:$0xf]
      %s3552 = scalar_lea.vmem %s8, 256
      %v3553 = vld [vmem:[%s3552] sm:$0xf]
      %v3554 = vld [vmem:[%s3552 + $0x4] sm:$0xf]
      %v3555 = vld [vmem:[%s3552 + $0x8] sm:$0xf]
      %v3556 = vld [vmem:[%s3552 + $0xc] sm:$0xf]
      %v3557 = vld [vmem:[%s3552 + $0x10] sm:$0xf]
      %v3558 = vld [vmem:[%s3552 + $0x14] sm:$0xf]
      %v3559 = vld [vmem:[%s3552 + $0x18] sm:$0xf]
      %v3560 = vld [vmem:[%s3552 + $0x1c] sm:$0xf]
      %v3569 = vunpack.c.l.b16 %v3553
      %v3570 = vunpack.c.l.b16 %v3554
      %v3571 = vunpack.c.l.b16 %v3555
      %v3572 = vunpack.c.l.b16 %v3556
      %v3573 = vunpack.c.l.b16 %v3557
      %v3574 = vunpack.c.l.b16 %v3558
      %v3575 = vunpack.c.l.b16 %v3559
      %v3576 = vunpack.c.l.b16 %v3560
      %v3577 = vpack.c.b16 %v3570, %v3569
      %v3578 = vpack.c.b16 %v3572, %v3571
      %v3579 = vpack.c.b16 %v3574, %v3573
      %v3580 = vpack.c.b16 %v3576, %v3575
      %3585 = vmatpush.bf16.msra.mxu0 0
      %3586 = vmatpush.bf16.msra.mxu0 0
      %3587 = vmatpush.bf16.msra.mxu0 0
      %3588 = vmatpush.bf16.msra.mxu0 0
      %3589 = vmatpush.bf16.msra.mxu0 %v3580
      %3590 = vmatpush.bf16.msra.mxu0 %v3579
      %3591 = vmatpush.bf16.msra.mxu0 %v3578
      %3592 = vmatpush.bf16.msra.mxu0 %v3577
      %3593 = vmatmul.bf16.gmra.mxu0 %v2590
      %v3594 = vpop.f32.mrf.mxu0
      %v3595 = vadd.f32 0.0, %v3594
      %v3596 = vpop.f32.mrf.mxu0
      %v3597 = vadd.f32 0.0, %v3596
      %3598 = vdwg.mxu0
      %v3599 = vpack.c.bf16 %v3597, %v3595
      %v3608 = vunpack.c.l.b16 %v3544
      %v3609 = vunpack.c.l.b16 %v3545
      %v3610 = vunpack.c.l.b16 %v3546
      %v3611 = vunpack.c.l.b16 %v3547
      %v3612 = vunpack.c.l.b16 %v3548
      %v3613 = vunpack.c.l.b16 %v3549
      %v3614 = vunpack.c.l.b16 %v3550
      %v3615 = vunpack.c.l.b16 %v3551
      %v3616 = vpack.c.b16 %v3609, %v3608
      %v3617 = vpack.c.b16 %v3611, %v3610
      %v3618 = vpack.c.b16 %v3613, %v3612
      %v3619 = vpack.c.b16 %v3615, %v3614
      %v3621 = vsel %vm2684, %v3616, 0
      %v3624 = vsel %vm2684, %v3617, 0
      %v3627 = vsel %vm2684, %v3618, 0
      %v3630 = vsel %vm2684, %v3619, 0
      %3632 = vmatpush.bf16.msra.mxu0 0
      %3633 = vmatpush.bf16.msra.mxu0 0
      %3634 = vmatpush.bf16.msra.mxu0 0
      %3635 = vmatpush.bf16.msra.mxu0 0
      %3636 = vmatpush.bf16.msra.mxu0 0
      %3637 = vmatpush.bf16.msra.mxu0 0
      %3638 = vmatpush.bf16.msra.mxu0 0
      %3639 = vmatpush.bf16.msra.mxu0 %v3599
      %3640 = vmatmul.bf16.gmra.mxu0 %v3621
      %v3641 = vpop.f32.mrf.mxu0
      %v3642 = vadd.f32 0.0, %v3641
      %v3643 = vpop.f32.mrf.mxu0
      %v3644 = vadd.f32 0.0, %v3643
      %3645 = vmatmul.bf16.gmra.mxu0 %v3624
      %v3646 = vpop.f32.mrf.mxu0
      %v3647 = vadd.f32 0.0, %v3646
      %v3648 = vpop.f32.mrf.mxu0
      %v3649 = vadd.f32 0.0, %v3648
      %3650 = vmatmul.bf16.gmra.mxu0 %v3627
      %v3651 = vpop.f32.mrf.mxu0
      %v3652 = vadd.f32 0.0, %v3651
      %v3653 = vpop.f32.mrf.mxu0
      %v3654 = vadd.f32 0.0, %v3653
      %3655 = vmatmul.bf16.gmra.mxu0 %v3630
      %v3656 = vpop.f32.mrf.mxu0
      %v3657 = vadd.f32 0.0, %v3656
      %v3658 = vpop.f32.mrf.mxu0
      %v3659 = vadd.f32 0.0, %v3658
      %3660 = vdwg.mxu0
      %v3661 = vadd.f32 %v3535, %v3642
      %v3662 = vadd.f32 %v3536, %v3644
      %v3663 = vadd.f32 %v3537, %v3647
      %v3664 = vadd.f32 %v3538, %v3649
      %v3665 = vadd.f32 %v3539, %v3652
      %v3666 = vadd.f32 %v3540, %v3654
      %v3667 = vadd.f32 %v3541, %v3657
      %v3668 = vadd.f32 %v3542, %v3659
      %v3669 = vld [vmem:[%s9] sm:$0x1]
      %v3671 = vperm.slane %v3669, 0
      %v3673 = vadd.f32 %v3661, %v3671
      %v3674 = vadd.f32 %v3662, %v3671
      %v3675 = vadd.f32 %v3663, %v3671
      %v3676 = vadd.f32 %v3664, %v3671
      %v3677 = vadd.f32 %v3665, %v3671
      %v3678 = vadd.f32 %v3666, %v3671
      %v3679 = vadd.f32 %v3667, %v3671
      %v3680 = vadd.f32 %v3668, %v3671
      %v3681 = vmax.f32 %v3673, 0.0
      %v3682 = vmax.f32 %v3674, 0.0
      %v3683 = vmax.f32 %v3675, 0.0
      %v3684 = vmax.f32 %v3676, 0.0
      %v3685 = vmax.f32 %v3677, 0.0
      %v3686 = vmax.f32 %v3678, 0.0
      %v3687 = vmax.f32 %v3679, 0.0
      %v3688 = vmax.f32 %v3680, 0.0
      %v3689 = vpack.c.bf16 %v3682, %v3681
      %v3690 = vpack.c.bf16 %v3684, %v3683
      %v3691 = vpack.c.bf16 %v3686, %v3685
      %v3692 = vpack.c.bf16 %v3688, %v3687
      %v3693 = vld [vmem:[%s10] sm:$0xf]
      %v3694 = vld [vmem:[%s10 + $0x4] sm:$0xf]
      %v3695 = vld [vmem:[%s10 + $0x8] sm:$0xf]
      %v3696 = vld [vmem:[%s10 + $0xc] sm:$0xf]
      %v3697 = vld [vmem:[%s10 + $0x10] sm:$0xf]
      %v3698 = vld [vmem:[%s10 + $0x14] sm:$0xf]
      %v3699 = vld [vmem:[%s10 + $0x18] sm:$0xf]
      %v3700 = vld [vmem:[%s10 + $0x1c] sm:$0xf]
      %v3701 = vld [vmem:[%s10 + $0x20] sm:$0xf]
      %v3702 = vld [vmem:[%s10 + $0x24] sm:$0xf]
      %v3703 = vld [vmem:[%s10 + $0x28] sm:$0xf]
      %v3704 = vld [vmem:[%s10 + $0x2c] sm:$0xf]
      %v3705 = vld [vmem:[%s10 + $0x30] sm:$0xf]
      %v3706 = vld [vmem:[%s10 + $0x34] sm:$0xf]
      %v3707 = vld [vmem:[%s10 + $0x38] sm:$0xf]
      %v3708 = vld [vmem:[%s10 + $0x3c] sm:$0xf]
      %v3709 = vld [vmem:[%s10 + $0x40] sm:$0xf]
      %v3710 = vld [vmem:[%s10 + $0x44] sm:$0xf]
      %v3711 = vld [vmem:[%s10 + $0x48] sm:$0xf]
      %v3712 = vld [vmem:[%s10 + $0x4c] sm:$0xf]
      %v3713 = vld [vmem:[%s10 + $0x50] sm:$0xf]
      %v3714 = vld [vmem:[%s10 + $0x54] sm:$0xf]
      %v3715 = vld [vmem:[%s10 + $0x58] sm:$0xf]
      %v3716 = vld [vmem:[%s10 + $0x5c] sm:$0xf]
      %v3717 = vld [vmem:[%s10 + $0x60] sm:$0xf]
      %v3718 = vld [vmem:[%s10 + $0x64] sm:$0xf]
      %v3719 = vld [vmem:[%s10 + $0x68] sm:$0xf]
      %v3720 = vld [vmem:[%s10 + $0x6c] sm:$0xf]
      %v3721 = vld [vmem:[%s10 + $0x70] sm:$0xf]
      %v3722 = vld [vmem:[%s10 + $0x74] sm:$0xf]
      %v3723 = vld [vmem:[%s10 + $0x78] sm:$0xf]
      %v3724 = vld [vmem:[%s10 + $0x7c] sm:$0xf]
      %v3725 = vld [vmem:[%s11] sm:$0xf]
      %v3726 = vld [vmem:[%s11 + $0x4] sm:$0xf]
      %v3727 = vld [vmem:[%s11 + $0x8] sm:$0xf]
      %v3728 = vld [vmem:[%s11 + $0xc] sm:$0xf]
      %v3733 = vunpack.c.l.b16 %v3725
      %v3734 = vunpack.c.l.b16 %v3726
      %v3735 = vunpack.c.l.b16 %v3727
      %v3736 = vunpack.c.l.b16 %v3728
      %v3737 = vpack.c.b16 %v3734, %v3733
      %v3738 = vpack.c.b16 %v3736, %v3735
      %v3742 = vsel %vm2059, %v3689, 0
      %v3745 = vsel %vm2059, %v3690, 0
      %v3748 = vsel %vm2059, %v3691, 0
      %v3751 = vsel %vm2059, %v3692, 0
      %3753 = vmatpush.bf16.msra.mxu0 0
      %3754 = vmatpush.bf16.msra.mxu0 0
      %3755 = vmatpush.bf16.msra.mxu0 0
      %3756 = vmatpush.bf16.msra.mxu0 0
      %3757 = vmatpush.bf16.msra.mxu0 0
      %3758 = vmatpush.bf16.msra.mxu0 0
      %3759 = vmatpush.bf16.msra.mxu0 %v3738
      %3760 = vmatpush.bf16.msra.mxu0 %v3737
      %3761 = vmatmul.bf16.gmra.mxu0 %v3742
      %v3762 = vpop.f32.mrf.mxu0
      %v3763 = vadd.f32 0.0, %v3762
      %v3764 = vpop.f32.mrf.mxu0
      %v3765 = vadd.f32 0.0, %v3764
      %3766 = vmatmul.bf16.gmra.mxu0 %v3745
      %v3767 = vpop.f32.mrf.mxu0
      %v3768 = vadd.f32 0.0, %v3767
      %v3769 = vpop.f32.mrf.mxu0
      %v3770 = vadd.f32 0.0, %v3769
      %3771 = vmatmul.bf16.gmra.mxu0 %v3748
      %v3772 = vpop.f32.mrf.mxu0
      %v3773 = vadd.f32 0.0, %v3772
      %v3774 = vpop.f32.mrf.mxu0
      %v3775 = vadd.f32 0.0, %v3774
      %3776 = vmatmul.bf16.gmra.mxu0 %v3751
      %v3777 = vpop.f32.mrf.mxu0
      %v3778 = vadd.f32 0.0, %v3777
      %v3779 = vpop.f32.mrf.mxu0
      %v3780 = vadd.f32 0.0, %v3779
      %3781 = vdwg.mxu0
      %v3782 = vpack.c.bf16 %v3765, %v3763
      %v3783 = vpack.c.bf16 %v3770, %v3768
      %v3784 = vpack.c.bf16 %v3775, %v3773
      %v3785 = vpack.c.bf16 %v3780, %v3778
      %s3786 = scalar_lea.vmem %s10, 128
      %v3787 = vld [vmem:[%s3786] sm:$0xf]
      %v3788 = vld [vmem:[%s3786 + $0x4] sm:$0xf]
      %v3789 = vld [vmem:[%s3786 + $0x8] sm:$0xf]
      %v3790 = vld [vmem:[%s3786 + $0xc] sm:$0xf]
      %v3791 = vld [vmem:[%s3786 + $0x10] sm:$0xf]
      %v3792 = vld [vmem:[%s3786 + $0x14] sm:$0xf]
      %v3793 = vld [vmem:[%s3786 + $0x18] sm:$0xf]
      %v3794 = vld [vmem:[%s3786 + $0x1c] sm:$0xf]
      %v3795 = vld [vmem:[%s3786 + $0x20] sm:$0xf]
      %v3796 = vld [vmem:[%s3786 + $0x24] sm:$0xf]
      %v3797 = vld [vmem:[%s3786 + $0x28] sm:$0xf]
      %v3798 = vld [vmem:[%s3786 + $0x2c] sm:$0xf]
      %v3799 = vld [vmem:[%s3786 + $0x30] sm:$0xf]
      %v3800 = vld [vmem:[%s3786 + $0x34] sm:$0xf]
      %v3801 = vld [vmem:[%s3786 + $0x38] sm:$0xf]
      %v3802 = vld [vmem:[%s3786 + $0x3c] sm:$0xf]
      %v3803 = vld [vmem:[%s3786 + $0x40] sm:$0xf]
      %v3804 = vld [vmem:[%s3786 + $0x44] sm:$0xf]
      %v3805 = vld [vmem:[%s3786 + $0x48] sm:$0xf]
      %v3806 = vld [vmem:[%s3786 + $0x4c] sm:$0xf]
      %v3807 = vld [vmem:[%s3786 + $0x50] sm:$0xf]
      %v3808 = vld [vmem:[%s3786 + $0x54] sm:$0xf]
      %v3809 = vld [vmem:[%s3786 + $0x58] sm:$0xf]
      %v3810 = vld [vmem:[%s3786 + $0x5c] sm:$0xf]
      %v3811 = vld [vmem:[%s3786 + $0x60] sm:$0xf]
      %v3812 = vld [vmem:[%s3786 + $0x64] sm:$0xf]
      %v3813 = vld [vmem:[%s3786 + $0x68] sm:$0xf]
      %v3814 = vld [vmem:[%s3786 + $0x6c] sm:$0xf]
      %v3815 = vld [vmem:[%s3786 + $0x70] sm:$0xf]
      %v3816 = vld [vmem:[%s3786 + $0x74] sm:$0xf]
      %v3817 = vld [vmem:[%s3786 + $0x78] sm:$0xf]
      %v3818 = vld [vmem:[%s3786 + $0x7c] sm:$0xf]
      %s3819 = scalar_lea.vmem %s11, 16
      %v3820 = vld [vmem:[%s3819] sm:$0xf]
      %v3821 = vld [vmem:[%s3819 + $0x4] sm:$0xf]
      %v3822 = vld [vmem:[%s3819 + $0x8] sm:$0xf]
      %v3823 = vld [vmem:[%s3819 + $0xc] sm:$0xf]
      %v3828 = vunpack.c.l.b16 %v3820
      %v3829 = vunpack.c.l.b16 %v3821
      %v3830 = vunpack.c.l.b16 %v3822
      %v3831 = vunpack.c.l.b16 %v3823
      %v3832 = vpack.c.b16 %v3829, %v3828
      %v3833 = vpack.c.b16 %v3831, %v3830
      %3836 = vmatpush.bf16.msra.mxu0 0
      %3837 = vmatpush.bf16.msra.mxu0 0
      %3838 = vmatpush.bf16.msra.mxu0 0
      %3839 = vmatpush.bf16.msra.mxu0 0
      %3840 = vmatpush.bf16.msra.mxu0 0
      %3841 = vmatpush.bf16.msra.mxu0 0
      %3842 = vmatpush.bf16.msra.mxu0 %v3833
      %3843 = vmatpush.bf16.msra.mxu0 %v3832
      %3844 = vmatmul.bf16.gmra.mxu0 %v3742
      %v3845 = vpop.f32.mrf.mxu0
      %v3846 = vadd.f32 0.0, %v3845
      %v3847 = vpop.f32.mrf.mxu0
      %v3848 = vadd.f32 0.0, %v3847
      %3849 = vmatmul.bf16.gmra.mxu0 %v3745
      %v3850 = vpop.f32.mrf.mxu0
      %v3851 = vadd.f32 0.0, %v3850
      %v3852 = vpop.f32.mrf.mxu0
      %v3853 = vadd.f32 0.0, %v3852
      %3854 = vmatmul.bf16.gmra.mxu0 %v3748
      %v3855 = vpop.f32.mrf.mxu0
      %v3856 = vadd.f32 0.0, %v3855
      %v3857 = vpop.f32.mrf.mxu0
      %v3858 = vadd.f32 0.0, %v3857
      %3859 = vmatmul.bf16.gmra.mxu0 %v3751
      %v3860 = vpop.f32.mrf.mxu0
      %v3861 = vadd.f32 0.0, %v3860
      %v3862 = vpop.f32.mrf.mxu0
      %v3863 = vadd.f32 0.0, %v3862
      %3864 = vdwg.mxu0
      %v3865 = vpack.c.bf16 %v3848, %v3846
      %v3866 = vpack.c.bf16 %v3853, %v3851
      %v3867 = vpack.c.bf16 %v3858, %v3856
      %v3868 = vpack.c.bf16 %v3863, %v3861
      %v3901 = vunpack.c.l.b16 %v3787
      %v3902 = vunpack.c.l.b16 %v3788
      %v3903 = vunpack.c.l.b16 %v3789
      %v3904 = vunpack.c.l.b16 %v3790
      %v3905 = vunpack.c.l.b16 %v3791
      %v3906 = vunpack.c.l.b16 %v3792
      %v3907 = vunpack.c.l.b16 %v3793
      %v3908 = vunpack.c.l.b16 %v3794
      %v3909 = vunpack.c.l.b16 %v3795
      %v3910 = vunpack.c.l.b16 %v3796
      %v3911 = vunpack.c.l.b16 %v3797
      %v3912 = vunpack.c.l.b16 %v3798
      %v3913 = vunpack.c.l.b16 %v3799
      %v3914 = vunpack.c.l.b16 %v3800
      %v3915 = vunpack.c.l.b16 %v3801
      %v3916 = vunpack.c.l.b16 %v3802
      %v3917 = vunpack.c.l.b16 %v3803
      %v3918 = vunpack.c.l.b16 %v3804
      %v3919 = vunpack.c.l.b16 %v3805
      %v3920 = vunpack.c.l.b16 %v3806
      %v3921 = vunpack.c.l.b16 %v3807
      %v3922 = vunpack.c.l.b16 %v3808
      %v3923 = vunpack.c.l.b16 %v3809
      %v3924 = vunpack.c.l.b16 %v3810
      %v3925 = vunpack.c.l.b16 %v3811
      %v3926 = vunpack.c.l.b16 %v3812
      %v3927 = vunpack.c.l.b16 %v3813
      %v3928 = vunpack.c.l.b16 %v3814
      %v3929 = vunpack.c.l.b16 %v3815
      %v3930 = vunpack.c.l.b16 %v3816
      %v3931 = vunpack.c.l.b16 %v3817
      %v3932 = vunpack.c.l.b16 %v3818
      %v3933 = vpack.c.b16 %v3902, %v3901
      %v3934 = vpack.c.b16 %v3904, %v3903
      %v3935 = vpack.c.b16 %v3906, %v3905
      %v3936 = vpack.c.b16 %v3908, %v3907
      %v3937 = vpack.c.b16 %v3910, %v3909
      %v3938 = vpack.c.b16 %v3912, %v3911
      %v3939 = vpack.c.b16 %v3914, %v3913
      %v3940 = vpack.c.b16 %v3916, %v3915
      %v3941 = vpack.c.b16 %v3918, %v3917
      %v3942 = vpack.c.b16 %v3920, %v3919
      %v3943 = vpack.c.b16 %v3922, %v3921
      %v3944 = vpack.c.b16 %v3924, %v3923
      %v3945 = vpack.c.b16 %v3926, %v3925
      %v3946 = vpack.c.b16 %v3928, %v3927
      %v3947 = vpack.c.b16 %v3930, %v3929
      %v3948 = vpack.c.b16 %v3932, %v3931
      %v3950 = vsel %vm1997, %v3933, 0
      %v3953 = vsel %vm1997, %v3934, 0
      %v3956 = vsel %vm1997, %v3935, 0
      %v3959 = vsel %vm1997, %v3936, 0
      %v3962 = vsel %vm1997, %v3937, 0
      %v3965 = vsel %vm1997, %v3938, 0
      %v3968 = vsel %vm1997, %v3939, 0
      %v3971 = vsel %vm1997, %v3940, 0
      %v3974 = vsel %vm1997, %v3941, 0
      %v3977 = vsel %vm1997, %v3942, 0
      %v3980 = vsel %vm1997, %v3943, 0
      %v3983 = vsel %vm1997, %v3944, 0
      %v3986 = vsel %vm1997, %v3945, 0
      %v3989 = vsel %vm1997, %v3946, 0
      %v3992 = vsel %vm1997, %v3947, 0
      %v3995 = vsel %vm1997, %v3948, 0
      %3997 = vmatpush.bf16.msra.mxu0 0
      %3998 = vmatpush.bf16.msra.mxu0 0
      %3999 = vmatpush.bf16.msra.mxu0 0
      %4000 = vmatpush.bf16.msra.mxu0 0
      %4001 = vmatpush.bf16.msra.mxu0 %v3868
      %4002 = vmatpush.bf16.msra.mxu0 %v3867
      %4003 = vmatpush.bf16.msra.mxu0 %v3866
      %4004 = vmatpush.bf16.msra.mxu0 %v3865
      %4005 = vmatmul.bf16.gmra.mxu0 %v3950
      %v4006 = vpop.f32.mrf.mxu0
      %v4007 = vadd.f32 0.0, %v4006
      %v4008 = vpop.f32.mrf.mxu0
      %v4009 = vadd.f32 0.0, %v4008
      %4010 = vmatmul.bf16.gmra.mxu0 %v3953
      %v4011 = vpop.f32.mrf.mxu0
      %v4012 = vadd.f32 0.0, %v4011
      %v4013 = vpop.f32.mrf.mxu0
      %v4014 = vadd.f32 0.0, %v4013
      %4015 = vmatmul.bf16.gmra.mxu0 %v3956
      %v4016 = vpop.f32.mrf.mxu0
      %v4017 = vadd.f32 0.0, %v4016
      %v4018 = vpop.f32.mrf.mxu0
      %v4019 = vadd.f32 0.0, %v4018
      %4020 = vmatmul.bf16.gmra.mxu0 %v3959
      %v4021 = vpop.f32.mrf.mxu0
      %v4022 = vadd.f32 0.0, %v4021
      %v4023 = vpop.f32.mrf.mxu0
      %v4024 = vadd.f32 0.0, %v4023
      %4025 = vmatmul.bf16.gmra.mxu0 %v3962
      %v4026 = vpop.f32.mrf.mxu0
      %v4027 = vadd.f32 0.0, %v4026
      %v4028 = vpop.f32.mrf.mxu0
      %v4029 = vadd.f32 0.0, %v4028
      %4030 = vmatmul.bf16.gmra.mxu0 %v3965
      %v4031 = vpop.f32.mrf.mxu0
      %v4032 = vadd.f32 0.0, %v4031
      %v4033 = vpop.f32.mrf.mxu0
      %v4034 = vadd.f32 0.0, %v4033
      %4035 = vmatmul.bf16.gmra.mxu0 %v3968
      %v4036 = vpop.f32.mrf.mxu0
      %v4037 = vadd.f32 0.0, %v4036
      %v4038 = vpop.f32.mrf.mxu0
      %v4039 = vadd.f32 0.0, %v4038
      %4040 = vmatmul.bf16.gmra.mxu0 %v3971
      %v4041 = vpop.f32.mrf.mxu0
      %v4042 = vadd.f32 0.0, %v4041
      %v4043 = vpop.f32.mrf.mxu0
      %v4044 = vadd.f32 0.0, %v4043
      %4045 = vmatmul.bf16.gmra.mxu0 %v3974
      %v4046 = vpop.f32.mrf.mxu0
      %v4047 = vadd.f32 0.0, %v4046
      %v4048 = vpop.f32.mrf.mxu0
      %v4049 = vadd.f32 0.0, %v4048
      %4050 = vmatmul.bf16.gmra.mxu0 %v3977
      %v4051 = vpop.f32.mrf.mxu0
      %v4052 = vadd.f32 0.0, %v4051
      %v4053 = vpop.f32.mrf.mxu0
      %v4054 = vadd.f32 0.0, %v4053
      %4055 = vmatmul.bf16.gmra.mxu0 %v3980
      %v4056 = vpop.f32.mrf.mxu0
      %v4057 = vadd.f32 0.0, %v4056
      %v4058 = vpop.f32.mrf.mxu0
      %v4059 = vadd.f32 0.0, %v4058
      %4060 = vmatmul.bf16.gmra.mxu0 %v3983
      %v4061 = vpop.f32.mrf.mxu0
      %v4062 = vadd.f32 0.0, %v4061
      %v4063 = vpop.f32.mrf.mxu0
      %v4064 = vadd.f32 0.0, %v4063
      %4065 = vmatmul.bf16.gmra.mxu0 %v3986
      %v4066 = vpop.f32.mrf.mxu0
      %v4067 = vadd.f32 0.0, %v4066
      %v4068 = vpop.f32.mrf.mxu0
      %v4069 = vadd.f32 0.0, %v4068
      %4070 = vmatmul.bf16.gmra.mxu0 %v3989
      %v4071 = vpop.f32.mrf.mxu0
      %v4072 = vadd.f32 0.0, %v4071
      %v4073 = vpop.f32.mrf.mxu0
      %v4074 = vadd.f32 0.0, %v4073
      %4075 = vmatmul.bf16.gmra.mxu0 %v3992
      %v4076 = vpop.f32.mrf.mxu0
      %v4077 = vadd.f32 0.0, %v4076
      %v4078 = vpop.f32.mrf.mxu0
      %v4079 = vadd.f32 0.0, %v4078
      %4080 = vmatmul.bf16.gmra.mxu0 %v3995
      %v4081 = vpop.f32.mrf.mxu0
      %v4082 = vadd.f32 0.0, %v4081
      %v4083 = vpop.f32.mrf.mxu0
      %v4084 = vadd.f32 0.0, %v4083
      %4085 = vdwg.mxu0
      %v4118 = vunpack.c.l.b16 %v3693
      %v4119 = vunpack.c.l.b16 %v3694
      %v4120 = vunpack.c.l.b16 %v3695
      %v4121 = vunpack.c.l.b16 %v3696
      %v4122 = vunpack.c.l.b16 %v3697
      %v4123 = vunpack.c.l.b16 %v3698
      %v4124 = vunpack.c.l.b16 %v3699
      %v4125 = vunpack.c.l.b16 %v3700
      %v4126 = vunpack.c.l.b16 %v3701
      %v4127 = vunpack.c.l.b16 %v3702
      %v4128 = vunpack.c.l.b16 %v3703
      %v4129 = vunpack.c.l.b16 %v3704
      %v4130 = vunpack.c.l.b16 %v3705
      %v4131 = vunpack.c.l.b16 %v3706
      %v4132 = vunpack.c.l.b16 %v3707
      %v4133 = vunpack.c.l.b16 %v3708
      %v4134 = vunpack.c.l.b16 %v3709
      %v4135 = vunpack.c.l.b16 %v3710
      %v4136 = vunpack.c.l.b16 %v3711
      %v4137 = vunpack.c.l.b16 %v3712
      %v4138 = vunpack.c.l.b16 %v3713
      %v4139 = vunpack.c.l.b16 %v3714
      %v4140 = vunpack.c.l.b16 %v3715
      %v4141 = vunpack.c.l.b16 %v3716
      %v4142 = vunpack.c.l.b16 %v3717
      %v4143 = vunpack.c.l.b16 %v3718
      %v4144 = vunpack.c.l.b16 %v3719
      %v4145 = vunpack.c.l.b16 %v3720
      %v4146 = vunpack.c.l.b16 %v3721
      %v4147 = vunpack.c.l.b16 %v3722
      %v4148 = vunpack.c.l.b16 %v3723
      %v4149 = vunpack.c.l.b16 %v3724
      %v4150 = vpack.c.b16 %v4119, %v4118
      %v4151 = vpack.c.b16 %v4121, %v4120
      %v4152 = vpack.c.b16 %v4123, %v4122
      %v4153 = vpack.c.b16 %v4125, %v4124
      %v4154 = vpack.c.b16 %v4127, %v4126
      %v4155 = vpack.c.b16 %v4129, %v4128
      %v4156 = vpack.c.b16 %v4131, %v4130
      %v4157 = vpack.c.b16 %v4133, %v4132
      %v4158 = vpack.c.b16 %v4135, %v4134
      %v4159 = vpack.c.b16 %v4137, %v4136
      %v4160 = vpack.c.b16 %v4139, %v4138
      %v4161 = vpack.c.b16 %v4141, %v4140
      %v4162 = vpack.c.b16 %v4143, %v4142
      %v4163 = vpack.c.b16 %v4145, %v4144
      %v4164 = vpack.c.b16 %v4147, %v4146
      %v4165 = vpack.c.b16 %v4149, %v4148
      %v4167 = vsel %vm1997, %v4150, 0
      %v4170 = vsel %vm1997, %v4151, 0
      %v4173 = vsel %vm1997, %v4152, 0
      %v4176 = vsel %vm1997, %v4153, 0
      %v4179 = vsel %vm1997, %v4154, 0
      %v4182 = vsel %vm1997, %v4155, 0
      %v4185 = vsel %vm1997, %v4156, 0
      %v4188 = vsel %vm1997, %v4157, 0
      %v4191 = vsel %vm1997, %v4158, 0
      %v4194 = vsel %vm1997, %v4159, 0
      %v4197 = vsel %vm1997, %v4160, 0
      %v4200 = vsel %vm1997, %v4161, 0
      %v4203 = vsel %vm1997, %v4162, 0
      %v4206 = vsel %vm1997, %v4163, 0
      %v4209 = vsel %vm1997, %v4164, 0
      %v4212 = vsel %vm1997, %v4165, 0
      %4214 = vmatpush.bf16.msra.mxu0 0
      %4215 = vmatpush.bf16.msra.mxu0 0
      %4216 = vmatpush.bf16.msra.mxu0 0
      %4217 = vmatpush.bf16.msra.mxu0 0
      %4218 = vmatpush.bf16.msra.mxu0 %v3785
      %4219 = vmatpush.bf16.msra.mxu0 %v3784
      %4220 = vmatpush.bf16.msra.mxu0 %v3783
      %4221 = vmatpush.bf16.msra.mxu0 %v3782
      %4222 = vmatmul.bf16.gmra.mxu0 %v4167
      %v4223 = vpop.f32.mrf.mxu0
      %v4224 = vadd.f32 %v4007, %v4223
      %v4225 = vpop.f32.mrf.mxu0
      %v4226 = vadd.f32 %v4009, %v4225
      %4227 = vmatmul.bf16.gmra.mxu0 %v4170
      %v4228 = vpop.f32.mrf.mxu0
      %v4229 = vadd.f32 %v4012, %v4228
      %v4230 = vpop.f32.mrf.mxu0
      %v4231 = vadd.f32 %v4014, %v4230
      %4232 = vmatmul.bf16.gmra.mxu0 %v4173
      %v4233 = vpop.f32.mrf.mxu0
      %v4234 = vadd.f32 %v4017, %v4233
      %v4235 = vpop.f32.mrf.mxu0
      %v4236 = vadd.f32 %v4019, %v4235
      %4237 = vmatmul.bf16.gmra.mxu0 %v4176
      %v4238 = vpop.f32.mrf.mxu0
      %v4239 = vadd.f32 %v4022, %v4238
      %v4240 = vpop.f32.mrf.mxu0
      %v4241 = vadd.f32 %v4024, %v4240
      %4242 = vmatmul.bf16.gmra.mxu0 %v4179
      %v4243 = vpop.f32.mrf.mxu0
      %v4244 = vadd.f32 %v4027, %v4243
      %v4245 = vpop.f32.mrf.mxu0
      %v4246 = vadd.f32 %v4029, %v4245
      %4247 = vmatmul.bf16.gmra.mxu0 %v4182
      %v4248 = vpop.f32.mrf.mxu0
      %v4249 = vadd.f32 %v4032, %v4248
      %v4250 = vpop.f32.mrf.mxu0
      %v4251 = vadd.f32 %v4034, %v4250
      %4252 = vmatmul.bf16.gmra.mxu0 %v4185
      %v4253 = vpop.f32.mrf.mxu0
      %v4254 = vadd.f32 %v4037, %v4253
      %v4255 = vpop.f32.mrf.mxu0
      %v4256 = vadd.f32 %v4039, %v4255
      %4257 = vmatmul.bf16.gmra.mxu0 %v4188
      %v4258 = vpop.f32.mrf.mxu0
      %v4259 = vadd.f32 %v4042, %v4258
      %v4260 = vpop.f32.mrf.mxu0
      %v4261 = vadd.f32 %v4044, %v4260
      %4262 = vmatmul.bf16.gmra.mxu0 %v4191
      %v4263 = vpop.f32.mrf.mxu0
      %v4264 = vadd.f32 %v4047, %v4263
      %v4265 = vpop.f32.mrf.mxu0
      %v4266 = vadd.f32 %v4049, %v4265
      %4267 = vmatmul.bf16.gmra.mxu0 %v4194
      %v4268 = vpop.f32.mrf.mxu0
      %v4269 = vadd.f32 %v4052, %v4268
      %v4270 = vpop.f32.mrf.mxu0
      %v4271 = vadd.f32 %v4054, %v4270
      %4272 = vmatmul.bf16.gmra.mxu0 %v4197
      %v4273 = vpop.f32.mrf.mxu0
      %v4274 = vadd.f32 %v4057, %v4273
      %v4275 = vpop.f32.mrf.mxu0
      %v4276 = vadd.f32 %v4059, %v4275
      %4277 = vmatmul.bf16.gmra.mxu0 %v4200
      %v4278 = vpop.f32.mrf.mxu0
      %v4279 = vadd.f32 %v4062, %v4278
      %v4280 = vpop.f32.mrf.mxu0
      %v4281 = vadd.f32 %v4064, %v4280
      %4282 = vmatmul.bf16.gmra.mxu0 %v4203
      %v4283 = vpop.f32.mrf.mxu0
      %v4284 = vadd.f32 %v4067, %v4283
      %v4285 = vpop.f32.mrf.mxu0
      %v4286 = vadd.f32 %v4069, %v4285
      %4287 = vmatmul.bf16.gmra.mxu0 %v4206
      %v4288 = vpop.f32.mrf.mxu0
      %v4289 = vadd.f32 %v4072, %v4288
      %v4290 = vpop.f32.mrf.mxu0
      %v4291 = vadd.f32 %v4074, %v4290
      %4292 = vmatmul.bf16.gmra.mxu0 %v4209
      %v4293 = vpop.f32.mrf.mxu0
      %v4294 = vadd.f32 %v4077, %v4293
      %v4295 = vpop.f32.mrf.mxu0
      %v4296 = vadd.f32 %v4079, %v4295
      %4297 = vmatmul.bf16.gmra.mxu0 %v4212
      %v4298 = vpop.f32.mrf.mxu0
      %v4299 = vadd.f32 %v4082, %v4298
      %v4300 = vpop.f32.mrf.mxu0
      %v4301 = vadd.f32 %v4084, %v4300
      %4302 = vdwg.mxu0
      %s4303 = scalar_lea.vmem %s10, 256
      %v4304 = vld [vmem:[%s4303] sm:$0xf]
      %v4305 = vld [vmem:[%s4303 + $0x4] sm:$0xf]
      %v4306 = vld [vmem:[%s4303 + $0x8] sm:$0xf]
      %v4307 = vld [vmem:[%s4303 + $0xc] sm:$0xf]
      %v4308 = vld [vmem:[%s4303 + $0x10] sm:$0xf]
      %v4309 = vld [vmem:[%s4303 + $0x14] sm:$0xf]
      %v4310 = vld [vmem:[%s4303 + $0x18] sm:$0xf]
      %v4311 = vld [vmem:[%s4303 + $0x1c] sm:$0xf]
      %v4312 = vld [vmem:[%s4303 + $0x20] sm:$0xf]
      %v4313 = vld [vmem:[%s4303 + $0x24] sm:$0xf]
      %v4314 = vld [vmem:[%s4303 + $0x28] sm:$0xf]
      %v4315 = vld [vmem:[%s4303 + $0x2c] sm:$0xf]
      %v4316 = vld [vmem:[%s4303 + $0x30] sm:$0xf]
      %v4317 = vld [vmem:[%s4303 + $0x34] sm:$0xf]
      %v4318 = vld [vmem:[%s4303 + $0x38] sm:$0xf]
      %v4319 = vld [vmem:[%s4303 + $0x3c] sm:$0xf]
      %v4320 = vld [vmem:[%s4303 + $0x40] sm:$0xf]
      %v4321 = vld [vmem:[%s4303 + $0x44] sm:$0xf]
      %v4322 = vld [vmem:[%s4303 + $0x48] sm:$0xf]
      %v4323 = vld [vmem:[%s4303 + $0x4c] sm:$0xf]
      %v4324 = vld [vmem:[%s4303 + $0x50] sm:$0xf]
      %v4325 = vld [vmem:[%s4303 + $0x54] sm:$0xf]
      %v4326 = vld [vmem:[%s4303 + $0x58] sm:$0xf]
      %v4327 = vld [vmem:[%s4303 + $0x5c] sm:$0xf]
      %v4328 = vld [vmem:[%s4303 + $0x60] sm:$0xf]
      %v4329 = vld [vmem:[%s4303 + $0x64] sm:$0xf]
      %v4330 = vld [vmem:[%s4303 + $0x68] sm:$0xf]
      %v4331 = vld [vmem:[%s4303 + $0x6c] sm:$0xf]
      %v4332 = vld [vmem:[%s4303 + $0x70] sm:$0xf]
      %v4333 = vld [vmem:[%s4303 + $0x74] sm:$0xf]
      %v4334 = vld [vmem:[%s4303 + $0x78] sm:$0xf]
      %v4335 = vld [vmem:[%s4303 + $0x7c] sm:$0xf]
      %s4336 = scalar_lea.vmem %s11, 32
      %v4337 = vld [vmem:[%s4336] sm:$0xf]
      %v4338 = vld [vmem:[%s4336 + $0x4] sm:$0xf]
      %v4339 = vld [vmem:[%s4336 + $0x8] sm:$0xf]
      %v4340 = vld [vmem:[%s4336 + $0xc] sm:$0xf]
      %v4345 = vunpack.c.l.b16 %v4337
      %v4346 = vunpack.c.l.b16 %v4338
      %v4347 = vunpack.c.l.b16 %v4339
      %v4348 = vunpack.c.l.b16 %v4340
      %v4349 = vpack.c.b16 %v4346, %v4345
      %v4350 = vpack.c.b16 %v4348, %v4347
      %4353 = vmatpush.bf16.msra.mxu0 0
      %4354 = vmatpush.bf16.msra.mxu0 0
      %4355 = vmatpush.bf16.msra.mxu0 0
      %4356 = vmatpush.bf16.msra.mxu0 0
      %4357 = vmatpush.bf16.msra.mxu0 0
      %4358 = vmatpush.bf16.msra.mxu0 0
      %4359 = vmatpush.bf16.msra.mxu0 %v4350
      %4360 = vmatpush.bf16.msra.mxu0 %v4349
      %4361 = vmatmul.bf16.gmra.mxu0 %v3742
      %v4362 = vpop.f32.mrf.mxu0
      %v4363 = vadd.f32 0.0, %v4362
      %v4364 = vpop.f32.mrf.mxu0
      %v4365 = vadd.f32 0.0, %v4364
      %4366 = vmatmul.bf16.gmra.mxu0 %v3745
      %v4367 = vpop.f32.mrf.mxu0
      %v4368 = vadd.f32 0.0, %v4367
      %v4369 = vpop.f32.mrf.mxu0
      %v4370 = vadd.f32 0.0, %v4369
      %4371 = vmatmul.bf16.gmra.mxu0 %v3748
      %v4372 = vpop.f32.mrf.mxu0
      %v4373 = vadd.f32 0.0, %v4372
      %v4374 = vpop.f32.mrf.mxu0
      %v4375 = vadd.f32 0.0, %v4374
      %4376 = vmatmul.bf16.gmra.mxu0 %v3751
      %v4377 = vpop.f32.mrf.mxu0
      %v4378 = vadd.f32 0.0, %v4377
      %v4379 = vpop.f32.mrf.mxu0
      %v4380 = vadd.f32 0.0, %v4379
      %4381 = vdwg.mxu0
      %v4382 = vpack.c.bf16 %v4365, %v4363
      %v4383 = vpack.c.bf16 %v4370, %v4368
      %v4384 = vpack.c.bf16 %v4375, %v4373
      %v4385 = vpack.c.bf16 %v4380, %v4378
      %v4418 = vunpack.c.l.b16 %v4304
      %v4419 = vunpack.c.l.b16 %v4305
      %v4420 = vunpack.c.l.b16 %v4306
      %v4421 = vunpack.c.l.b16 %v4307
      %v4422 = vunpack.c.l.b16 %v4308
      %v4423 = vunpack.c.l.b16 %v4309
      %v4424 = vunpack.c.l.b16 %v4310
      %v4425 = vunpack.c.l.b16 %v4311
      %v4426 = vunpack.c.l.b16 %v4312
      %v4427 = vunpack.c.l.b16 %v4313
      %v4428 = vunpack.c.l.b16 %v4314
      %v4429 = vunpack.c.l.b16 %v4315
      %v4430 = vunpack.c.l.b16 %v4316
      %v4431 = vunpack.c.l.b16 %v4317
      %v4432 = vunpack.c.l.b16 %v4318
      %v4433 = vunpack.c.l.b16 %v4319
      %v4434 = vunpack.c.l.b16 %v4320
      %v4435 = vunpack.c.l.b16 %v4321
      %v4436 = vunpack.c.l.b16 %v4322
      %v4437 = vunpack.c.l.b16 %v4323
      %v4438 = vunpack.c.l.b16 %v4324
      %v4439 = vunpack.c.l.b16 %v4325
      %v4440 = vunpack.c.l.b16 %v4326
      %v4441 = vunpack.c.l.b16 %v4327
      %v4442 = vunpack.c.l.b16 %v4328
      %v4443 = vunpack.c.l.b16 %v4329
      %v4444 = vunpack.c.l.b16 %v4330
      %v4445 = vunpack.c.l.b16 %v4331
      %v4446 = vunpack.c.l.b16 %v4332
      %v4447 = vunpack.c.l.b16 %v4333
      %v4448 = vunpack.c.l.b16 %v4334
      %v4449 = vunpack.c.l.b16 %v4335
      %v4450 = vpack.c.b16 %v4419, %v4418
      %v4451 = vpack.c.b16 %v4421, %v4420
      %v4452 = vpack.c.b16 %v4423, %v4422
      %v4453 = vpack.c.b16 %v4425, %v4424
      %v4454 = vpack.c.b16 %v4427, %v4426
      %v4455 = vpack.c.b16 %v4429, %v4428
      %v4456 = vpack.c.b16 %v4431, %v4430
      %v4457 = vpack.c.b16 %v4433, %v4432
      %v4458 = vpack.c.b16 %v4435, %v4434
      %v4459 = vpack.c.b16 %v4437, %v4436
      %v4460 = vpack.c.b16 %v4439, %v4438
      %v4461 = vpack.c.b16 %v4441, %v4440
      %v4462 = vpack.c.b16 %v4443, %v4442
      %v4463 = vpack.c.b16 %v4445, %v4444
      %v4464 = vpack.c.b16 %v4447, %v4446
      %v4465 = vpack.c.b16 %v4449, %v4448
      %v4467 = vsel %vm1997, %v4450, 0
      %v4470 = vsel %vm1997, %v4451, 0
      %v4473 = vsel %vm1997, %v4452, 0
      %v4476 = vsel %vm1997, %v4453, 0
      %v4479 = vsel %vm1997, %v4454, 0
      %v4482 = vsel %vm1997, %v4455, 0
      %v4485 = vsel %vm1997, %v4456, 0
      %v4488 = vsel %vm1997, %v4457, 0
      %v4491 = vsel %vm1997, %v4458, 0
      %v4494 = vsel %vm1997, %v4459, 0
      %v4497 = vsel %vm1997, %v4460, 0
      %v4500 = vsel %vm1997, %v4461, 0
      %v4503 = vsel %vm1997, %v4462, 0
      %v4506 = vsel %vm1997, %v4463, 0
      %v4509 = vsel %vm1997, %v4464, 0
      %v4512 = vsel %vm1997, %v4465, 0
      %4514 = vmatpush.bf16.msra.mxu0 0
      %4515 = vmatpush.bf16.msra.mxu0 0
      %4516 = vmatpush.bf16.msra.mxu0 0
      %4517 = vmatpush.bf16.msra.mxu0 0
      %4518 = vmatpush.bf16.msra.mxu0 %v4385
      %4519 = vmatpush.bf16.msra.mxu0 %v4384
      %4520 = vmatpush.bf16.msra.mxu0 %v4383
      %4521 = vmatpush.bf16.msra.mxu0 %v4382
      %4522 = vmatmul.bf16.gmra.mxu0 %v4467
      %v4523 = vpop.f32.mrf.mxu0
      %v4524 = vadd.f32 0.0, %v4523
      %v4525 = vpop.f32.mrf.mxu0
      %v4526 = vadd.f32 0.0, %v4525
      %4527 = vmatmul.bf16.gmra.mxu0 %v4470
      %v4528 = vpop.f32.mrf.mxu0
      %v4529 = vadd.f32 0.0, %v4528
      %v4530 = vpop.f32.mrf.mxu0
      %v4531 = vadd.f32 0.0, %v4530
      %4532 = vmatmul.bf16.gmra.mxu0 %v4473
      %v4533 = vpop.f32.mrf.mxu0
      %v4534 = vadd.f32 0.0, %v4533
      %v4535 = vpop.f32.mrf.mxu0
      %v4536 = vadd.f32 0.0, %v4535
      %4537 = vmatmul.bf16.gmra.mxu0 %v4476
      %v4538 = vpop.f32.mrf.mxu0
      %v4539 = vadd.f32 0.0, %v4538
      %v4540 = vpop.f32.mrf.mxu0
      %v4541 = vadd.f32 0.0, %v4540
      %4542 = vmatmul.bf16.gmra.mxu0 %v4479
      %v4543 = vpop.f32.mrf.mxu0
      %v4544 = vadd.f32 0.0, %v4543
      %v4545 = vpop.f32.mrf.mxu0
      %v4546 = vadd.f32 0.0, %v4545
      %4547 = vmatmul.bf16.gmra.mxu0 %v4482
      %v4548 = vpop.f32.mrf.mxu0
      %v4549 = vadd.f32 0.0, %v4548
      %v4550 = vpop.f32.mrf.mxu0
      %v4551 = vadd.f32 0.0, %v4550
      %4552 = vmatmul.bf16.gmra.mxu0 %v4485
      %v4553 = vpop.f32.mrf.mxu0
      %v4554 = vadd.f32 0.0, %v4553
      %v4555 = vpop.f32.mrf.mxu0
      %v4556 = vadd.f32 0.0, %v4555
      %4557 = vmatmul.bf16.gmra.mxu0 %v4488
      %v4558 = vpop.f32.mrf.mxu0
      %v4559 = vadd.f32 0.0, %v4558
      %v4560 = vpop.f32.mrf.mxu0
      %v4561 = vadd.f32 0.0, %v4560
      %4562 = vmatmul.bf16.gmra.mxu0 %v4491
      %v4563 = vpop.f32.mrf.mxu0
      %v4564 = vadd.f32 0.0, %v4563
      %v4565 = vpop.f32.mrf.mxu0
      %v4566 = vadd.f32 0.0, %v4565
      %4567 = vmatmul.bf16.gmra.mxu0 %v4494
      %v4568 = vpop.f32.mrf.mxu0
      %v4569 = vadd.f32 0.0, %v4568
      %v4570 = vpop.f32.mrf.mxu0
      %v4571 = vadd.f32 0.0, %v4570
      %4572 = vmatmul.bf16.gmra.mxu0 %v4497
      %v4573 = vpop.f32.mrf.mxu0
      %v4574 = vadd.f32 0.0, %v4573
      %v4575 = vpop.f32.mrf.mxu0
      %v4576 = vadd.f32 0.0, %v4575
      %4577 = vmatmul.bf16.gmra.mxu0 %v4500
      %v4578 = vpop.f32.mrf.mxu0
      %v4579 = vadd.f32 0.0, %v4578
      %v4580 = vpop.f32.mrf.mxu0
      %v4581 = vadd.f32 0.0, %v4580
      %4582 = vmatmul.bf16.gmra.mxu0 %v4503
      %v4583 = vpop.f32.mrf.mxu0
      %v4584 = vadd.f32 0.0, %v4583
      %v4585 = vpop.f32.mrf.mxu0
      %v4586 = vadd.f32 0.0, %v4585
      %4587 = vmatmul.bf16.gmra.mxu0 %v4506
      %v4588 = vpop.f32.mrf.mxu0
      %v4589 = vadd.f32 0.0, %v4588
      %v4590 = vpop.f32.mrf.mxu0
      %v4591 = vadd.f32 0.0, %v4590
      %4592 = vmatmul.bf16.gmra.mxu0 %v4509
      %v4593 = vpop.f32.mrf.mxu0
      %v4594 = vadd.f32 0.0, %v4593
      %v4595 = vpop.f32.mrf.mxu0
      %v4596 = vadd.f32 0.0, %v4595
      %4597 = vmatmul.bf16.gmra.mxu0 %v4512
      %v4598 = vpop.f32.mrf.mxu0
      %v4599 = vadd.f32 0.0, %v4598
      %v4600 = vpop.f32.mrf.mxu0
      %v4601 = vadd.f32 0.0, %v4600
      %4602 = vdwg.mxu0
      %v4603 = vadd.f32 %v4224, %v4524
      %v4604 = vadd.f32 %v4226, %v4526
      %v4605 = vadd.f32 %v4229, %v4529
      %v4606 = vadd.f32 %v4231, %v4531
      %v4607 = vadd.f32 %v4234, %v4534
      %v4608 = vadd.f32 %v4236, %v4536
      %v4609 = vadd.f32 %v4239, %v4539
      %v4610 = vadd.f32 %v4241, %v4541
      %v4611 = vadd.f32 %v4244, %v4544
      %v4612 = vadd.f32 %v4246, %v4546
      %v4613 = vadd.f32 %v4249, %v4549
      %v4614 = vadd.f32 %v4251, %v4551
      %v4615 = vadd.f32 %v4254, %v4554
      %v4616 = vadd.f32 %v4256, %v4556
      %v4617 = vadd.f32 %v4259, %v4559
      %v4618 = vadd.f32 %v4261, %v4561
      %v4619 = vadd.f32 %v4264, %v4564
      %v4620 = vadd.f32 %v4266, %v4566
      %v4621 = vadd.f32 %v4269, %v4569
      %v4622 = vadd.f32 %v4271, %v4571
      %v4623 = vadd.f32 %v4274, %v4574
      %v4624 = vadd.f32 %v4276, %v4576
      %v4625 = vadd.f32 %v4279, %v4579
      %v4626 = vadd.f32 %v4281, %v4581
      %v4627 = vadd.f32 %v4284, %v4584
      %v4628 = vadd.f32 %v4286, %v4586
      %v4629 = vadd.f32 %v4289, %v4589
      %v4630 = vadd.f32 %v4291, %v4591
      %v4631 = vadd.f32 %v4294, %v4594
      %v4632 = vadd.f32 %v4296, %v4596
      %v4633 = vadd.f32 %v4299, %v4599
      %v4634 = vadd.f32 %v4301, %v4601
      %s4635 = scalar_lea.vmem %s10, 384
      %v4636 = vld [vmem:[%s4635] sm:$0xf]
      %v4637 = vld [vmem:[%s4635 + $0x4] sm:$0xf]
      %v4638 = vld [vmem:[%s4635 + $0x8] sm:$0xf]
      %v4639 = vld [vmem:[%s4635 + $0xc] sm:$0xf]
      %v4640 = vld [vmem:[%s4635 + $0x10] sm:$0xf]
      %v4641 = vld [vmem:[%s4635 + $0x14] sm:$0xf]
      %v4642 = vld [vmem:[%s4635 + $0x18] sm:$0xf]
      %v4643 = vld [vmem:[%s4635 + $0x1c] sm:$0xf]
      %v4644 = vld [vmem:[%s4635 + $0x20] sm:$0xf]
      %v4645 = vld [vmem:[%s4635 + $0x24] sm:$0xf]
      %v4646 = vld [vmem:[%s4635 + $0x28] sm:$0xf]
      %v4647 = vld [vmem:[%s4635 + $0x2c] sm:$0xf]
      %v4648 = vld [vmem:[%s4635 + $0x30] sm:$0xf]
      %v4649 = vld [vmem:[%s4635 + $0x34] sm:$0xf]
      %v4650 = vld [vmem:[%s4635 + $0x38] sm:$0xf]
      %v4651 = vld [vmem:[%s4635 + $0x3c] sm:$0xf]
      %v4652 = vld [vmem:[%s4635 + $0x40] sm:$0xf]
      %v4653 = vld [vmem:[%s4635 + $0x44] sm:$0xf]
      %v4654 = vld [vmem:[%s4635 + $0x48] sm:$0xf]
      %v4655 = vld [vmem:[%s4635 + $0x4c] sm:$0xf]
      %v4656 = vld [vmem:[%s4635 + $0x50] sm:$0xf]
      %v4657 = vld [vmem:[%s4635 + $0x54] sm:$0xf]
      %v4658 = vld [vmem:[%s4635 + $0x58] sm:$0xf]
      %v4659 = vld [vmem:[%s4635 + $0x5c] sm:$0xf]
      %v4660 = vld [vmem:[%s4635 + $0x60] sm:$0xf]
      %v4661 = vld [vmem:[%s4635 + $0x64] sm:$0xf]
      %v4662 = vld [vmem:[%s4635 + $0x68] sm:$0xf]
      %v4663 = vld [vmem:[%s4635 + $0x6c] sm:$0xf]
      %v4664 = vld [vmem:[%s4635 + $0x70] sm:$0xf]
      %v4665 = vld [vmem:[%s4635 + $0x74] sm:$0xf]
      %v4666 = vld [vmem:[%s4635 + $0x78] sm:$0xf]
      %v4667 = vld [vmem:[%s4635 + $0x7c] sm:$0xf]
      %s4668 = scalar_lea.vmem %s11, 48
      %v4669 = vld [vmem:[%s4668] sm:$0xf]
      %v4670 = vld [vmem:[%s4668 + $0x4] sm:$0xf]
      %v4671 = vld [vmem:[%s4668 + $0x8] sm:$0xf]
      %v4672 = vld [vmem:[%s4668 + $0xc] sm:$0xf]
      %v4677 = vunpack.c.l.b16 %v4669
      %v4678 = vunpack.c.l.b16 %v4670
      %v4679 = vunpack.c.l.b16 %v4671
      %v4680 = vunpack.c.l.b16 %v4672
      %v4681 = vpack.c.b16 %v4678, %v4677
      %v4682 = vpack.c.b16 %v4680, %v4679
      %4685 = vmatpush.bf16.msra.mxu0 0
      %4686 = vmatpush.bf16.msra.mxu0 0
      %4687 = vmatpush.bf16.msra.mxu0 0
      %4688 = vmatpush.bf16.msra.mxu0 0
      %4689 = vmatpush.bf16.msra.mxu0 0
      %4690 = vmatpush.bf16.msra.mxu0 0
      %4691 = vmatpush.bf16.msra.mxu0 %v4682
      %4692 = vmatpush.bf16.msra.mxu0 %v4681
      %4693 = vmatmul.bf16.gmra.mxu0 %v3742
      %v4694 = vpop.f32.mrf.mxu0
      %v4695 = vadd.f32 0.0, %v4694
      %v4696 = vpop.f32.mrf.mxu0
      %v4697 = vadd.f32 0.0, %v4696
      %4698 = vmatmul.bf16.gmra.mxu0 %v3745
      %v4699 = vpop.f32.mrf.mxu0
      %v4700 = vadd.f32 0.0, %v4699
      %v4701 = vpop.f32.mrf.mxu0
      %v4702 = vadd.f32 0.0, %v4701
      %4703 = vmatmul.bf16.gmra.mxu0 %v3748
      %v4704 = vpop.f32.mrf.mxu0
      %v4705 = vadd.f32 0.0, %v4704
      %v4706 = vpop.f32.mrf.mxu0
      %v4707 = vadd.f32 0.0, %v4706
      %4708 = vmatmul.bf16.gmra.mxu0 %v3751
      %v4709 = vpop.f32.mrf.mxu0
      %v4710 = vadd.f32 0.0, %v4709
      %v4711 = vpop.f32.mrf.mxu0
      %v4712 = vadd.f32 0.0, %v4711
      %4713 = vdwg.mxu0
      %v4714 = vpack.c.bf16 %v4697, %v4695
      %v4715 = vpack.c.bf16 %v4702, %v4700
      %v4716 = vpack.c.bf16 %v4707, %v4705
      %v4717 = vpack.c.bf16 %v4712, %v4710
      %v4750 = vunpack.c.l.b16 %v4636
      %v4751 = vunpack.c.l.b16 %v4637
      %v4752 = vunpack.c.l.b16 %v4638
      %v4753 = vunpack.c.l.b16 %v4639
      %v4754 = vunpack.c.l.b16 %v4640
      %v4755 = vunpack.c.l.b16 %v4641
      %v4756 = vunpack.c.l.b16 %v4642
      %v4757 = vunpack.c.l.b16 %v4643
      %v4758 = vunpack.c.l.b16 %v4644
      %v4759 = vunpack.c.l.b16 %v4645
      %v4760 = vunpack.c.l.b16 %v4646
      %v4761 = vunpack.c.l.b16 %v4647
      %v4762 = vunpack.c.l.b16 %v4648
      %v4763 = vunpack.c.l.b16 %v4649
      %v4764 = vunpack.c.l.b16 %v4650
      %v4765 = vunpack.c.l.b16 %v4651
      %v4766 = vunpack.c.l.b16 %v4652
      %v4767 = vunpack.c.l.b16 %v4653
      %v4768 = vunpack.c.l.b16 %v4654
      %v4769 = vunpack.c.l.b16 %v4655
      %v4770 = vunpack.c.l.b16 %v4656
      %v4771 = vunpack.c.l.b16 %v4657
      %v4772 = vunpack.c.l.b16 %v4658
      %v4773 = vunpack.c.l.b16 %v4659
      %v4774 = vunpack.c.l.b16 %v4660
      %v4775 = vunpack.c.l.b16 %v4661
      %v4776 = vunpack.c.l.b16 %v4662
      %v4777 = vunpack.c.l.b16 %v4663
      %v4778 = vunpack.c.l.b16 %v4664
      %v4779 = vunpack.c.l.b16 %v4665
      %v4780 = vunpack.c.l.b16 %v4666
      %v4781 = vunpack.c.l.b16 %v4667
      %v4782 = vpack.c.b16 %v4751, %v4750
      %v4783 = vpack.c.b16 %v4753, %v4752
      %v4784 = vpack.c.b16 %v4755, %v4754
      %v4785 = vpack.c.b16 %v4757, %v4756
      %v4786 = vpack.c.b16 %v4759, %v4758
      %v4787 = vpack.c.b16 %v4761, %v4760
      %v4788 = vpack.c.b16 %v4763, %v4762
      %v4789 = vpack.c.b16 %v4765, %v4764
      %v4790 = vpack.c.b16 %v4767, %v4766
      %v4791 = vpack.c.b16 %v4769, %v4768
      %v4792 = vpack.c.b16 %v4771, %v4770
      %v4793 = vpack.c.b16 %v4773, %v4772
      %v4794 = vpack.c.b16 %v4775, %v4774
      %v4795 = vpack.c.b16 %v4777, %v4776
      %v4796 = vpack.c.b16 %v4779, %v4778
      %v4797 = vpack.c.b16 %v4781, %v4780
      %v4799 = vsel %vm1997, %v4782, 0
      %v4802 = vsel %vm1997, %v4783, 0
      %v4805 = vsel %vm1997, %v4784, 0
      %v4808 = vsel %vm1997, %v4785, 0
      %v4811 = vsel %vm1997, %v4786, 0
      %v4814 = vsel %vm1997, %v4787, 0
      %v4817 = vsel %vm1997, %v4788, 0
      %v4820 = vsel %vm1997, %v4789, 0
      %v4823 = vsel %vm1997, %v4790, 0
      %v4826 = vsel %vm1997, %v4791, 0
      %v4829 = vsel %vm1997, %v4792, 0
      %v4832 = vsel %vm1997, %v4793, 0
      %v4835 = vsel %vm1997, %v4794, 0
      %v4838 = vsel %vm1997, %v4795, 0
      %v4841 = vsel %vm1997, %v4796, 0
      %v4844 = vsel %vm1997, %v4797, 0
      %4846 = vmatpush.bf16.msra.mxu0 0
      %4847 = vmatpush.bf16.msra.mxu0 0
      %4848 = vmatpush.bf16.msra.mxu0 0
      %4849 = vmatpush.bf16.msra.mxu0 0
      %4850 = vmatpush.bf16.msra.mxu0 %v4717
      %4851 = vmatpush.bf16.msra.mxu0 %v4716
      %4852 = vmatpush.bf16.msra.mxu0 %v4715
      %4853 = vmatpush.bf16.msra.mxu0 %v4714
      %4854 = vmatmul.bf16.gmra.mxu0 %v4799
      %v4855 = vpop.f32.mrf.mxu0
      %v4856 = vadd.f32 0.0, %v4855
      %v4857 = vpop.f32.mrf.mxu0
      %v4858 = vadd.f32 0.0, %v4857
      %4859 = vmatmul.bf16.gmra.mxu0 %v4802
      %v4860 = vpop.f32.mrf.mxu0
      %v4861 = vadd.f32 0.0, %v4860
      %v4862 = vpop.f32.mrf.mxu0
      %v4863 = vadd.f32 0.0, %v4862
      %4864 = vmatmul.bf16.gmra.mxu0 %v4805
      %v4865 = vpop.f32.mrf.mxu0
      %v4866 = vadd.f32 0.0, %v4865
      %v4867 = vpop.f32.mrf.mxu0
      %v4868 = vadd.f32 0.0, %v4867
      %4869 = vmatmul.bf16.gmra.mxu0 %v4808
      %v4870 = vpop.f32.mrf.mxu0
      %v4871 = vadd.f32 0.0, %v4870
      %v4872 = vpop.f32.mrf.mxu0
      %v4873 = vadd.f32 0.0, %v4872
      %4874 = vmatmul.bf16.gmra.mxu0 %v4811
      %v4875 = vpop.f32.mrf.mxu0
      %v4876 = vadd.f32 0.0, %v4875
      %v4877 = vpop.f32.mrf.mxu0
      %v4878 = vadd.f32 0.0, %v4877
      %4879 = vmatmul.bf16.gmra.mxu0 %v4814
      %v4880 = vpop.f32.mrf.mxu0
      %v4881 = vadd.f32 0.0, %v4880
      %v4882 = vpop.f32.mrf.mxu0
      %v4883 = vadd.f32 0.0, %v4882
      %4884 = vmatmul.bf16.gmra.mxu0 %v4817
      %v4885 = vpop.f32.mrf.mxu0
      %v4886 = vadd.f32 0.0, %v4885
      %v4887 = vpop.f32.mrf.mxu0
      %v4888 = vadd.f32 0.0, %v4887
      %4889 = vmatmul.bf16.gmra.mxu0 %v4820
      %v4890 = vpop.f32.mrf.mxu0
      %v4891 = vadd.f32 0.0, %v4890
      %v4892 = vpop.f32.mrf.mxu0
      %v4893 = vadd.f32 0.0, %v4892
      %4894 = vmatmul.bf16.gmra.mxu0 %v4823
      %v4895 = vpop.f32.mrf.mxu0
      %v4896 = vadd.f32 0.0, %v4895
      %v4897 = vpop.f32.mrf.mxu0
      %v4898 = vadd.f32 0.0, %v4897
      %4899 = vmatmul.bf16.gmra.mxu0 %v4826
      %v4900 = vpop.f32.mrf.mxu0
      %v4901 = vadd.f32 0.0, %v4900
      %v4902 = vpop.f32.mrf.mxu0
      %v4903 = vadd.f32 0.0, %v4902
      %4904 = vmatmul.bf16.gmra.mxu0 %v4829
      %v4905 = vpop.f32.mrf.mxu0
      %v4906 = vadd.f32 0.0, %v4905
      %v4907 = vpop.f32.mrf.mxu0
      %v4908 = vadd.f32 0.0, %v4907
      %4909 = vmatmul.bf16.gmra.mxu0 %v4832
      %v4910 = vpop.f32.mrf.mxu0
      %v4911 = vadd.f32 0.0, %v4910
      %v4912 = vpop.f32.mrf.mxu0
      %v4913 = vadd.f32 0.0, %v4912
      %4914 = vmatmul.bf16.gmra.mxu0 %v4835
      %v4915 = vpop.f32.mrf.mxu0
      %v4916 = vadd.f32 0.0, %v4915
      %v4917 = vpop.f32.mrf.mxu0
      %v4918 = vadd.f32 0.0, %v4917
      %4919 = vmatmul.bf16.gmra.mxu0 %v4838
      %v4920 = vpop.f32.mrf.mxu0
      %v4921 = vadd.f32 0.0, %v4920
      %v4922 = vpop.f32.mrf.mxu0
      %v4923 = vadd.f32 0.0, %v4922
      %4924 = vmatmul.bf16.gmra.mxu0 %v4841
      %v4925 = vpop.f32.mrf.mxu0
      %v4926 = vadd.f32 0.0, %v4925
      %v4927 = vpop.f32.mrf.mxu0
      %v4928 = vadd.f32 0.0, %v4927
      %4929 = vmatmul.bf16.gmra.mxu0 %v4844
      %v4930 = vpop.f32.mrf.mxu0
      %v4931 = vadd.f32 0.0, %v4930
      %v4932 = vpop.f32.mrf.mxu0
      %v4933 = vadd.f32 0.0, %v4932
      %4934 = vdwg.mxu0
      %v4935 = vadd.f32 %v4603, %v4856
      %v4936 = vadd.f32 %v4604, %v4858
      %v4937 = vadd.f32 %v4605, %v4861
      %v4938 = vadd.f32 %v4606, %v4863
      %v4939 = vadd.f32 %v4607, %v4866
      %v4940 = vadd.f32 %v4608, %v4868
      %v4941 = vadd.f32 %v4609, %v4871
      %v4942 = vadd.f32 %v4610, %v4873
      %v4943 = vadd.f32 %v4611, %v4876
      %v4944 = vadd.f32 %v4612, %v4878
      %v4945 = vadd.f32 %v4613, %v4881
      %v4946 = vadd.f32 %v4614, %v4883
      %v4947 = vadd.f32 %v4615, %v4886
      %v4948 = vadd.f32 %v4616, %v4888
      %v4949 = vadd.f32 %v4617, %v4891
      %v4950 = vadd.f32 %v4618, %v4893
      %v4951 = vadd.f32 %v4619, %v4896
      %v4952 = vadd.f32 %v4620, %v4898
      %v4953 = vadd.f32 %v4621, %v4901
      %v4954 = vadd.f32 %v4622, %v4903
      %v4955 = vadd.f32 %v4623, %v4906
      %v4956 = vadd.f32 %v4624, %v4908
      %v4957 = vadd.f32 %v4625, %v4911
      %v4958 = vadd.f32 %v4626, %v4913
      %v4959 = vadd.f32 %v4627, %v4916
      %v4960 = vadd.f32 %v4628, %v4918
      %v4961 = vadd.f32 %v4629, %v4921
      %v4962 = vadd.f32 %v4630, %v4923
      %v4963 = vadd.f32 %v4631, %v4926
      %v4964 = vadd.f32 %v4632, %v4928
      %v4965 = vadd.f32 %v4633, %v4931
      %v4966 = vadd.f32 %v4634, %v4933
      %s4967 = scalar_lea.vmem %s10, 512
      %v4968 = vld [vmem:[%s4967] sm:$0xf]
      %v4969 = vld [vmem:[%s4967 + $0x4] sm:$0xf]
      %v4970 = vld [vmem:[%s4967 + $0x8] sm:$0xf]
      %v4971 = vld [vmem:[%s4967 + $0xc] sm:$0xf]
      %v4972 = vld [vmem:[%s4967 + $0x10] sm:$0xf]
      %v4973 = vld [vmem:[%s4967 + $0x14] sm:$0xf]
      %v4974 = vld [vmem:[%s4967 + $0x18] sm:$0xf]
      %v4975 = vld [vmem:[%s4967 + $0x1c] sm:$0xf]
      %v4976 = vld [vmem:[%s4967 + $0x20] sm:$0xf]
      %v4977 = vld [vmem:[%s4967 + $0x24] sm:$0xf]
      %v4978 = vld [vmem:[%s4967 + $0x28] sm:$0xf]
      %v4979 = vld [vmem:[%s4967 + $0x2c] sm:$0xf]
      %v4980 = vld [vmem:[%s4967 + $0x30] sm:$0xf]
      %v4981 = vld [vmem:[%s4967 + $0x34] sm:$0xf]
      %v4982 = vld [vmem:[%s4967 + $0x38] sm:$0xf]
      %v4983 = vld [vmem:[%s4967 + $0x3c] sm:$0xf]
      %v4984 = vld [vmem:[%s4967 + $0x40] sm:$0xf]
      %v4985 = vld [vmem:[%s4967 + $0x44] sm:$0xf]
      %v4986 = vld [vmem:[%s4967 + $0x48] sm:$0xf]
      %v4987 = vld [vmem:[%s4967 + $0x4c] sm:$0xf]
      %v4988 = vld [vmem:[%s4967 + $0x50] sm:$0xf]
      %v4989 = vld [vmem:[%s4967 + $0x54] sm:$0xf]
      %v4990 = vld [vmem:[%s4967 + $0x58] sm:$0xf]
      %v4991 = vld [vmem:[%s4967 + $0x5c] sm:$0xf]
      %v4992 = vld [vmem:[%s4967 + $0x60] sm:$0xf]
      %v4993 = vld [vmem:[%s4967 + $0x64] sm:$0xf]
      %v4994 = vld [vmem:[%s4967 + $0x68] sm:$0xf]
      %v4995 = vld [vmem:[%s4967 + $0x6c] sm:$0xf]
      %v4996 = vld [vmem:[%s4967 + $0x70] sm:$0xf]
      %v4997 = vld [vmem:[%s4967 + $0x74] sm:$0xf]
      %v4998 = vld [vmem:[%s4967 + $0x78] sm:$0xf]
      %v4999 = vld [vmem:[%s4967 + $0x7c] sm:$0xf]
      %s5000 = scalar_lea.vmem %s11, 64
      %v5001 = vld [vmem:[%s5000] sm:$0xf]
      %v5002 = vld [vmem:[%s5000 + $0x4] sm:$0xf]
      %v5003 = vld [vmem:[%s5000 + $0x8] sm:$0xf]
      %v5004 = vld [vmem:[%s5000 + $0xc] sm:$0xf]
      %v5009 = vunpack.c.l.b16 %v5001
      %v5010 = vunpack.c.l.b16 %v5002
      %v5011 = vunpack.c.l.b16 %v5003
      %v5012 = vunpack.c.l.b16 %v5004
      %v5013 = vpack.c.b16 %v5010, %v5009
      %v5014 = vpack.c.b16 %v5012, %v5011
      %5017 = vmatpush.bf16.msra.mxu0 0
      %5018 = vmatpush.bf16.msra.mxu0 0
      %5019 = vmatpush.bf16.msra.mxu0 0
      %5020 = vmatpush.bf16.msra.mxu0 0
      %5021 = vmatpush.bf16.msra.mxu0 0
      %5022 = vmatpush.bf16.msra.mxu0 0
      %5023 = vmatpush.bf16.msra.mxu0 %v5014
      %5024 = vmatpush.bf16.msra.mxu0 %v5013
      %5025 = vmatmul.bf16.gmra.mxu0 %v3742
      %v5026 = vpop.f32.mrf.mxu0
      %v5027 = vadd.f32 0.0, %v5026
      %v5028 = vpop.f32.mrf.mxu0
      %v5029 = vadd.f32 0.0, %v5028
      %5030 = vmatmul.bf16.gmra.mxu0 %v3745
      %v5031 = vpop.f32.mrf.mxu0
      %v5032 = vadd.f32 0.0, %v5031
      %v5033 = vpop.f32.mrf.mxu0
      %v5034 = vadd.f32 0.0, %v5033
      %5035 = vmatmul.bf16.gmra.mxu0 %v3748
      %v5036 = vpop.f32.mrf.mxu0
      %v5037 = vadd.f32 0.0, %v5036
      %v5038 = vpop.f32.mrf.mxu0
      %v5039 = vadd.f32 0.0, %v5038
      %5040 = vmatmul.bf16.gmra.mxu0 %v3751
      %v5041 = vpop.f32.mrf.mxu0
      %v5042 = vadd.f32 0.0, %v5041
      %v5043 = vpop.f32.mrf.mxu0
      %v5044 = vadd.f32 0.0, %v5043
      %5045 = vdwg.mxu0
      %v5046 = vpack.c.bf16 %v5029, %v5027
      %v5047 = vpack.c.bf16 %v5034, %v5032
      %v5048 = vpack.c.bf16 %v5039, %v5037
      %v5049 = vpack.c.bf16 %v5044, %v5042
      %v5082 = vunpack.c.l.b16 %v4968
      %v5083 = vunpack.c.l.b16 %v4969
      %v5084 = vunpack.c.l.b16 %v4970
      %v5085 = vunpack.c.l.b16 %v4971
      %v5086 = vunpack.c.l.b16 %v4972
      %v5087 = vunpack.c.l.b16 %v4973
      %v5088 = vunpack.c.l.b16 %v4974
      %v5089 = vunpack.c.l.b16 %v4975
      %v5090 = vunpack.c.l.b16 %v4976
      %v5091 = vunpack.c.l.b16 %v4977
      %v5092 = vunpack.c.l.b16 %v4978
      %v5093 = vunpack.c.l.b16 %v4979
      %v5094 = vunpack.c.l.b16 %v4980
      %v5095 = vunpack.c.l.b16 %v4981
      %v5096 = vunpack.c.l.b16 %v4982
      %v5097 = vunpack.c.l.b16 %v4983
      %v5098 = vunpack.c.l.b16 %v4984
      %v5099 = vunpack.c.l.b16 %v4985
      %v5100 = vunpack.c.l.b16 %v4986
      %v5101 = vunpack.c.l.b16 %v4987
      %v5102 = vunpack.c.l.b16 %v4988
      %v5103 = vunpack.c.l.b16 %v4989
      %v5104 = vunpack.c.l.b16 %v4990
      %v5105 = vunpack.c.l.b16 %v4991
      %v5106 = vunpack.c.l.b16 %v4992
      %v5107 = vunpack.c.l.b16 %v4993
      %v5108 = vunpack.c.l.b16 %v4994
      %v5109 = vunpack.c.l.b16 %v4995
      %v5110 = vunpack.c.l.b16 %v4996
      %v5111 = vunpack.c.l.b16 %v4997
      %v5112 = vunpack.c.l.b16 %v4998
      %v5113 = vunpack.c.l.b16 %v4999
      %v5114 = vpack.c.b16 %v5083, %v5082
      %v5115 = vpack.c.b16 %v5085, %v5084
      %v5116 = vpack.c.b16 %v5087, %v5086
      %v5117 = vpack.c.b16 %v5089, %v5088
      %v5118 = vpack.c.b16 %v5091, %v5090
      %v5119 = vpack.c.b16 %v5093, %v5092
      %v5120 = vpack.c.b16 %v5095, %v5094
      %v5121 = vpack.c.b16 %v5097, %v5096
      %v5122 = vpack.c.b16 %v5099, %v5098
      %v5123 = vpack.c.b16 %v5101, %v5100
      %v5124 = vpack.c.b16 %v5103, %v5102
      %v5125 = vpack.c.b16 %v5105, %v5104
      %v5126 = vpack.c.b16 %v5107, %v5106
      %v5127 = vpack.c.b16 %v5109, %v5108
      %v5128 = vpack.c.b16 %v5111, %v5110
      %v5129 = vpack.c.b16 %v5113, %v5112
      %v5131 = vsel %vm1997, %v5114, 0
      %v5134 = vsel %vm1997, %v5115, 0
      %v5137 = vsel %vm1997, %v5116, 0
      %v5140 = vsel %vm1997, %v5117, 0
      %v5143 = vsel %vm1997, %v5118, 0
      %v5146 = vsel %vm1997, %v5119, 0
      %v5149 = vsel %vm1997, %v5120, 0
      %v5152 = vsel %vm1997, %v5121, 0
      %v5155 = vsel %vm1997, %v5122, 0
      %v5158 = vsel %vm1997, %v5123, 0
      %v5161 = vsel %vm1997, %v5124, 0
      %v5164 = vsel %vm1997, %v5125, 0
      %v5167 = vsel %vm1997, %v5126, 0
      %v5170 = vsel %vm1997, %v5127, 0
      %v5173 = vsel %vm1997, %v5128, 0
      %v5176 = vsel %vm1997, %v5129, 0
      %5178 = vmatpush.bf16.msra.mxu0 0
      %5179 = vmatpush.bf16.msra.mxu0 0
      %5180 = vmatpush.bf16.msra.mxu0 0
      %5181 = vmatpush.bf16.msra.mxu0 0
      %5182 = vmatpush.bf16.msra.mxu0 %v5049
      %5183 = vmatpush.bf16.msra.mxu0 %v5048
      %5184 = vmatpush.bf16.msra.mxu0 %v5047
      %5185 = vmatpush.bf16.msra.mxu0 %v5046
      %5186 = vmatmul.bf16.gmra.mxu0 %v5131
      %v5187 = vpop.f32.mrf.mxu0
      %v5188 = vadd.f32 0.0, %v5187
      %v5189 = vpop.f32.mrf.mxu0
      %v5190 = vadd.f32 0.0, %v5189
      %5191 = vmatmul.bf16.gmra.mxu0 %v5134
      %v5192 = vpop.f32.mrf.mxu0
      %v5193 = vadd.f32 0.0, %v5192
      %v5194 = vpop.f32.mrf.mxu0
      %v5195 = vadd.f32 0.0, %v5194
      %5196 = vmatmul.bf16.gmra.mxu0 %v5137
      %v5197 = vpop.f32.mrf.mxu0
      %v5198 = vadd.f32 0.0, %v5197
      %v5199 = vpop.f32.mrf.mxu0
      %v5200 = vadd.f32 0.0, %v5199
      %5201 = vmatmul.bf16.gmra.mxu0 %v5140
      %v5202 = vpop.f32.mrf.mxu0
      %v5203 = vadd.f32 0.0, %v5202
      %v5204 = vpop.f32.mrf.mxu0
      %v5205 = vadd.f32 0.0, %v5204
      %5206 = vmatmul.bf16.gmra.mxu0 %v5143
      %v5207 = vpop.f32.mrf.mxu0
      %v5208 = vadd.f32 0.0, %v5207
      %v5209 = vpop.f32.mrf.mxu0
      %v5210 = vadd.f32 0.0, %v5209
      %5211 = vmatmul.bf16.gmra.mxu0 %v5146
      %v5212 = vpop.f32.mrf.mxu0
      %v5213 = vadd.f32 0.0, %v5212
      %v5214 = vpop.f32.mrf.mxu0
      %v5215 = vadd.f32 0.0, %v5214
      %5216 = vmatmul.bf16.gmra.mxu0 %v5149
      %v5217 = vpop.f32.mrf.mxu0
      %v5218 = vadd.f32 0.0, %v5217
      %v5219 = vpop.f32.mrf.mxu0
      %v5220 = vadd.f32 0.0, %v5219
      %5221 = vmatmul.bf16.gmra.mxu0 %v5152
      %v5222 = vpop.f32.mrf.mxu0
      %v5223 = vadd.f32 0.0, %v5222
      %v5224 = vpop.f32.mrf.mxu0
      %v5225 = vadd.f32 0.0, %v5224
      %5226 = vmatmul.bf16.gmra.mxu0 %v5155
      %v5227 = vpop.f32.mrf.mxu0
      %v5228 = vadd.f32 0.0, %v5227
      %v5229 = vpop.f32.mrf.mxu0
      %v5230 = vadd.f32 0.0, %v5229
      %5231 = vmatmul.bf16.gmra.mxu0 %v5158
      %v5232 = vpop.f32.mrf.mxu0
      %v5233 = vadd.f32 0.0, %v5232
      %v5234 = vpop.f32.mrf.mxu0
      %v5235 = vadd.f32 0.0, %v5234
      %5236 = vmatmul.bf16.gmra.mxu0 %v5161
      %v5237 = vpop.f32.mrf.mxu0
      %v5238 = vadd.f32 0.0, %v5237
      %v5239 = vpop.f32.mrf.mxu0
      %v5240 = vadd.f32 0.0, %v5239
      %5241 = vmatmul.bf16.gmra.mxu0 %v5164
      %v5242 = vpop.f32.mrf.mxu0
      %v5243 = vadd.f32 0.0, %v5242
      %v5244 = vpop.f32.mrf.mxu0
      %v5245 = vadd.f32 0.0, %v5244
      %5246 = vmatmul.bf16.gmra.mxu0 %v5167
      %v5247 = vpop.f32.mrf.mxu0
      %v5248 = vadd.f32 0.0, %v5247
      %v5249 = vpop.f32.mrf.mxu0
      %v5250 = vadd.f32 0.0, %v5249
      %5251 = vmatmul.bf16.gmra.mxu0 %v5170
      %v5252 = vpop.f32.mrf.mxu0
      %v5253 = vadd.f32 0.0, %v5252
      %v5254 = vpop.f32.mrf.mxu0
      %v5255 = vadd.f32 0.0, %v5254
      %5256 = vmatmul.bf16.gmra.mxu0 %v5173
      %v5257 = vpop.f32.mrf.mxu0
      %v5258 = vadd.f32 0.0, %v5257
      %v5259 = vpop.f32.mrf.mxu0
      %v5260 = vadd.f32 0.0, %v5259
      %5261 = vmatmul.bf16.gmra.mxu0 %v5176
      %v5262 = vpop.f32.mrf.mxu0
      %v5263 = vadd.f32 0.0, %v5262
      %v5264 = vpop.f32.mrf.mxu0
      %v5265 = vadd.f32 0.0, %v5264
      %5266 = vdwg.mxu0
      %v5267 = vadd.f32 %v4935, %v5188
      %v5268 = vadd.f32 %v4936, %v5190
      %v5269 = vadd.f32 %v4937, %v5193
      %v5270 = vadd.f32 %v4938, %v5195
      %v5271 = vadd.f32 %v4939, %v5198
      %v5272 = vadd.f32 %v4940, %v5200
      %v5273 = vadd.f32 %v4941, %v5203
      %v5274 = vadd.f32 %v4942, %v5205
      %v5275 = vadd.f32 %v4943, %v5208
      %v5276 = vadd.f32 %v4944, %v5210
      %v5277 = vadd.f32 %v4945, %v5213
      %v5278 = vadd.f32 %v4946, %v5215
      %v5279 = vadd.f32 %v4947, %v5218
      %v5280 = vadd.f32 %v4948, %v5220
      %v5281 = vadd.f32 %v4949, %v5223
      %v5282 = vadd.f32 %v4950, %v5225
      %v5283 = vadd.f32 %v4951, %v5228
      %v5284 = vadd.f32 %v4952, %v5230
      %v5285 = vadd.f32 %v4953, %v5233
      %v5286 = vadd.f32 %v4954, %v5235
      %v5287 = vadd.f32 %v4955, %v5238
      %v5288 = vadd.f32 %v4956, %v5240
      %v5289 = vadd.f32 %v4957, %v5243
      %v5290 = vadd.f32 %v4958, %v5245
      %v5291 = vadd.f32 %v4959, %v5248
      %v5292 = vadd.f32 %v4960, %v5250
      %v5293 = vadd.f32 %v4961, %v5253
      %v5294 = vadd.f32 %v4962, %v5255
      %v5295 = vadd.f32 %v4963, %v5258
      %v5296 = vadd.f32 %v4964, %v5260
      %v5297 = vadd.f32 %v4965, %v5263
      %v5298 = vadd.f32 %v4966, %v5265
      %s5299 = scalar_lea.vmem %s10, 640
      %v5300 = vld [vmem:[%s5299] sm:$0xf]
      %v5301 = vld [vmem:[%s5299 + $0x4] sm:$0xf]
      %v5302 = vld [vmem:[%s5299 + $0x8] sm:$0xf]
      %v5303 = vld [vmem:[%s5299 + $0xc] sm:$0xf]
      %v5304 = vld [vmem:[%s5299 + $0x10] sm:$0xf]
      %v5305 = vld [vmem:[%s5299 + $0x14] sm:$0xf]
      %v5306 = vld [vmem:[%s5299 + $0x18] sm:$0xf]
      %v5307 = vld [vmem:[%s5299 + $0x1c] sm:$0xf]
      %v5308 = vld [vmem:[%s5299 + $0x20] sm:$0xf]
      %v5309 = vld [vmem:[%s5299 + $0x24] sm:$0xf]
      %v5310 = vld [vmem:[%s5299 + $0x28] sm:$0xf]
      %v5311 = vld [vmem:[%s5299 + $0x2c] sm:$0xf]
      %v5312 = vld [vmem:[%s5299 + $0x30] sm:$0xf]
      %v5313 = vld [vmem:[%s5299 + $0x34] sm:$0xf]
      %v5314 = vld [vmem:[%s5299 + $0x38] sm:$0xf]
      %v5315 = vld [vmem:[%s5299 + $0x3c] sm:$0xf]
      %v5316 = vld [vmem:[%s5299 + $0x40] sm:$0xf]
      %v5317 = vld [vmem:[%s5299 + $0x44] sm:$0xf]
      %v5318 = vld [vmem:[%s5299 + $0x48] sm:$0xf]
      %v5319 = vld [vmem:[%s5299 + $0x4c] sm:$0xf]
      %v5320 = vld [vmem:[%s5299 + $0x50] sm:$0xf]
      %v5321 = vld [vmem:[%s5299 + $0x54] sm:$0xf]
      %v5322 = vld [vmem:[%s5299 + $0x58] sm:$0xf]
      %v5323 = vld [vmem:[%s5299 + $0x5c] sm:$0xf]
      %v5324 = vld [vmem:[%s5299 + $0x60] sm:$0xf]
      %v5325 = vld [vmem:[%s5299 + $0x64] sm:$0xf]
      %v5326 = vld [vmem:[%s5299 + $0x68] sm:$0xf]
      %v5327 = vld [vmem:[%s5299 + $0x6c] sm:$0xf]
      %v5328 = vld [vmem:[%s5299 + $0x70] sm:$0xf]
      %v5329 = vld [vmem:[%s5299 + $0x74] sm:$0xf]
      %v5330 = vld [vmem:[%s5299 + $0x78] sm:$0xf]
      %v5331 = vld [vmem:[%s5299 + $0x7c] sm:$0xf]
      %s5332 = scalar_lea.vmem %s11, 80
      %v5333 = vld [vmem:[%s5332] sm:$0xf]
      %v5334 = vld [vmem:[%s5332 + $0x4] sm:$0xf]
      %v5335 = vld [vmem:[%s5332 + $0x8] sm:$0xf]
      %v5336 = vld [vmem:[%s5332 + $0xc] sm:$0xf]
      %v5341 = vunpack.c.l.b16 %v5333
      %v5342 = vunpack.c.l.b16 %v5334
      %v5343 = vunpack.c.l.b16 %v5335
      %v5344 = vunpack.c.l.b16 %v5336
      %v5345 = vpack.c.b16 %v5342, %v5341
      %v5346 = vpack.c.b16 %v5344, %v5343
      %5349 = vmatpush.bf16.msra.mxu0 0
      %5350 = vmatpush.bf16.msra.mxu0 0
      %5351 = vmatpush.bf16.msra.mxu0 0
      %5352 = vmatpush.bf16.msra.mxu0 0
      %5353 = vmatpush.bf16.msra.mxu0 0
      %5354 = vmatpush.bf16.msra.mxu0 0
      %5355 = vmatpush.bf16.msra.mxu0 %v5346
      %5356 = vmatpush.bf16.msra.mxu0 %v5345
      %5357 = vmatmul.bf16.gmra.mxu0 %v3742
      %v5358 = vpop.f32.mrf.mxu0
      %v5359 = vadd.f32 0.0, %v5358
      %v5360 = vpop.f32.mrf.mxu0
      %v5361 = vadd.f32 0.0, %v5360
      %5362 = vmatmul.bf16.gmra.mxu0 %v3745
      %v5363 = vpop.f32.mrf.mxu0
      %v5364 = vadd.f32 0.0, %v5363
      %v5365 = vpop.f32.mrf.mxu0
      %v5366 = vadd.f32 0.0, %v5365
      %5367 = vmatmul.bf16.gmra.mxu0 %v3748
      %v5368 = vpop.f32.mrf.mxu0
      %v5369 = vadd.f32 0.0, %v5368
      %v5370 = vpop.f32.mrf.mxu0
      %v5371 = vadd.f32 0.0, %v5370
      %5372 = vmatmul.bf16.gmra.mxu0 %v3751
      %v5373 = vpop.f32.mrf.mxu0
      %v5374 = vadd.f32 0.0, %v5373
      %v5375 = vpop.f32.mrf.mxu0
      %v5376 = vadd.f32 0.0, %v5375
      %5377 = vdwg.mxu0
      %v5378 = vpack.c.bf16 %v5361, %v5359
      %v5379 = vpack.c.bf16 %v5366, %v5364
      %v5380 = vpack.c.bf16 %v5371, %v5369
      %v5381 = vpack.c.bf16 %v5376, %v5374
      %v5414 = vunpack.c.l.b16 %v5300
      %v5415 = vunpack.c.l.b16 %v5301
      %v5416 = vunpack.c.l.b16 %v5302
      %v5417 = vunpack.c.l.b16 %v5303
      %v5418 = vunpack.c.l.b16 %v5304
      %v5419 = vunpack.c.l.b16 %v5305
      %v5420 = vunpack.c.l.b16 %v5306
      %v5421 = vunpack.c.l.b16 %v5307
      %v5422 = vunpack.c.l.b16 %v5308
      %v5423 = vunpack.c.l.b16 %v5309
      %v5424 = vunpack.c.l.b16 %v5310
      %v5425 = vunpack.c.l.b16 %v5311
      %v5426 = vunpack.c.l.b16 %v5312
      %v5427 = vunpack.c.l.b16 %v5313
      %v5428 = vunpack.c.l.b16 %v5314
      %v5429 = vunpack.c.l.b16 %v5315
      %v5430 = vunpack.c.l.b16 %v5316
      %v5431 = vunpack.c.l.b16 %v5317
      %v5432 = vunpack.c.l.b16 %v5318
      %v5433 = vunpack.c.l.b16 %v5319
      %v5434 = vunpack.c.l.b16 %v5320
      %v5435 = vunpack.c.l.b16 %v5321
      %v5436 = vunpack.c.l.b16 %v5322
      %v5437 = vunpack.c.l.b16 %v5323
      %v5438 = vunpack.c.l.b16 %v5324
      %v5439 = vunpack.c.l.b16 %v5325
      %v5440 = vunpack.c.l.b16 %v5326
      %v5441 = vunpack.c.l.b16 %v5327
      %v5442 = vunpack.c.l.b16 %v5328
      %v5443 = vunpack.c.l.b16 %v5329
      %v5444 = vunpack.c.l.b16 %v5330
      %v5445 = vunpack.c.l.b16 %v5331
      %v5446 = vpack.c.b16 %v5415, %v5414
      %v5447 = vpack.c.b16 %v5417, %v5416
      %v5448 = vpack.c.b16 %v5419, %v5418
      %v5449 = vpack.c.b16 %v5421, %v5420
      %v5450 = vpack.c.b16 %v5423, %v5422
      %v5451 = vpack.c.b16 %v5425, %v5424
      %v5452 = vpack.c.b16 %v5427, %v5426
      %v5453 = vpack.c.b16 %v5429, %v5428
      %v5454 = vpack.c.b16 %v5431, %v5430
      %v5455 = vpack.c.b16 %v5433, %v5432
      %v5456 = vpack.c.b16 %v5435, %v5434
      %v5457 = vpack.c.b16 %v5437, %v5436
      %v5458 = vpack.c.b16 %v5439, %v5438
      %v5459 = vpack.c.b16 %v5441, %v5440
      %v5460 = vpack.c.b16 %v5443, %v5442
      %v5461 = vpack.c.b16 %v5445, %v5444
      %v5463 = vsel %vm1997, %v5446, 0
      %v5466 = vsel %vm1997, %v5447, 0
      %v5469 = vsel %vm1997, %v5448, 0
      %v5472 = vsel %vm1997, %v5449, 0
      %v5475 = vsel %vm1997, %v5450, 0
      %v5478 = vsel %vm1997, %v5451, 0
      %v5481 = vsel %vm1997, %v5452, 0
      %v5484 = vsel %vm1997, %v5453, 0
      %v5487 = vsel %vm1997, %v5454, 0
      %v5490 = vsel %vm1997, %v5455, 0
      %v5493 = vsel %vm1997, %v5456, 0
      %v5496 = vsel %vm1997, %v5457, 0
      %v5499 = vsel %vm1997, %v5458, 0
      %v5502 = vsel %vm1997, %v5459, 0
      %v5505 = vsel %vm1997, %v5460, 0
      %v5508 = vsel %vm1997, %v5461, 0
      %5510 = vmatpush.bf16.msra.mxu0 0
      %5511 = vmatpush.bf16.msra.mxu0 0
      %5512 = vmatpush.bf16.msra.mxu0 0
      %5513 = vmatpush.bf16.msra.mxu0 0
      %5514 = vmatpush.bf16.msra.mxu0 %v5381
      %5515 = vmatpush.bf16.msra.mxu0 %v5380
      %5516 = vmatpush.bf16.msra.mxu0 %v5379
      %5517 = vmatpush.bf16.msra.mxu0 %v5378
      %5518 = vmatmul.bf16.gmra.mxu0 %v5463
      %v5519 = vpop.f32.mrf.mxu0
      %v5520 = vadd.f32 0.0, %v5519
      %v5521 = vpop.f32.mrf.mxu0
      %v5522 = vadd.f32 0.0, %v5521
      %5523 = vmatmul.bf16.gmra.mxu0 %v5466
      %v5524 = vpop.f32.mrf.mxu0
      %v5525 = vadd.f32 0.0, %v5524
      %v5526 = vpop.f32.mrf.mxu0
      %v5527 = vadd.f32 0.0, %v5526
      %5528 = vmatmul.bf16.gmra.mxu0 %v5469
      %v5529 = vpop.f32.mrf.mxu0
      %v5530 = vadd.f32 0.0, %v5529
      %v5531 = vpop.f32.mrf.mxu0
      %v5532 = vadd.f32 0.0, %v5531
      %5533 = vmatmul.bf16.gmra.mxu0 %v5472
      %v5534 = vpop.f32.mrf.mxu0
      %v5535 = vadd.f32 0.0, %v5534
      %v5536 = vpop.f32.mrf.mxu0
      %v5537 = vadd.f32 0.0, %v5536
      %5538 = vmatmul.bf16.gmra.mxu0 %v5475
      %v5539 = vpop.f32.mrf.mxu0
      %v5540 = vadd.f32 0.0, %v5539
      %v5541 = vpop.f32.mrf.mxu0
      %v5542 = vadd.f32 0.0, %v5541
      %5543 = vmatmul.bf16.gmra.mxu0 %v5478
      %v5544 = vpop.f32.mrf.mxu0
      %v5545 = vadd.f32 0.0, %v5544
      %v5546 = vpop.f32.mrf.mxu0
      %v5547 = vadd.f32 0.0, %v5546
      %5548 = vmatmul.bf16.gmra.mxu0 %v5481
      %v5549 = vpop.f32.mrf.mxu0
      %v5550 = vadd.f32 0.0, %v5549
      %v5551 = vpop.f32.mrf.mxu0
      %v5552 = vadd.f32 0.0, %v5551
      %5553 = vmatmul.bf16.gmra.mxu0 %v5484
      %v5554 = vpop.f32.mrf.mxu0
      %v5555 = vadd.f32 0.0, %v5554
      %v5556 = vpop.f32.mrf.mxu0
      %v5557 = vadd.f32 0.0, %v5556
      %5558 = vmatmul.bf16.gmra.mxu0 %v5487
      %v5559 = vpop.f32.mrf.mxu0
      %v5560 = vadd.f32 0.0, %v5559
      %v5561 = vpop.f32.mrf.mxu0
      %v5562 = vadd.f32 0.0, %v5561
      %5563 = vmatmul.bf16.gmra.mxu0 %v5490
      %v5564 = vpop.f32.mrf.mxu0
      %v5565 = vadd.f32 0.0, %v5564
      %v5566 = vpop.f32.mrf.mxu0
      %v5567 = vadd.f32 0.0, %v5566
      %5568 = vmatmul.bf16.gmra.mxu0 %v5493
      %v5569 = vpop.f32.mrf.mxu0
      %v5570 = vadd.f32 0.0, %v5569
      %v5571 = vpop.f32.mrf.mxu0
      %v5572 = vadd.f32 0.0, %v5571
      %5573 = vmatmul.bf16.gmra.mxu0 %v5496
      %v5574 = vpop.f32.mrf.mxu0
      %v5575 = vadd.f32 0.0, %v5574
      %v5576 = vpop.f32.mrf.mxu0
      %v5577 = vadd.f32 0.0, %v5576
      %5578 = vmatmul.bf16.gmra.mxu0 %v5499
      %v5579 = vpop.f32.mrf.mxu0
      %v5580 = vadd.f32 0.0, %v5579
      %v5581 = vpop.f32.mrf.mxu0
      %v5582 = vadd.f32 0.0, %v5581
      %5583 = vmatmul.bf16.gmra.mxu0 %v5502
      %v5584 = vpop.f32.mrf.mxu0
      %v5585 = vadd.f32 0.0, %v5584
      %v5586 = vpop.f32.mrf.mxu0
      %v5587 = vadd.f32 0.0, %v5586
      %5588 = vmatmul.bf16.gmra.mxu0 %v5505
      %v5589 = vpop.f32.mrf.mxu0
      %v5590 = vadd.f32 0.0, %v5589
      %v5591 = vpop.f32.mrf.mxu0
      %v5592 = vadd.f32 0.0, %v5591
      %5593 = vmatmul.bf16.gmra.mxu0 %v5508
      %v5594 = vpop.f32.mrf.mxu0
      %v5595 = vadd.f32 0.0, %v5594
      %v5596 = vpop.f32.mrf.mxu0
      %v5597 = vadd.f32 0.0, %v5596
      %5598 = vdwg.mxu0
      %v5599 = vadd.f32 %v5267, %v5520
      %v5600 = vadd.f32 %v5268, %v5522
      %v5601 = vadd.f32 %v5269, %v5525
      %v5602 = vadd.f32 %v5270, %v5527
      %v5603 = vadd.f32 %v5271, %v5530
      %v5604 = vadd.f32 %v5272, %v5532
      %v5605 = vadd.f32 %v5273, %v5535
      %v5606 = vadd.f32 %v5274, %v5537
      %v5607 = vadd.f32 %v5275, %v5540
      %v5608 = vadd.f32 %v5276, %v5542
      %v5609 = vadd.f32 %v5277, %v5545
      %v5610 = vadd.f32 %v5278, %v5547
      %v5611 = vadd.f32 %v5279, %v5550
      %v5612 = vadd.f32 %v5280, %v5552
      %v5613 = vadd.f32 %v5281, %v5555
      %v5614 = vadd.f32 %v5282, %v5557
      %v5615 = vadd.f32 %v5283, %v5560
      %v5616 = vadd.f32 %v5284, %v5562
      %v5617 = vadd.f32 %v5285, %v5565
      %v5618 = vadd.f32 %v5286, %v5567
      %v5619 = vadd.f32 %v5287, %v5570
      %v5620 = vadd.f32 %v5288, %v5572
      %v5621 = vadd.f32 %v5289, %v5575
      %v5622 = vadd.f32 %v5290, %v5577
      %v5623 = vadd.f32 %v5291, %v5580
      %v5624 = vadd.f32 %v5292, %v5582
      %v5625 = vadd.f32 %v5293, %v5585
      %v5626 = vadd.f32 %v5294, %v5587
      %v5627 = vadd.f32 %v5295, %v5590
      %v5628 = vadd.f32 %v5296, %v5592
      %v5629 = vadd.f32 %v5297, %v5595
      %v5630 = vadd.f32 %v5298, %v5597
      %s5631 = scalar_lea.vmem %s10, 768
      %v5632 = vld [vmem:[%s5631] sm:$0xf]
      %v5633 = vld [vmem:[%s5631 + $0x4] sm:$0xf]
      %v5634 = vld [vmem:[%s5631 + $0x8] sm:$0xf]
      %v5635 = vld [vmem:[%s5631 + $0xc] sm:$0xf]
      %v5636 = vld [vmem:[%s5631 + $0x10] sm:$0xf]
      %v5637 = vld [vmem:[%s5631 + $0x14] sm:$0xf]
      %v5638 = vld [vmem:[%s5631 + $0x18] sm:$0xf]
      %v5639 = vld [vmem:[%s5631 + $0x1c] sm:$0xf]
      %v5640 = vld [vmem:[%s5631 + $0x20] sm:$0xf]
      %v5641 = vld [vmem:[%s5631 + $0x24] sm:$0xf]
      %v5642 = vld [vmem:[%s5631 + $0x28] sm:$0xf]
      %v5643 = vld [vmem:[%s5631 + $0x2c] sm:$0xf]
      %v5644 = vld [vmem:[%s5631 + $0x30] sm:$0xf]
      %v5645 = vld [vmem:[%s5631 + $0x34] sm:$0xf]
      %v5646 = vld [vmem:[%s5631 + $0x38] sm:$0xf]
      %v5647 = vld [vmem:[%s5631 + $0x3c] sm:$0xf]
      %v5648 = vld [vmem:[%s5631 + $0x40] sm:$0xf]
      %v5649 = vld [vmem:[%s5631 + $0x44] sm:$0xf]
      %v5650 = vld [vmem:[%s5631 + $0x48] sm:$0xf]
      %v5651 = vld [vmem:[%s5631 + $0x4c] sm:$0xf]
      %v5652 = vld [vmem:[%s5631 + $0x50] sm:$0xf]
      %v5653 = vld [vmem:[%s5631 + $0x54] sm:$0xf]
      %v5654 = vld [vmem:[%s5631 + $0x58] sm:$0xf]
      %v5655 = vld [vmem:[%s5631 + $0x5c] sm:$0xf]
      %v5656 = vld [vmem:[%s5631 + $0x60] sm:$0xf]
      %v5657 = vld [vmem:[%s5631 + $0x64] sm:$0xf]
      %v5658 = vld [vmem:[%s5631 + $0x68] sm:$0xf]
      %v5659 = vld [vmem:[%s5631 + $0x6c] sm:$0xf]
      %v5660 = vld [vmem:[%s5631 + $0x70] sm:$0xf]
      %v5661 = vld [vmem:[%s5631 + $0x74] sm:$0xf]
      %v5662 = vld [vmem:[%s5631 + $0x78] sm:$0xf]
      %v5663 = vld [vmem:[%s5631 + $0x7c] sm:$0xf]
      %s5664 = scalar_lea.vmem %s11, 96
      %v5665 = vld [vmem:[%s5664] sm:$0xf]
      %v5666 = vld [vmem:[%s5664 + $0x4] sm:$0xf]
      %v5667 = vld [vmem:[%s5664 + $0x8] sm:$0xf]
      %v5668 = vld [vmem:[%s5664 + $0xc] sm:$0xf]
      %v5673 = vunpack.c.l.b16 %v5665
      %v5674 = vunpack.c.l.b16 %v5666
      %v5675 = vunpack.c.l.b16 %v5667
      %v5676 = vunpack.c.l.b16 %v5668
      %v5677 = vpack.c.b16 %v5674, %v5673
      %v5678 = vpack.c.b16 %v5676, %v5675
      %5681 = vmatpush.bf16.msra.mxu0 0
      %5682 = vmatpush.bf16.msra.mxu0 0
      %5683 = vmatpush.bf16.msra.mxu0 0
      %5684 = vmatpush.bf16.msra.mxu0 0
      %5685 = vmatpush.bf16.msra.mxu0 0
      %5686 = vmatpush.bf16.msra.mxu0 0
      %5687 = vmatpush.bf16.msra.mxu0 %v5678
      %5688 = vmatpush.bf16.msra.mxu0 %v5677
      %5689 = vmatmul.bf16.gmra.mxu0 %v3742
      %v5690 = vpop.f32.mrf.mxu0
      %v5691 = vadd.f32 0.0, %v5690
      %v5692 = vpop.f32.mrf.mxu0
      %v5693 = vadd.f32 0.0, %v5692
      %5694 = vmatmul.bf16.gmra.mxu0 %v3745
      %v5695 = vpop.f32.mrf.mxu0
      %v5696 = vadd.f32 0.0, %v5695
      %v5697 = vpop.f32.mrf.mxu0
      %v5698 = vadd.f32 0.0, %v5697
      %5699 = vmatmul.bf16.gmra.mxu0 %v3748
      %v5700 = vpop.f32.mrf.mxu0
      %v5701 = vadd.f32 0.0, %v5700
      %v5702 = vpop.f32.mrf.mxu0
      %v5703 = vadd.f32 0.0, %v5702
      %5704 = vmatmul.bf16.gmra.mxu0 %v3751
      %v5705 = vpop.f32.mrf.mxu0
      %v5706 = vadd.f32 0.0, %v5705
      %v5707 = vpop.f32.mrf.mxu0
      %v5708 = vadd.f32 0.0, %v5707
      %5709 = vdwg.mxu0
      %v5710 = vpack.c.bf16 %v5693, %v5691
      %v5711 = vpack.c.bf16 %v5698, %v5696
      %v5712 = vpack.c.bf16 %v5703, %v5701
      %v5713 = vpack.c.bf16 %v5708, %v5706
      %v5746 = vunpack.c.l.b16 %v5632
      %v5747 = vunpack.c.l.b16 %v5633
      %v5748 = vunpack.c.l.b16 %v5634
      %v5749 = vunpack.c.l.b16 %v5635
      %v5750 = vunpack.c.l.b16 %v5636
      %v5751 = vunpack.c.l.b16 %v5637
      %v5752 = vunpack.c.l.b16 %v5638
      %v5753 = vunpack.c.l.b16 %v5639
      %v5754 = vunpack.c.l.b16 %v5640
      %v5755 = vunpack.c.l.b16 %v5641
      %v5756 = vunpack.c.l.b16 %v5642
      %v5757 = vunpack.c.l.b16 %v5643
      %v5758 = vunpack.c.l.b16 %v5644
      %v5759 = vunpack.c.l.b16 %v5645
      %v5760 = vunpack.c.l.b16 %v5646
      %v5761 = vunpack.c.l.b16 %v5647
      %v5762 = vunpack.c.l.b16 %v5648
      %v5763 = vunpack.c.l.b16 %v5649
      %v5764 = vunpack.c.l.b16 %v5650
      %v5765 = vunpack.c.l.b16 %v5651
      %v5766 = vunpack.c.l.b16 %v5652
      %v5767 = vunpack.c.l.b16 %v5653
      %v5768 = vunpack.c.l.b16 %v5654
      %v5769 = vunpack.c.l.b16 %v5655
      %v5770 = vunpack.c.l.b16 %v5656
      %v5771 = vunpack.c.l.b16 %v5657
      %v5772 = vunpack.c.l.b16 %v5658
      %v5773 = vunpack.c.l.b16 %v5659
      %v5774 = vunpack.c.l.b16 %v5660
      %v5775 = vunpack.c.l.b16 %v5661
      %v5776 = vunpack.c.l.b16 %v5662
      %v5777 = vunpack.c.l.b16 %v5663
      %v5778 = vpack.c.b16 %v5747, %v5746
      %v5779 = vpack.c.b16 %v5749, %v5748
      %v5780 = vpack.c.b16 %v5751, %v5750
      %v5781 = vpack.c.b16 %v5753, %v5752
      %v5782 = vpack.c.b16 %v5755, %v5754
      %v5783 = vpack.c.b16 %v5757, %v5756
      %v5784 = vpack.c.b16 %v5759, %v5758
      %v5785 = vpack.c.b16 %v5761, %v5760
      %v5786 = vpack.c.b16 %v5763, %v5762
      %v5787 = vpack.c.b16 %v5765, %v5764
      %v5788 = vpack.c.b16 %v5767, %v5766
      %v5789 = vpack.c.b16 %v5769, %v5768
      %v5790 = vpack.c.b16 %v5771, %v5770
      %v5791 = vpack.c.b16 %v5773, %v5772
      %v5792 = vpack.c.b16 %v5775, %v5774
      %v5793 = vpack.c.b16 %v5777, %v5776
      %v5795 = vsel %vm1997, %v5778, 0
      %v5798 = vsel %vm1997, %v5779, 0
      %v5801 = vsel %vm1997, %v5780, 0
      %v5804 = vsel %vm1997, %v5781, 0
      %v5807 = vsel %vm1997, %v5782, 0
      %v5810 = vsel %vm1997, %v5783, 0
      %v5813 = vsel %vm1997, %v5784, 0
      %v5816 = vsel %vm1997, %v5785, 0
      %v5819 = vsel %vm1997, %v5786, 0
      %v5822 = vsel %vm1997, %v5787, 0
      %v5825 = vsel %vm1997, %v5788, 0
      %v5828 = vsel %vm1997, %v5789, 0
      %v5831 = vsel %vm1997, %v5790, 0
      %v5834 = vsel %vm1997, %v5791, 0
      %v5837 = vsel %vm1997, %v5792, 0
      %v5840 = vsel %vm1997, %v5793, 0
      %5842 = vmatpush.bf16.msra.mxu0 0
      %5843 = vmatpush.bf16.msra.mxu0 0
      %5844 = vmatpush.bf16.msra.mxu0 0
      %5845 = vmatpush.bf16.msra.mxu0 0
      %5846 = vmatpush.bf16.msra.mxu0 %v5713
      %5847 = vmatpush.bf16.msra.mxu0 %v5712
      %5848 = vmatpush.bf16.msra.mxu0 %v5711
      %5849 = vmatpush.bf16.msra.mxu0 %v5710
      %5850 = vmatmul.bf16.gmra.mxu0 %v5795
      %v5851 = vpop.f32.mrf.mxu0
      %v5852 = vadd.f32 0.0, %v5851
      %v5853 = vpop.f32.mrf.mxu0
      %v5854 = vadd.f32 0.0, %v5853
      %5855 = vmatmul.bf16.gmra.mxu0 %v5798
      %v5856 = vpop.f32.mrf.mxu0
      %v5857 = vadd.f32 0.0, %v5856
      %v5858 = vpop.f32.mrf.mxu0
      %v5859 = vadd.f32 0.0, %v5858
      %5860 = vmatmul.bf16.gmra.mxu0 %v5801
      %v5861 = vpop.f32.mrf.mxu0
      %v5862 = vadd.f32 0.0, %v5861
      %v5863 = vpop.f32.mrf.mxu0
      %v5864 = vadd.f32 0.0, %v5863
      %5865 = vmatmul.bf16.gmra.mxu0 %v5804
      %v5866 = vpop.f32.mrf.mxu0
      %v5867 = vadd.f32 0.0, %v5866
      %v5868 = vpop.f32.mrf.mxu0
      %v5869 = vadd.f32 0.0, %v5868
      %5870 = vmatmul.bf16.gmra.mxu0 %v5807
      %v5871 = vpop.f32.mrf.mxu0
      %v5872 = vadd.f32 0.0, %v5871
      %v5873 = vpop.f32.mrf.mxu0
      %v5874 = vadd.f32 0.0, %v5873
      %5875 = vmatmul.bf16.gmra.mxu0 %v5810
      %v5876 = vpop.f32.mrf.mxu0
      %v5877 = vadd.f32 0.0, %v5876
      %v5878 = vpop.f32.mrf.mxu0
      %v5879 = vadd.f32 0.0, %v5878
      %5880 = vmatmul.bf16.gmra.mxu0 %v5813
      %v5881 = vpop.f32.mrf.mxu0
      %v5882 = vadd.f32 0.0, %v5881
      %v5883 = vpop.f32.mrf.mxu0
      %v5884 = vadd.f32 0.0, %v5883
      %5885 = vmatmul.bf16.gmra.mxu0 %v5816
      %v5886 = vpop.f32.mrf.mxu0
      %v5887 = vadd.f32 0.0, %v5886
      %v5888 = vpop.f32.mrf.mxu0
      %v5889 = vadd.f32 0.0, %v5888
      %5890 = vmatmul.bf16.gmra.mxu0 %v5819
      %v5891 = vpop.f32.mrf.mxu0
      %v5892 = vadd.f32 0.0, %v5891
      %v5893 = vpop.f32.mrf.mxu0
      %v5894 = vadd.f32 0.0, %v5893
      %5895 = vmatmul.bf16.gmra.mxu0 %v5822
      %v5896 = vpop.f32.mrf.mxu0
      %v5897 = vadd.f32 0.0, %v5896
      %v5898 = vpop.f32.mrf.mxu0
      %v5899 = vadd.f32 0.0, %v5898
      %5900 = vmatmul.bf16.gmra.mxu0 %v5825
      %v5901 = vpop.f32.mrf.mxu0
      %v5902 = vadd.f32 0.0, %v5901
      %v5903 = vpop.f32.mrf.mxu0
      %v5904 = vadd.f32 0.0, %v5903
      %5905 = vmatmul.bf16.gmra.mxu0 %v5828
      %v5906 = vpop.f32.mrf.mxu0
      %v5907 = vadd.f32 0.0, %v5906
      %v5908 = vpop.f32.mrf.mxu0
      %v5909 = vadd.f32 0.0, %v5908
      %5910 = vmatmul.bf16.gmra.mxu0 %v5831
      %v5911 = vpop.f32.mrf.mxu0
      %v5912 = vadd.f32 0.0, %v5911
      %v5913 = vpop.f32.mrf.mxu0
      %v5914 = vadd.f32 0.0, %v5913
      %5915 = vmatmul.bf16.gmra.mxu0 %v5834
      %v5916 = vpop.f32.mrf.mxu0
      %v5917 = vadd.f32 0.0, %v5916
      %v5918 = vpop.f32.mrf.mxu0
      %v5919 = vadd.f32 0.0, %v5918
      %5920 = vmatmul.bf16.gmra.mxu0 %v5837
      %v5921 = vpop.f32.mrf.mxu0
      %v5922 = vadd.f32 0.0, %v5921
      %v5923 = vpop.f32.mrf.mxu0
      %v5924 = vadd.f32 0.0, %v5923
      %5925 = vmatmul.bf16.gmra.mxu0 %v5840
      %v5926 = vpop.f32.mrf.mxu0
      %v5927 = vadd.f32 0.0, %v5926
      %v5928 = vpop.f32.mrf.mxu0
      %v5929 = vadd.f32 0.0, %v5928
      %5930 = vdwg.mxu0
      %v5931 = vadd.f32 %v5599, %v5852
      %v5932 = vadd.f32 %v5600, %v5854
      %v5933 = vadd.f32 %v5601, %v5857
      %v5934 = vadd.f32 %v5602, %v5859
      %v5935 = vadd.f32 %v5603, %v5862
      %v5936 = vadd.f32 %v5604, %v5864
      %v5937 = vadd.f32 %v5605, %v5867
      %v5938 = vadd.f32 %v5606, %v5869
      %v5939 = vadd.f32 %v5607, %v5872
      %v5940 = vadd.f32 %v5608, %v5874
      %v5941 = vadd.f32 %v5609, %v5877
      %v5942 = vadd.f32 %v5610, %v5879
      %v5943 = vadd.f32 %v5611, %v5882
      %v5944 = vadd.f32 %v5612, %v5884
      %v5945 = vadd.f32 %v5613, %v5887
      %v5946 = vadd.f32 %v5614, %v5889
      %v5947 = vadd.f32 %v5615, %v5892
      %v5948 = vadd.f32 %v5616, %v5894
      %v5949 = vadd.f32 %v5617, %v5897
      %v5950 = vadd.f32 %v5618, %v5899
      %v5951 = vadd.f32 %v5619, %v5902
      %v5952 = vadd.f32 %v5620, %v5904
      %v5953 = vadd.f32 %v5621, %v5907
      %v5954 = vadd.f32 %v5622, %v5909
      %v5955 = vadd.f32 %v5623, %v5912
      %v5956 = vadd.f32 %v5624, %v5914
      %v5957 = vadd.f32 %v5625, %v5917
      %v5958 = vadd.f32 %v5626, %v5919
      %v5959 = vadd.f32 %v5627, %v5922
      %v5960 = vadd.f32 %v5628, %v5924
      %v5961 = vadd.f32 %v5629, %v5927
      %v5962 = vadd.f32 %v5630, %v5929
      %s5963 = scalar_lea.vmem %s10, 896
      %v5964 = vld [vmem:[%s5963] sm:$0xf]
      %v5965 = vld [vmem:[%s5963 + $0x4] sm:$0xf]
      %v5966 = vld [vmem:[%s5963 + $0x8] sm:$0xf]
      %v5967 = vld [vmem:[%s5963 + $0xc] sm:$0xf]
      %v5968 = vld [vmem:[%s5963 + $0x10] sm:$0xf]
      %v5969 = vld [vmem:[%s5963 + $0x14] sm:$0xf]
      %v5970 = vld [vmem:[%s5963 + $0x18] sm:$0xf]
      %v5971 = vld [vmem:[%s5963 + $0x1c] sm:$0xf]
      %v5972 = vld [vmem:[%s5963 + $0x20] sm:$0xf]
      %v5973 = vld [vmem:[%s5963 + $0x24] sm:$0xf]
      %v5974 = vld [vmem:[%s5963 + $0x28] sm:$0xf]
      %v5975 = vld [vmem:[%s5963 + $0x2c] sm:$0xf]
      %v5976 = vld [vmem:[%s5963 + $0x30] sm:$0xf]
      %v5977 = vld [vmem:[%s5963 + $0x34] sm:$0xf]
      %v5978 = vld [vmem:[%s5963 + $0x38] sm:$0xf]
      %v5979 = vld [vmem:[%s5963 + $0x3c] sm:$0xf]
      %v5980 = vld [vmem:[%s5963 + $0x40] sm:$0xf]
      %v5981 = vld [vmem:[%s5963 + $0x44] sm:$0xf]
      %v5982 = vld [vmem:[%s5963 + $0x48] sm:$0xf]
      %v5983 = vld [vmem:[%s5963 + $0x4c] sm:$0xf]
      %v5984 = vld [vmem:[%s5963 + $0x50] sm:$0xf]
      %v5985 = vld [vmem:[%s5963 + $0x54] sm:$0xf]
      %v5986 = vld [vmem:[%s5963 + $0x58] sm:$0xf]
      %v5987 = vld [vmem:[%s5963 + $0x5c] sm:$0xf]
      %v5988 = vld [vmem:[%s5963 + $0x60] sm:$0xf]
      %v5989 = vld [vmem:[%s5963 + $0x64] sm:$0xf]
      %v5990 = vld [vmem:[%s5963 + $0x68] sm:$0xf]
      %v5991 = vld [vmem:[%s5963 + $0x6c] sm:$0xf]
      %v5992 = vld [vmem:[%s5963 + $0x70] sm:$0xf]
      %v5993 = vld [vmem:[%s5963 + $0x74] sm:$0xf]
      %v5994 = vld [vmem:[%s5963 + $0x78] sm:$0xf]
      %v5995 = vld [vmem:[%s5963 + $0x7c] sm:$0xf]
      %s5996 = scalar_lea.vmem %s11, 112
      %v5997 = vld [vmem:[%s5996] sm:$0xf]
      %v5998 = vld [vmem:[%s5996 + $0x4] sm:$0xf]
      %v5999 = vld [vmem:[%s5996 + $0x8] sm:$0xf]
      %v6000 = vld [vmem:[%s5996 + $0xc] sm:$0xf]
      %v6005 = vunpack.c.l.b16 %v5997
      %v6006 = vunpack.c.l.b16 %v5998
      %v6007 = vunpack.c.l.b16 %v5999
      %v6008 = vunpack.c.l.b16 %v6000
      %v6009 = vpack.c.b16 %v6006, %v6005
      %v6010 = vpack.c.b16 %v6008, %v6007
      %6013 = vmatpush.bf16.msra.mxu0 0
      %6014 = vmatpush.bf16.msra.mxu0 0
      %6015 = vmatpush.bf16.msra.mxu0 0
      %6016 = vmatpush.bf16.msra.mxu0 0
      %6017 = vmatpush.bf16.msra.mxu0 0
      %6018 = vmatpush.bf16.msra.mxu0 0
      %6019 = vmatpush.bf16.msra.mxu0 %v6010
      %6020 = vmatpush.bf16.msra.mxu0 %v6009
      %6021 = vmatmul.bf16.gmra.mxu0 %v3742
      %v6022 = vpop.f32.mrf.mxu0
      %v6023 = vadd.f32 0.0, %v6022
      %v6024 = vpop.f32.mrf.mxu0
      %v6025 = vadd.f32 0.0, %v6024
      %6026 = vmatmul.bf16.gmra.mxu0 %v3745
      %v6027 = vpop.f32.mrf.mxu0
      %v6028 = vadd.f32 0.0, %v6027
      %v6029 = vpop.f32.mrf.mxu0
      %v6030 = vadd.f32 0.0, %v6029
      %6031 = vmatmul.bf16.gmra.mxu0 %v3748
      %v6032 = vpop.f32.mrf.mxu0
      %v6033 = vadd.f32 0.0, %v6032
      %v6034 = vpop.f32.mrf.mxu0
      %v6035 = vadd.f32 0.0, %v6034
      %6036 = vmatmul.bf16.gmra.mxu0 %v3751
      %v6037 = vpop.f32.mrf.mxu0
      %v6038 = vadd.f32 0.0, %v6037
      %v6039 = vpop.f32.mrf.mxu0
      %v6040 = vadd.f32 0.0, %v6039
      %6041 = vdwg.mxu0
      %v6042 = vpack.c.bf16 %v6025, %v6023
      %v6043 = vpack.c.bf16 %v6030, %v6028
      %v6044 = vpack.c.bf16 %v6035, %v6033
      %v6045 = vpack.c.bf16 %v6040, %v6038
      %v6078 = vunpack.c.l.b16 %v5964
      %v6079 = vunpack.c.l.b16 %v5965
      %v6080 = vunpack.c.l.b16 %v5966
      %v6081 = vunpack.c.l.b16 %v5967
      %v6082 = vunpack.c.l.b16 %v5968
      %v6083 = vunpack.c.l.b16 %v5969
      %v6084 = vunpack.c.l.b16 %v5970
      %v6085 = vunpack.c.l.b16 %v5971
      %v6086 = vunpack.c.l.b16 %v5972
      %v6087 = vunpack.c.l.b16 %v5973
      %v6088 = vunpack.c.l.b16 %v5974
      %v6089 = vunpack.c.l.b16 %v5975
      %v6090 = vunpack.c.l.b16 %v5976
      %v6091 = vunpack.c.l.b16 %v5977
      %v6092 = vunpack.c.l.b16 %v5978
      %v6093 = vunpack.c.l.b16 %v5979
      %v6094 = vunpack.c.l.b16 %v5980
      %v6095 = vunpack.c.l.b16 %v5981
      %v6096 = vunpack.c.l.b16 %v5982
      %v6097 = vunpack.c.l.b16 %v5983
      %v6098 = vunpack.c.l.b16 %v5984
      %v6099 = vunpack.c.l.b16 %v5985
      %v6100 = vunpack.c.l.b16 %v5986
      %v6101 = vunpack.c.l.b16 %v5987
      %v6102 = vunpack.c.l.b16 %v5988
      %v6103 = vunpack.c.l.b16 %v5989
      %v6104 = vunpack.c.l.b16 %v5990
      %v6105 = vunpack.c.l.b16 %v5991
      %v6106 = vunpack.c.l.b16 %v5992
      %v6107 = vunpack.c.l.b16 %v5993
      %v6108 = vunpack.c.l.b16 %v5994
      %v6109 = vunpack.c.l.b16 %v5995
      %v6110 = vpack.c.b16 %v6079, %v6078
      %v6111 = vpack.c.b16 %v6081, %v6080
      %v6112 = vpack.c.b16 %v6083, %v6082
      %v6113 = vpack.c.b16 %v6085, %v6084
      %v6114 = vpack.c.b16 %v6087, %v6086
      %v6115 = vpack.c.b16 %v6089, %v6088
      %v6116 = vpack.c.b16 %v6091, %v6090
      %v6117 = vpack.c.b16 %v6093, %v6092
      %v6118 = vpack.c.b16 %v6095, %v6094
      %v6119 = vpack.c.b16 %v6097, %v6096
      %v6120 = vpack.c.b16 %v6099, %v6098
      %v6121 = vpack.c.b16 %v6101, %v6100
      %v6122 = vpack.c.b16 %v6103, %v6102
      %v6123 = vpack.c.b16 %v6105, %v6104
      %v6124 = vpack.c.b16 %v6107, %v6106
      %v6125 = vpack.c.b16 %v6109, %v6108
      %v6127 = vsel %vm1997, %v6110, 0
      %v6130 = vsel %vm1997, %v6111, 0
      %v6133 = vsel %vm1997, %v6112, 0
      %v6136 = vsel %vm1997, %v6113, 0
      %v6139 = vsel %vm1997, %v6114, 0
      %v6142 = vsel %vm1997, %v6115, 0
      %v6145 = vsel %vm1997, %v6116, 0
      %v6148 = vsel %vm1997, %v6117, 0
      %v6151 = vsel %vm1997, %v6118, 0
      %v6154 = vsel %vm1997, %v6119, 0
      %v6157 = vsel %vm1997, %v6120, 0
      %v6160 = vsel %vm1997, %v6121, 0
      %v6163 = vsel %vm1997, %v6122, 0
      %v6166 = vsel %vm1997, %v6123, 0
      %v6169 = vsel %vm1997, %v6124, 0
      %v6172 = vsel %vm1997, %v6125, 0
      %6174 = vmatpush.bf16.msra.mxu0 0
      %6175 = vmatpush.bf16.msra.mxu0 0
      %6176 = vmatpush.bf16.msra.mxu0 0
      %6177 = vmatpush.bf16.msra.mxu0 0
      %6178 = vmatpush.bf16.msra.mxu0 %v6045
      %6179 = vmatpush.bf16.msra.mxu0 %v6044
      %6180 = vmatpush.bf16.msra.mxu0 %v6043
      %6181 = vmatpush.bf16.msra.mxu0 %v6042
      %6182 = vmatmul.bf16.gmra.mxu0 %v6127
      %v6183 = vpop.f32.mrf.mxu0
      %v6184 = vadd.f32 0.0, %v6183
      %v6185 = vpop.f32.mrf.mxu0
      %v6186 = vadd.f32 0.0, %v6185
      %6187 = vmatmul.bf16.gmra.mxu0 %v6130
      %v6188 = vpop.f32.mrf.mxu0
      %v6189 = vadd.f32 0.0, %v6188
      %v6190 = vpop.f32.mrf.mxu0
      %v6191 = vadd.f32 0.0, %v6190
      %6192 = vmatmul.bf16.gmra.mxu0 %v6133
      %v6193 = vpop.f32.mrf.mxu0
      %v6194 = vadd.f32 0.0, %v6193
      %v6195 = vpop.f32.mrf.mxu0
      %v6196 = vadd.f32 0.0, %v6195
      %6197 = vmatmul.bf16.gmra.mxu0 %v6136
      %v6198 = vpop.f32.mrf.mxu0
      %v6199 = vadd.f32 0.0, %v6198
      %v6200 = vpop.f32.mrf.mxu0
      %v6201 = vadd.f32 0.0, %v6200
      %6202 = vmatmul.bf16.gmra.mxu0 %v6139
      %v6203 = vpop.f32.mrf.mxu0
      %v6204 = vadd.f32 0.0, %v6203
      %v6205 = vpop.f32.mrf.mxu0
      %v6206 = vadd.f32 0.0, %v6205
      %6207 = vmatmul.bf16.gmra.mxu0 %v6142
      %v6208 = vpop.f32.mrf.mxu0
      %v6209 = vadd.f32 0.0, %v6208
      %v6210 = vpop.f32.mrf.mxu0
      %v6211 = vadd.f32 0.0, %v6210
      %6212 = vmatmul.bf16.gmra.mxu0 %v6145
      %v6213 = vpop.f32.mrf.mxu0
      %v6214 = vadd.f32 0.0, %v6213
      %v6215 = vpop.f32.mrf.mxu0
      %v6216 = vadd.f32 0.0, %v6215
      %6217 = vmatmul.bf16.gmra.mxu0 %v6148
      %v6218 = vpop.f32.mrf.mxu0
      %v6219 = vadd.f32 0.0, %v6218
      %v6220 = vpop.f32.mrf.mxu0
      %v6221 = vadd.f32 0.0, %v6220
      %6222 = vmatmul.bf16.gmra.mxu0 %v6151
      %v6223 = vpop.f32.mrf.mxu0
      %v6224 = vadd.f32 0.0, %v6223
      %v6225 = vpop.f32.mrf.mxu0
      %v6226 = vadd.f32 0.0, %v6225
      %6227 = vmatmul.bf16.gmra.mxu0 %v6154
      %v6228 = vpop.f32.mrf.mxu0
      %v6229 = vadd.f32 0.0, %v6228
      %v6230 = vpop.f32.mrf.mxu0
      %v6231 = vadd.f32 0.0, %v6230
      %6232 = vmatmul.bf16.gmra.mxu0 %v6157
      %v6233 = vpop.f32.mrf.mxu0
      %v6234 = vadd.f32 0.0, %v6233
      %v6235 = vpop.f32.mrf.mxu0
      %v6236 = vadd.f32 0.0, %v6235
      %6237 = vmatmul.bf16.gmra.mxu0 %v6160
      %v6238 = vpop.f32.mrf.mxu0
      %v6239 = vadd.f32 0.0, %v6238
      %v6240 = vpop.f32.mrf.mxu0
      %v6241 = vadd.f32 0.0, %v6240
      %6242 = vmatmul.bf16.gmra.mxu0 %v6163
      %v6243 = vpop.f32.mrf.mxu0
      %v6244 = vadd.f32 0.0, %v6243
      %v6245 = vpop.f32.mrf.mxu0
      %v6246 = vadd.f32 0.0, %v6245
      %6247 = vmatmul.bf16.gmra.mxu0 %v6166
      %v6248 = vpop.f32.mrf.mxu0
      %v6249 = vadd.f32 0.0, %v6248
      %v6250 = vpop.f32.mrf.mxu0
      %v6251 = vadd.f32 0.0, %v6250
      %6252 = vmatmul.bf16.gmra.mxu0 %v6169
      %v6253 = vpop.f32.mrf.mxu0
      %v6254 = vadd.f32 0.0, %v6253
      %v6255 = vpop.f32.mrf.mxu0
      %v6256 = vadd.f32 0.0, %v6255
      %6257 = vmatmul.bf16.gmra.mxu0 %v6172
      %v6258 = vpop.f32.mrf.mxu0
      %v6259 = vadd.f32 0.0, %v6258
      %v6260 = vpop.f32.mrf.mxu0
      %v6261 = vadd.f32 0.0, %v6260
      %6262 = vdwg.mxu0
      %v6263 = vadd.f32 %v5931, %v6184
      %v6264 = vadd.f32 %v5932, %v6186
      %v6265 = vadd.f32 %v5933, %v6189
      %v6266 = vadd.f32 %v5934, %v6191
      %v6267 = vadd.f32 %v5935, %v6194
      %v6268 = vadd.f32 %v5936, %v6196
      %v6269 = vadd.f32 %v5937, %v6199
      %v6270 = vadd.f32 %v5938, %v6201
      %v6271 = vadd.f32 %v5939, %v6204
      %v6272 = vadd.f32 %v5940, %v6206
      %v6273 = vadd.f32 %v5941, %v6209
      %v6274 = vadd.f32 %v5942, %v6211
      %v6275 = vadd.f32 %v5943, %v6214
      %v6276 = vadd.f32 %v5944, %v6216
      %v6277 = vadd.f32 %v5945, %v6219
      %v6278 = vadd.f32 %v5946, %v6221
      %v6279 = vadd.f32 %v5947, %v6224
      %v6280 = vadd.f32 %v5948, %v6226
      %v6281 = vadd.f32 %v5949, %v6229
      %v6282 = vadd.f32 %v5950, %v6231
      %v6283 = vadd.f32 %v5951, %v6234
      %v6284 = vadd.f32 %v5952, %v6236
      %v6285 = vadd.f32 %v5953, %v6239
      %v6286 = vadd.f32 %v5954, %v6241
      %v6287 = vadd.f32 %v5955, %v6244
      %v6288 = vadd.f32 %v5956, %v6246
      %v6289 = vadd.f32 %v5957, %v6249
      %v6290 = vadd.f32 %v5958, %v6251
      %v6291 = vadd.f32 %v5959, %v6254
      %v6292 = vadd.f32 %v5960, %v6256
      %v6293 = vadd.f32 %v5961, %v6259
      %v6294 = vadd.f32 %v5962, %v6261
      %s6295 = scalar_lea.vmem %s10, 1024
      %v6296 = vld [vmem:[%s6295] sm:$0xf]
      %v6297 = vld [vmem:[%s6295 + $0x4] sm:$0xf]
      %v6298 = vld [vmem:[%s6295 + $0x8] sm:$0xf]
      %v6299 = vld [vmem:[%s6295 + $0xc] sm:$0xf]
      %v6300 = vld [vmem:[%s6295 + $0x10] sm:$0xf]
      %v6301 = vld [vmem:[%s6295 + $0x14] sm:$0xf]
      %v6302 = vld [vmem:[%s6295 + $0x18] sm:$0xf]
      %v6303 = vld [vmem:[%s6295 + $0x1c] sm:$0xf]
      %v6304 = vld [vmem:[%s6295 + $0x20] sm:$0xf]
      %v6305 = vld [vmem:[%s6295 + $0x24] sm:$0xf]
      %v6306 = vld [vmem:[%s6295 + $0x28] sm:$0xf]
      %v6307 = vld [vmem:[%s6295 + $0x2c] sm:$0xf]
      %v6308 = vld [vmem:[%s6295 + $0x30] sm:$0xf]
      %v6309 = vld [vmem:[%s6295 + $0x34] sm:$0xf]
      %v6310 = vld [vmem:[%s6295 + $0x38] sm:$0xf]
      %v6311 = vld [vmem:[%s6295 + $0x3c] sm:$0xf]
      %v6312 = vld [vmem:[%s6295 + $0x40] sm:$0xf]
      %v6313 = vld [vmem:[%s6295 + $0x44] sm:$0xf]
      %v6314 = vld [vmem:[%s6295 + $0x48] sm:$0xf]
      %v6315 = vld [vmem:[%s6295 + $0x4c] sm:$0xf]
      %v6316 = vld [vmem:[%s6295 + $0x50] sm:$0xf]
      %v6317 = vld [vmem:[%s6295 + $0x54] sm:$0xf]
      %v6318 = vld [vmem:[%s6295 + $0x58] sm:$0xf]
      %v6319 = vld [vmem:[%s6295 + $0x5c] sm:$0xf]
      %v6320 = vld [vmem:[%s6295 + $0x60] sm:$0xf]
      %v6321 = vld [vmem:[%s6295 + $0x64] sm:$0xf]
      %v6322 = vld [vmem:[%s6295 + $0x68] sm:$0xf]
      %v6323 = vld [vmem:[%s6295 + $0x6c] sm:$0xf]
      %v6324 = vld [vmem:[%s6295 + $0x70] sm:$0xf]
      %v6325 = vld [vmem:[%s6295 + $0x74] sm:$0xf]
      %v6326 = vld [vmem:[%s6295 + $0x78] sm:$0xf]
      %v6327 = vld [vmem:[%s6295 + $0x7c] sm:$0xf]
      %s6328 = scalar_lea.vmem %s11, 128
      %v6329 = vld [vmem:[%s6328] sm:$0xf]
      %v6330 = vld [vmem:[%s6328 + $0x4] sm:$0xf]
      %v6331 = vld [vmem:[%s6328 + $0x8] sm:$0xf]
      %v6332 = vld [vmem:[%s6328 + $0xc] sm:$0xf]
      %v6337 = vunpack.c.l.b16 %v6329
      %v6338 = vunpack.c.l.b16 %v6330
      %v6339 = vunpack.c.l.b16 %v6331
      %v6340 = vunpack.c.l.b16 %v6332
      %v6341 = vpack.c.b16 %v6338, %v6337
      %v6342 = vpack.c.b16 %v6340, %v6339
      %6345 = vmatpush.bf16.msra.mxu0 0
      %6346 = vmatpush.bf16.msra.mxu0 0
      %6347 = vmatpush.bf16.msra.mxu0 0
      %6348 = vmatpush.bf16.msra.mxu0 0
      %6349 = vmatpush.bf16.msra.mxu0 0
      %6350 = vmatpush.bf16.msra.mxu0 0
      %6351 = vmatpush.bf16.msra.mxu0 %v6342
      %6352 = vmatpush.bf16.msra.mxu0 %v6341
      %6353 = vmatmul.bf16.gmra.mxu0 %v3742
      %v6354 = vpop.f32.mrf.mxu0
      %v6355 = vadd.f32 0.0, %v6354
      %v6356 = vpop.f32.mrf.mxu0
      %v6357 = vadd.f32 0.0, %v6356
      %6358 = vmatmul.bf16.gmra.mxu0 %v3745
      %v6359 = vpop.f32.mrf.mxu0
      %v6360 = vadd.f32 0.0, %v6359
      %v6361 = vpop.f32.mrf.mxu0
      %v6362 = vadd.f32 0.0, %v6361
      %6363 = vmatmul.bf16.gmra.mxu0 %v3748
      %v6364 = vpop.f32.mrf.mxu0
      %v6365 = vadd.f32 0.0, %v6364
      %v6366 = vpop.f32.mrf.mxu0
      %v6367 = vadd.f32 0.0, %v6366
      %6368 = vmatmul.bf16.gmra.mxu0 %v3751
      %v6369 = vpop.f32.mrf.mxu0
      %v6370 = vadd.f32 0.0, %v6369
      %v6371 = vpop.f32.mrf.mxu0
      %v6372 = vadd.f32 0.0, %v6371
      %6373 = vdwg.mxu0
      %v6374 = vpack.c.bf16 %v6357, %v6355
      %v6375 = vpack.c.bf16 %v6362, %v6360
      %v6376 = vpack.c.bf16 %v6367, %v6365
      %v6377 = vpack.c.bf16 %v6372, %v6370
      %v6410 = vunpack.c.l.b16 %v6296
      %v6411 = vunpack.c.l.b16 %v6297
      %v6412 = vunpack.c.l.b16 %v6298
      %v6413 = vunpack.c.l.b16 %v6299
      %v6414 = vunpack.c.l.b16 %v6300
      %v6415 = vunpack.c.l.b16 %v6301
      %v6416 = vunpack.c.l.b16 %v6302
      %v6417 = vunpack.c.l.b16 %v6303
      %v6418 = vunpack.c.l.b16 %v6304
      %v6419 = vunpack.c.l.b16 %v6305
      %v6420 = vunpack.c.l.b16 %v6306
      %v6421 = vunpack.c.l.b16 %v6307
      %v6422 = vunpack.c.l.b16 %v6308
      %v6423 = vunpack.c.l.b16 %v6309
      %v6424 = vunpack.c.l.b16 %v6310
      %v6425 = vunpack.c.l.b16 %v6311
      %v6426 = vunpack.c.l.b16 %v6312
      %v6427 = vunpack.c.l.b16 %v6313
      %v6428 = vunpack.c.l.b16 %v6314
      %v6429 = vunpack.c.l.b16 %v6315
      %v6430 = vunpack.c.l.b16 %v6316
      %v6431 = vunpack.c.l.b16 %v6317
      %v6432 = vunpack.c.l.b16 %v6318
      %v6433 = vunpack.c.l.b16 %v6319
      %v6434 = vunpack.c.l.b16 %v6320
      %v6435 = vunpack.c.l.b16 %v6321
      %v6436 = vunpack.c.l.b16 %v6322
      %v6437 = vunpack.c.l.b16 %v6323
      %v6438 = vunpack.c.l.b16 %v6324
      %v6439 = vunpack.c.l.b16 %v6325
      %v6440 = vunpack.c.l.b16 %v6326
      %v6441 = vunpack.c.l.b16 %v6327
      %v6442 = vpack.c.b16 %v6411, %v6410
      %v6443 = vpack.c.b16 %v6413, %v6412
      %v6444 = vpack.c.b16 %v6415, %v6414
      %v6445 = vpack.c.b16 %v6417, %v6416
      %v6446 = vpack.c.b16 %v6419, %v6418
      %v6447 = vpack.c.b16 %v6421, %v6420
      %v6448 = vpack.c.b16 %v6423, %v6422
      %v6449 = vpack.c.b16 %v6425, %v6424
      %v6450 = vpack.c.b16 %v6427, %v6426
      %v6451 = vpack.c.b16 %v6429, %v6428
      %v6452 = vpack.c.b16 %v6431, %v6430
      %v6453 = vpack.c.b16 %v6433, %v6432
      %v6454 = vpack.c.b16 %v6435, %v6434
      %v6455 = vpack.c.b16 %v6437, %v6436
      %v6456 = vpack.c.b16 %v6439, %v6438
      %v6457 = vpack.c.b16 %v6441, %v6440
      %v6459 = vsel %vm1997, %v6442, 0
      %v6462 = vsel %vm1997, %v6443, 0
      %v6465 = vsel %vm1997, %v6444, 0
      %v6468 = vsel %vm1997, %v6445, 0
      %v6471 = vsel %vm1997, %v6446, 0
      %v6474 = vsel %vm1997, %v6447, 0
      %v6477 = vsel %vm1997, %v6448, 0
      %v6480 = vsel %vm1997, %v6449, 0
      %v6483 = vsel %vm1997, %v6450, 0
      %v6486 = vsel %vm1997, %v6451, 0
      %v6489 = vsel %vm1997, %v6452, 0
      %v6492 = vsel %vm1997, %v6453, 0
      %v6495 = vsel %vm1997, %v6454, 0
      %v6498 = vsel %vm1997, %v6455, 0
      %v6501 = vsel %vm1997, %v6456, 0
      %v6504 = vsel %vm1997, %v6457, 0
      %6506 = vmatpush.bf16.msra.mxu0 0
      %6507 = vmatpush.bf16.msra.mxu0 0
      %6508 = vmatpush.bf16.msra.mxu0 0
      %6509 = vmatpush.bf16.msra.mxu0 0
      %6510 = vmatpush.bf16.msra.mxu0 %v6377
      %6511 = vmatpush.bf16.msra.mxu0 %v6376
      %6512 = vmatpush.bf16.msra.mxu0 %v6375
      %6513 = vmatpush.bf16.msra.mxu0 %v6374
      %6514 = vmatmul.bf16.gmra.mxu0 %v6459
      %v6515 = vpop.f32.mrf.mxu0
      %v6516 = vadd.f32 0.0, %v6515
      %v6517 = vpop.f32.mrf.mxu0
      %v6518 = vadd.f32 0.0, %v6517
      %6519 = vmatmul.bf16.gmra.mxu0 %v6462
      %v6520 = vpop.f32.mrf.mxu0
      %v6521 = vadd.f32 0.0, %v6520
      %v6522 = vpop.f32.mrf.mxu0
      %v6523 = vadd.f32 0.0, %v6522
      %6524 = vmatmul.bf16.gmra.mxu0 %v6465
      %v6525 = vpop.f32.mrf.mxu0
      %v6526 = vadd.f32 0.0, %v6525
      %v6527 = vpop.f32.mrf.mxu0
      %v6528 = vadd.f32 0.0, %v6527
      %6529 = vmatmul.bf16.gmra.mxu0 %v6468
      %v6530 = vpop.f32.mrf.mxu0
      %v6531 = vadd.f32 0.0, %v6530
      %v6532 = vpop.f32.mrf.mxu0
      %v6533 = vadd.f32 0.0, %v6532
      %6534 = vmatmul.bf16.gmra.mxu0 %v6471
      %v6535 = vpop.f32.mrf.mxu0
      %v6536 = vadd.f32 0.0, %v6535
      %v6537 = vpop.f32.mrf.mxu0
      %v6538 = vadd.f32 0.0, %v6537
      %6539 = vmatmul.bf16.gmra.mxu0 %v6474
      %v6540 = vpop.f32.mrf.mxu0
      %v6541 = vadd.f32 0.0, %v6540
      %v6542 = vpop.f32.mrf.mxu0
      %v6543 = vadd.f32 0.0, %v6542
      %6544 = vmatmul.bf16.gmra.mxu0 %v6477
      %v6545 = vpop.f32.mrf.mxu0
      %v6546 = vadd.f32 0.0, %v6545
      %v6547 = vpop.f32.mrf.mxu0
      %v6548 = vadd.f32 0.0, %v6547
      %6549 = vmatmul.bf16.gmra.mxu0 %v6480
      %v6550 = vpop.f32.mrf.mxu0
      %v6551 = vadd.f32 0.0, %v6550
      %v6552 = vpop.f32.mrf.mxu0
      %v6553 = vadd.f32 0.0, %v6552
      %6554 = vmatmul.bf16.gmra.mxu0 %v6483
      %v6555 = vpop.f32.mrf.mxu0
      %v6556 = vadd.f32 0.0, %v6555
      %v6557 = vpop.f32.mrf.mxu0
      %v6558 = vadd.f32 0.0, %v6557
      %6559 = vmatmul.bf16.gmra.mxu0 %v6486
      %v6560 = vpop.f32.mrf.mxu0
      %v6561 = vadd.f32 0.0, %v6560
      %v6562 = vpop.f32.mrf.mxu0
      %v6563 = vadd.f32 0.0, %v6562
      %6564 = vmatmul.bf16.gmra.mxu0 %v6489
      %v6565 = vpop.f32.mrf.mxu0
      %v6566 = vadd.f32 0.0, %v6565
      %v6567 = vpop.f32.mrf.mxu0
      %v6568 = vadd.f32 0.0, %v6567
      %6569 = vmatmul.bf16.gmra.mxu0 %v6492
      %v6570 = vpop.f32.mrf.mxu0
      %v6571 = vadd.f32 0.0, %v6570
      %v6572 = vpop.f32.mrf.mxu0
      %v6573 = vadd.f32 0.0, %v6572
      %6574 = vmatmul.bf16.gmra.mxu0 %v6495
      %v6575 = vpop.f32.mrf.mxu0
      %v6576 = vadd.f32 0.0, %v6575
      %v6577 = vpop.f32.mrf.mxu0
      %v6578 = vadd.f32 0.0, %v6577
      %6579 = vmatmul.bf16.gmra.mxu0 %v6498
      %v6580 = vpop.f32.mrf.mxu0
      %v6581 = vadd.f32 0.0, %v6580
      %v6582 = vpop.f32.mrf.mxu0
      %v6583 = vadd.f32 0.0, %v6582
      %6584 = vmatmul.bf16.gmra.mxu0 %v6501
      %v6585 = vpop.f32.mrf.mxu0
      %v6586 = vadd.f32 0.0, %v6585
      %v6587 = vpop.f32.mrf.mxu0
      %v6588 = vadd.f32 0.0, %v6587
      %6589 = vmatmul.bf16.gmra.mxu0 %v6504
      %v6590 = vpop.f32.mrf.mxu0
      %v6591 = vadd.f32 0.0, %v6590
      %v6592 = vpop.f32.mrf.mxu0
      %v6593 = vadd.f32 0.0, %v6592
      %6594 = vdwg.mxu0
      %v6595 = vadd.f32 %v6263, %v6516
      %v6596 = vadd.f32 %v6264, %v6518
      %v6597 = vadd.f32 %v6265, %v6521
      %v6598 = vadd.f32 %v6266, %v6523
      %v6599 = vadd.f32 %v6267, %v6526
      %v6600 = vadd.f32 %v6268, %v6528
      %v6601 = vadd.f32 %v6269, %v6531
      %v6602 = vadd.f32 %v6270, %v6533
      %v6603 = vadd.f32 %v6271, %v6536
      %v6604 = vadd.f32 %v6272, %v6538
      %v6605 = vadd.f32 %v6273, %v6541
      %v6606 = vadd.f32 %v6274, %v6543
      %v6607 = vadd.f32 %v6275, %v6546
      %v6608 = vadd.f32 %v6276, %v6548
      %v6609 = vadd.f32 %v6277, %v6551
      %v6610 = vadd.f32 %v6278, %v6553
      %v6611 = vadd.f32 %v6279, %v6556
      %v6612 = vadd.f32 %v6280, %v6558
      %v6613 = vadd.f32 %v6281, %v6561
      %v6614 = vadd.f32 %v6282, %v6563
      %v6615 = vadd.f32 %v6283, %v6566
      %v6616 = vadd.f32 %v6284, %v6568
      %v6617 = vadd.f32 %v6285, %v6571
      %v6618 = vadd.f32 %v6286, %v6573
      %v6619 = vadd.f32 %v6287, %v6576
      %v6620 = vadd.f32 %v6288, %v6578
      %v6621 = vadd.f32 %v6289, %v6581
      %v6622 = vadd.f32 %v6290, %v6583
      %v6623 = vadd.f32 %v6291, %v6586
      %v6624 = vadd.f32 %v6292, %v6588
      %v6625 = vadd.f32 %v6293, %v6591
      %v6626 = vadd.f32 %v6294, %v6593
      %v6627 = vld [vmem:[%s12] sm:$0x1]
      %v6629 = vperm.slane %v6627, 0
      %v6631 = vadd.f32 %v6595, %v6629
      %v6632 = vadd.f32 %v6596, %v6629
      %v6633 = vadd.f32 %v6597, %v6629
      %v6634 = vadd.f32 %v6598, %v6629
      %v6635 = vadd.f32 %v6599, %v6629
      %v6636 = vadd.f32 %v6600, %v6629
      %v6637 = vadd.f32 %v6601, %v6629
      %v6638 = vadd.f32 %v6602, %v6629
      %v6639 = vadd.f32 %v6603, %v6629
      %v6640 = vadd.f32 %v6604, %v6629
      %v6641 = vadd.f32 %v6605, %v6629
      %v6642 = vadd.f32 %v6606, %v6629
      %v6643 = vadd.f32 %v6607, %v6629
      %v6644 = vadd.f32 %v6608, %v6629
      %v6645 = vadd.f32 %v6609, %v6629
      %v6646 = vadd.f32 %v6610, %v6629
      %v6647 = vadd.f32 %v6611, %v6629
      %v6648 = vadd.f32 %v6612, %v6629
      %v6649 = vadd.f32 %v6613, %v6629
      %v6650 = vadd.f32 %v6614, %v6629
      %v6651 = vadd.f32 %v6615, %v6629
      %v6652 = vadd.f32 %v6616, %v6629
      %v6653 = vadd.f32 %v6617, %v6629
      %v6654 = vadd.f32 %v6618, %v6629
      %v6655 = vadd.f32 %v6619, %v6629
      %v6656 = vadd.f32 %v6620, %v6629
      %v6657 = vadd.f32 %v6621, %v6629
      %v6658 = vadd.f32 %v6622, %v6629
      %v6659 = vadd.f32 %v6623, %v6629
      %v6660 = vadd.f32 %v6624, %v6629
      %v6661 = vadd.f32 %v6625, %v6629
      %v6662 = vadd.f32 %v6626, %v6629
      %v6663 = vsub.f32 0.0, %v6631
      %v6664 = vsub.f32 0.0, %v6632
      %v6665 = vsub.f32 0.0, %v6633
      %v6666 = vsub.f32 0.0, %v6634
      %v6667 = vsub.f32 0.0, %v6635
      %v6668 = vsub.f32 0.0, %v6636
      %v6669 = vsub.f32 0.0, %v6637
      %v6670 = vsub.f32 0.0, %v6638
      %v6671 = vsub.f32 0.0, %v6639
      %v6672 = vsub.f32 0.0, %v6640
      %v6673 = vsub.f32 0.0, %v6641
      %v6674 = vsub.f32 0.0, %v6642
      %v6675 = vsub.f32 0.0, %v6643
      %v6676 = vsub.f32 0.0, %v6644
      %v6677 = vsub.f32 0.0, %v6645
      %v6678 = vsub.f32 0.0, %v6646
      %v6679 = vsub.f32 0.0, %v6647
      %v6680 = vsub.f32 0.0, %v6648
      %v6681 = vsub.f32 0.0, %v6649
      %v6682 = vsub.f32 0.0, %v6650
      %v6683 = vsub.f32 0.0, %v6651
      %v6684 = vsub.f32 0.0, %v6652
      %v6685 = vsub.f32 0.0, %v6653
      %v6686 = vsub.f32 0.0, %v6654
      %v6687 = vsub.f32 0.0, %v6655
      %v6688 = vsub.f32 0.0, %v6656
      %v6689 = vsub.f32 0.0, %v6657
      %v6690 = vsub.f32 0.0, %v6658
      %v6691 = vsub.f32 0.0, %v6659
      %v6692 = vsub.f32 0.0, %v6660
      %v6693 = vsub.f32 0.0, %v6661
      %v6694 = vsub.f32 0.0, %v6662
      %v6695 = vmul.f32 %v6663, 1.442695
      %v6696 = vpow.pop %v6695
      %v6697 = vmul.f32 %v6664, 1.442695
      %v6698 = vpow.pop %v6697
      %v6699 = vmul.f32 %v6665, 1.442695
      %v6700 = vpow.pop %v6699
      %v6701 = vmul.f32 %v6666, 1.442695
      %v6702 = vpow.pop %v6701
      %v6703 = vmul.f32 %v6667, 1.442695
      %v6704 = vpow.pop %v6703
      %v6705 = vmul.f32 %v6668, 1.442695
      %v6706 = vpow.pop %v6705
      %v6707 = vmul.f32 %v6669, 1.442695
      %v6708 = vpow.pop %v6707
      %v6709 = vmul.f32 %v6670, 1.442695
      %v6710 = vpow.pop %v6709
      %v6711 = vmul.f32 %v6671, 1.442695
      %v6712 = vpow.pop %v6711
      %v6713 = vmul.f32 %v6672, 1.442695
      %v6714 = vpow.pop %v6713
      %v6715 = vmul.f32 %v6673, 1.442695
      %v6716 = vpow.pop %v6715
      %v6717 = vmul.f32 %v6674, 1.442695
      %v6718 = vpow.pop %v6717
      %v6719 = vmul.f32 %v6675, 1.442695
      %v6720 = vpow.pop %v6719
      %v6721 = vmul.f32 %v6676, 1.442695
      %v6722 = vpow.pop %v6721
      %v6723 = vmul.f32 %v6677, 1.442695
      %v6724 = vpow.pop %v6723
      %v6725 = vmul.f32 %v6678, 1.442695
      %v6726 = vpow.pop %v6725
      %v6727 = vmul.f32 %v6679, 1.442695
      %v6728 = vpow.pop %v6727
      %v6729 = vmul.f32 %v6680, 1.442695
      %v6730 = vpow.pop %v6729
      %v6731 = vmul.f32 %v6681, 1.442695
      %v6732 = vpow.pop %v6731
      %v6733 = vmul.f32 %v6682, 1.442695
      %v6734 = vpow.pop %v6733
      %v6735 = vmul.f32 %v6683, 1.442695
      %v6736 = vpow.pop %v6735
      %v6737 = vmul.f32 %v6684, 1.442695
      %v6738 = vpow.pop %v6737
      %v6739 = vmul.f32 %v6685, 1.442695
      %v6740 = vpow.pop %v6739
      %v6741 = vmul.f32 %v6686, 1.442695
      %v6742 = vpow.pop %v6741
      %v6743 = vmul.f32 %v6687, 1.442695
      %v6744 = vpow.pop %v6743
      %v6745 = vmul.f32 %v6688, 1.442695
      %v6746 = vpow.pop %v6745
      %v6747 = vmul.f32 %v6689, 1.442695
      %v6748 = vpow.pop %v6747
      %v6749 = vmul.f32 %v6690, 1.442695
      %v6750 = vpow.pop %v6749
      %v6751 = vmul.f32 %v6691, 1.442695
      %v6752 = vpow.pop %v6751
      %v6753 = vmul.f32 %v6692, 1.442695
      %v6754 = vpow.pop %v6753
      %v6755 = vmul.f32 %v6693, 1.442695
      %v6756 = vpow.pop %v6755
      %v6757 = vmul.f32 %v6694, 1.442695
      %v6758 = vpow.pop %v6757
      %v6759 = vadd.f32 %v6696, 1.0
      %v6760 = vadd.f32 %v6698, 1.0
      %v6761 = vadd.f32 %v6700, 1.0
      %v6762 = vadd.f32 %v6702, 1.0
      %v6763 = vadd.f32 %v6704, 1.0
      %v6764 = vadd.f32 %v6706, 1.0
      %v6765 = vadd.f32 %v6708, 1.0
      %v6766 = vadd.f32 %v6710, 1.0
      %v6767 = vadd.f32 %v6712, 1.0
      %v6768 = vadd.f32 %v6714, 1.0
      %v6769 = vadd.f32 %v6716, 1.0
      %v6770 = vadd.f32 %v6718, 1.0
      %v6771 = vadd.f32 %v6720, 1.0
      %v6772 = vadd.f32 %v6722, 1.0
      %v6773 = vadd.f32 %v6724, 1.0
      %v6774 = vadd.f32 %v6726, 1.0
      %v6775 = vadd.f32 %v6728, 1.0
      %v6776 = vadd.f32 %v6730, 1.0
      %v6777 = vadd.f32 %v6732, 1.0
      %v6778 = vadd.f32 %v6734, 1.0
      %v6779 = vadd.f32 %v6736, 1.0
      %v6780 = vadd.f32 %v6738, 1.0
      %v6781 = vadd.f32 %v6740, 1.0
      %v6782 = vadd.f32 %v6742, 1.0
      %v6783 = vadd.f32 %v6744, 1.0
      %v6784 = vadd.f32 %v6746, 1.0
      %v6785 = vadd.f32 %v6748, 1.0
      %v6786 = vadd.f32 %v6750, 1.0
      %v6787 = vadd.f32 %v6752, 1.0
      %v6788 = vadd.f32 %v6754, 1.0
      %v6789 = vadd.f32 %v6756, 1.0
      %v6790 = vadd.f32 %v6758, 1.0
      %v6791 = vrcp.pop %v6759
      %v6792 = vrcp.pop %v6760
      %v6793 = vrcp.pop %v6761
      %v6794 = vrcp.pop %v6762
      %v6795 = vrcp.pop %v6763
      %v6796 = vrcp.pop %v6764
      %v6797 = vrcp.pop %v6765
      %v6798 = vrcp.pop %v6766
      %v6799 = vrcp.pop %v6767
      %v6800 = vrcp.pop %v6768
      %v6801 = vrcp.pop %v6769
      %v6802 = vrcp.pop %v6770
      %v6803 = vrcp.pop %v6771
      %v6804 = vrcp.pop %v6772
      %v6805 = vrcp.pop %v6773
      %v6806 = vrcp.pop %v6774
      %v6807 = vrcp.pop %v6775
      %v6808 = vrcp.pop %v6776
      %v6809 = vrcp.pop %v6777
      %v6810 = vrcp.pop %v6778
      %v6811 = vrcp.pop %v6779
      %v6812 = vrcp.pop %v6780
      %v6813 = vrcp.pop %v6781
      %v6814 = vrcp.pop %v6782
      %v6815 = vrcp.pop %v6783
      %v6816 = vrcp.pop %v6784
      %v6817 = vrcp.pop %v6785
      %v6818 = vrcp.pop %v6786
      %v6819 = vrcp.pop %v6787
      %v6820 = vrcp.pop %v6788
      %v6821 = vrcp.pop %v6789
      %v6822 = vrcp.pop %v6790
      %6823 = vst.msk [vmem:[%s442] sm:$0xff] %vm717, %v6791
      %6824 = vst.msk [vmem:[%s442 + $0x8] sm:$0xff] %vm717, %v6792
      %6825 = vst.msk [vmem:[%s442 + $0x10] sm:$0xff] %vm717, %v6793
      %6826 = vst.msk [vmem:[%s442 + $0x18] sm:$0xff] %vm717, %v6794
      %6827 = vst.msk [vmem:[%s442 + $0x20] sm:$0xff] %vm717, %v6795
      %6828 = vst.msk [vmem:[%s442 + $0x28] sm:$0xff] %vm717, %v6796
      %6829 = vst.msk [vmem:[%s442 + $0x30] sm:$0xff] %vm717, %v6797
      %6830 = vst.msk [vmem:[%s442 + $0x38] sm:$0xff] %vm717, %v6798
      %6831 = vst.msk [vmem:[%s442 + $0x40] sm:$0xff] %vm717, %v6799
      %6832 = vst.msk [vmem:[%s442 + $0x48] sm:$0xff] %vm717, %v6800
      %6833 = vst.msk [vmem:[%s442 + $0x50] sm:$0xff] %vm717, %v6801
      %6834 = vst.msk [vmem:[%s442 + $0x58] sm:$0xff] %vm717, %v6802
      %6835 = vst.msk [vmem:[%s442 + $0x60] sm:$0xff] %vm717, %v6803
      %6836 = vst.msk [vmem:[%s442 + $0x68] sm:$0xff] %vm717, %v6804
      %6837 = vst.msk [vmem:[%s442 + $0x70] sm:$0xff] %vm717, %v6805
      %6838 = vst.msk [vmem:[%s442 + $0x78] sm:$0xff] %vm717, %v6806
      %6839 = vst.msk [vmem:[%s442 + $0x80] sm:$0xff] %vm717, %v6807
      %6840 = vst.msk [vmem:[%s442 + $0x88] sm:$0xff] %vm717, %v6808
      %6841 = vst.msk [vmem:[%s442 + $0x90] sm:$0xff] %vm717, %v6809
      %6842 = vst.msk [vmem:[%s442 + $0x98] sm:$0xff] %vm717, %v6810
      %6843 = vst.msk [vmem:[%s442 + $0xa0] sm:$0xff] %vm717, %v6811
      %6844 = vst.msk [vmem:[%s442 + $0xa8] sm:$0xff] %vm717, %v6812
      %6845 = vst.msk [vmem:[%s442 + $0xb0] sm:$0xff] %vm717, %v6813
      %6846 = vst.msk [vmem:[%s442 + $0xb8] sm:$0xff] %vm717, %v6814
      %6847 = vst.msk [vmem:[%s442 + $0xc0] sm:$0xff] %vm717, %v6815
      %6848 = vst.msk [vmem:[%s442 + $0xc8] sm:$0xff] %vm717, %v6816
      %6849 = vst.msk [vmem:[%s442 + $0xd0] sm:$0xff] %vm717, %v6817
      %6850 = vst.msk [vmem:[%s442 + $0xd8] sm:$0xff] %vm717, %v6818
      %6851 = vst.msk [vmem:[%s442 + $0xe0] sm:$0xff] %vm717, %v6819
      %6852 = vst.msk [vmem:[%s442 + $0xe8] sm:$0xff] %vm717, %v6820
      %6853 = vst.msk [vmem:[%s442 + $0xf0] sm:$0xff] %vm717, %v6821
      %6854 = vst.msk [vmem:[%s442 + $0xf8] sm:$0xff] %vm717, %v6822
      %s6855 = smul.u32 32, %s24
      %p6856 = scmp.lt.s32.totalorder %s6855, 63
      %s6857 = scalar_select %p6856, %s6855, 63
      %s6858 = smul.addr %s6857, 8
      %s6859 = scalar_lea.vmem %s13, %s6858
      // Predicated region
      $region73: #{autoencoder_forward.1} parent=71 // pred_check
        %p6860 = pneg %p320
      $region74: #{autoencoder_forward.1} parent=71 // pred_check_branch
        %6862 = sbr.rel (%p6860) target = $region76
      $region75: #{autoencoder_forward.1} parent=71 // pred_region
        %s6863 = smul.u32 32, %s24
      $region76: #{autoencoder_forward.1} parent=71 // pred_fallthru
        _
    $region72: #{autoencoder_forward.1} parent=5 // pred_fallthru
      _
    %p6864 = scmp.le.s32.totalorder 2, %s19
    // Predicated region
    $region77: #{autoencoder_forward.1} parent=5 // pred_check
      %p6865 = pneg %p6864
    $region78: #{autoencoder_forward.1} parent=5 // pred_check_branch
      %6867 = sbr.rel (%p6865) target = $region80
    $region79: #{autoencoder_forward.1} parent=5 // pred_region
      %s6868 = ssub.s32 %s19, 2
      // Predicated region
      $region81: #{autoencoder_forward.1} parent=79 // pred_check
        %p6869 = pneg %p326
      $region82: #{autoencoder_forward.1} parent=79 // pred_check_branch
        %6871 = sbr.rel (%p6869) target = $region84
      $region83: #{autoencoder_forward.1} parent=79 // pred_region
        %s6872 = smul.u32 32, %s25
        %p6873 = scmp.lt.s32.totalorder %s6872, 63
        %s6874 = scalar_select %p6873, %s6872, 63
        %s6875 = smul.addr %s6874, 8
        %s6876 = scalar_lea.vmem %s13, %s6875
      $region84: #{autoencoder_forward.1} parent=79 // pred_fallthru
        _
    $region80: #{autoencoder_forward.1} parent=5 // pred_fallthru
      _
  $region6: #{autoencoder_forward.1} parent=0 // loop_footer
    %s23 = sadd.s32 1, %s19
  $region7: #{autoencoder_forward.1} parent=0 // loop_footer_branch
    %18 = sbr.rel target = $region3
  $region8: #{autoencoder_forward.1} parent=0 // loop_exit
    _

</llo_original>
